<compile_context>
chip_gen: v7x
topology: tpu7x:2x2x1
jax: 0.10.0
libtpu: 0.0.40
codegen_flags: <defaults>
</compile_context>

<pallas_src>
import functools
import math

import jax
import jax.numpy as jnp
from jax import lax
from jax.experimental import pallas as pl
from jax.experimental.pallas import tpu as pltpu


# ----------------------------------------------------------------------------
# In-kernel helpers
# ----------------------------------------------------------------------------
def _im2col_matmul(xpad_ref, wmat, n, cin, h, w):
    """3x3 'same' conv as a single MXU matmul.

    xpad_ref : (N, Cin, H+2, W+2) f32 VMEM scratch (zero halo already filled)
    wmat     : (Cout, 9*Cin) bf16, row index ordered (ky, kx, ci)
    returns  : (Cout, N*H*W) f32
    """
    hw = h * w
    per_image = []
    for i in range(n):                      # static unroll (small N)
        taps = []
        for ky in range(3):
            for kx in range(3):
                taps.append(
                    xpad_ref[i, :, ky:ky + h, kx:kx + w].reshape(cin, hw))
        per_image.append(jnp.concatenate(taps, axis=0))      # (9*Cin, H*W)
    patches = jnp.concatenate(per_image, axis=1)             # (9*Cin, N*H*W)
    return jnp.dot(wmat, patches.astype(jnp.bfloat16),
                   preferred_element_type=jnp.float32)


def _bn_relu(y, gamma, beta, inv_count, eps):
    """Training-mode BatchNorm (biased batch var over N,H,W) + ReLU, in f32.

    y: (C, N*H*W) f32; gamma/beta: (C, 1) f32.
    """
    mean = jnp.sum(y, axis=-1, keepdims=True) * inv_count            # (C, 1)
    var = jnp.sum((y - mean) ** 2, axis=-1, keepdims=True) * inv_count
    scale = gamma * lax.rsqrt(var + eps)                             # EUP
    shift = beta - mean * scale
    return jnp.maximum(y * scale + shift, 0.0)


# ----------------------------------------------------------------------------
# Fused kernel (whole batch in one grid step)
# ----------------------------------------------------------------------------
def smooth_conv_kernel(x_ref, w1_ref, b1_ref, g1_ref, be1_ref,
                       w2_ref, b2_ref, g2_ref, be2_ref,
                       o_ref, xpad1, xpad2, *, eps):
    n, cin, h, w = x_ref.shape
    cout = o_ref.shape[1]
    hw = h * w
    inv_count = 1.0 / float(n * hw)

    # ---- layer 1: zero-halo pad -> conv+bias -> BN+ReLU -------------------
    xpad1[...] = jnp.zeros_like(xpad1)
    xpad1[:, :, 1:h + 1, 1:w + 1] = x_ref[...]
    y1 = _im2col_matmul(xpad1, w1_ref[...], n, cin, h, w) + b1_ref[...]
    a1 = _bn_relu(y1, g1_ref[...], be1_ref[...], inv_count, eps)

    # ---- layer 2: zero-halo pad -> conv+bias -> BN+ReLU -------------------
    xpad2[...] = jnp.zeros_like(xpad2)
    for i in range(n):
        xpad2[i, :, 1:h + 1, 1:w + 1] = (
            a1[:, i * hw:(i + 1) * hw].reshape(cout, h, w))
    y2 = _im2col_matmul(xpad2, w2_ref[...], n, cout, h, w) + b2_ref[...]
    a2 = _bn_relu(y2, g2_ref[...], be2_ref[...], inv_count, eps)

    # ---- lane-dense channel-first output: (N, Cout, H*W) ------------------
    for i in range(n):
        o_ref[i] = a2[:, i * hw:(i + 1) * hw]


# ----------------------------------------------------------------------------
# Wrapper
# ----------------------------------------------------------------------------
def smooth_convolution(x_nchw, params, eps=1e-5):
    """Forward pass of SmoothConvolution.  Input/output are NCHW (PyTorch)."""
    n, cin, h, w = x_nchw.shape
    cout = params["w1"].shape[0]
    hw = h * w

    x = x_nchw.astype(jnp.float32)
    # OIHW -> (Cout, 9*Cin) matmul form, row index ordered (ky, kx, ci), bf16.
    w1m = jnp.transpose(params["w1"], (0, 2, 3, 1)).reshape(cout, 9 * cin)
    w2m = jnp.transpose(params["w2"], (0, 2, 3, 1)).reshape(cout, 9 * cout)
    w1m = w1m.astype(jnp.bfloat16)
    w2m = w2m.astype(jnp.bfloat16)
    col = lambda v: v.reshape(-1, 1).astype(jnp.float32)

    flops = 2 * n * hw * 9 * (cin * cout + cout * cout)
    bytes_accessed = (x.size * 4 + w1m.size * 2 + w2m.size * 2
                      + 6 * cout * 4 + n * cout * hw * 4)

    out = pl.pallas_call(
        functools.partial(smooth_conv_kernel, eps=eps),
        out_shape=jax.ShapeDtypeStruct((n, cout, hw), jnp.float32),
        grid=(1,),
        in_specs=[
            pl.BlockSpec((n, cin, h, w), lambda i: (0, 0, 0, 0)),
            pl.BlockSpec((cout, 9 * cin), lambda i: (0, 0)),
            pl.BlockSpec((cout, 1), lambda i: (0, 0)),
            pl.BlockSpec((cout, 1), lambda i: (0, 0)),
            pl.BlockSpec((cout, 1), lambda i: (0, 0)),
            pl.BlockSpec((cout, 9 * cout), lambda i: (0, 0)),
            pl.BlockSpec((cout, 1), lambda i: (0, 0)),
            pl.BlockSpec((cout, 1), lambda i: (0, 0)),
            pl.BlockSpec((cout, 1), lambda i: (0, 0)),
        ],
        out_specs=pl.BlockSpec((n, cout, hw), lambda i: (0, 0, 0)),
        scratch_shapes=[
            pltpu.VMEM((n, cin, h + 2, w + 2), jnp.float32),
            pltpu.VMEM((n, cout, h + 2, w + 2), jnp.float32),
        ],
        compiler_params=pltpu.CompilerParams(
            dimension_semantics=("arbitrary",),
            vmem_limit_bytes=32 * 1024 * 1024,
        ),
        cost_estimate=pl.CostEstimate(
            flops=flops, transcendentals=2 * cout,
            bytes_accessed=bytes_accessed),
    )(x, w1m, col(params["b1"]), col(params["g1"]), col(params["be1"]),
      w2m, col(params["b2"]), col(params["g2"]), col(params["be2"]))

    # (N, Cout, H*W) -> NCHW; pure metadata reshape, no transpose / HBM pass.
    return out.reshape(n, cout, h, w)


# ----------------------------------------------------------------------------
# Deterministic parameter init (PyTorch-like uniform fan-in bounds, OIHW)
# ----------------------------------------------------------------------------
def init_params(key, in_channels, out_channels):
    k1, k2, k3, k4 = jax.random.split(key, 4)
    bound1 = 1.0 / math.sqrt(in_channels * 9)
    bound2 = 1.0 / math.sqrt(out_channels * 9)
    return {
        "w1": jax.random.uniform(k1, (out_channels, in_channels, 3, 3),
                                 jnp.float32, -bound1, bound1),
        "b1": jax.random.uniform(k2, (out_channels,), jnp.float32,
                                 -bound1, bound1),
        "g1": jnp.ones((out_channels,), jnp.float32),
        "be1": jnp.zeros((out_channels,), jnp.float32),
        "w2": jax.random.uniform(k3, (out_channels, out_channels, 3, 3),
                                 jnp.float32, -bound2, bound2),
        "b2": jax.random.uniform(k4, (out_channels,), jnp.float32,
                                 -bound2, bound2),
        "g2": jnp.ones((out_channels,), jnp.float32),
        "be2": jnp.zeros((out_channels,), jnp.float32),
    }


# ----------------------------------------------------------------------------
# Pure-JAX f32 reference (for correctness check), NCHW / OIHW like PyTorch
# ----------------------------------------------------------------------------
def _ref_forward(x_nchw, params, eps=1e-5):
    def conv_ref(x, wgt, b):
        y = lax.conv_general_dilated(
            x, wgt, window_strides=(1, 1), padding="SAME",
            dimension_numbers=("NCHW", "OIHW", "NCHW"))
        return y + b.reshape(1, -1, 1, 1)

    def bn_relu_ref(x, g, be):
        mean = jnp.mean(x, axis=(0, 2, 3), keepdims=True)
        var = jnp.var(x, axis=(0, 2, 3), keepdims=True)   # biased (train mode)
        y = (x - mean) / jnp.sqrt(var + eps) * g.reshape(1, -1, 1, 1) \
            + be.reshape(1, -1, 1, 1)
        return jnp.maximum(y, 0.0)

    x = x_nchw.astype(jnp.float32)
    x = bn_relu_ref(conv_ref(x, params["w1"], params["b1"]),
                    params["g1"], params["be1"])
    x = bn_relu_ref(conv_ref(x, params["w2"], params["b2"]),
                    params["g2"], params["be2"])
    return x


if __name__ == "__main__":
    key = jax.random.PRNGKey(0)
    kx, kp = jax.random.split(key)

    batch, in_channels, out_channels, hw = 2, 4, 8, 16
    x = jax.random.normal(kx, (batch, in_channels, hw, hw), jnp.float32)  # NCHW
    params = init_params(kp, in_channels, out_channels)

    out = jax.block_until_ready(smooth_convolution(x, params))
    ref = jax.block_until_ready(_ref_forward(x, params))

    assert out.shape == (batch, out_channels, hw, hw)
    # bf16 matmul operands (f32 accumulation) => loosened tolerance vs f32 ref.
    assert jnp.allclose(out, ref, rtol=5e-2, atol=5e-2), (
        float(jnp.max(jnp.abs(out - ref))))
    print("KERNEL_OK")
</pallas_src>

<mosaic_0001>
module attributes {stable_mosaic.version = 11 : i64} {
  func.func @smooth_conv_kernel(%arg0: i32, %arg1: memref<2x4x16x16xf32, #tpu.memory_space<vmem>>, %arg2: memref<8x36xbf16, #tpu.memory_space<vmem>>, %arg3: memref<8x1xf32, #tpu.memory_space<vmem>>, %arg4: memref<8x1xf32, #tpu.memory_space<vmem>>, %arg5: memref<8x1xf32, #tpu.memory_space<vmem>>, %arg6: memref<8x72xbf16, #tpu.memory_space<vmem>>, %arg7: memref<8x1xf32, #tpu.memory_space<vmem>>, %arg8: memref<8x1xf32, #tpu.memory_space<vmem>>, %arg9: memref<8x1xf32, #tpu.memory_space<vmem>>, %arg10: memref<2x8x256xf32, #tpu.memory_space<vmem>>, %arg11: memref<2x4x18x18xf32, #tpu.memory_space<vmem>>, %arg12: memref<2x8x18x18xf32, #tpu.memory_space<vmem>>) attributes {dimension_semantics = [#tpu.dimension_semantics<arbitrary>], iteration_bounds = array<i64: 1>, scalar_prefetch = 0 : i64, scratch_operands = 2 : i64, tpu.core_type = #tpu.core_type<tc>, window_params = [{pipeline_mode = #tpu.pipeline_mode<synchronous>, transform_indices = @transform_0, window_bounds = array<i64: 2, 4, 16, 16>}, {pipeline_mode = #tpu.pipeline_mode<synchronous>, transform_indices = @transform_1, window_bounds = array<i64: 8, 36>}, {pipeline_mode = #tpu.pipeline_mode<synchronous>, transform_indices = @transform_2, window_bounds = array<i64: 8, 1>}, {pipeline_mode = #tpu.pipeline_mode<synchronous>, transform_indices = @transform_3, window_bounds = array<i64: 8, 1>}, {pipeline_mode = #tpu.pipeline_mode<synchronous>, transform_indices = @transform_4, window_bounds = array<i64: 8, 1>}, {pipeline_mode = #tpu.pipeline_mode<synchronous>, transform_indices = @transform_5, window_bounds = array<i64: 8, 72>}, {pipeline_mode = #tpu.pipeline_mode<synchronous>, transform_indices = @transform_6, window_bounds = array<i64: 8, 1>}, {pipeline_mode = #tpu.pipeline_mode<synchronous>, transform_indices = @transform_7, window_bounds = array<i64: 8, 1>}, {pipeline_mode = #tpu.pipeline_mode<synchronous>, transform_indices = @transform_8, window_bounds = array<i64: 8, 1>}, {pipeline_mode = #tpu.pipeline_mode<synchronous>, transform_indices = @transform_9, window_bounds = array<i64: 2, 8, 256>}]} {
    %cst = arith.constant 0.000000e+00 : f32
    %0 = vector.broadcast %cst : f32 to vector<2x4x18x18xf32>
    %c0 = arith.constant 0 : index
    %c0_0 = arith.constant 0 : index
    %c0_1 = arith.constant 0 : index
    %c0_2 = arith.constant 0 : index
    %1 = vector.load %arg11[%c0, %c0_0, %c0_1, %c0_2] : memref<2x4x18x18xf32, #tpu.memory_space<vmem>>, vector<2x4x18x18xf32>
    tpu.vector_store %arg11[%c0, %c0_0, %c0_1, %c0_2], %0 {strides = array<i32>} : memref<2x4x18x18xf32, #tpu.memory_space<vmem>>, vector<2x4x18x18xf32>,
    %c0_3 = arith.constant 0 : index
    %c0_4 = arith.constant 0 : index
    %c0_5 = arith.constant 0 : index
    %c0_6 = arith.constant 0 : index
    %2 = vector.load %arg1[%c0_3, %c0_4, %c0_5, %c0_6] : memref<2x4x16x16xf32, #tpu.memory_space<vmem>>, vector<2x4x16x16xf32>
    %c0_7 = arith.constant 0 : index
    %c0_8 = arith.constant 0 : index
    %c1 = arith.constant 1 : index
    %c1_9 = arith.constant 1 : index
    %3 = vector.load %arg11[%c0_7, %c0_8, %c1, %c1_9] : memref<2x4x18x18xf32, #tpu.memory_space<vmem>>, vector<2x4x16x16xf32>
    tpu.vector_store %arg11[%c0_7, %c0_8, %c1, %c1_9], %2 {strides = array<i32>} : memref<2x4x18x18xf32, #tpu.memory_space<vmem>>, vector<2x4x16x16xf32>,
    %c0_10 = arith.constant 0 : index
    %c0_11 = arith.constant 0 : index
    %4 = vector.load %arg2[%c0_10, %c0_11] : memref<8x36xbf16, #tpu.memory_space<vmem>>, vector<8x36xbf16>
    %c0_12 = arith.constant 0 : index
    %c0_13 = arith.constant 0 : index
    %c0_14 = arith.constant 0 : index
    %c0_15 = arith.constant 0 : index
    %5 = vector.load %arg11[%c0_12, %c0_13, %c0_14, %c0_15] : memref<2x4x18x18xf32, #tpu.memory_space<vmem>>, vector<1x4x16x16xf32>
    %6 = vector.shape_cast %5 : vector<1x4x16x16xf32> to vector<4x16x16xf32>
    %7 = vector.shape_cast %6 : vector<4x16x16xf32> to vector<4x256xf32>
    %c0_16 = arith.constant 0 : index
    %c0_17 = arith.constant 0 : index
    %c0_18 = arith.constant 0 : index
    %c1_19 = arith.constant 1 : index
    %8 = vector.load %arg11[%c0_16, %c0_17, %c0_18, %c1_19] : memref<2x4x18x18xf32, #tpu.memory_space<vmem>>, vector<1x4x16x16xf32>
    %9 = vector.shape_cast %8 : vector<1x4x16x16xf32> to vector<4x16x16xf32>
    %10 = vector.shape_cast %9 : vector<4x16x16xf32> to vector<4x256xf32>
    %c0_20 = arith.constant 0 : index
    %c0_21 = arith.constant 0 : index
    %c0_22 = arith.constant 0 : index
    %c2 = arith.constant 2 : index
    %11 = vector.load %arg11[%c0_20, %c0_21, %c0_22, %c2] : memref<2x4x18x18xf32, #tpu.memory_space<vmem>>, vector<1x4x16x16xf32>
    %12 = vector.shape_cast %11 : vector<1x4x16x16xf32> to vector<4x16x16xf32>
    %13 = vector.shape_cast %12 : vector<4x16x16xf32> to vector<4x256xf32>
    %c0_23 = arith.constant 0 : index
    %c0_24 = arith.constant 0 : index
    %c1_25 = arith.constant 1 : index
    %c0_26 = arith.constant 0 : index
    %14 = vector.load %arg11[%c0_23, %c0_24, %c1_25, %c0_26] : memref<2x4x18x18xf32, #tpu.memory_space<vmem>>, vector<1x4x16x16xf32>
    %15 = vector.shape_cast %14 : vector<1x4x16x16xf32> to vector<4x16x16xf32>
    %16 = vector.shape_cast %15 : vector<4x16x16xf32> to vector<4x256xf32>
    %c0_27 = arith.constant 0 : index
    %c0_28 = arith.constant 0 : index
    %c1_29 = arith.constant 1 : index
    %c1_30 = arith.constant 1 : index
    %17 = vector.load %arg11[%c0_27, %c0_28, %c1_29, %c1_30] : memref<2x4x18x18xf32, #tpu.memory_space<vmem>>, vector<1x4x16x16xf32>
    %18 = vector.shape_cast %17 : vector<1x4x16x16xf32> to vector<4x16x16xf32>
    %19 = vector.shape_cast %18 : vector<4x16x16xf32> to vector<4x256xf32>
    %c0_31 = arith.constant 0 : index
    %c0_32 = arith.constant 0 : index
    %c1_33 = arith.constant 1 : index
    %c2_34 = arith.constant 2 : index
    %20 = vector.load %arg11[%c0_31, %c0_32, %c1_33, %c2_34] : memref<2x4x18x18xf32, #tpu.memory_space<vmem>>, vector<1x4x16x16xf32>
    %21 = vector.shape_cast %20 : vector<1x4x16x16xf32> to vector<4x16x16xf32>
    %22 = vector.shape_cast %21 : vector<4x16x16xf32> to vector<4x256xf32>
    %c0_35 = arith.constant 0 : index
    %c0_36 = arith.constant 0 : index
    %c2_37 = arith.constant 2 : index
    %c0_38 = arith.constant 0 : index
    %23 = vector.load %arg11[%c0_35, %c0_36, %c2_37, %c0_38] : memref<2x4x18x18xf32, #tpu.memory_space<vmem>>, vector<1x4x16x16xf32>
    %24 = vector.shape_cast %23 : vector<1x4x16x16xf32> to vector<4x16x16xf32>
    %25 = vector.shape_cast %24 : vector<4x16x16xf32> to vector<4x256xf32>
    %c0_39 = arith.constant 0 : index
    %c0_40 = arith.constant 0 : index
    %c2_41 = arith.constant 2 : index
    %c1_42 = arith.constant 1 : index
    %26 = vector.load %arg11[%c0_39, %c0_40, %c2_41, %c1_42] : memref<2x4x18x18xf32, #tpu.memory_space<vmem>>, vector<1x4x16x16xf32>
    %27 = vector.shape_cast %26 : vector<1x4x16x16xf32> to vector<4x16x16xf32>
    %28 = vector.shape_cast %27 : vector<4x16x16xf32> to vector<4x256xf32>
    %c0_43 = arith.constant 0 : index
    %c0_44 = arith.constant 0 : index
    %c2_45 = arith.constant 2 : index
    %c2_46 = arith.constant 2 : index
    %29 = vector.load %arg11[%c0_43, %c0_44, %c2_45, %c2_46] : memref<2x4x18x18xf32, #tpu.memory_space<vmem>>, vector<1x4x16x16xf32>
    %30 = vector.shape_cast %29 : vector<1x4x16x16xf32> to vector<4x16x16xf32>
    %31 = vector.shape_cast %30 : vector<4x16x16xf32> to vector<4x256xf32>
    %32 = tpu.concatenate %7, %10, %13, %16, %19, %22, %25, %28, %31 in 0 : vector<4x256xf32>, vector<4x256xf32>, vector<4x256xf32>, vector<4x256xf32>, vector<4x256xf32>, vector<4x256xf32>, vector<4x256xf32>, vector<4x256xf32>, vector<4x256xf32> -> vector<36x256xf32>
    %c1_47 = arith.constant 1 : index
    %c0_48 = arith.constant 0 : index
    %c0_49 = arith.constant 0 : index
    %c0_50 = arith.constant 0 : index
    %33 = vector.load %arg11[%c1_47, %c0_48, %c0_49, %c0_50] : memref<2x4x18x18xf32, #tpu.memory_space<vmem>>, vector<1x4x16x16xf32>
    %34 = vector.shape_cast %33 : vector<1x4x16x16xf32> to vector<4x16x16xf32>
    %35 = vector.shape_cast %34 : vector<4x16x16xf32> to vector<4x256xf32>
    %c1_51 = arith.constant 1 : index
    %c0_52 = arith.constant 0 : index
    %c0_53 = arith.constant 0 : index
    %c1_54 = arith.constant 1 : index
    %36 = vector.load %arg11[%c1_51, %c0_52, %c0_53, %c1_54] : memref<2x4x18x18xf32, #tpu.memory_space<vmem>>, vector<1x4x16x16xf32>
    %37 = vector.shape_cast %36 : vector<1x4x16x16xf32> to vector<4x16x16xf32>
    %38 = vector.shape_cast %37 : vector<4x16x16xf32> to vector<4x256xf32>
    %c1_55 = arith.constant 1 : index
    %c0_56 = arith.constant 0 : index
    %c0_57 = arith.constant 0 : index
    %c2_58 = arith.constant 2 : index
    %39 = vector.load %arg11[%c1_55, %c0_56, %c0_57, %c2_58] : memref<2x4x18x18xf32, #tpu.memory_space<vmem>>, vector<1x4x16x16xf32>
    %40 = vector.shape_cast %39 : vector<1x4x16x16xf32> to vector<4x16x16xf32>
    %41 = vector.shape_cast %40 : vector<4x16x16xf32> to vector<4x256xf32>
    %c1_59 = arith.constant 1 : index
    %c0_60 = arith.constant 0 : index
    %c1_61 = arith.constant 1 : index
    %c0_62 = arith.constant 0 : index
    %42 = vector.load %arg11[%c1_59, %c0_60, %c1_61, %c0_62] : memref<2x4x18x18xf32, #tpu.memory_space<vmem>>, vector<1x4x16x16xf32>
    %43 = vector.shape_cast %42 : vector<1x4x16x16xf32> to vector<4x16x16xf32>
    %44 = vector.shape_cast %43 : vector<4x16x16xf32> to vector<4x256xf32>
    %c1_63 = arith.constant 1 : index
    %c0_64 = arith.constant 0 : index
    %c1_65 = arith.constant 1 : index
    %c1_66 = arith.constant 1 : index
    %45 = vector.load %arg11[%c1_63, %c0_64, %c1_65, %c1_66] : memref<2x4x18x18xf32, #tpu.memory_space<vmem>>, vector<1x4x16x16xf32>
    %46 = vector.shape_cast %45 : vector<1x4x16x16xf32> to vector<4x16x16xf32>
    %47 = vector.shape_cast %46 : vector<4x16x16xf32> to vector<4x256xf32>
    %c1_67 = arith.constant 1 : index
    %c0_68 = arith.constant 0 : index
    %c1_69 = arith.constant 1 : index
    %c2_70 = arith.constant 2 : index
    %48 = vector.load %arg11[%c1_67, %c0_68, %c1_69, %c2_70] : memref<2x4x18x18xf32, #tpu.memory_space<vmem>>, vector<1x4x16x16xf32>
    %49 = vector.shape_cast %48 : vector<1x4x16x16xf32> to vector<4x16x16xf32>
    %50 = vector.shape_cast %49 : vector<4x16x16xf32> to vector<4x256xf32>
    %c1_71 = arith.constant 1 : index
    %c0_72 = arith.constant 0 : index
    %c2_73 = arith.constant 2 : index
    %c0_74 = arith.constant 0 : index
    %51 = vector.load %arg11[%c1_71, %c0_72, %c2_73, %c0_74] : memref<2x4x18x18xf32, #tpu.memory_space<vmem>>, vector<1x4x16x16xf32>
    %52 = vector.shape_cast %51 : vector<1x4x16x16xf32> to vector<4x16x16xf32>
    %53 = vector.shape_cast %52 : vector<4x16x16xf32> to vector<4x256xf32>
    %c1_75 = arith.constant 1 : index
    %c0_76 = arith.constant 0 : index
    %c2_77 = arith.constant 2 : index
    %c1_78 = arith.constant 1 : index
    %54 = vector.load %arg11[%c1_75, %c0_76, %c2_77, %c1_78] : memref<2x4x18x18xf32, #tpu.memory_space<vmem>>, vector<1x4x16x16xf32>
    %55 = vector.shape_cast %54 : vector<1x4x16x16xf32> to vector<4x16x16xf32>
    %56 = vector.shape_cast %55 : vector<4x16x16xf32> to vector<4x256xf32>
    %c1_79 = arith.constant 1 : index
    %c0_80 = arith.constant 0 : index
    %c2_81 = arith.constant 2 : index
    %c2_82 = arith.constant 2 : index
    %57 = vector.load %arg11[%c1_79, %c0_80, %c2_81, %c2_82] : memref<2x4x18x18xf32, #tpu.memory_space<vmem>>, vector<1x4x16x16xf32>
    %58 = vector.shape_cast %57 : vector<1x4x16x16xf32> to vector<4x16x16xf32>
    %59 = vector.shape_cast %58 : vector<4x16x16xf32> to vector<4x256xf32>
    %60 = tpu.concatenate %35, %38, %41, %44, %47, %50, %53, %56, %59 in 0 : vector<4x256xf32>, vector<4x256xf32>, vector<4x256xf32>, vector<4x256xf32>, vector<4x256xf32>, vector<4x256xf32>, vector<4x256xf32>, vector<4x256xf32>, vector<4x256xf32> -> vector<36x256xf32>
    %61 = tpu.concatenate %32, %60 in 1 : vector<36x256xf32>, vector<36x256xf32> -> vector<36x512xf32>
    %62 = arith.truncf %61 : vector<36x512xf32> to vector<36x512xbf16>
    %cst_83 = arith.constant dense<0.000000e+00> : vector<8x512xf32>
    %63 = tpu.matmul %4, %62, %cst_83 {dimension_numbers = #tpu.dot_dimension_numbers<[1], [0], [0], [1], [0, 0, 1, 1], [], []>} : vector<8x36xbf16>, vector<36x512xbf16>, vector<8x512xf32> -> vector<8x512xf32>
    %c0_84 = arith.constant 0 : index
    %c0_85 = arith.constant 0 : index
    %64 = vector.load %arg3[%c0_84, %c0_85] : memref<8x1xf32, #tpu.memory_space<vmem>>, vector<8x1xf32>
    %65 = vector.broadcast %64 : vector<8x1xf32> to vector<8x512xf32>
    %66 = arith.addf %63, %65 : vector<8x512xf32>
    %c0_86 = arith.constant 0 : index
    %c0_87 = arith.constant 0 : index
    %67 = vector.load %arg4[%c0_86, %c0_87] : memref<8x1xf32, #tpu.memory_space<vmem>>, vector<8x1xf32>
    %c0_88 = arith.constant 0 : index
    %c0_89 = arith.constant 0 : index
    %68 = vector.load %arg5[%c0_88, %c0_89] : memref<8x1xf32, #tpu.memory_space<vmem>>, vector<8x1xf32>
    %cst_90 = arith.constant dense<0.000000e+00> : vector<8xf32>
    %69 = vector.multi_reduction <add>, %66, %cst_90 [1] : vector<8x512xf32> to vector<8xf32>
    %70 = vector.shape_cast %69 : vector<8xf32> to vector<8x1xf32>
    %cst_91 = arith.constant 0.001953125 : f32
    %71 = vector.broadcast %cst_91 : f32 to vector<8x1xf32>
    %72 = arith.mulf %70, %71 : vector<8x1xf32>
    %73 = vector.broadcast %72 : vector<8x1xf32> to vector<8x512xf32>
    %74 = arith.subf %66, %73 : vector<8x512xf32>
    %75 = arith.mulf %74, %74 : vector<8x512xf32>
    %cst_92 = arith.constant dense<0.000000e+00> : vector<8xf32>
    %76 = vector.multi_reduction <add>, %75, %cst_92 [1] : vector<8x512xf32> to vector<8xf32>
    %77 = vector.shape_cast %76 : vector<8xf32> to vector<8x1xf32>
    %cst_93 = arith.constant 0.001953125 : f32
    %78 = vector.broadcast %cst_93 : f32 to vector<8x1xf32>
    %79 = arith.mulf %77, %78 : vector<8x1xf32>
    %cst_94 = arith.constant 9.99999974E-6 : f32
    %80 = vector.broadcast %cst_94 : f32 to vector<8x1xf32>
    %81 = arith.addf %79, %80 : vector<8x1xf32>
    %82 = math.rsqrt %81 : vector<8x1xf32>
    %83 = arith.mulf %67, %82 : vector<8x1xf32>
    %84 = arith.mulf %72, %83 : vector<8x1xf32>
    %85 = arith.subf %68, %84 : vector<8x1xf32>
    %86 = vector.broadcast %83 : vector<8x1xf32> to vector<8x512xf32>
    %87 = arith.mulf %66, %86 : vector<8x512xf32>
    %88 = vector.broadcast %85 : vector<8x1xf32> to vector<8x512xf32>
    %89 = arith.addf %87, %88 : vector<8x512xf32>
    %cst_95 = arith.constant 0.000000e+00 : f32
    %90 = vector.broadcast %cst_95 : f32 to vector<8x512xf32>
    %91 = arith.maximumf %89, %90 : vector<8x512xf32>
    %cst_96 = arith.constant 0.000000e+00 : f32
    %92 = vector.broadcast %cst_96 : f32 to vector<2x8x18x18xf32>
    %c0_97 = arith.constant 0 : index
    %c0_98 = arith.constant 0 : index
    %c0_99 = arith.constant 0 : index
    %c0_100 = arith.constant 0 : index
    %93 = vector.load %arg12[%c0_97, %c0_98, %c0_99, %c0_100] : memref<2x8x18x18xf32, #tpu.memory_space<vmem>>, vector<2x8x18x18xf32>
    tpu.vector_store %arg12[%c0_97, %c0_98, %c0_99, %c0_100], %92 {strides = array<i32>} : memref<2x8x18x18xf32, #tpu.memory_space<vmem>>, vector<2x8x18x18xf32>,
    %94 = vector.extract_strided_slice %91 {offsets = [0, 0], sizes = [8, 256], strides = [1, 1]} : vector<8x512xf32> to vector<8x256xf32>
    %95 = vector.shape_cast %94 : vector<8x256xf32> to vector<8x16x16xf32>
    %c0_101 = arith.constant 0 : index
    %c0_102 = arith.constant 0 : index
    %c1_103 = arith.constant 1 : index
    %c1_104 = arith.constant 1 : index
    %96 = vector.load %arg12[%c0_101, %c0_102, %c1_103, %c1_104] : memref<2x8x18x18xf32, #tpu.memory_space<vmem>>, vector<1x8x16x16xf32>
    %97 = vector.shape_cast %96 : vector<1x8x16x16xf32> to vector<8x16x16xf32>
    %98 = vector.shape_cast %95 : vector<8x16x16xf32> to vector<1x8x16x16xf32>
    tpu.vector_store %arg12[%c0_101, %c0_102, %c1_103, %c1_104], %98 {strides = array<i32>} : memref<2x8x18x18xf32, #tpu.memory_space<vmem>>, vector<1x8x16x16xf32>,
    %99 = vector.extract_strided_slice %91 {offsets = [0, 256], sizes = [8, 256], strides = [1, 1]} : vector<8x512xf32> to vector<8x256xf32>
    %100 = vector.shape_cast %99 : vector<8x256xf32> to vector<8x16x16xf32>
    %c1_105 = arith.constant 1 : index
    %c0_106 = arith.constant 0 : index
    %c1_107 = arith.constant 1 : index
    %c1_108 = arith.constant 1 : index
    %101 = vector.load %arg12[%c1_105, %c0_106, %c1_107, %c1_108] : memref<2x8x18x18xf32, #tpu.memory_space<vmem>>, vector<1x8x16x16xf32>
    %102 = vector.shape_cast %101 : vector<1x8x16x16xf32> to vector<8x16x16xf32>
    %103 = vector.shape_cast %100 : vector<8x16x16xf32> to vector<1x8x16x16xf32>
    tpu.vector_store %arg12[%c1_105, %c0_106, %c1_107, %c1_108], %103 {strides = array<i32>} : memref<2x8x18x18xf32, #tpu.memory_space<vmem>>, vector<1x8x16x16xf32>,
    %c0_109 = arith.constant 0 : index
    %c0_110 = arith.constant 0 : index
    %104 = vector.load %arg6[%c0_109, %c0_110] : memref<8x72xbf16, #tpu.memory_space<vmem>>, vector<8x72xbf16>
    %c0_111 = arith.constant 0 : index
    %c0_112 = arith.constant 0 : index
    %c0_113 = arith.constant 0 : index
    %c0_114 = arith.constant 0 : index
    %105 = vector.load %arg12[%c0_111, %c0_112, %c0_113, %c0_114] : memref<2x8x18x18xf32, #tpu.memory_space<vmem>>, vector<1x8x16x16xf32>
    %106 = vector.shape_cast %105 : vector<1x8x16x16xf32> to vector<8x16x16xf32>
    %107 = vector.shape_cast %106 : vector<8x16x16xf32> to vector<8x256xf32>
    %c0_115 = arith.constant 0 : index
    %c0_116 = arith.constant 0 : index
    %c0_117 = arith.constant 0 : index
    %c1_118 = arith.constant 1 : index
    %108 = vector.load %arg12[%c0_115, %c0_116, %c0_117, %c1_118] : memref<2x8x18x18xf32, #tpu.memory_space<vmem>>, vector<1x8x16x16xf32>
    %109 = vector.shape_cast %108 : vector<1x8x16x16xf32> to vector<8x16x16xf32>
    %110 = vector.shape_cast %109 : vector<8x16x16xf32> to vector<8x256xf32>
    %c0_119 = arith.constant 0 : index
    %c0_120 = arith.constant 0 : index
    %c0_121 = arith.constant 0 : index
    %c2_122 = arith.constant 2 : index
    %111 = vector.load %arg12[%c0_119, %c0_120, %c0_121, %c2_122] : memref<2x8x18x18xf32, #tpu.memory_space<vmem>>, vector<1x8x16x16xf32>
    %112 = vector.shape_cast %111 : vector<1x8x16x16xf32> to vector<8x16x16xf32>
    %113 = vector.shape_cast %112 : vector<8x16x16xf32> to vector<8x256xf32>
    %c0_123 = arith.constant 0 : index
    %c0_124 = arith.constant 0 : index
    %c1_125 = arith.constant 1 : index
    %c0_126 = arith.constant 0 : index
    %114 = vector.load %arg12[%c0_123, %c0_124, %c1_125, %c0_126] : memref<2x8x18x18xf32, #tpu.memory_space<vmem>>, vector<1x8x16x16xf32>
    %115 = vector.shape_cast %114 : vector<1x8x16x16xf32> to vector<8x16x16xf32>
    %116 = vector.shape_cast %115 : vector<8x16x16xf32> to vector<8x256xf32>
    %c0_127 = arith.constant 0 : index
    %c0_128 = arith.constant 0 : index
    %c1_129 = arith.constant 1 : index
    %c1_130 = arith.constant 1 : index
    %117 = vector.load %arg12[%c0_127, %c0_128, %c1_129, %c1_130] : memref<2x8x18x18xf32, #tpu.memory_space<vmem>>, vector<1x8x16x16xf32>
    %118 = vector.shape_cast %117 : vector<1x8x16x16xf32> to vector<8x16x16xf32>
    %119 = vector.shape_cast %118 : vector<8x16x16xf32> to vector<8x256xf32>
    %c0_131 = arith.constant 0 : index
    %c0_132 = arith.constant 0 : index
    %c1_133 = arith.constant 1 : index
    %c2_134 = arith.constant 2 : index
    %120 = vector.load %arg12[%c0_131, %c0_132, %c1_133, %c2_134] : memref<2x8x18x18xf32, #tpu.memory_space<vmem>>, vector<1x8x16x16xf32>
    %121 = vector.shape_cast %120 : vector<1x8x16x16xf32> to vector<8x16x16xf32>
    %122 = vector.shape_cast %121 : vector<8x16x16xf32> to vector<8x256xf32>
    %c0_135 = arith.constant 0 : index
    %c0_136 = arith.constant 0 : index
    %c2_137 = arith.constant 2 : index
    %c0_138 = arith.constant 0 : index
    %123 = vector.load %arg12[%c0_135, %c0_136, %c2_137, %c0_138] : memref<2x8x18x18xf32, #tpu.memory_space<vmem>>, vector<1x8x16x16xf32>
    %124 = vector.shape_cast %123 : vector<1x8x16x16xf32> to vector<8x16x16xf32>
    %125 = vector.shape_cast %124 : vector<8x16x16xf32> to vector<8x256xf32>
    %c0_139 = arith.constant 0 : index
    %c0_140 = arith.constant 0 : index
    %c2_141 = arith.constant 2 : index
    %c1_142 = arith.constant 1 : index
    %126 = vector.load %arg12[%c0_139, %c0_140, %c2_141, %c1_142] : memref<2x8x18x18xf32, #tpu.memory_space<vmem>>, vector<1x8x16x16xf32>
    %127 = vector.shape_cast %126 : vector<1x8x16x16xf32> to vector<8x16x16xf32>
    %128 = vector.shape_cast %127 : vector<8x16x16xf32> to vector<8x256xf32>
    %c0_143 = arith.constant 0 : index
    %c0_144 = arith.constant 0 : index
    %c2_145 = arith.constant 2 : index
    %c2_146 = arith.constant 2 : index
    %129 = vector.load %arg12[%c0_143, %c0_144, %c2_145, %c2_146] : memref<2x8x18x18xf32, #tpu.memory_space<vmem>>, vector<1x8x16x16xf32>
    %130 = vector.shape_cast %129 : vector<1x8x16x16xf32> to vector<8x16x16xf32>
    %131 = vector.shape_cast %130 : vector<8x16x16xf32> to vector<8x256xf32>
    %132 = tpu.concatenate %107, %110, %113, %116, %119, %122, %125, %128, %131 in 0 : vector<8x256xf32>, vector<8x256xf32>, vector<8x256xf32>, vector<8x256xf32>, vector<8x256xf32>, vector<8x256xf32>, vector<8x256xf32>, vector<8x256xf32>, vector<8x256xf32> -> vector<72x256xf32>
    %c1_147 = arith.constant 1 : index
    %c0_148 = arith.constant 0 : index
    %c0_149 = arith.constant 0 : index
    %c0_150 = arith.constant 0 : index
    %133 = vector.load %arg12[%c1_147, %c0_148, %c0_149, %c0_150] : memref<2x8x18x18xf32, #tpu.memory_space<vmem>>, vector<1x8x16x16xf32>
    %134 = vector.shape_cast %133 : vector<1x8x16x16xf32> to vector<8x16x16xf32>
    %135 = vector.shape_cast %134 : vector<8x16x16xf32> to vector<8x256xf32>
    %c1_151 = arith.constant 1 : index
    %c0_152 = arith.constant 0 : index
    %c0_153 = arith.constant 0 : index
    %c1_154 = arith.constant 1 : index
    %136 = vector.load %arg12[%c1_151, %c0_152, %c0_153, %c1_154] : memref<2x8x18x18xf32, #tpu.memory_space<vmem>>, vector<1x8x16x16xf32>
    %137 = vector.shape_cast %136 : vector<1x8x16x16xf32> to vector<8x16x16xf32>
    %138 = vector.shape_cast %137 : vector<8x16x16xf32> to vector<8x256xf32>
    %c1_155 = arith.constant 1 : index
    %c0_156 = arith.constant 0 : index
    %c0_157 = arith.constant 0 : index
    %c2_158 = arith.constant 2 : index
    %139 = vector.load %arg12[%c1_155, %c0_156, %c0_157, %c2_158] : memref<2x8x18x18xf32, #tpu.memory_space<vmem>>, vector<1x8x16x16xf32>
    %140 = vector.shape_cast %139 : vector<1x8x16x16xf32> to vector<8x16x16xf32>
    %141 = vector.shape_cast %140 : vector<8x16x16xf32> to vector<8x256xf32>
    %c1_159 = arith.constant 1 : index
    %c0_160 = arith.constant 0 : index
    %c1_161 = arith.constant 1 : index
    %c0_162 = arith.constant 0 : index
    %142 = vector.load %arg12[%c1_159, %c0_160, %c1_161, %c0_162] : memref<2x8x18x18xf32, #tpu.memory_space<vmem>>, vector<1x8x16x16xf32>
    %143 = vector.shape_cast %142 : vector<1x8x16x16xf32> to vector<8x16x16xf32>
    %144 = vector.shape_cast %143 : vector<8x16x16xf32> to vector<8x256xf32>
    %c1_163 = arith.constant 1 : index
    %c0_164 = arith.constant 0 : index
    %c1_165 = arith.constant 1 : index
    %c1_166 = arith.constant 1 : index
    %145 = vector.load %arg12[%c1_163, %c0_164, %c1_165, %c1_166] : memref<2x8x18x18xf32, #tpu.memory_space<vmem>>, vector<1x8x16x16xf32>
    %146 = vector.shape_cast %145 : vector<1x8x16x16xf32> to vector<8x16x16xf32>
    %147 = vector.shape_cast %146 : vector<8x16x16xf32> to vector<8x256xf32>
    %c1_167 = arith.constant 1 : index
    %c0_168 = arith.constant 0 : index
    %c1_169 = arith.constant 1 : index
    %c2_170 = arith.constant 2 : index
    %148 = vector.load %arg12[%c1_167, %c0_168, %c1_169, %c2_170] : memref<2x8x18x18xf32, #tpu.memory_space<vmem>>, vector<1x8x16x16xf32>
    %149 = vector.shape_cast %148 : vector<1x8x16x16xf32> to vector<8x16x16xf32>
    %150 = vector.shape_cast %149 : vector<8x16x16xf32> to vector<8x256xf32>
    %c1_171 = arith.constant 1 : index
    %c0_172 = arith.constant 0 : index
    %c2_173 = arith.constant 2 : index
    %c0_174 = arith.constant 0 : index
    %151 = vector.load %arg12[%c1_171, %c0_172, %c2_173, %c0_174] : memref<2x8x18x18xf32, #tpu.memory_space<vmem>>, vector<1x8x16x16xf32>
    %152 = vector.shape_cast %151 : vector<1x8x16x16xf32> to vector<8x16x16xf32>
    %153 = vector.shape_cast %152 : vector<8x16x16xf32> to vector<8x256xf32>
    %c1_175 = arith.constant 1 : index
    %c0_176 = arith.constant 0 : index
    %c2_177 = arith.constant 2 : index
    %c1_178 = arith.constant 1 : index
    %154 = vector.load %arg12[%c1_175, %c0_176, %c2_177, %c1_178] : memref<2x8x18x18xf32, #tpu.memory_space<vmem>>, vector<1x8x16x16xf32>
    %155 = vector.shape_cast %154 : vector<1x8x16x16xf32> to vector<8x16x16xf32>
    %156 = vector.shape_cast %155 : vector<8x16x16xf32> to vector<8x256xf32>
    %c1_179 = arith.constant 1 : index
    %c0_180 = arith.constant 0 : index
    %c2_181 = arith.constant 2 : index
    %c2_182 = arith.constant 2 : index
    %157 = vector.load %arg12[%c1_179, %c0_180, %c2_181, %c2_182] : memref<2x8x18x18xf32, #tpu.memory_space<vmem>>, vector<1x8x16x16xf32>
    %158 = vector.shape_cast %157 : vector<1x8x16x16xf32> to vector<8x16x16xf32>
    %159 = vector.shape_cast %158 : vector<8x16x16xf32> to vector<8x256xf32>
    %160 = tpu.concatenate %135, %138, %141, %144, %147, %150, %153, %156, %159 in 0 : vector<8x256xf32>, vector<8x256xf32>, vector<8x256xf32>, vector<8x256xf32>, vector<8x256xf32>, vector<8x256xf32>, vector<8x256xf32>, vector<8x256xf32>, vector<8x256xf32> -> vector<72x256xf32>
    %161 = tpu.concatenate %132, %160 in 1 : vector<72x256xf32>, vector<72x256xf32> -> vector<72x512xf32>
    %162 = arith.truncf %161 : vector<72x512xf32> to vector<72x512xbf16>
    %cst_183 = arith.constant dense<0.000000e+00> : vector<8x512xf32>
    %163 = tpu.matmul %104, %162, %cst_183 {dimension_numbers = #tpu.dot_dimension_numbers<[1], [0], [0], [1], [0, 0, 1, 1], [], []>} : vector<8x72xbf16>, vector<72x512xbf16>, vector<8x512xf32> -> vector<8x512xf32>
    %c0_184 = arith.constant 0 : index
    %c0_185 = arith.constant 0 : index
    %164 = vector.load %arg7[%c0_184, %c0_185] : memref<8x1xf32, #tpu.memory_space<vmem>>, vector<8x1xf32>
    %165 = vector.broadcast %164 : vector<8x1xf32> to vector<8x512xf32>
    %166 = arith.addf %163, %165 : vector<8x512xf32>
    %c0_186 = arith.constant 0 : index
    %c0_187 = arith.constant 0 : index
    %167 = vector.load %arg8[%c0_186, %c0_187] : memref<8x1xf32, #tpu.memory_space<vmem>>, vector<8x1xf32>
    %c0_188 = arith.constant 0 : index
    %c0_189 = arith.constant 0 : index
    %168 = vector.load %arg9[%c0_188, %c0_189] : memref<8x1xf32, #tpu.memory_space<vmem>>, vector<8x1xf32>
    %cst_190 = arith.constant dense<0.000000e+00> : vector<8xf32>
    %169 = vector.multi_reduction <add>, %166, %cst_190 [1] : vector<8x512xf32> to vector<8xf32>
    %170 = vector.shape_cast %169 : vector<8xf32> to vector<8x1xf32>
    %cst_191 = arith.constant 0.001953125 : f32
    %171 = vector.broadcast %cst_191 : f32 to vector<8x1xf32>
    %172 = arith.mulf %170, %171 : vector<8x1xf32>
    %173 = vector.broadcast %172 : vector<8x1xf32> to vector<8x512xf32>
    %174 = arith.subf %166, %173 : vector<8x512xf32>
    %175 = arith.mulf %174, %174 : vector<8x512xf32>
    %cst_192 = arith.constant dense<0.000000e+00> : vector<8xf32>
    %176 = vector.multi_reduction <add>, %175, %cst_192 [1] : vector<8x512xf32> to vector<8xf32>
    %177 = vector.shape_cast %176 : vector<8xf32> to vector<8x1xf32>
    %cst_193 = arith.constant 0.001953125 : f32
    %178 = vector.broadcast %cst_193 : f32 to vector<8x1xf32>
    %179 = arith.mulf %177, %178 : vector<8x1xf32>
    %cst_194 = arith.constant 9.99999974E-6 : f32
    %180 = vector.broadcast %cst_194 : f32 to vector<8x1xf32>
    %181 = arith.addf %179, %180 : vector<8x1xf32>
    %182 = math.rsqrt %181 : vector<8x1xf32>
    %183 = arith.mulf %167, %182 : vector<8x1xf32>
    %184 = arith.mulf %172, %183 : vector<8x1xf32>
    %185 = arith.subf %168, %184 : vector<8x1xf32>
    %186 = vector.broadcast %183 : vector<8x1xf32> to vector<8x512xf32>
    %187 = arith.mulf %166, %186 : vector<8x512xf32>
    %188 = vector.broadcast %185 : vector<8x1xf32> to vector<8x512xf32>
    %189 = arith.addf %187, %188 : vector<8x512xf32>
    %cst_195 = arith.constant 0.000000e+00 : f32
    %190 = vector.broadcast %cst_195 : f32 to vector<8x512xf32>
    %191 = arith.maximumf %189, %190 : vector<8x512xf32>
    %192 = vector.extract_strided_slice %191 {offsets = [0, 0], sizes = [8, 256], strides = [1, 1]} : vector<8x512xf32> to vector<8x256xf32>
    %c0_196 = arith.constant 0 : index
    %c0_197 = arith.constant 0 : index
    %c0_198 = arith.constant 0 : index
    %193 = vector.load %arg10[%c0_196, %c0_197, %c0_198] : memref<2x8x256xf32, #tpu.memory_space<vmem>>, vector<1x8x256xf32>
    %194 = vector.shape_cast %193 : vector<1x8x256xf32> to vector<8x256xf32>
    %195 = vector.shape_cast %192 : vector<8x256xf32> to vector<1x8x256xf32>
    tpu.vector_store %arg10[%c0_196, %c0_197, %c0_198], %195 {strides = array<i32>} : memref<2x8x256xf32, #tpu.memory_space<vmem>>, vector<1x8x256xf32>,
    %196 = vector.extract_strided_slice %191 {offsets = [0, 256], sizes = [8, 256], strides = [1, 1]} : vector<8x512xf32> to vector<8x256xf32>
    %c1_199 = arith.constant 1 : index
    %c0_200 = arith.constant 0 : index
    %c0_201 = arith.constant 0 : index
    %197 = vector.load %arg10[%c1_199, %c0_200, %c0_201] : memref<2x8x256xf32, #tpu.memory_space<vmem>>, vector<1x8x256xf32>
    %198 = vector.shape_cast %197 : vector<1x8x256xf32> to vector<8x256xf32>
    %199 = vector.shape_cast %196 : vector<8x256xf32> to vector<1x8x256xf32>
    tpu.vector_store %arg10[%c1_199, %c0_200, %c0_201], %199 {strides = array<i32>} : memref<2x8x256xf32, #tpu.memory_space<vmem>>, vector<1x8x256xf32>,
    return
  }
  func.func @transform_0(%arg0: i32) -> (i32, i32, i32, i32) {
    %c0_i32 = arith.constant 0 : i32
    %c0_i32_0 = arith.constant 0 : i32
    %c0_i32_1 = arith.constant 0 : i32
    %c0_i32_2 = arith.constant 0 : i32
    %c0_i32_3 = arith.constant 0 : i32
    return %c0_i32, %c0_i32_0, %c0_i32_1, %c0_i32_2 : i32, i32, i32, i32
  }
  func.func @transform_1(%arg0: i32) -> (i32, i32) {
    %c0_i32 = arith.constant 0 : i32
    %c0_i32_0 = arith.constant 0 : i32
    %c0_i32_1 = arith.constant 0 : i32
    return %c0_i32, %c0_i32_0 : i32, i32
  }
  func.func @transform_2(%arg0: i32) -> (i32, i32) {
    %c0_i32 = arith.constant 0 : i32
    %c0_i32_0 = arith.constant 0 : i32
    %c0_i32_1 = arith.constant 0 : i32
    return %c0_i32, %c0_i32_0 : i32, i32
  }
  func.func @transform_3(%arg0: i32) -> (i32, i32) {
    %c0_i32 = arith.constant 0 : i32
    %c0_i32_0 = arith.constant 0 : i32
    %c0_i32_1 = arith.constant 0 : i32
    return %c0_i32, %c0_i32_0 : i32, i32
  }
  func.func @transform_4(%arg0: i32) -> (i32, i32) {
    %c0_i32 = arith.constant 0 : i32
    %c0_i32_0 = arith.constant 0 : i32
    %c0_i32_1 = arith.constant 0 : i32
    return %c0_i32, %c0_i32_0 : i32, i32
  }
  func.func @transform_5(%arg0: i32) -> (i32, i32) {
    %c0_i32 = arith.constant 0 : i32
    %c0_i32_0 = arith.constant 0 : i32
    %c0_i32_1 = arith.constant 0 : i32
    return %c0_i32, %c0_i32_0 : i32, i32
  }
  func.func @transform_6(%arg0: i32) -> (i32, i32) {
    %c0_i32 = arith.constant 0 : i32
    %c0_i32_0 = arith.constant 0 : i32
    %c0_i32_1 = arith.constant 0 : i32
    return %c0_i32, %c0_i32_0 : i32, i32
  }
  func.func @transform_7(%arg0: i32) -> (i32, i32) {
    %c0_i32 = arith.constant 0 : i32
    %c0_i32_0 = arith.constant 0 : i32
    %c0_i32_1 = arith.constant 0 : i32
    return %c0_i32, %c0_i32_0 : i32, i32
  }
  func.func @transform_8(%arg0: i32) -> (i32, i32) {
    %c0_i32 = arith.constant 0 : i32
    %c0_i32_0 = arith.constant 0 : i32
    %c0_i32_1 = arith.constant 0 : i32
    return %c0_i32, %c0_i32_0 : i32, i32
  }
  func.func @transform_9(%arg0: i32) -> (i32, i32, i32) {
    %c0_i32 = arith.constant 0 : i32
    %c0_i32_0 = arith.constant 0 : i32
    %c0_i32_1 = arith.constant 0 : i32
    %c0_i32_2 = arith.constant 0 : i32
    return %c0_i32, %c0_i32_0, %c0_i32_1 : i32, i32, i32
  }
}

</mosaic_0001>

<llo_original>
// kernel: tpu_custom_call.1
$region0: #{tpu_custom_call.1}
  #allocation0 [shape = 'u32[]', space=smem, size = 0x4, offset = 0x4, fixed_abs, tag = 'smem constant byte address 0x4 - core index']
  #allocation1 [shape = 'u32[144,128]{1,0:T(1,128)}', space=vmem, size = 0x12000, scoped, tag = 'internal scratch']
  #allocation2 [shape = 'f32[2,4,18,18]{3,2,1,0:T(8,128)}', space=vmem, size = 0x18000, scoped, tag = 'scratch operand']
  #allocation3 [shape = 'f32[2,8,18,18]{3,2,1,0:T(8,128)}', space=vmem, size = 0x30000, scoped, tag = 'scratch operand']
  %s0 = inlined_call_operand.hbm [shape: f32[2,4,16,16], index: 0, kind: input, shape index: {}]
  %s1 = inlined_call_operand.vmem [shape: bf16[8,36], index: 1, kind: input, shape index: {}]
  %s2 = inlined_call_operand.vmem [shape: f32[8,1], index: 2, kind: input, shape index: {}]
  %s3 = inlined_call_operand.vmem [shape: f32[8,1], index: 3, kind: input, shape index: {}]
  %s4 = inlined_call_operand.vmem [shape: f32[8,1], index: 4, kind: input, shape index: {}]
  %s5 = inlined_call_operand.vmem [shape: bf16[8,72], index: 5, kind: input, shape index: {}]
  %s6 = inlined_call_operand.vmem [shape: f32[8,1], index: 6, kind: input, shape index: {}]
  %s7 = inlined_call_operand.vmem [shape: f32[8,1], index: 7, kind: input, shape index: {}]
  %s8 = inlined_call_operand.vmem [shape: f32[8,1], index: 8, kind: input, shape index: {}]
  %s9 = inlined_call_operand.hbm [shape: f32[2,8,256], index: 9, kind: output, shape index: {}]
  %s10 = sld [smem:[#allocation0]]
  $region50: #{tpu_custom_call.1} parent=0
    _
  %s12 = ssub.s32 1, %s10
  %s13 = scalar_select 0, %s12, %s10
  $region1: #{tpu_custom_call.1} parent=0
    #allocation4 [shape = 'u8[65536]{0}', space=vmem, size = 0x10000, scoped, tag = 'input window, operand 0, single buffered']
    #allocation5 [shape = 's32[1]{0}', space=sflag, size = 0x4, scoped, tag = 'scoped memory for tpu_custom_call.1']
    #allocation6 [shape = 's32[1]{0}', space=sflag, size = 0x4, scoped, tag = 'scoped memory for tpu_custom_call.1']
    #allocation7 [shape = 'u8[16384]{0}', space=vmem, size = 0x4000, scoped, tag = 'output window, operand 0, single buffered']
    %14 = vsyncpa [#allocation5], 0
    %15 = vsyncpa [#allocation6], 0
    // Predicated region
    $region2: #{tpu_custom_call.1} parent=1 // pred_check
      _
    $region3: #{tpu_custom_call.1} parent=1 // pred_check_branch
      %17 = sbr.rel (0) target = $region5
    $region4: #{tpu_custom_call.1} parent=1 // pred_region
      %s19 = ssub.s32 2048, 2048
      %20 = vsyncadd [#allocation5], %s19
      %s21 = sshll.u32 [#allocation4], 4
      %s22 = int_to_ptr.vmem [resolvable:$true] %s21
      %27 = dma.hbm_to_vmem [thread:$0]  %s0, 2048, %s22, [#allocation5], 128, 128, 8
    $region5: #{tpu_custom_call.1} parent=1 // pred_fallthru
      _
    // Predicated region
    $region6: #{tpu_custom_call.1} parent=1 // pred_check
      _
    $region7: #{tpu_custom_call.1} parent=1 // pred_check_branch
      %29 = sbr.rel (0) target = $region9
    $region8: #{tpu_custom_call.1} parent=1 // pred_region
      _
    $region9: #{tpu_custom_call.1} parent=1 // pred_fallthru
      _
    // Predicated region
    $region10: #{tpu_custom_call.1} parent=1 // pred_check
      _
    $region11: #{tpu_custom_call.1} parent=1 // pred_check_branch
      %31 = sbr.rel (0) target = $region13
    $region12: #{tpu_custom_call.1} parent=1 // pred_region
      _
    $region13: #{tpu_custom_call.1} parent=1 // pred_fallthru
      _
    // Predicated region
    $region14: #{tpu_custom_call.1} parent=1 // pred_check
      _
    $region15: #{tpu_custom_call.1} parent=1 // pred_check_branch
      %33 = sbr.rel (0) target = $region17
    $region16: #{tpu_custom_call.1} parent=1 // pred_region
      _
    $region17: #{tpu_custom_call.1} parent=1 // pred_fallthru
      _
    // Predicated region
    $region18: #{tpu_custom_call.1} parent=1 // pred_check
      _
    $region19: #{tpu_custom_call.1} parent=1 // pred_check_branch
      %35 = sbr.rel (0) target = $region21
    $region20: #{tpu_custom_call.1} parent=1 // pred_region
      _
    $region21: #{tpu_custom_call.1} parent=1 // pred_fallthru
      _
    // Predicated region
    $region22: #{tpu_custom_call.1} parent=1 // pred_check
      _
    $region23: #{tpu_custom_call.1} parent=1 // pred_check_branch
      %37 = sbr.rel (0) target = $region25
    $region24: #{tpu_custom_call.1} parent=1 // pred_region
      _
    $region25: #{tpu_custom_call.1} parent=1 // pred_fallthru
      _
    // Predicated region
    $region26: #{tpu_custom_call.1} parent=1 // pred_check
      _
    $region27: #{tpu_custom_call.1} parent=1 // pred_check_branch
      %39 = sbr.rel (0) target = $region29
    $region28: #{tpu_custom_call.1} parent=1 // pred_region
      _
    $region29: #{tpu_custom_call.1} parent=1 // pred_fallthru
      _
    // Predicated region
    $region30: #{tpu_custom_call.1} parent=1 // pred_check
      _
    $region31: #{tpu_custom_call.1} parent=1 // pred_check_branch
      %41 = sbr.rel (0) target = $region33
    $region32: #{tpu_custom_call.1} parent=1 // pred_region
      _
    $region33: #{tpu_custom_call.1} parent=1 // pred_fallthru
      _
    // Predicated region
    $region34: #{tpu_custom_call.1} parent=1 // pred_check
      _
    $region35: #{tpu_custom_call.1} parent=1 // pred_check_branch
      %43 = sbr.rel (0) target = $region37
    $region36: #{tpu_custom_call.1} parent=1 // pred_region
      _
    $region37: #{tpu_custom_call.1} parent=1 // pred_fallthru
      _
    // Predicated region
    $region38: #{tpu_custom_call.1} parent=1 // pred_check
      _
    $region39: #{tpu_custom_call.1} parent=1 // pred_check_branch
      %45 = sbr.rel (0) target = $region41
    $region40: #{tpu_custom_call.1} parent=1 // pred_region
      %46 = dma.done [#allocation5], 2048
    $region41: #{tpu_custom_call.1} parent=1 // pred_fallthru
      _
    %vm48 = vcmask 146432
    %49 = vst.msk [vmem:[#allocation2] sm:$0xff] %vm48, 0.0
    %50 = vst.msk [vmem:[#allocation2 + $0x8] sm:$0xff] %vm48, 0.0
    %vm51 = vcmask 140288
    %52 = vst.msk [vmem:[#allocation2 + $0x10] sm:$0x3] %vm51, 0.0
    %53 = vst.msk [vmem:[#allocation2 + $0x18] sm:$0xff] %vm48, 0.0
    %54 = vst.msk [vmem:[#allocation2 + $0x20] sm:$0xff] %vm48, 0.0
    %55 = vst.msk [vmem:[#allocation2 + $0x28] sm:$0x3] %vm51, 0.0
    %56 = vst.msk [vmem:[#allocation2 + $0x30] sm:$0xff] %vm48, 0.0
    %57 = vst.msk [vmem:[#allocation2 + $0x38] sm:$0xff] %vm48, 0.0
    %58 = vst.msk [vmem:[#allocation2 + $0x40] sm:$0x3] %vm51, 0.0
    %59 = vst.msk [vmem:[#allocation2 + $0x48] sm:$0xff] %vm48, 0.0
    %60 = vst.msk [vmem:[#allocation2 + $0x50] sm:$0xff] %vm48, 0.0
    %61 = vst.msk [vmem:[#allocation2 + $0x58] sm:$0x3] %vm51, 0.0
    %62 = vst.msk [vmem:[#allocation2 + $0x60] sm:$0xff] %vm48, 0.0
    %63 = vst.msk [vmem:[#allocation2 + $0x68] sm:$0xff] %vm48, 0.0
    %64 = vst.msk [vmem:[#allocation2 + $0x70] sm:$0x3] %vm51, 0.0
    %65 = vst.msk [vmem:[#allocation2 + $0x78] sm:$0xff] %vm48, 0.0
    %66 = vst.msk [vmem:[#allocation2 + $0x80] sm:$0xff] %vm48, 0.0
    %67 = vst.msk [vmem:[#allocation2 + $0x88] sm:$0x3] %vm51, 0.0
    %68 = vst.msk [vmem:[#allocation2 + $0x90] sm:$0xff] %vm48, 0.0
    %69 = vst.msk [vmem:[#allocation2 + $0x98] sm:$0xff] %vm48, 0.0
    %70 = vst.msk [vmem:[#allocation2 + $0xa0] sm:$0x3] %vm51, 0.0
    %71 = vst.msk [vmem:[#allocation2 + $0xa8] sm:$0xff] %vm48, 0.0
    %72 = vst.msk [vmem:[#allocation2 + $0xb0] sm:$0xff] %vm48, 0.0
    %73 = vst.msk [vmem:[#allocation2 + $0xb8] sm:$0x3] %vm51, 0.0
    %v74 = vld [vmem:[#allocation4] sm:$0xff]
    %v75 = vld [vmem:[#allocation4 + $0x8] sm:$0xff]
    %v76 = vld [vmem:[#allocation4 + $0x10] sm:$0xff]
    %v77 = vld [vmem:[#allocation4 + $0x18] sm:$0xff]
    %v78 = vld [vmem:[#allocation4 + $0x20] sm:$0xff]
    %v79 = vld [vmem:[#allocation4 + $0x28] sm:$0xff]
    %v80 = vld [vmem:[#allocation4 + $0x30] sm:$0xff]
    %v81 = vld [vmem:[#allocation4 + $0x38] sm:$0xff]
    %v82 = vld [vmem:[#allocation4 + $0x40] sm:$0xff]
    %v83 = vld [vmem:[#allocation4 + $0x48] sm:$0xff]
    %v84 = vld [vmem:[#allocation4 + $0x50] sm:$0xff]
    %v85 = vld [vmem:[#allocation4 + $0x58] sm:$0xff]
    %v86 = vld [vmem:[#allocation4 + $0x60] sm:$0xff]
    %v87 = vld [vmem:[#allocation4 + $0x68] sm:$0xff]
    %v88 = vld [vmem:[#allocation4 + $0x70] sm:$0xff]
    %v89 = vld [vmem:[#allocation4 + $0x78] sm:$0xff]
    %106 = vrot.lane.b32.xlu0 %v74, 1
    %v107 = vpop.permute.xlu0 %106
    %108 = vrot.lane.b32.xlu0 %v75, 1
    %v109 = vpop.permute.xlu0 %108
    %110 = vrot.lane.b32.xlu0 %v76, 1
    %v111 = vpop.permute.xlu0 %110
    %112 = vrot.lane.b32.xlu0 %v77, 1
    %v113 = vpop.permute.xlu0 %112
    %114 = vrot.lane.b32.xlu0 %v78, 1
    %v115 = vpop.permute.xlu0 %114
    %116 = vrot.lane.b32.xlu0 %v79, 1
    %v117 = vpop.permute.xlu0 %116
    %118 = vrot.lane.b32.xlu0 %v80, 1
    %v119 = vpop.permute.xlu0 %118
    %120 = vrot.lane.b32.xlu0 %v81, 1
    %v121 = vpop.permute.xlu0 %120
    %122 = vrot.lane.b32.xlu0 %v82, 1
    %v123 = vpop.permute.xlu0 %122
    %124 = vrot.lane.b32.xlu0 %v83, 1
    %v125 = vpop.permute.xlu0 %124
    %126 = vrot.lane.b32.xlu0 %v84, 1
    %v127 = vpop.permute.xlu0 %126
    %128 = vrot.lane.b32.xlu0 %v85, 1
    %v129 = vpop.permute.xlu0 %128
    %130 = vrot.lane.b32.xlu0 %v86, 1
    %v131 = vpop.permute.xlu0 %130
    %132 = vrot.lane.b32.xlu0 %v87, 1
    %v133 = vpop.permute.xlu0 %132
    %134 = vrot.lane.b32.xlu0 %v88, 1
    %v135 = vpop.permute.xlu0 %134
    %136 = vrot.lane.b32.xlu0 %v89, 1
    %v137 = vpop.permute.xlu0 %136
    %vm154 = vcmask 138248
    %155 = vst.msk [vmem:[#allocation2 + $0x1] sm:$0xff] %vm154, %v107
    %156 = vst.msk [vmem:[#allocation2 + $0x9] sm:$0xff] %vm154, %v109
    %157 = vst.msk [vmem:[#allocation2 + $0x19] sm:$0xff] %vm154, %v111
    %158 = vst.msk [vmem:[#allocation2 + $0x21] sm:$0xff] %vm154, %v113
    %159 = vst.msk [vmem:[#allocation2 + $0x31] sm:$0xff] %vm154, %v115
    %160 = vst.msk [vmem:[#allocation2 + $0x39] sm:$0xff] %vm154, %v117
    %161 = vst.msk [vmem:[#allocation2 + $0x49] sm:$0xff] %vm154, %v119
    %162 = vst.msk [vmem:[#allocation2 + $0x51] sm:$0xff] %vm154, %v121
    %163 = vst.msk [vmem:[#allocation2 + $0x61] sm:$0xff] %vm154, %v123
    %164 = vst.msk [vmem:[#allocation2 + $0x69] sm:$0xff] %vm154, %v125
    %165 = vst.msk [vmem:[#allocation2 + $0x79] sm:$0xff] %vm154, %v127
    %166 = vst.msk [vmem:[#allocation2 + $0x81] sm:$0xff] %vm154, %v129
    %167 = vst.msk [vmem:[#allocation2 + $0x91] sm:$0xff] %vm154, %v131
    %168 = vst.msk [vmem:[#allocation2 + $0x99] sm:$0xff] %vm154, %v133
    %169 = vst.msk [vmem:[#allocation2 + $0xa9] sm:$0xff] %vm154, %v135
    %170 = vst.msk [vmem:[#allocation2 + $0xb1] sm:$0xff] %vm154, %v137
    %v171 = vld [vmem:[%s1] sm:$0xf]
    %v172 = vld [vmem:[#allocation2] sm:$0xff]
    %v173 = vld [vmem:[#allocation2 + $0x8] sm:$0xff]
    %v174 = vld [vmem:[#allocation2 + $0x18] sm:$0xff]
    %v175 = vld [vmem:[#allocation2 + $0x20] sm:$0xff]
    %v176 = vld [vmem:[#allocation2 + $0x30] sm:$0xff]
    %v177 = vld [vmem:[#allocation2 + $0x38] sm:$0xff]
    %v178 = vld [vmem:[#allocation2 + $0x48] sm:$0xff]
    %v179 = vld [vmem:[#allocation2 + $0x50] sm:$0xff]
    %v180 = vcombine.low %v172, %v176
    %v181 = vcombine.high %v172, %v176
    %v183 = vunpack.c.l.s4 1983009808
    %v184 = vunpack.c.0.s8 %v183
    %v185 = vlaneseq
    %v186 = vshrl.u32 %v185, 7
    %v187 = vsub.s32 %v184, %v186
    %v188 = vrot.slane %v180, %v187
    %v190 = vunpack.c.l.s4 1983009808
    %v191 = vunpack.c.0.s8 %v190
    %v192 = vlaneseq
    %v193 = vshrl.u32 %v192, 7
    %v194 = vsub.s32 %v191, %v193
    %v195 = vrot.slane %v181, %v194
    %v196 = vcombine.low %v174, %v178
    %v197 = vcombine.high %v174, %v178
    %v199 = vunpack.c.l.s4 1983009808
    %v200 = vunpack.c.0.s8 %v199
    %v201 = vlaneseq
    %v202 = vshrl.u32 %v201, 7
    %v203 = vsub.s32 %v200, %v202
    %v204 = vrot.slane %v196, %v203
    %v206 = vunpack.c.l.s4 1983009808
    %v207 = vunpack.c.0.s8 %v206
    %v208 = vlaneseq
    %v209 = vshrl.u32 %v208, 7
    %v210 = vsub.s32 %v207, %v209
    %v211 = vrot.slane %v197, %v210
    %v212 = vcombine.low %v188, %v204
    %v213 = vcombine.high %v188, %v204
    %v215 = vunpack.c.l.s4 1934713408
    %v216 = vunpack.c.0.s8 %v215
    %v217 = vlaneseq
    %v218 = vshrl.u32 %v217, 7
    %v219 = vsub.s32 %v216, %v218
    %v220 = vrot.slane %v212, %v219
    %v222 = vunpack.c.l.s4 1934713408
    %v223 = vunpack.c.0.s8 %v222
    %v224 = vlaneseq
    %v225 = vshrl.u32 %v224, 7
    %v226 = vsub.s32 %v223, %v225
    %v227 = vrot.slane %v213, %v226
    %v228 = vcombine.low %v195, %v211
    %v229 = vcombine.high %v195, %v211
    %v231 = vunpack.c.l.s4 1934713408
    %v232 = vunpack.c.0.s8 %v231
    %v233 = vlaneseq
    %v234 = vshrl.u32 %v233, 7
    %v235 = vsub.s32 %v232, %v234
    %v236 = vrot.slane %v228, %v235
    %v238 = vunpack.c.l.s4 1934713408
    %v239 = vunpack.c.0.s8 %v238
    %v240 = vlaneseq
    %v241 = vshrl.u32 %v240, 7
    %v242 = vsub.s32 %v239, %v241
    %v243 = vrot.slane %v229, %v242
    %v244 = vcombine.high %v220, 0.0
    %v245 = vcombine.high %v227, 0.0
    %v246 = vcombine.high %v236, 0.0
    %v247 = vcombine.high %v243, 0.0
    %v248 = vcombine.low %v173, %v177
    %v249 = vcombine.high %v173, %v177
    %v251 = vunpack.c.l.s4 1983009808
    %v252 = vunpack.c.0.s8 %v251
    %v253 = vlaneseq
    %v254 = vshrl.u32 %v253, 7
    %v255 = vsub.s32 %v252, %v254
    %v256 = vrot.slane %v248, %v255
    %v258 = vunpack.c.l.s4 1983009808
    %v259 = vunpack.c.0.s8 %v258
    %v260 = vlaneseq
    %v261 = vshrl.u32 %v260, 7
    %v262 = vsub.s32 %v259, %v261
    %v263 = vrot.slane %v249, %v262
    %v264 = vcombine.low %v175, %v179
    %v265 = vcombine.high %v175, %v179
    %v267 = vunpack.c.l.s4 1983009808
    %v268 = vunpack.c.0.s8 %v267
    %v269 = vlaneseq
    %v270 = vshrl.u32 %v269, 7
    %v271 = vsub.s32 %v268, %v270
    %v272 = vrot.slane %v264, %v271
    %v274 = vunpack.c.l.s4 1983009808
    %v275 = vunpack.c.0.s8 %v274
    %v276 = vlaneseq
    %v277 = vshrl.u32 %v276, 7
    %v278 = vsub.s32 %v275, %v277
    %v279 = vrot.slane %v265, %v278
    %v280 = vcombine.low %v256, %v272
    %v281 = vcombine.high %v256, %v272
    %v283 = vunpack.c.l.s4 1934713408
    %v284 = vunpack.c.0.s8 %v283
    %v285 = vlaneseq
    %v286 = vshrl.u32 %v285, 7
    %v287 = vsub.s32 %v284, %v286
    %v288 = vrot.slane %v280, %v287
    %v290 = vunpack.c.l.s4 1934713408
    %v291 = vunpack.c.0.s8 %v290
    %v292 = vlaneseq
    %v293 = vshrl.u32 %v292, 7
    %v294 = vsub.s32 %v291, %v293
    %v295 = vrot.slane %v281, %v294
    %v296 = vcombine.low %v263, %v279
    %v297 = vcombine.high %v263, %v279
    %v299 = vunpack.c.l.s4 1934713408
    %v300 = vunpack.c.0.s8 %v299
    %v301 = vlaneseq
    %v302 = vshrl.u32 %v301, 7
    %v303 = vsub.s32 %v300, %v302
    %v304 = vrot.slane %v296, %v303
    %v306 = vunpack.c.l.s4 1934713408
    %v307 = vunpack.c.0.s8 %v306
    %v308 = vlaneseq
    %v309 = vshrl.u32 %v308, 7
    %v310 = vsub.s32 %v307, %v309
    %v311 = vrot.slane %v297, %v310
    %v312 = vcombine.high %v288, 0.0
    %v313 = vcombine.high %v295, 0.0
    %v314 = vcombine.high %v304, 0.0
    %v315 = vcombine.high %v311, 0.0
    %317 = vrot.lane.b32.xlu0 %v244, 16
    %v318 = vpop.permute.xlu0 %317
    %321 = vrot.lane.b32.xlu0 %v227, 32
    %v322 = vpop.permute.xlu0 %321
    %325 = vrot.lane.b32.xlu0 %v245, 48
    %v326 = vpop.permute.xlu0 %325
    %329 = vrot.lane.b32.xlu0 %v236, 64
    %v330 = vpop.permute.xlu0 %329
    %333 = vrot.lane.b32.xlu0 %v246, 80
    %v334 = vpop.permute.xlu0 %333
    %337 = vrot.lane.b32.xlu0 %v243, 96
    %v338 = vpop.permute.xlu0 %337
    %341 = vrot.lane.b32.xlu0 %v247, 112
    %v342 = vpop.permute.xlu0 %341
    %345 = vrot.lane.b32.xlu0 %v312, 16
    %v346 = vpop.permute.xlu0 %345
    %349 = vrot.lane.b32.xlu0 %v295, 32
    %v350 = vpop.permute.xlu0 %349
    %353 = vrot.lane.b32.xlu0 %v313, 48
    %v354 = vpop.permute.xlu0 %353
    %357 = vrot.lane.b32.xlu0 %v304, 64
    %v358 = vpop.permute.xlu0 %357
    %361 = vrot.lane.b32.xlu0 %v314, 80
    %v362 = vpop.permute.xlu0 %361
    %365 = vrot.lane.b32.xlu0 %v311, 96
    %v366 = vpop.permute.xlu0 %365
    %369 = vrot.lane.b32.xlu0 %v315, 112
    %v370 = vpop.permute.xlu0 %369
    %vm372 = vcmask 130048
    %v373 = vsel %vm372, %v220, %v318
    %vm374 = vcmask 261120
    %v375 = vsel %vm374, %v373, %v322
    %vm376 = vcmask 392192
    %v377 = vsel %vm376, %v375, %v326
    %vm378 = vcmask 523264
    %v379 = vsel %vm378, %v377, %v330
    %vm380 = vcmask 654336
    %v381 = vsel %vm380, %v379, %v334
    %vm382 = vcmask 785408
    %v383 = vsel %vm382, %v381, %v338
    %vm384 = vcmask 916480
    %v385 = vsel %vm384, %v383, %v342
    %v386 = vsel %vm372, %v288, %v346
    %v387 = vsel %vm374, %v386, %v350
    %v388 = vsel %vm376, %v387, %v354
    %v389 = vsel %vm378, %v388, %v358
    %v390 = vsel %vm380, %v389, %v362
    %v391 = vsel %vm382, %v390, %v366
    %v392 = vsel %vm384, %v391, %v370
    %401 = vrot.lane.b32.xlu0 %v172, 127
    %v402 = vpop.permute.xlu0 %401
    %403 = vrot.lane.b32.xlu0 %v173, 127
    %v404 = vpop.permute.xlu0 %403
    %405 = vrot.lane.b32.xlu0 %v174, 127
    %v406 = vpop.permute.xlu0 %405
    %407 = vrot.lane.b32.xlu0 %v175, 127
    %v408 = vpop.permute.xlu0 %407
    %409 = vrot.lane.b32.xlu0 %v176, 127
    %v410 = vpop.permute.xlu0 %409
    %411 = vrot.lane.b32.xlu0 %v177, 127
    %v412 = vpop.permute.xlu0 %411
    %413 = vrot.lane.b32.xlu0 %v178, 127
    %v414 = vpop.permute.xlu0 %413
    %415 = vrot.lane.b32.xlu0 %v179, 127
    %v416 = vpop.permute.xlu0 %415
    %v425 = vcombine.low %v402, %v410
    %v426 = vcombine.high %v402, %v410
    %v428 = vunpack.c.l.s4 1983009808
    %v429 = vunpack.c.0.s8 %v428
    %v430 = vlaneseq
    %v431 = vshrl.u32 %v430, 7
    %v432 = vsub.s32 %v429, %v431
    %v433 = vrot.slane %v425, %v432
    %v435 = vunpack.c.l.s4 1983009808
    %v436 = vunpack.c.0.s8 %v435
    %v437 = vlaneseq
    %v438 = vshrl.u32 %v437, 7
    %v439 = vsub.s32 %v436, %v438
    %v440 = vrot.slane %v426, %v439
    %v441 = vcombine.low %v406, %v414
    %v442 = vcombine.high %v406, %v414
    %v444 = vunpack.c.l.s4 1983009808
    %v445 = vunpack.c.0.s8 %v444
    %v446 = vlaneseq
    %v447 = vshrl.u32 %v446, 7
    %v448 = vsub.s32 %v445, %v447
    %v449 = vrot.slane %v441, %v448
    %v451 = vunpack.c.l.s4 1983009808
    %v452 = vunpack.c.0.s8 %v451
    %v453 = vlaneseq
    %v454 = vshrl.u32 %v453, 7
    %v455 = vsub.s32 %v452, %v454
    %v456 = vrot.slane %v442, %v455
    %v457 = vcombine.low %v433, %v449
    %v458 = vcombine.high %v433, %v449
    %v460 = vunpack.c.l.s4 1934713408
    %v461 = vunpack.c.0.s8 %v460
    %v462 = vlaneseq
    %v463 = vshrl.u32 %v462, 7
    %v464 = vsub.s32 %v461, %v463
    %v465 = vrot.slane %v457, %v464
    %v467 = vunpack.c.l.s4 1934713408
    %v468 = vunpack.c.0.s8 %v467
    %v469 = vlaneseq
    %v470 = vshrl.u32 %v469, 7
    %v471 = vsub.s32 %v468, %v470
    %v472 = vrot.slane %v458, %v471
    %v473 = vcombine.low %v440, %v456
    %v474 = vcombine.high %v440, %v456
    %v476 = vunpack.c.l.s4 1934713408
    %v477 = vunpack.c.0.s8 %v476
    %v478 = vlaneseq
    %v479 = vshrl.u32 %v478, 7
    %v480 = vsub.s32 %v477, %v479
    %v481 = vrot.slane %v473, %v480
    %v483 = vunpack.c.l.s4 1934713408
    %v484 = vunpack.c.0.s8 %v483
    %v485 = vlaneseq
    %v486 = vshrl.u32 %v485, 7
    %v487 = vsub.s32 %v484, %v486
    %v488 = vrot.slane %v474, %v487
    %v489 = vcombine.high %v465, 0.0
    %v490 = vcombine.high %v472, 0.0
    %v491 = vcombine.high %v481, 0.0
    %v492 = vcombine.high %v488, 0.0
    %v493 = vcombine.low %v404, %v412
    %v494 = vcombine.high %v404, %v412
    %v496 = vunpack.c.l.s4 1983009808
    %v497 = vunpack.c.0.s8 %v496
    %v498 = vlaneseq
    %v499 = vshrl.u32 %v498, 7
    %v500 = vsub.s32 %v497, %v499
    %v501 = vrot.slane %v493, %v500
    %v503 = vunpack.c.l.s4 1983009808
    %v504 = vunpack.c.0.s8 %v503
    %v505 = vlaneseq
    %v506 = vshrl.u32 %v505, 7
    %v507 = vsub.s32 %v504, %v506
    %v508 = vrot.slane %v494, %v507
    %v509 = vcombine.low %v408, %v416
    %v510 = vcombine.high %v408, %v416
    %v512 = vunpack.c.l.s4 1983009808
    %v513 = vunpack.c.0.s8 %v512
    %v514 = vlaneseq
    %v515 = vshrl.u32 %v514, 7
    %v516 = vsub.s32 %v513, %v515
    %v517 = vrot.slane %v509, %v516
    %v519 = vunpack.c.l.s4 1983009808
    %v520 = vunpack.c.0.s8 %v519
    %v521 = vlaneseq
    %v522 = vshrl.u32 %v521, 7
    %v523 = vsub.s32 %v520, %v522
    %v524 = vrot.slane %v510, %v523
    %v525 = vcombine.low %v501, %v517
    %v526 = vcombine.high %v501, %v517
    %v528 = vunpack.c.l.s4 1934713408
    %v529 = vunpack.c.0.s8 %v528
    %v530 = vlaneseq
    %v531 = vshrl.u32 %v530, 7
    %v532 = vsub.s32 %v529, %v531
    %v533 = vrot.slane %v525, %v532
    %v535 = vunpack.c.l.s4 1934713408
    %v536 = vunpack.c.0.s8 %v535
    %v537 = vlaneseq
    %v538 = vshrl.u32 %v537, 7
    %v539 = vsub.s32 %v536, %v538
    %v540 = vrot.slane %v526, %v539
    %v541 = vcombine.low %v508, %v524
    %v542 = vcombine.high %v508, %v524
    %v544 = vunpack.c.l.s4 1934713408
    %v545 = vunpack.c.0.s8 %v544
    %v546 = vlaneseq
    %v547 = vshrl.u32 %v546, 7
    %v548 = vsub.s32 %v545, %v547
    %v549 = vrot.slane %v541, %v548
    %v551 = vunpack.c.l.s4 1934713408
    %v552 = vunpack.c.0.s8 %v551
    %v553 = vlaneseq
    %v554 = vshrl.u32 %v553, 7
    %v555 = vsub.s32 %v552, %v554
    %v556 = vrot.slane %v542, %v555
    %v557 = vcombine.high %v533, 0.0
    %v558 = vcombine.high %v540, 0.0
    %v559 = vcombine.high %v549, 0.0
    %v560 = vcombine.high %v556, 0.0
    %562 = vrot.lane.b32.xlu0 %v489, 16
    %v563 = vpop.permute.xlu0 %562
    %566 = vrot.lane.b32.xlu0 %v472, 32
    %v567 = vpop.permute.xlu0 %566
    %570 = vrot.lane.b32.xlu0 %v490, 48
    %v571 = vpop.permute.xlu0 %570
    %574 = vrot.lane.b32.xlu0 %v481, 64
    %v575 = vpop.permute.xlu0 %574
    %578 = vrot.lane.b32.xlu0 %v491, 80
    %v579 = vpop.permute.xlu0 %578
    %582 = vrot.lane.b32.xlu0 %v488, 96
    %v583 = vpop.permute.xlu0 %582
    %586 = vrot.lane.b32.xlu0 %v492, 112
    %v587 = vpop.permute.xlu0 %586
    %590 = vrot.lane.b32.xlu0 %v557, 16
    %v591 = vpop.permute.xlu0 %590
    %594 = vrot.lane.b32.xlu0 %v540, 32
    %v595 = vpop.permute.xlu0 %594
    %598 = vrot.lane.b32.xlu0 %v558, 48
    %v599 = vpop.permute.xlu0 %598
    %602 = vrot.lane.b32.xlu0 %v549, 64
    %v603 = vpop.permute.xlu0 %602
    %606 = vrot.lane.b32.xlu0 %v559, 80
    %v607 = vpop.permute.xlu0 %606
    %610 = vrot.lane.b32.xlu0 %v556, 96
    %v611 = vpop.permute.xlu0 %610
    %614 = vrot.lane.b32.xlu0 %v560, 112
    %v615 = vpop.permute.xlu0 %614
    %v617 = vsel %vm372, %v465, %v563
    %v618 = vsel %vm374, %v617, %v567
    %v619 = vsel %vm376, %v618, %v571
    %v620 = vsel %vm378, %v619, %v575
    %v621 = vsel %vm380, %v620, %v579
    %v622 = vsel %vm382, %v621, %v583
    %v623 = vsel %vm384, %v622, %v587
    %v624 = vsel %vm372, %v533, %v591
    %v625 = vsel %vm374, %v624, %v595
    %v626 = vsel %vm376, %v625, %v599
    %v627 = vsel %vm378, %v626, %v603
    %v628 = vsel %vm380, %v627, %v607
    %v629 = vsel %vm382, %v628, %v611
    %v630 = vsel %vm384, %v629, %v615
    %631 = vrot.lane.b32.xlu0 %v172, 126
    %v632 = vpop.permute.xlu0 %631
    %633 = vrot.lane.b32.xlu0 %v173, 126
    %v634 = vpop.permute.xlu0 %633
    %635 = vrot.lane.b32.xlu0 %v174, 126
    %v636 = vpop.permute.xlu0 %635
    %637 = vrot.lane.b32.xlu0 %v175, 126
    %v638 = vpop.permute.xlu0 %637
    %639 = vrot.lane.b32.xlu0 %v176, 126
    %v640 = vpop.permute.xlu0 %639
    %641 = vrot.lane.b32.xlu0 %v177, 126
    %v642 = vpop.permute.xlu0 %641
    %643 = vrot.lane.b32.xlu0 %v178, 126
    %v644 = vpop.permute.xlu0 %643
    %645 = vrot.lane.b32.xlu0 %v179, 126
    %v646 = vpop.permute.xlu0 %645
    %v655 = vcombine.low %v632, %v640
    %v656 = vcombine.high %v632, %v640
    %v658 = vunpack.c.l.s4 1983009808
    %v659 = vunpack.c.0.s8 %v658
    %v660 = vlaneseq
    %v661 = vshrl.u32 %v660, 7
    %v662 = vsub.s32 %v659, %v661
    %v663 = vrot.slane %v655, %v662
    %v665 = vunpack.c.l.s4 1983009808
    %v666 = vunpack.c.0.s8 %v665
    %v667 = vlaneseq
    %v668 = vshrl.u32 %v667, 7
    %v669 = vsub.s32 %v666, %v668
    %v670 = vrot.slane %v656, %v669
    %v671 = vcombine.low %v636, %v644
    %v672 = vcombine.high %v636, %v644
    %v674 = vunpack.c.l.s4 1983009808
    %v675 = vunpack.c.0.s8 %v674
    %v676 = vlaneseq
    %v677 = vshrl.u32 %v676, 7
    %v678 = vsub.s32 %v675, %v677
    %v679 = vrot.slane %v671, %v678
    %v681 = vunpack.c.l.s4 1983009808
    %v682 = vunpack.c.0.s8 %v681
    %v683 = vlaneseq
    %v684 = vshrl.u32 %v683, 7
    %v685 = vsub.s32 %v682, %v684
    %v686 = vrot.slane %v672, %v685
    %v687 = vcombine.low %v663, %v679
    %v688 = vcombine.high %v663, %v679
    %v690 = vunpack.c.l.s4 1934713408
    %v691 = vunpack.c.0.s8 %v690
    %v692 = vlaneseq
    %v693 = vshrl.u32 %v692, 7
    %v694 = vsub.s32 %v691, %v693
    %v695 = vrot.slane %v687, %v694
    %v697 = vunpack.c.l.s4 1934713408
    %v698 = vunpack.c.0.s8 %v697
    %v699 = vlaneseq
    %v700 = vshrl.u32 %v699, 7
    %v701 = vsub.s32 %v698, %v700
    %v702 = vrot.slane %v688, %v701
    %v703 = vcombine.low %v670, %v686
    %v704 = vcombine.high %v670, %v686
    %v706 = vunpack.c.l.s4 1934713408
    %v707 = vunpack.c.0.s8 %v706
    %v708 = vlaneseq
    %v709 = vshrl.u32 %v708, 7
    %v710 = vsub.s32 %v707, %v709
    %v711 = vrot.slane %v703, %v710
    %v713 = vunpack.c.l.s4 1934713408
    %v714 = vunpack.c.0.s8 %v713
    %v715 = vlaneseq
    %v716 = vshrl.u32 %v715, 7
    %v717 = vsub.s32 %v714, %v716
    %v718 = vrot.slane %v704, %v717
    %v719 = vcombine.high %v695, 0.0
    %v720 = vcombine.high %v702, 0.0
    %v721 = vcombine.high %v711, 0.0
    %v722 = vcombine.high %v718, 0.0
    %v723 = vcombine.low %v634, %v642
    %v724 = vcombine.high %v634, %v642
    %v726 = vunpack.c.l.s4 1983009808
    %v727 = vunpack.c.0.s8 %v726
    %v728 = vlaneseq
    %v729 = vshrl.u32 %v728, 7
    %v730 = vsub.s32 %v727, %v729
    %v731 = vrot.slane %v723, %v730
    %v733 = vunpack.c.l.s4 1983009808
    %v734 = vunpack.c.0.s8 %v733
    %v735 = vlaneseq
    %v736 = vshrl.u32 %v735, 7
    %v737 = vsub.s32 %v734, %v736
    %v738 = vrot.slane %v724, %v737
    %v739 = vcombine.low %v638, %v646
    %v740 = vcombine.high %v638, %v646
    %v742 = vunpack.c.l.s4 1983009808
    %v743 = vunpack.c.0.s8 %v742
    %v744 = vlaneseq
    %v745 = vshrl.u32 %v744, 7
    %v746 = vsub.s32 %v743, %v745
    %v747 = vrot.slane %v739, %v746
    %v749 = vunpack.c.l.s4 1983009808
    %v750 = vunpack.c.0.s8 %v749
    %v751 = vlaneseq
    %v752 = vshrl.u32 %v751, 7
    %v753 = vsub.s32 %v750, %v752
    %v754 = vrot.slane %v740, %v753
    %v755 = vcombine.low %v731, %v747
    %v756 = vcombine.high %v731, %v747
    %v758 = vunpack.c.l.s4 1934713408
    %v759 = vunpack.c.0.s8 %v758
    %v760 = vlaneseq
    %v761 = vshrl.u32 %v760, 7
    %v762 = vsub.s32 %v759, %v761
    %v763 = vrot.slane %v755, %v762
    %v765 = vunpack.c.l.s4 1934713408
    %v766 = vunpack.c.0.s8 %v765
    %v767 = vlaneseq
    %v768 = vshrl.u32 %v767, 7
    %v769 = vsub.s32 %v766, %v768
    %v770 = vrot.slane %v756, %v769
    %v771 = vcombine.low %v738, %v754
    %v772 = vcombine.high %v738, %v754
    %v774 = vunpack.c.l.s4 1934713408
    %v775 = vunpack.c.0.s8 %v774
    %v776 = vlaneseq
    %v777 = vshrl.u32 %v776, 7
    %v778 = vsub.s32 %v775, %v777
    %v779 = vrot.slane %v771, %v778
    %v781 = vunpack.c.l.s4 1934713408
    %v782 = vunpack.c.0.s8 %v781
    %v783 = vlaneseq
    %v784 = vshrl.u32 %v783, 7
    %v785 = vsub.s32 %v782, %v784
    %v786 = vrot.slane %v772, %v785
    %v787 = vcombine.high %v763, 0.0
    %v788 = vcombine.high %v770, 0.0
    %v789 = vcombine.high %v779, 0.0
    %v790 = vcombine.high %v786, 0.0
    %792 = vrot.lane.b32.xlu0 %v719, 16
    %v793 = vpop.permute.xlu0 %792
    %796 = vrot.lane.b32.xlu0 %v702, 32
    %v797 = vpop.permute.xlu0 %796
    %800 = vrot.lane.b32.xlu0 %v720, 48
    %v801 = vpop.permute.xlu0 %800
    %804 = vrot.lane.b32.xlu0 %v711, 64
    %v805 = vpop.permute.xlu0 %804
    %808 = vrot.lane.b32.xlu0 %v721, 80
    %v809 = vpop.permute.xlu0 %808
    %812 = vrot.lane.b32.xlu0 %v718, 96
    %v813 = vpop.permute.xlu0 %812
    %816 = vrot.lane.b32.xlu0 %v722, 112
    %v817 = vpop.permute.xlu0 %816
    %820 = vrot.lane.b32.xlu0 %v787, 16
    %v821 = vpop.permute.xlu0 %820
    %824 = vrot.lane.b32.xlu0 %v770, 32
    %v825 = vpop.permute.xlu0 %824
    %828 = vrot.lane.b32.xlu0 %v788, 48
    %v829 = vpop.permute.xlu0 %828
    %832 = vrot.lane.b32.xlu0 %v779, 64
    %v833 = vpop.permute.xlu0 %832
    %836 = vrot.lane.b32.xlu0 %v789, 80
    %v837 = vpop.permute.xlu0 %836
    %840 = vrot.lane.b32.xlu0 %v786, 96
    %v841 = vpop.permute.xlu0 %840
    %844 = vrot.lane.b32.xlu0 %v790, 112
    %v845 = vpop.permute.xlu0 %844
    %v847 = vsel %vm372, %v695, %v793
    %v848 = vsel %vm374, %v847, %v797
    %v849 = vsel %vm376, %v848, %v801
    %v850 = vsel %vm378, %v849, %v805
    %v851 = vsel %vm380, %v850, %v809
    %v852 = vsel %vm382, %v851, %v813
    %v853 = vsel %vm384, %v852, %v817
    %v854 = vsel %vm372, %v763, %v821
    %v855 = vsel %vm374, %v854, %v825
    %v856 = vsel %vm376, %v855, %v829
    %v857 = vsel %vm378, %v856, %v833
    %v858 = vsel %vm380, %v857, %v837
    %v859 = vsel %vm382, %v858, %v841
    %v860 = vsel %vm384, %v859, %v845
    %v861 = vld [vmem:[#allocation2 + $0x1] sm:$0xff]
    %v862 = vld [vmem:[#allocation2 + $0x9] sm:$0xff]
    %v863 = vld [vmem:[#allocation2 + $0x19] sm:$0xff]
    %v864 = vld [vmem:[#allocation2 + $0x21] sm:$0xff]
    %v865 = vld [vmem:[#allocation2 + $0x31] sm:$0xff]
    %v866 = vld [vmem:[#allocation2 + $0x39] sm:$0xff]
    %v867 = vld [vmem:[#allocation2 + $0x49] sm:$0xff]
    %v868 = vld [vmem:[#allocation2 + $0x51] sm:$0xff]
    %v869 = vcombine.low %v861, %v865
    %v870 = vcombine.high %v861, %v865
    %v872 = vunpack.c.l.s4 1983009808
    %v873 = vunpack.c.0.s8 %v872
    %v874 = vlaneseq
    %v875 = vshrl.u32 %v874, 7
    %v876 = vsub.s32 %v873, %v875
    %v877 = vrot.slane %v869, %v876
    %v879 = vunpack.c.l.s4 1983009808
    %v880 = vunpack.c.0.s8 %v879
    %v881 = vlaneseq
    %v882 = vshrl.u32 %v881, 7
    %v883 = vsub.s32 %v880, %v882
    %v884 = vrot.slane %v870, %v883
    %v885 = vcombine.low %v863, %v867
    %v886 = vcombine.high %v863, %v867
    %v888 = vunpack.c.l.s4 1983009808
    %v889 = vunpack.c.0.s8 %v888
    %v890 = vlaneseq
    %v891 = vshrl.u32 %v890, 7
    %v892 = vsub.s32 %v889, %v891
    %v893 = vrot.slane %v885, %v892
    %v895 = vunpack.c.l.s4 1983009808
    %v896 = vunpack.c.0.s8 %v895
    %v897 = vlaneseq
    %v898 = vshrl.u32 %v897, 7
    %v899 = vsub.s32 %v896, %v898
    %v900 = vrot.slane %v886, %v899
    %v901 = vcombine.low %v877, %v893
    %v902 = vcombine.high %v877, %v893
    %v904 = vunpack.c.l.s4 1934713408
    %v905 = vunpack.c.0.s8 %v904
    %v906 = vlaneseq
    %v907 = vshrl.u32 %v906, 7
    %v908 = vsub.s32 %v905, %v907
    %v909 = vrot.slane %v901, %v908
    %v911 = vunpack.c.l.s4 1934713408
    %v912 = vunpack.c.0.s8 %v911
    %v913 = vlaneseq
    %v914 = vshrl.u32 %v913, 7
    %v915 = vsub.s32 %v912, %v914
    %v916 = vrot.slane %v902, %v915
    %v917 = vcombine.low %v884, %v900
    %v918 = vcombine.high %v884, %v900
    %v920 = vunpack.c.l.s4 1934713408
    %v921 = vunpack.c.0.s8 %v920
    %v922 = vlaneseq
    %v923 = vshrl.u32 %v922, 7
    %v924 = vsub.s32 %v921, %v923
    %v925 = vrot.slane %v917, %v924
    %v927 = vunpack.c.l.s4 1934713408
    %v928 = vunpack.c.0.s8 %v927
    %v929 = vlaneseq
    %v930 = vshrl.u32 %v929, 7
    %v931 = vsub.s32 %v928, %v930
    %v932 = vrot.slane %v918, %v931
    %v933 = vcombine.high %v909, 0.0
    %v934 = vcombine.high %v916, 0.0
    %v935 = vcombine.high %v925, 0.0
    %v936 = vcombine.high %v932, 0.0
    %v937 = vcombine.low %v862, %v866
    %v938 = vcombine.high %v862, %v866
    %v940 = vunpack.c.l.s4 1983009808
    %v941 = vunpack.c.0.s8 %v940
    %v942 = vlaneseq
    %v943 = vshrl.u32 %v942, 7
    %v944 = vsub.s32 %v941, %v943
    %v945 = vrot.slane %v937, %v944
    %v947 = vunpack.c.l.s4 1983009808
    %v948 = vunpack.c.0.s8 %v947
    %v949 = vlaneseq
    %v950 = vshrl.u32 %v949, 7
    %v951 = vsub.s32 %v948, %v950
    %v952 = vrot.slane %v938, %v951
    %v953 = vcombine.low %v864, %v868
    %v954 = vcombine.high %v864, %v868
    %v956 = vunpack.c.l.s4 1983009808
    %v957 = vunpack.c.0.s8 %v956
    %v958 = vlaneseq
    %v959 = vshrl.u32 %v958, 7
    %v960 = vsub.s32 %v957, %v959
    %v961 = vrot.slane %v953, %v960
    %v963 = vunpack.c.l.s4 1983009808
    %v964 = vunpack.c.0.s8 %v963
    %v965 = vlaneseq
    %v966 = vshrl.u32 %v965, 7
    %v967 = vsub.s32 %v964, %v966
    %v968 = vrot.slane %v954, %v967
    %v969 = vcombine.low %v945, %v961
    %v970 = vcombine.high %v945, %v961
    %v972 = vunpack.c.l.s4 1934713408
    %v973 = vunpack.c.0.s8 %v972
    %v974 = vlaneseq
    %v975 = vshrl.u32 %v974, 7
    %v976 = vsub.s32 %v973, %v975
    %v977 = vrot.slane %v969, %v976
    %v979 = vunpack.c.l.s4 1934713408
    %v980 = vunpack.c.0.s8 %v979
    %v981 = vlaneseq
    %v982 = vshrl.u32 %v981, 7
    %v983 = vsub.s32 %v980, %v982
    %v984 = vrot.slane %v970, %v983
    %v985 = vcombine.low %v952, %v968
    %v986 = vcombine.high %v952, %v968
    %v988 = vunpack.c.l.s4 1934713408
    %v989 = vunpack.c.0.s8 %v988
    %v990 = vlaneseq
    %v991 = vshrl.u32 %v990, 7
    %v992 = vsub.s32 %v989, %v991
    %v993 = vrot.slane %v985, %v992
    %v995 = vunpack.c.l.s4 1934713408
    %v996 = vunpack.c.0.s8 %v995
    %v997 = vlaneseq
    %v998 = vshrl.u32 %v997, 7
    %v999 = vsub.s32 %v996, %v998
    %v1000 = vrot.slane %v986, %v999
    %v1001 = vcombine.high %v977, 0.0
    %v1002 = vcombine.high %v984, 0.0
    %v1003 = vcombine.high %v993, 0.0
    %v1004 = vcombine.high %v1000, 0.0
    %1006 = vrot.lane.b32.xlu0 %v933, 16
    %v1007 = vpop.permute.xlu0 %1006
    %1010 = vrot.lane.b32.xlu0 %v916, 32
    %v1011 = vpop.permute.xlu0 %1010
    %1014 = vrot.lane.b32.xlu0 %v934, 48
    %v1015 = vpop.permute.xlu0 %1014
    %1018 = vrot.lane.b32.xlu0 %v925, 64
    %v1019 = vpop.permute.xlu0 %1018
    %1022 = vrot.lane.b32.xlu0 %v935, 80
    %v1023 = vpop.permute.xlu0 %1022
    %1026 = vrot.lane.b32.xlu0 %v932, 96
    %v1027 = vpop.permute.xlu0 %1026
    %1030 = vrot.lane.b32.xlu0 %v936, 112
    %v1031 = vpop.permute.xlu0 %1030
    %1034 = vrot.lane.b32.xlu0 %v1001, 16
    %v1035 = vpop.permute.xlu0 %1034
    %1038 = vrot.lane.b32.xlu0 %v984, 32
    %v1039 = vpop.permute.xlu0 %1038
    %1042 = vrot.lane.b32.xlu0 %v1002, 48
    %v1043 = vpop.permute.xlu0 %1042
    %1046 = vrot.lane.b32.xlu0 %v993, 64
    %v1047 = vpop.permute.xlu0 %1046
    %1050 = vrot.lane.b32.xlu0 %v1003, 80
    %v1051 = vpop.permute.xlu0 %1050
    %1054 = vrot.lane.b32.xlu0 %v1000, 96
    %v1055 = vpop.permute.xlu0 %1054
    %1058 = vrot.lane.b32.xlu0 %v1004, 112
    %v1059 = vpop.permute.xlu0 %1058
    %v1061 = vsel %vm372, %v909, %v1007
    %v1062 = vsel %vm374, %v1061, %v1011
    %v1063 = vsel %vm376, %v1062, %v1015
    %v1064 = vsel %vm378, %v1063, %v1019
    %v1065 = vsel %vm380, %v1064, %v1023
    %v1066 = vsel %vm382, %v1065, %v1027
    %v1067 = vsel %vm384, %v1066, %v1031
    %v1068 = vsel %vm372, %v977, %v1035
    %v1069 = vsel %vm374, %v1068, %v1039
    %v1070 = vsel %vm376, %v1069, %v1043
    %v1071 = vsel %vm378, %v1070, %v1047
    %v1072 = vsel %vm380, %v1071, %v1051
    %v1073 = vsel %vm382, %v1072, %v1055
    %v1074 = vsel %vm384, %v1073, %v1059
    %1083 = vrot.lane.b32.xlu0 %v861, 127
    %v1084 = vpop.permute.xlu0 %1083
    %1085 = vrot.lane.b32.xlu0 %v862, 127
    %v1086 = vpop.permute.xlu0 %1085
    %1087 = vrot.lane.b32.xlu0 %v863, 127
    %v1088 = vpop.permute.xlu0 %1087
    %1089 = vrot.lane.b32.xlu0 %v864, 127
    %v1090 = vpop.permute.xlu0 %1089
    %1091 = vrot.lane.b32.xlu0 %v865, 127
    %v1092 = vpop.permute.xlu0 %1091
    %1093 = vrot.lane.b32.xlu0 %v866, 127
    %v1094 = vpop.permute.xlu0 %1093
    %1095 = vrot.lane.b32.xlu0 %v867, 127
    %v1096 = vpop.permute.xlu0 %1095
    %1097 = vrot.lane.b32.xlu0 %v868, 127
    %v1098 = vpop.permute.xlu0 %1097
    %v1107 = vcombine.low %v1084, %v1092
    %v1108 = vcombine.high %v1084, %v1092
    %v1110 = vunpack.c.l.s4 1983009808
    %v1111 = vunpack.c.0.s8 %v1110
    %v1112 = vlaneseq
    %v1113 = vshrl.u32 %v1112, 7
    %v1114 = vsub.s32 %v1111, %v1113
    %v1115 = vrot.slane %v1107, %v1114
    %v1117 = vunpack.c.l.s4 1983009808
    %v1118 = vunpack.c.0.s8 %v1117
    %v1119 = vlaneseq
    %v1120 = vshrl.u32 %v1119, 7
    %v1121 = vsub.s32 %v1118, %v1120
    %v1122 = vrot.slane %v1108, %v1121
    %v1123 = vcombine.low %v1088, %v1096
    %v1124 = vcombine.high %v1088, %v1096
    %v1126 = vunpack.c.l.s4 1983009808
    %v1127 = vunpack.c.0.s8 %v1126
    %v1128 = vlaneseq
    %v1129 = vshrl.u32 %v1128, 7
    %v1130 = vsub.s32 %v1127, %v1129
    %v1131 = vrot.slane %v1123, %v1130
    %v1133 = vunpack.c.l.s4 1983009808
    %v1134 = vunpack.c.0.s8 %v1133
    %v1135 = vlaneseq
    %v1136 = vshrl.u32 %v1135, 7
    %v1137 = vsub.s32 %v1134, %v1136
    %v1138 = vrot.slane %v1124, %v1137
    %v1139 = vcombine.low %v1115, %v1131
    %v1140 = vcombine.high %v1115, %v1131
    %v1142 = vunpack.c.l.s4 1934713408
    %v1143 = vunpack.c.0.s8 %v1142
    %v1144 = vlaneseq
    %v1145 = vshrl.u32 %v1144, 7
    %v1146 = vsub.s32 %v1143, %v1145
    %v1147 = vrot.slane %v1139, %v1146
    %v1149 = vunpack.c.l.s4 1934713408
    %v1150 = vunpack.c.0.s8 %v1149
    %v1151 = vlaneseq
    %v1152 = vshrl.u32 %v1151, 7
    %v1153 = vsub.s32 %v1150, %v1152
    %v1154 = vrot.slane %v1140, %v1153
    %v1155 = vcombine.low %v1122, %v1138
    %v1156 = vcombine.high %v1122, %v1138
    %v1158 = vunpack.c.l.s4 1934713408
    %v1159 = vunpack.c.0.s8 %v1158
    %v1160 = vlaneseq
    %v1161 = vshrl.u32 %v1160, 7
    %v1162 = vsub.s32 %v1159, %v1161
    %v1163 = vrot.slane %v1155, %v1162
    %v1165 = vunpack.c.l.s4 1934713408
    %v1166 = vunpack.c.0.s8 %v1165
    %v1167 = vlaneseq
    %v1168 = vshrl.u32 %v1167, 7
    %v1169 = vsub.s32 %v1166, %v1168
    %v1170 = vrot.slane %v1156, %v1169
    %v1171 = vcombine.high %v1147, 0.0
    %v1172 = vcombine.high %v1154, 0.0
    %v1173 = vcombine.high %v1163, 0.0
    %v1174 = vcombine.high %v1170, 0.0
    %v1175 = vcombine.low %v1086, %v1094
    %v1176 = vcombine.high %v1086, %v1094
    %v1178 = vunpack.c.l.s4 1983009808
    %v1179 = vunpack.c.0.s8 %v1178
    %v1180 = vlaneseq
    %v1181 = vshrl.u32 %v1180, 7
    %v1182 = vsub.s32 %v1179, %v1181
    %v1183 = vrot.slane %v1175, %v1182
    %v1185 = vunpack.c.l.s4 1983009808
    %v1186 = vunpack.c.0.s8 %v1185
    %v1187 = vlaneseq
    %v1188 = vshrl.u32 %v1187, 7
    %v1189 = vsub.s32 %v1186, %v1188
    %v1190 = vrot.slane %v1176, %v1189
    %v1191 = vcombine.low %v1090, %v1098
    %v1192 = vcombine.high %v1090, %v1098
    %v1194 = vunpack.c.l.s4 1983009808
    %v1195 = vunpack.c.0.s8 %v1194
    %v1196 = vlaneseq
    %v1197 = vshrl.u32 %v1196, 7
    %v1198 = vsub.s32 %v1195, %v1197
    %v1199 = vrot.slane %v1191, %v1198
    %v1201 = vunpack.c.l.s4 1983009808
    %v1202 = vunpack.c.0.s8 %v1201
    %v1203 = vlaneseq
    %v1204 = vshrl.u32 %v1203, 7
    %v1205 = vsub.s32 %v1202, %v1204
    %v1206 = vrot.slane %v1192, %v1205
    %v1207 = vcombine.low %v1183, %v1199
    %v1208 = vcombine.high %v1183, %v1199
    %v1210 = vunpack.c.l.s4 1934713408
    %v1211 = vunpack.c.0.s8 %v1210
    %v1212 = vlaneseq
    %v1213 = vshrl.u32 %v1212, 7
    %v1214 = vsub.s32 %v1211, %v1213
    %v1215 = vrot.slane %v1207, %v1214
    %v1217 = vunpack.c.l.s4 1934713408
    %v1218 = vunpack.c.0.s8 %v1217
    %v1219 = vlaneseq
    %v1220 = vshrl.u32 %v1219, 7
    %v1221 = vsub.s32 %v1218, %v1220
    %v1222 = vrot.slane %v1208, %v1221
    %v1223 = vcombine.low %v1190, %v1206
    %v1224 = vcombine.high %v1190, %v1206
    %v1226 = vunpack.c.l.s4 1934713408
    %v1227 = vunpack.c.0.s8 %v1226
    %v1228 = vlaneseq
    %v1229 = vshrl.u32 %v1228, 7
    %v1230 = vsub.s32 %v1227, %v1229
    %v1231 = vrot.slane %v1223, %v1230
    %v1233 = vunpack.c.l.s4 1934713408
    %v1234 = vunpack.c.0.s8 %v1233
    %v1235 = vlaneseq
    %v1236 = vshrl.u32 %v1235, 7
    %v1237 = vsub.s32 %v1234, %v1236
    %v1238 = vrot.slane %v1224, %v1237
    %v1239 = vcombine.high %v1215, 0.0
    %v1240 = vcombine.high %v1222, 0.0
    %v1241 = vcombine.high %v1231, 0.0
    %v1242 = vcombine.high %v1238, 0.0
    %1244 = vrot.lane.b32.xlu0 %v1171, 16
    %v1245 = vpop.permute.xlu0 %1244
    %1248 = vrot.lane.b32.xlu0 %v1154, 32
    %v1249 = vpop.permute.xlu0 %1248
    %1252 = vrot.lane.b32.xlu0 %v1172, 48
    %v1253 = vpop.permute.xlu0 %1252
    %1256 = vrot.lane.b32.xlu0 %v1163, 64
    %v1257 = vpop.permute.xlu0 %1256
    %1260 = vrot.lane.b32.xlu0 %v1173, 80
    %v1261 = vpop.permute.xlu0 %1260
    %1264 = vrot.lane.b32.xlu0 %v1170, 96
    %v1265 = vpop.permute.xlu0 %1264
    %1268 = vrot.lane.b32.xlu0 %v1174, 112
    %v1269 = vpop.permute.xlu0 %1268
    %1272 = vrot.lane.b32.xlu0 %v1239, 16
    %v1273 = vpop.permute.xlu0 %1272
    %1276 = vrot.lane.b32.xlu0 %v1222, 32
    %v1277 = vpop.permute.xlu0 %1276
    %1280 = vrot.lane.b32.xlu0 %v1240, 48
    %v1281 = vpop.permute.xlu0 %1280
    %1284 = vrot.lane.b32.xlu0 %v1231, 64
    %v1285 = vpop.permute.xlu0 %1284
    %1288 = vrot.lane.b32.xlu0 %v1241, 80
    %v1289 = vpop.permute.xlu0 %1288
    %1292 = vrot.lane.b32.xlu0 %v1238, 96
    %v1293 = vpop.permute.xlu0 %1292
    %1296 = vrot.lane.b32.xlu0 %v1242, 112
    %v1297 = vpop.permute.xlu0 %1296
    %v1299 = vsel %vm372, %v1147, %v1245
    %v1300 = vsel %vm374, %v1299, %v1249
    %v1301 = vsel %vm376, %v1300, %v1253
    %v1302 = vsel %vm378, %v1301, %v1257
    %v1303 = vsel %vm380, %v1302, %v1261
    %v1304 = vsel %vm382, %v1303, %v1265
    %v1305 = vsel %vm384, %v1304, %v1269
    %v1306 = vsel %vm372, %v1215, %v1273
    %v1307 = vsel %vm374, %v1306, %v1277
    %v1308 = vsel %vm376, %v1307, %v1281
    %v1309 = vsel %vm378, %v1308, %v1285
    %v1310 = vsel %vm380, %v1309, %v1289
    %v1311 = vsel %vm382, %v1310, %v1293
    %v1312 = vsel %vm384, %v1311, %v1297
    %1313 = vrot.lane.b32.xlu0 %v861, 126
    %v1314 = vpop.permute.xlu0 %1313
    %1315 = vrot.lane.b32.xlu0 %v862, 126
    %v1316 = vpop.permute.xlu0 %1315
    %1317 = vrot.lane.b32.xlu0 %v863, 126
    %v1318 = vpop.permute.xlu0 %1317
    %1319 = vrot.lane.b32.xlu0 %v864, 126
    %v1320 = vpop.permute.xlu0 %1319
    %1321 = vrot.lane.b32.xlu0 %v865, 126
    %v1322 = vpop.permute.xlu0 %1321
    %1323 = vrot.lane.b32.xlu0 %v866, 126
    %v1324 = vpop.permute.xlu0 %1323
    %1325 = vrot.lane.b32.xlu0 %v867, 126
    %v1326 = vpop.permute.xlu0 %1325
    %1327 = vrot.lane.b32.xlu0 %v868, 126
    %v1328 = vpop.permute.xlu0 %1327
    %v1337 = vcombine.low %v1314, %v1322
    %v1338 = vcombine.high %v1314, %v1322
    %v1340 = vunpack.c.l.s4 1983009808
    %v1341 = vunpack.c.0.s8 %v1340
    %v1342 = vlaneseq
    %v1343 = vshrl.u32 %v1342, 7
    %v1344 = vsub.s32 %v1341, %v1343
    %v1345 = vrot.slane %v1337, %v1344
    %v1347 = vunpack.c.l.s4 1983009808
    %v1348 = vunpack.c.0.s8 %v1347
    %v1349 = vlaneseq
    %v1350 = vshrl.u32 %v1349, 7
    %v1351 = vsub.s32 %v1348, %v1350
    %v1352 = vrot.slane %v1338, %v1351
    %v1353 = vcombine.low %v1318, %v1326
    %v1354 = vcombine.high %v1318, %v1326
    %v1356 = vunpack.c.l.s4 1983009808
    %v1357 = vunpack.c.0.s8 %v1356
    %v1358 = vlaneseq
    %v1359 = vshrl.u32 %v1358, 7
    %v1360 = vsub.s32 %v1357, %v1359
    %v1361 = vrot.slane %v1353, %v1360
    %v1363 = vunpack.c.l.s4 1983009808
    %v1364 = vunpack.c.0.s8 %v1363
    %v1365 = vlaneseq
    %v1366 = vshrl.u32 %v1365, 7
    %v1367 = vsub.s32 %v1364, %v1366
    %v1368 = vrot.slane %v1354, %v1367
    %v1369 = vcombine.low %v1345, %v1361
    %v1370 = vcombine.high %v1345, %v1361
    %v1372 = vunpack.c.l.s4 1934713408
    %v1373 = vunpack.c.0.s8 %v1372
    %v1374 = vlaneseq
    %v1375 = vshrl.u32 %v1374, 7
    %v1376 = vsub.s32 %v1373, %v1375
    %v1377 = vrot.slane %v1369, %v1376
    %v1379 = vunpack.c.l.s4 1934713408
    %v1380 = vunpack.c.0.s8 %v1379
    %v1381 = vlaneseq
    %v1382 = vshrl.u32 %v1381, 7
    %v1383 = vsub.s32 %v1380, %v1382
    %v1384 = vrot.slane %v1370, %v1383
    %v1385 = vcombine.low %v1352, %v1368
    %v1386 = vcombine.high %v1352, %v1368
    %v1388 = vunpack.c.l.s4 1934713408
    %v1389 = vunpack.c.0.s8 %v1388
    %v1390 = vlaneseq
    %v1391 = vshrl.u32 %v1390, 7
    %v1392 = vsub.s32 %v1389, %v1391
    %v1393 = vrot.slane %v1385, %v1392
    %v1395 = vunpack.c.l.s4 1934713408
    %v1396 = vunpack.c.0.s8 %v1395
    %v1397 = vlaneseq
    %v1398 = vshrl.u32 %v1397, 7
    %v1399 = vsub.s32 %v1396, %v1398
    %v1400 = vrot.slane %v1386, %v1399
    %v1401 = vcombine.high %v1377, 0.0
    %v1402 = vcombine.high %v1384, 0.0
    %v1403 = vcombine.high %v1393, 0.0
    %v1404 = vcombine.high %v1400, 0.0
    %v1405 = vcombine.low %v1316, %v1324
    %v1406 = vcombine.high %v1316, %v1324
    %v1408 = vunpack.c.l.s4 1983009808
    %v1409 = vunpack.c.0.s8 %v1408
    %v1410 = vlaneseq
    %v1411 = vshrl.u32 %v1410, 7
    %v1412 = vsub.s32 %v1409, %v1411
    %v1413 = vrot.slane %v1405, %v1412
    %v1415 = vunpack.c.l.s4 1983009808
    %v1416 = vunpack.c.0.s8 %v1415
    %v1417 = vlaneseq
    %v1418 = vshrl.u32 %v1417, 7
    %v1419 = vsub.s32 %v1416, %v1418
    %v1420 = vrot.slane %v1406, %v1419
    %v1421 = vcombine.low %v1320, %v1328
    %v1422 = vcombine.high %v1320, %v1328
    %v1424 = vunpack.c.l.s4 1983009808
    %v1425 = vunpack.c.0.s8 %v1424
    %v1426 = vlaneseq
    %v1427 = vshrl.u32 %v1426, 7
    %v1428 = vsub.s32 %v1425, %v1427
    %v1429 = vrot.slane %v1421, %v1428
    %v1431 = vunpack.c.l.s4 1983009808
    %v1432 = vunpack.c.0.s8 %v1431
    %v1433 = vlaneseq
    %v1434 = vshrl.u32 %v1433, 7
    %v1435 = vsub.s32 %v1432, %v1434
    %v1436 = vrot.slane %v1422, %v1435
    %v1437 = vcombine.low %v1413, %v1429
    %v1438 = vcombine.high %v1413, %v1429
    %v1440 = vunpack.c.l.s4 1934713408
    %v1441 = vunpack.c.0.s8 %v1440
    %v1442 = vlaneseq
    %v1443 = vshrl.u32 %v1442, 7
    %v1444 = vsub.s32 %v1441, %v1443
    %v1445 = vrot.slane %v1437, %v1444
    %v1447 = vunpack.c.l.s4 1934713408
    %v1448 = vunpack.c.0.s8 %v1447
    %v1449 = vlaneseq
    %v1450 = vshrl.u32 %v1449, 7
    %v1451 = vsub.s32 %v1448, %v1450
    %v1452 = vrot.slane %v1438, %v1451
    %v1453 = vcombine.low %v1420, %v1436
    %v1454 = vcombine.high %v1420, %v1436
    %v1456 = vunpack.c.l.s4 1934713408
    %v1457 = vunpack.c.0.s8 %v1456
    %v1458 = vlaneseq
    %v1459 = vshrl.u32 %v1458, 7
    %v1460 = vsub.s32 %v1457, %v1459
    %v1461 = vrot.slane %v1453, %v1460
    %v1463 = vunpack.c.l.s4 1934713408
    %v1464 = vunpack.c.0.s8 %v1463
    %v1465 = vlaneseq
    %v1466 = vshrl.u32 %v1465, 7
    %v1467 = vsub.s32 %v1464, %v1466
    %v1468 = vrot.slane %v1454, %v1467
    %v1469 = vcombine.high %v1445, 0.0
    %v1470 = vcombine.high %v1452, 0.0
    %v1471 = vcombine.high %v1461, 0.0
    %v1472 = vcombine.high %v1468, 0.0
    %1474 = vrot.lane.b32.xlu0 %v1401, 16
    %v1475 = vpop.permute.xlu0 %1474
    %1478 = vrot.lane.b32.xlu0 %v1384, 32
    %v1479 = vpop.permute.xlu0 %1478
    %1482 = vrot.lane.b32.xlu0 %v1402, 48
    %v1483 = vpop.permute.xlu0 %1482
    %1486 = vrot.lane.b32.xlu0 %v1393, 64
    %v1487 = vpop.permute.xlu0 %1486
    %1490 = vrot.lane.b32.xlu0 %v1403, 80
    %v1491 = vpop.permute.xlu0 %1490
    %1494 = vrot.lane.b32.xlu0 %v1400, 96
    %v1495 = vpop.permute.xlu0 %1494
    %1498 = vrot.lane.b32.xlu0 %v1404, 112
    %v1499 = vpop.permute.xlu0 %1498
    %1502 = vrot.lane.b32.xlu0 %v1469, 16
    %v1503 = vpop.permute.xlu0 %1502
    %1506 = vrot.lane.b32.xlu0 %v1452, 32
    %v1507 = vpop.permute.xlu0 %1506
    %1510 = vrot.lane.b32.xlu0 %v1470, 48
    %v1511 = vpop.permute.xlu0 %1510
    %1514 = vrot.lane.b32.xlu0 %v1461, 64
    %v1515 = vpop.permute.xlu0 %1514
    %1518 = vrot.lane.b32.xlu0 %v1471, 80
    %v1519 = vpop.permute.xlu0 %1518
    %1522 = vrot.lane.b32.xlu0 %v1468, 96
    %v1523 = vpop.permute.xlu0 %1522
    %1526 = vrot.lane.b32.xlu0 %v1472, 112
    %v1527 = vpop.permute.xlu0 %1526
    %v1529 = vsel %vm372, %v1377, %v1475
    %v1530 = vsel %vm374, %v1529, %v1479
    %v1531 = vsel %vm376, %v1530, %v1483
    %v1532 = vsel %vm378, %v1531, %v1487
    %v1533 = vsel %vm380, %v1532, %v1491
    %v1534 = vsel %vm382, %v1533, %v1495
    %v1535 = vsel %vm384, %v1534, %v1499
    %v1536 = vsel %vm372, %v1445, %v1503
    %v1537 = vsel %vm374, %v1536, %v1507
    %v1538 = vsel %vm376, %v1537, %v1511
    %v1539 = vsel %vm378, %v1538, %v1515
    %v1540 = vsel %vm380, %v1539, %v1519
    %v1541 = vsel %vm382, %v1540, %v1523
    %v1542 = vsel %vm384, %v1541, %v1527
    %v1543 = vld [vmem:[#allocation2 + $0x2] sm:$0xff]
    %v1544 = vld [vmem:[#allocation2 + $0xa] sm:$0xff]
    %v1545 = vld [vmem:[#allocation2 + $0x1a] sm:$0xff]
    %v1546 = vld [vmem:[#allocation2 + $0x22] sm:$0xff]
    %v1547 = vld [vmem:[#allocation2 + $0x32] sm:$0xff]
    %v1548 = vld [vmem:[#allocation2 + $0x3a] sm:$0xff]
    %v1549 = vld [vmem:[#allocation2 + $0x4a] sm:$0xff]
    %v1550 = vld [vmem:[#allocation2 + $0x52] sm:$0xff]
    %v1551 = vcombine.low %v1543, %v1547
    %v1552 = vcombine.high %v1543, %v1547
    %v1554 = vunpack.c.l.s4 1983009808
    %v1555 = vunpack.c.0.s8 %v1554
    %v1556 = vlaneseq
    %v1557 = vshrl.u32 %v1556, 7
    %v1558 = vsub.s32 %v1555, %v1557
    %v1559 = vrot.slane %v1551, %v1558
    %v1561 = vunpack.c.l.s4 1983009808
    %v1562 = vunpack.c.0.s8 %v1561
    %v1563 = vlaneseq
    %v1564 = vshrl.u32 %v1563, 7
    %v1565 = vsub.s32 %v1562, %v1564
    %v1566 = vrot.slane %v1552, %v1565
    %v1567 = vcombine.low %v1545, %v1549
    %v1568 = vcombine.high %v1545, %v1549
    %v1570 = vunpack.c.l.s4 1983009808
    %v1571 = vunpack.c.0.s8 %v1570
    %v1572 = vlaneseq
    %v1573 = vshrl.u32 %v1572, 7
    %v1574 = vsub.s32 %v1571, %v1573
    %v1575 = vrot.slane %v1567, %v1574
    %v1577 = vunpack.c.l.s4 1983009808
    %v1578 = vunpack.c.0.s8 %v1577
    %v1579 = vlaneseq
    %v1580 = vshrl.u32 %v1579, 7
    %v1581 = vsub.s32 %v1578, %v1580
    %v1582 = vrot.slane %v1568, %v1581
    %v1583 = vcombine.low %v1559, %v1575
    %v1584 = vcombine.high %v1559, %v1575
    %v1586 = vunpack.c.l.s4 1934713408
    %v1587 = vunpack.c.0.s8 %v1586
    %v1588 = vlaneseq
    %v1589 = vshrl.u32 %v1588, 7
    %v1590 = vsub.s32 %v1587, %v1589
    %v1591 = vrot.slane %v1583, %v1590
    %v1593 = vunpack.c.l.s4 1934713408
    %v1594 = vunpack.c.0.s8 %v1593
    %v1595 = vlaneseq
    %v1596 = vshrl.u32 %v1595, 7
    %v1597 = vsub.s32 %v1594, %v1596
    %v1598 = vrot.slane %v1584, %v1597
    %v1599 = vcombine.low %v1566, %v1582
    %v1600 = vcombine.high %v1566, %v1582
    %v1602 = vunpack.c.l.s4 1934713408
    %v1603 = vunpack.c.0.s8 %v1602
    %v1604 = vlaneseq
    %v1605 = vshrl.u32 %v1604, 7
    %v1606 = vsub.s32 %v1603, %v1605
    %v1607 = vrot.slane %v1599, %v1606
    %v1609 = vunpack.c.l.s4 1934713408
    %v1610 = vunpack.c.0.s8 %v1609
    %v1611 = vlaneseq
    %v1612 = vshrl.u32 %v1611, 7
    %v1613 = vsub.s32 %v1610, %v1612
    %v1614 = vrot.slane %v1600, %v1613
    %v1615 = vcombine.high %v1591, 0.0
    %v1616 = vcombine.high %v1598, 0.0
    %v1617 = vcombine.high %v1607, 0.0
    %v1618 = vcombine.high %v1614, 0.0
    %v1619 = vcombine.low %v1544, %v1548
    %v1620 = vcombine.high %v1544, %v1548
    %v1622 = vunpack.c.l.s4 1983009808
    %v1623 = vunpack.c.0.s8 %v1622
    %v1624 = vlaneseq
    %v1625 = vshrl.u32 %v1624, 7
    %v1626 = vsub.s32 %v1623, %v1625
    %v1627 = vrot.slane %v1619, %v1626
    %v1629 = vunpack.c.l.s4 1983009808
    %v1630 = vunpack.c.0.s8 %v1629
    %v1631 = vlaneseq
    %v1632 = vshrl.u32 %v1631, 7
    %v1633 = vsub.s32 %v1630, %v1632
    %v1634 = vrot.slane %v1620, %v1633
    %v1635 = vcombine.low %v1546, %v1550
    %v1636 = vcombine.high %v1546, %v1550
    %v1638 = vunpack.c.l.s4 1983009808
    %v1639 = vunpack.c.0.s8 %v1638
    %v1640 = vlaneseq
    %v1641 = vshrl.u32 %v1640, 7
    %v1642 = vsub.s32 %v1639, %v1641
    %v1643 = vrot.slane %v1635, %v1642
    %v1645 = vunpack.c.l.s4 1983009808
    %v1646 = vunpack.c.0.s8 %v1645
    %v1647 = vlaneseq
    %v1648 = vshrl.u32 %v1647, 7
    %v1649 = vsub.s32 %v1646, %v1648
    %v1650 = vrot.slane %v1636, %v1649
    %v1651 = vcombine.low %v1627, %v1643
    %v1652 = vcombine.high %v1627, %v1643
    %v1654 = vunpack.c.l.s4 1934713408
    %v1655 = vunpack.c.0.s8 %v1654
    %v1656 = vlaneseq
    %v1657 = vshrl.u32 %v1656, 7
    %v1658 = vsub.s32 %v1655, %v1657
    %v1659 = vrot.slane %v1651, %v1658
    %v1661 = vunpack.c.l.s4 1934713408
    %v1662 = vunpack.c.0.s8 %v1661
    %v1663 = vlaneseq
    %v1664 = vshrl.u32 %v1663, 7
    %v1665 = vsub.s32 %v1662, %v1664
    %v1666 = vrot.slane %v1652, %v1665
    %v1667 = vcombine.low %v1634, %v1650
    %v1668 = vcombine.high %v1634, %v1650
    %v1670 = vunpack.c.l.s4 1934713408
    %v1671 = vunpack.c.0.s8 %v1670
    %v1672 = vlaneseq
    %v1673 = vshrl.u32 %v1672, 7
    %v1674 = vsub.s32 %v1671, %v1673
    %v1675 = vrot.slane %v1667, %v1674
    %v1677 = vunpack.c.l.s4 1934713408
    %v1678 = vunpack.c.0.s8 %v1677
    %v1679 = vlaneseq
    %v1680 = vshrl.u32 %v1679, 7
    %v1681 = vsub.s32 %v1678, %v1680
    %v1682 = vrot.slane %v1668, %v1681
    %v1683 = vcombine.high %v1659, 0.0
    %v1684 = vcombine.high %v1666, 0.0
    %v1685 = vcombine.high %v1675, 0.0
    %v1686 = vcombine.high %v1682, 0.0
    %1688 = vrot.lane.b32.xlu0 %v1615, 16
    %v1689 = vpop.permute.xlu0 %1688
    %1692 = vrot.lane.b32.xlu0 %v1598, 32
    %v1693 = vpop.permute.xlu0 %1692
    %1696 = vrot.lane.b32.xlu0 %v1616, 48
    %v1697 = vpop.permute.xlu0 %1696
    %1700 = vrot.lane.b32.xlu0 %v1607, 64
    %v1701 = vpop.permute.xlu0 %1700
    %1704 = vrot.lane.b32.xlu0 %v1617, 80
    %v1705 = vpop.permute.xlu0 %1704
    %1708 = vrot.lane.b32.xlu0 %v1614, 96
    %v1709 = vpop.permute.xlu0 %1708
    %1712 = vrot.lane.b32.xlu0 %v1618, 112
    %v1713 = vpop.permute.xlu0 %1712
    %1716 = vrot.lane.b32.xlu0 %v1683, 16
    %v1717 = vpop.permute.xlu0 %1716
    %1720 = vrot.lane.b32.xlu0 %v1666, 32
    %v1721 = vpop.permute.xlu0 %1720
    %1724 = vrot.lane.b32.xlu0 %v1684, 48
    %v1725 = vpop.permute.xlu0 %1724
    %1728 = vrot.lane.b32.xlu0 %v1675, 64
    %v1729 = vpop.permute.xlu0 %1728
    %1732 = vrot.lane.b32.xlu0 %v1685, 80
    %v1733 = vpop.permute.xlu0 %1732
    %1736 = vrot.lane.b32.xlu0 %v1682, 96
    %v1737 = vpop.permute.xlu0 %1736
    %1740 = vrot.lane.b32.xlu0 %v1686, 112
    %v1741 = vpop.permute.xlu0 %1740
    %v1743 = vsel %vm372, %v1591, %v1689
    %v1744 = vsel %vm374, %v1743, %v1693
    %v1745 = vsel %vm376, %v1744, %v1697
    %v1746 = vsel %vm378, %v1745, %v1701
    %v1747 = vsel %vm380, %v1746, %v1705
    %v1748 = vsel %vm382, %v1747, %v1709
    %v1749 = vsel %vm384, %v1748, %v1713
    %v1750 = vsel %vm372, %v1659, %v1717
    %v1751 = vsel %vm374, %v1750, %v1721
    %v1752 = vsel %vm376, %v1751, %v1725
    %v1753 = vsel %vm378, %v1752, %v1729
    %v1754 = vsel %vm380, %v1753, %v1733
    %v1755 = vsel %vm382, %v1754, %v1737
    %v1756 = vsel %vm384, %v1755, %v1741
    %1765 = vrot.lane.b32.xlu0 %v1543, 127
    %v1766 = vpop.permute.xlu0 %1765
    %1767 = vrot.lane.b32.xlu0 %v1544, 127
    %v1768 = vpop.permute.xlu0 %1767
    %1769 = vrot.lane.b32.xlu0 %v1545, 127
    %v1770 = vpop.permute.xlu0 %1769
    %1771 = vrot.lane.b32.xlu0 %v1546, 127
    %v1772 = vpop.permute.xlu0 %1771
    %1773 = vrot.lane.b32.xlu0 %v1547, 127
    %v1774 = vpop.permute.xlu0 %1773
    %1775 = vrot.lane.b32.xlu0 %v1548, 127
    %v1776 = vpop.permute.xlu0 %1775
    %1777 = vrot.lane.b32.xlu0 %v1549, 127
    %v1778 = vpop.permute.xlu0 %1777
    %1779 = vrot.lane.b32.xlu0 %v1550, 127
    %v1780 = vpop.permute.xlu0 %1779
    %v1789 = vcombine.low %v1766, %v1774
    %v1790 = vcombine.high %v1766, %v1774
    %v1792 = vunpack.c.l.s4 1983009808
    %v1793 = vunpack.c.0.s8 %v1792
    %v1794 = vlaneseq
    %v1795 = vshrl.u32 %v1794, 7
    %v1796 = vsub.s32 %v1793, %v1795
    %v1797 = vrot.slane %v1789, %v1796
    %v1799 = vunpack.c.l.s4 1983009808
    %v1800 = vunpack.c.0.s8 %v1799
    %v1801 = vlaneseq
    %v1802 = vshrl.u32 %v1801, 7
    %v1803 = vsub.s32 %v1800, %v1802
    %v1804 = vrot.slane %v1790, %v1803
    %v1805 = vcombine.low %v1770, %v1778
    %v1806 = vcombine.high %v1770, %v1778
    %v1808 = vunpack.c.l.s4 1983009808
    %v1809 = vunpack.c.0.s8 %v1808
    %v1810 = vlaneseq
    %v1811 = vshrl.u32 %v1810, 7
    %v1812 = vsub.s32 %v1809, %v1811
    %v1813 = vrot.slane %v1805, %v1812
    %v1815 = vunpack.c.l.s4 1983009808
    %v1816 = vunpack.c.0.s8 %v1815
    %v1817 = vlaneseq
    %v1818 = vshrl.u32 %v1817, 7
    %v1819 = vsub.s32 %v1816, %v1818
    %v1820 = vrot.slane %v1806, %v1819
    %v1821 = vcombine.low %v1797, %v1813
    %v1822 = vcombine.high %v1797, %v1813
    %v1824 = vunpack.c.l.s4 1934713408
    %v1825 = vunpack.c.0.s8 %v1824
    %v1826 = vlaneseq
    %v1827 = vshrl.u32 %v1826, 7
    %v1828 = vsub.s32 %v1825, %v1827
    %v1829 = vrot.slane %v1821, %v1828
    %v1831 = vunpack.c.l.s4 1934713408
    %v1832 = vunpack.c.0.s8 %v1831
    %v1833 = vlaneseq
    %v1834 = vshrl.u32 %v1833, 7
    %v1835 = vsub.s32 %v1832, %v1834
    %v1836 = vrot.slane %v1822, %v1835
    %v1837 = vcombine.low %v1804, %v1820
    %v1838 = vcombine.high %v1804, %v1820
    %v1840 = vunpack.c.l.s4 1934713408
    %v1841 = vunpack.c.0.s8 %v1840
    %v1842 = vlaneseq
    %v1843 = vshrl.u32 %v1842, 7
    %v1844 = vsub.s32 %v1841, %v1843
    %v1845 = vrot.slane %v1837, %v1844
    %v1847 = vunpack.c.l.s4 1934713408
    %v1848 = vunpack.c.0.s8 %v1847
    %v1849 = vlaneseq
    %v1850 = vshrl.u32 %v1849, 7
    %v1851 = vsub.s32 %v1848, %v1850
    %v1852 = vrot.slane %v1838, %v1851
    %v1853 = vcombine.high %v1829, 0.0
    %v1854 = vcombine.high %v1836, 0.0
    %v1855 = vcombine.high %v1845, 0.0
    %v1856 = vcombine.high %v1852, 0.0
    %v1857 = vcombine.low %v1768, %v1776
    %v1858 = vcombine.high %v1768, %v1776
    %v1860 = vunpack.c.l.s4 1983009808
    %v1861 = vunpack.c.0.s8 %v1860
    %v1862 = vlaneseq
    %v1863 = vshrl.u32 %v1862, 7
    %v1864 = vsub.s32 %v1861, %v1863
    %v1865 = vrot.slane %v1857, %v1864
    %v1867 = vunpack.c.l.s4 1983009808
    %v1868 = vunpack.c.0.s8 %v1867
    %v1869 = vlaneseq
    %v1870 = vshrl.u32 %v1869, 7
    %v1871 = vsub.s32 %v1868, %v1870
    %v1872 = vrot.slane %v1858, %v1871
    %v1873 = vcombine.low %v1772, %v1780
    %v1874 = vcombine.high %v1772, %v1780
    %v1876 = vunpack.c.l.s4 1983009808
    %v1877 = vunpack.c.0.s8 %v1876
    %v1878 = vlaneseq
    %v1879 = vshrl.u32 %v1878, 7
    %v1880 = vsub.s32 %v1877, %v1879
    %v1881 = vrot.slane %v1873, %v1880
    %v1883 = vunpack.c.l.s4 1983009808
    %v1884 = vunpack.c.0.s8 %v1883
    %v1885 = vlaneseq
    %v1886 = vshrl.u32 %v1885, 7
    %v1887 = vsub.s32 %v1884, %v1886
    %v1888 = vrot.slane %v1874, %v1887
    %v1889 = vcombine.low %v1865, %v1881
    %v1890 = vcombine.high %v1865, %v1881
    %v1892 = vunpack.c.l.s4 1934713408
    %v1893 = vunpack.c.0.s8 %v1892
    %v1894 = vlaneseq
    %v1895 = vshrl.u32 %v1894, 7
    %v1896 = vsub.s32 %v1893, %v1895
    %v1897 = vrot.slane %v1889, %v1896
    %v1899 = vunpack.c.l.s4 1934713408
    %v1900 = vunpack.c.0.s8 %v1899
    %v1901 = vlaneseq
    %v1902 = vshrl.u32 %v1901, 7
    %v1903 = vsub.s32 %v1900, %v1902
    %v1904 = vrot.slane %v1890, %v1903
    %v1905 = vcombine.low %v1872, %v1888
    %v1906 = vcombine.high %v1872, %v1888
    %v1908 = vunpack.c.l.s4 1934713408
    %v1909 = vunpack.c.0.s8 %v1908
    %v1910 = vlaneseq
    %v1911 = vshrl.u32 %v1910, 7
    %v1912 = vsub.s32 %v1909, %v1911
    %v1913 = vrot.slane %v1905, %v1912
    %v1915 = vunpack.c.l.s4 1934713408
    %v1916 = vunpack.c.0.s8 %v1915
    %v1917 = vlaneseq
    %v1918 = vshrl.u32 %v1917, 7
    %v1919 = vsub.s32 %v1916, %v1918
    %v1920 = vrot.slane %v1906, %v1919
    %v1921 = vcombine.high %v1897, 0.0
    %v1922 = vcombine.high %v1904, 0.0
    %v1923 = vcombine.high %v1913, 0.0
    %v1924 = vcombine.high %v1920, 0.0
    %1926 = vrot.lane.b32.xlu0 %v1853, 16
    %v1927 = vpop.permute.xlu0 %1926
    %1930 = vrot.lane.b32.xlu0 %v1836, 32
    %v1931 = vpop.permute.xlu0 %1930
    %1934 = vrot.lane.b32.xlu0 %v1854, 48
    %v1935 = vpop.permute.xlu0 %1934
    %1938 = vrot.lane.b32.xlu0 %v1845, 64
    %v1939 = vpop.permute.xlu0 %1938
    %1942 = vrot.lane.b32.xlu0 %v1855, 80
    %v1943 = vpop.permute.xlu0 %1942
    %1946 = vrot.lane.b32.xlu0 %v1852, 96
    %v1947 = vpop.permute.xlu0 %1946
    %1950 = vrot.lane.b32.xlu0 %v1856, 112
    %v1951 = vpop.permute.xlu0 %1950
    %1954 = vrot.lane.b32.xlu0 %v1921, 16
    %v1955 = vpop.permute.xlu0 %1954
    %1958 = vrot.lane.b32.xlu0 %v1904, 32
    %v1959 = vpop.permute.xlu0 %1958
    %1962 = vrot.lane.b32.xlu0 %v1922, 48
    %v1963 = vpop.permute.xlu0 %1962
    %1966 = vrot.lane.b32.xlu0 %v1913, 64
    %v1967 = vpop.permute.xlu0 %1966
    %1970 = vrot.lane.b32.xlu0 %v1923, 80
    %v1971 = vpop.permute.xlu0 %1970
    %1974 = vrot.lane.b32.xlu0 %v1920, 96
    %v1975 = vpop.permute.xlu0 %1974
    %1978 = vrot.lane.b32.xlu0 %v1924, 112
    %v1979 = vpop.permute.xlu0 %1978
    %v1981 = vsel %vm372, %v1829, %v1927
    %v1982 = vsel %vm374, %v1981, %v1931
    %v1983 = vsel %vm376, %v1982, %v1935
    %v1984 = vsel %vm378, %v1983, %v1939
    %v1985 = vsel %vm380, %v1984, %v1943
    %v1986 = vsel %vm382, %v1985, %v1947
    %v1987 = vsel %vm384, %v1986, %v1951
    %v1988 = vsel %vm372, %v1897, %v1955
    %v1989 = vsel %vm374, %v1988, %v1959
    %v1990 = vsel %vm376, %v1989, %v1963
    %v1991 = vsel %vm378, %v1990, %v1967
    %v1992 = vsel %vm380, %v1991, %v1971
    %v1993 = vsel %vm382, %v1992, %v1975
    %v1994 = vsel %vm384, %v1993, %v1979
    %1995 = vrot.lane.b32.xlu0 %v1543, 126
    %v1996 = vpop.permute.xlu0 %1995
    %1997 = vrot.lane.b32.xlu0 %v1544, 126
    %v1998 = vpop.permute.xlu0 %1997
    %1999 = vrot.lane.b32.xlu0 %v1545, 126
    %v2000 = vpop.permute.xlu0 %1999
    %2001 = vrot.lane.b32.xlu0 %v1546, 126
    %v2002 = vpop.permute.xlu0 %2001
    %2003 = vrot.lane.b32.xlu0 %v1547, 126
    %v2004 = vpop.permute.xlu0 %2003
    %2005 = vrot.lane.b32.xlu0 %v1548, 126
    %v2006 = vpop.permute.xlu0 %2005
    %2007 = vrot.lane.b32.xlu0 %v1549, 126
    %v2008 = vpop.permute.xlu0 %2007
    %2009 = vrot.lane.b32.xlu0 %v1550, 126
    %v2010 = vpop.permute.xlu0 %2009
    %v2019 = vcombine.low %v1996, %v2004
    %v2020 = vcombine.high %v1996, %v2004
    %v2022 = vunpack.c.l.s4 1983009808
    %v2023 = vunpack.c.0.s8 %v2022
    %v2024 = vlaneseq
    %v2025 = vshrl.u32 %v2024, 7
    %v2026 = vsub.s32 %v2023, %v2025
    %v2027 = vrot.slane %v2019, %v2026
    %v2029 = vunpack.c.l.s4 1983009808
    %v2030 = vunpack.c.0.s8 %v2029
    %v2031 = vlaneseq
    %v2032 = vshrl.u32 %v2031, 7
    %v2033 = vsub.s32 %v2030, %v2032
    %v2034 = vrot.slane %v2020, %v2033
    %v2035 = vcombine.low %v2000, %v2008
    %v2036 = vcombine.high %v2000, %v2008
    %v2038 = vunpack.c.l.s4 1983009808
    %v2039 = vunpack.c.0.s8 %v2038
    %v2040 = vlaneseq
    %v2041 = vshrl.u32 %v2040, 7
    %v2042 = vsub.s32 %v2039, %v2041
    %v2043 = vrot.slane %v2035, %v2042
    %v2045 = vunpack.c.l.s4 1983009808
    %v2046 = vunpack.c.0.s8 %v2045
    %v2047 = vlaneseq
    %v2048 = vshrl.u32 %v2047, 7
    %v2049 = vsub.s32 %v2046, %v2048
    %v2050 = vrot.slane %v2036, %v2049
    %v2051 = vcombine.low %v2027, %v2043
    %v2052 = vcombine.high %v2027, %v2043
    %v2054 = vunpack.c.l.s4 1934713408
    %v2055 = vunpack.c.0.s8 %v2054
    %v2056 = vlaneseq
    %v2057 = vshrl.u32 %v2056, 7
    %v2058 = vsub.s32 %v2055, %v2057
    %v2059 = vrot.slane %v2051, %v2058
    %v2061 = vunpack.c.l.s4 1934713408
    %v2062 = vunpack.c.0.s8 %v2061
    %v2063 = vlaneseq
    %v2064 = vshrl.u32 %v2063, 7
    %v2065 = vsub.s32 %v2062, %v2064
    %v2066 = vrot.slane %v2052, %v2065
    %v2067 = vcombine.low %v2034, %v2050
    %v2068 = vcombine.high %v2034, %v2050
    %v2070 = vunpack.c.l.s4 1934713408
    %v2071 = vunpack.c.0.s8 %v2070
    %v2072 = vlaneseq
    %v2073 = vshrl.u32 %v2072, 7
    %v2074 = vsub.s32 %v2071, %v2073
    %v2075 = vrot.slane %v2067, %v2074
    %v2077 = vunpack.c.l.s4 1934713408
    %v2078 = vunpack.c.0.s8 %v2077
    %v2079 = vlaneseq
    %v2080 = vshrl.u32 %v2079, 7
    %v2081 = vsub.s32 %v2078, %v2080
    %v2082 = vrot.slane %v2068, %v2081
    %v2083 = vcombine.high %v2059, 0.0
    %v2084 = vcombine.high %v2066, 0.0
    %v2085 = vcombine.high %v2075, 0.0
    %v2086 = vcombine.high %v2082, 0.0
    %v2087 = vcombine.low %v1998, %v2006
    %v2088 = vcombine.high %v1998, %v2006
    %v2090 = vunpack.c.l.s4 1983009808
    %v2091 = vunpack.c.0.s8 %v2090
    %v2092 = vlaneseq
    %v2093 = vshrl.u32 %v2092, 7
    %v2094 = vsub.s32 %v2091, %v2093
    %v2095 = vrot.slane %v2087, %v2094
    %v2097 = vunpack.c.l.s4 1983009808
    %v2098 = vunpack.c.0.s8 %v2097
    %v2099 = vlaneseq
    %v2100 = vshrl.u32 %v2099, 7
    %v2101 = vsub.s32 %v2098, %v2100
    %v2102 = vrot.slane %v2088, %v2101
    %v2103 = vcombine.low %v2002, %v2010
    %v2104 = vcombine.high %v2002, %v2010
    %v2106 = vunpack.c.l.s4 1983009808
    %v2107 = vunpack.c.0.s8 %v2106
    %v2108 = vlaneseq
    %v2109 = vshrl.u32 %v2108, 7
    %v2110 = vsub.s32 %v2107, %v2109
    %v2111 = vrot.slane %v2103, %v2110
    %v2113 = vunpack.c.l.s4 1983009808
    %v2114 = vunpack.c.0.s8 %v2113
    %v2115 = vlaneseq
    %v2116 = vshrl.u32 %v2115, 7
    %v2117 = vsub.s32 %v2114, %v2116
    %v2118 = vrot.slane %v2104, %v2117
    %v2119 = vcombine.low %v2095, %v2111
    %v2120 = vcombine.high %v2095, %v2111
    %v2122 = vunpack.c.l.s4 1934713408
    %v2123 = vunpack.c.0.s8 %v2122
    %v2124 = vlaneseq
    %v2125 = vshrl.u32 %v2124, 7
    %v2126 = vsub.s32 %v2123, %v2125
    %v2127 = vrot.slane %v2119, %v2126
    %v2129 = vunpack.c.l.s4 1934713408
    %v2130 = vunpack.c.0.s8 %v2129
    %v2131 = vlaneseq
    %v2132 = vshrl.u32 %v2131, 7
    %v2133 = vsub.s32 %v2130, %v2132
    %v2134 = vrot.slane %v2120, %v2133
    %v2135 = vcombine.low %v2102, %v2118
    %v2136 = vcombine.high %v2102, %v2118
    %v2138 = vunpack.c.l.s4 1934713408
    %v2139 = vunpack.c.0.s8 %v2138
    %v2140 = vlaneseq
    %v2141 = vshrl.u32 %v2140, 7
    %v2142 = vsub.s32 %v2139, %v2141
    %v2143 = vrot.slane %v2135, %v2142
    %v2145 = vunpack.c.l.s4 1934713408
    %v2146 = vunpack.c.0.s8 %v2145
    %v2147 = vlaneseq
    %v2148 = vshrl.u32 %v2147, 7
    %v2149 = vsub.s32 %v2146, %v2148
    %v2150 = vrot.slane %v2136, %v2149
    %v2151 = vcombine.high %v2127, 0.0
    %v2152 = vcombine.high %v2134, 0.0
    %v2153 = vcombine.high %v2143, 0.0
    %v2154 = vcombine.high %v2150, 0.0
    %2156 = vrot.lane.b32.xlu0 %v2083, 16
    %v2157 = vpop.permute.xlu0 %2156
    %2160 = vrot.lane.b32.xlu0 %v2066, 32
    %v2161 = vpop.permute.xlu0 %2160
    %2164 = vrot.lane.b32.xlu0 %v2084, 48
    %v2165 = vpop.permute.xlu0 %2164
    %2168 = vrot.lane.b32.xlu0 %v2075, 64
    %v2169 = vpop.permute.xlu0 %2168
    %2172 = vrot.lane.b32.xlu0 %v2085, 80
    %v2173 = vpop.permute.xlu0 %2172
    %2176 = vrot.lane.b32.xlu0 %v2082, 96
    %v2177 = vpop.permute.xlu0 %2176
    %2180 = vrot.lane.b32.xlu0 %v2086, 112
    %v2181 = vpop.permute.xlu0 %2180
    %2184 = vrot.lane.b32.xlu0 %v2151, 16
    %v2185 = vpop.permute.xlu0 %2184
    %2188 = vrot.lane.b32.xlu0 %v2134, 32
    %v2189 = vpop.permute.xlu0 %2188
    %2192 = vrot.lane.b32.xlu0 %v2152, 48
    %v2193 = vpop.permute.xlu0 %2192
    %2196 = vrot.lane.b32.xlu0 %v2143, 64
    %v2197 = vpop.permute.xlu0 %2196
    %2200 = vrot.lane.b32.xlu0 %v2153, 80
    %v2201 = vpop.permute.xlu0 %2200
    %2204 = vrot.lane.b32.xlu0 %v2150, 96
    %v2205 = vpop.permute.xlu0 %2204
    %2208 = vrot.lane.b32.xlu0 %v2154, 112
    %v2209 = vpop.permute.xlu0 %2208
    %v2211 = vsel %vm372, %v2059, %v2157
    %v2212 = vsel %vm374, %v2211, %v2161
    %v2213 = vsel %vm376, %v2212, %v2165
    %v2214 = vsel %vm378, %v2213, %v2169
    %v2215 = vsel %vm380, %v2214, %v2173
    %v2216 = vsel %vm382, %v2215, %v2177
    %v2217 = vsel %vm384, %v2216, %v2181
    %v2218 = vsel %vm372, %v2127, %v2185
    %v2219 = vsel %vm374, %v2218, %v2189
    %v2220 = vsel %vm376, %v2219, %v2193
    %v2221 = vsel %vm378, %v2220, %v2197
    %v2222 = vsel %vm380, %v2221, %v2201
    %v2223 = vsel %vm382, %v2222, %v2205
    %v2224 = vsel %vm384, %v2223, %v2209
    %v2227 = vrot.slane %v623, 4
    %v2228 = vrot.slane %v630, 4
    %v2233 = vrot.slane %v1067, 4
    %v2234 = vrot.slane %v1074, 4
    %v2239 = vrot.slane %v1535, 4
    %v2240 = vrot.slane %v1542, 4
    %v2245 = vrot.slane %v1987, 4
    %v2246 = vrot.slane %v1994, 4
    %vm2249 = vcmask 1043456
    %v2250 = vsel %vm2249, %v385, %v2227
    %v2251 = vsel %vm2249, %v392, %v2228
    %v2252 = vsel %vm2249, %v853, %v2233
    %v2253 = vsel %vm2249, %v860, %v2234
    %v2254 = vsel %vm2249, %v1305, %v2239
    %v2255 = vsel %vm2249, %v1312, %v2240
    %v2256 = vsel %vm2249, %v1749, %v2245
    %v2257 = vsel %vm2249, %v1756, %v2246
    %s2258 = scalar_lea.vmem [#allocation2], 96
    %v2259 = vld [vmem:[%s2258] sm:$0xff]
    %v2260 = vld [vmem:[%s2258 + $0x8] sm:$0xff]
    %v2261 = vld [vmem:[%s2258 + $0x18] sm:$0xff]
    %v2262 = vld [vmem:[%s2258 + $0x20] sm:$0xff]
    %v2263 = vld [vmem:[%s2258 + $0x30] sm:$0xff]
    %v2264 = vld [vmem:[%s2258 + $0x38] sm:$0xff]
    %v2265 = vld [vmem:[%s2258 + $0x48] sm:$0xff]
    %v2266 = vld [vmem:[%s2258 + $0x50] sm:$0xff]
    %v2267 = vcombine.low %v2259, %v2263
    %v2268 = vcombine.high %v2259, %v2263
    %v2270 = vunpack.c.l.s4 1983009808
    %v2271 = vunpack.c.0.s8 %v2270
    %v2272 = vlaneseq
    %v2273 = vshrl.u32 %v2272, 7
    %v2274 = vsub.s32 %v2271, %v2273
    %v2275 = vrot.slane %v2267, %v2274
    %v2277 = vunpack.c.l.s4 1983009808
    %v2278 = vunpack.c.0.s8 %v2277
    %v2279 = vlaneseq
    %v2280 = vshrl.u32 %v2279, 7
    %v2281 = vsub.s32 %v2278, %v2280
    %v2282 = vrot.slane %v2268, %v2281
    %v2283 = vcombine.low %v2261, %v2265
    %v2284 = vcombine.high %v2261, %v2265
    %v2286 = vunpack.c.l.s4 1983009808
    %v2287 = vunpack.c.0.s8 %v2286
    %v2288 = vlaneseq
    %v2289 = vshrl.u32 %v2288, 7
    %v2290 = vsub.s32 %v2287, %v2289
    %v2291 = vrot.slane %v2283, %v2290
    %v2293 = vunpack.c.l.s4 1983009808
    %v2294 = vunpack.c.0.s8 %v2293
    %v2295 = vlaneseq
    %v2296 = vshrl.u32 %v2295, 7
    %v2297 = vsub.s32 %v2294, %v2296
    %v2298 = vrot.slane %v2284, %v2297
    %v2299 = vcombine.low %v2275, %v2291
    %v2300 = vcombine.high %v2275, %v2291
    %v2302 = vunpack.c.l.s4 1934713408
    %v2303 = vunpack.c.0.s8 %v2302
    %v2304 = vlaneseq
    %v2305 = vshrl.u32 %v2304, 7
    %v2306 = vsub.s32 %v2303, %v2305
    %v2307 = vrot.slane %v2299, %v2306
    %v2309 = vunpack.c.l.s4 1934713408
    %v2310 = vunpack.c.0.s8 %v2309
    %v2311 = vlaneseq
    %v2312 = vshrl.u32 %v2311, 7
    %v2313 = vsub.s32 %v2310, %v2312
    %v2314 = vrot.slane %v2300, %v2313
    %v2315 = vcombine.low %v2282, %v2298
    %v2316 = vcombine.high %v2282, %v2298
    %v2318 = vunpack.c.l.s4 1934713408
    %v2319 = vunpack.c.0.s8 %v2318
    %v2320 = vlaneseq
    %v2321 = vshrl.u32 %v2320, 7
    %v2322 = vsub.s32 %v2319, %v2321
    %v2323 = vrot.slane %v2315, %v2322
    %v2325 = vunpack.c.l.s4 1934713408
    %v2326 = vunpack.c.0.s8 %v2325
    %v2327 = vlaneseq
    %v2328 = vshrl.u32 %v2327, 7
    %v2329 = vsub.s32 %v2326, %v2328
    %v2330 = vrot.slane %v2316, %v2329
    %v2331 = vcombine.high %v2307, 0.0
    %v2332 = vcombine.high %v2314, 0.0
    %v2333 = vcombine.high %v2323, 0.0
    %v2334 = vcombine.high %v2330, 0.0
    %v2335 = vcombine.low %v2260, %v2264
    %v2336 = vcombine.high %v2260, %v2264
    %v2338 = vunpack.c.l.s4 1983009808
    %v2339 = vunpack.c.0.s8 %v2338
    %v2340 = vlaneseq
    %v2341 = vshrl.u32 %v2340, 7
    %v2342 = vsub.s32 %v2339, %v2341
    %v2343 = vrot.slane %v2335, %v2342
    %v2345 = vunpack.c.l.s4 1983009808
    %v2346 = vunpack.c.0.s8 %v2345
    %v2347 = vlaneseq
    %v2348 = vshrl.u32 %v2347, 7
    %v2349 = vsub.s32 %v2346, %v2348
    %v2350 = vrot.slane %v2336, %v2349
    %v2351 = vcombine.low %v2262, %v2266
    %v2352 = vcombine.high %v2262, %v2266
    %v2354 = vunpack.c.l.s4 1983009808
    %v2355 = vunpack.c.0.s8 %v2354
    %v2356 = vlaneseq
    %v2357 = vshrl.u32 %v2356, 7
    %v2358 = vsub.s32 %v2355, %v2357
    %v2359 = vrot.slane %v2351, %v2358
    %v2361 = vunpack.c.l.s4 1983009808
    %v2362 = vunpack.c.0.s8 %v2361
    %v2363 = vlaneseq
    %v2364 = vshrl.u32 %v2363, 7
    %v2365 = vsub.s32 %v2362, %v2364
    %v2366 = vrot.slane %v2352, %v2365
    %v2367 = vcombine.low %v2343, %v2359
    %v2368 = vcombine.high %v2343, %v2359
    %v2370 = vunpack.c.l.s4 1934713408
    %v2371 = vunpack.c.0.s8 %v2370
    %v2372 = vlaneseq
    %v2373 = vshrl.u32 %v2372, 7
    %v2374 = vsub.s32 %v2371, %v2373
    %v2375 = vrot.slane %v2367, %v2374
    %v2377 = vunpack.c.l.s4 1934713408
    %v2378 = vunpack.c.0.s8 %v2377
    %v2379 = vlaneseq
    %v2380 = vshrl.u32 %v2379, 7
    %v2381 = vsub.s32 %v2378, %v2380
    %v2382 = vrot.slane %v2368, %v2381
    %v2383 = vcombine.low %v2350, %v2366
    %v2384 = vcombine.high %v2350, %v2366
    %v2386 = vunpack.c.l.s4 1934713408
    %v2387 = vunpack.c.0.s8 %v2386
    %v2388 = vlaneseq
    %v2389 = vshrl.u32 %v2388, 7
    %v2390 = vsub.s32 %v2387, %v2389
    %v2391 = vrot.slane %v2383, %v2390
    %v2393 = vunpack.c.l.s4 1934713408
    %v2394 = vunpack.c.0.s8 %v2393
    %v2395 = vlaneseq
    %v2396 = vshrl.u32 %v2395, 7
    %v2397 = vsub.s32 %v2394, %v2396
    %v2398 = vrot.slane %v2384, %v2397
    %v2399 = vcombine.high %v2375, 0.0
    %v2400 = vcombine.high %v2382, 0.0
    %v2401 = vcombine.high %v2391, 0.0
    %v2402 = vcombine.high %v2398, 0.0
    %2404 = vrot.lane.b32.xlu0 %v2331, 16
    %v2405 = vpop.permute.xlu0 %2404
    %2408 = vrot.lane.b32.xlu0 %v2314, 32
    %v2409 = vpop.permute.xlu0 %2408
    %2412 = vrot.lane.b32.xlu0 %v2332, 48
    %v2413 = vpop.permute.xlu0 %2412
    %2416 = vrot.lane.b32.xlu0 %v2323, 64
    %v2417 = vpop.permute.xlu0 %2416
    %2420 = vrot.lane.b32.xlu0 %v2333, 80
    %v2421 = vpop.permute.xlu0 %2420
    %2424 = vrot.lane.b32.xlu0 %v2330, 96
    %v2425 = vpop.permute.xlu0 %2424
    %2428 = vrot.lane.b32.xlu0 %v2334, 112
    %v2429 = vpop.permute.xlu0 %2428
    %2432 = vrot.lane.b32.xlu0 %v2399, 16
    %v2433 = vpop.permute.xlu0 %2432
    %2436 = vrot.lane.b32.xlu0 %v2382, 32
    %v2437 = vpop.permute.xlu0 %2436
    %2440 = vrot.lane.b32.xlu0 %v2400, 48
    %v2441 = vpop.permute.xlu0 %2440
    %2444 = vrot.lane.b32.xlu0 %v2391, 64
    %v2445 = vpop.permute.xlu0 %2444
    %2448 = vrot.lane.b32.xlu0 %v2401, 80
    %v2449 = vpop.permute.xlu0 %2448
    %2452 = vrot.lane.b32.xlu0 %v2398, 96
    %v2453 = vpop.permute.xlu0 %2452
    %2456 = vrot.lane.b32.xlu0 %v2402, 112
    %v2457 = vpop.permute.xlu0 %2456
    %v2459 = vsel %vm372, %v2307, %v2405
    %v2460 = vsel %vm374, %v2459, %v2409
    %v2461 = vsel %vm376, %v2460, %v2413
    %v2462 = vsel %vm378, %v2461, %v2417
    %v2463 = vsel %vm380, %v2462, %v2421
    %v2464 = vsel %vm382, %v2463, %v2425
    %v2465 = vsel %vm384, %v2464, %v2429
    %v2466 = vsel %vm372, %v2375, %v2433
    %v2467 = vsel %vm374, %v2466, %v2437
    %v2468 = vsel %vm376, %v2467, %v2441
    %v2469 = vsel %vm378, %v2468, %v2445
    %v2470 = vsel %vm380, %v2469, %v2449
    %v2471 = vsel %vm382, %v2470, %v2453
    %v2472 = vsel %vm384, %v2471, %v2457
    %2481 = vrot.lane.b32.xlu0 %v2259, 127
    %v2482 = vpop.permute.xlu0 %2481
    %2483 = vrot.lane.b32.xlu0 %v2260, 127
    %v2484 = vpop.permute.xlu0 %2483
    %2485 = vrot.lane.b32.xlu0 %v2261, 127
    %v2486 = vpop.permute.xlu0 %2485
    %2487 = vrot.lane.b32.xlu0 %v2262, 127
    %v2488 = vpop.permute.xlu0 %2487
    %2489 = vrot.lane.b32.xlu0 %v2263, 127
    %v2490 = vpop.permute.xlu0 %2489
    %2491 = vrot.lane.b32.xlu0 %v2264, 127
    %v2492 = vpop.permute.xlu0 %2491
    %2493 = vrot.lane.b32.xlu0 %v2265, 127
    %v2494 = vpop.permute.xlu0 %2493
    %2495 = vrot.lane.b32.xlu0 %v2266, 127
    %v2496 = vpop.permute.xlu0 %2495
    %v2505 = vcombine.low %v2482, %v2490
    %v2506 = vcombine.high %v2482, %v2490
    %v2508 = vunpack.c.l.s4 1983009808
    %v2509 = vunpack.c.0.s8 %v2508
    %v2510 = vlaneseq
    %v2511 = vshrl.u32 %v2510, 7
    %v2512 = vsub.s32 %v2509, %v2511
    %v2513 = vrot.slane %v2505, %v2512
    %v2515 = vunpack.c.l.s4 1983009808
    %v2516 = vunpack.c.0.s8 %v2515
    %v2517 = vlaneseq
    %v2518 = vshrl.u32 %v2517, 7
    %v2519 = vsub.s32 %v2516, %v2518
    %v2520 = vrot.slane %v2506, %v2519
    %v2521 = vcombine.low %v2486, %v2494
    %v2522 = vcombine.high %v2486, %v2494
    %v2524 = vunpack.c.l.s4 1983009808
    %v2525 = vunpack.c.0.s8 %v2524
    %v2526 = vlaneseq
    %v2527 = vshrl.u32 %v2526, 7
    %v2528 = vsub.s32 %v2525, %v2527
    %v2529 = vrot.slane %v2521, %v2528
    %v2531 = vunpack.c.l.s4 1983009808
    %v2532 = vunpack.c.0.s8 %v2531
    %v2533 = vlaneseq
    %v2534 = vshrl.u32 %v2533, 7
    %v2535 = vsub.s32 %v2532, %v2534
    %v2536 = vrot.slane %v2522, %v2535
    %v2537 = vcombine.low %v2513, %v2529
    %v2538 = vcombine.high %v2513, %v2529
    %v2540 = vunpack.c.l.s4 1934713408
    %v2541 = vunpack.c.0.s8 %v2540
    %v2542 = vlaneseq
    %v2543 = vshrl.u32 %v2542, 7
    %v2544 = vsub.s32 %v2541, %v2543
    %v2545 = vrot.slane %v2537, %v2544
    %v2547 = vunpack.c.l.s4 1934713408
    %v2548 = vunpack.c.0.s8 %v2547
    %v2549 = vlaneseq
    %v2550 = vshrl.u32 %v2549, 7
    %v2551 = vsub.s32 %v2548, %v2550
    %v2552 = vrot.slane %v2538, %v2551
    %v2553 = vcombine.low %v2520, %v2536
    %v2554 = vcombine.high %v2520, %v2536
    %v2556 = vunpack.c.l.s4 1934713408
    %v2557 = vunpack.c.0.s8 %v2556
    %v2558 = vlaneseq
    %v2559 = vshrl.u32 %v2558, 7
    %v2560 = vsub.s32 %v2557, %v2559
    %v2561 = vrot.slane %v2553, %v2560
    %v2563 = vunpack.c.l.s4 1934713408
    %v2564 = vunpack.c.0.s8 %v2563
    %v2565 = vlaneseq
    %v2566 = vshrl.u32 %v2565, 7
    %v2567 = vsub.s32 %v2564, %v2566
    %v2568 = vrot.slane %v2554, %v2567
    %v2569 = vcombine.high %v2545, 0.0
    %v2570 = vcombine.high %v2552, 0.0
    %v2571 = vcombine.high %v2561, 0.0
    %v2572 = vcombine.high %v2568, 0.0
    %v2573 = vcombine.low %v2484, %v2492
    %v2574 = vcombine.high %v2484, %v2492
    %v2576 = vunpack.c.l.s4 1983009808
    %v2577 = vunpack.c.0.s8 %v2576
    %v2578 = vlaneseq
    %v2579 = vshrl.u32 %v2578, 7
    %v2580 = vsub.s32 %v2577, %v2579
    %v2581 = vrot.slane %v2573, %v2580
    %v2583 = vunpack.c.l.s4 1983009808
    %v2584 = vunpack.c.0.s8 %v2583
    %v2585 = vlaneseq
    %v2586 = vshrl.u32 %v2585, 7
    %v2587 = vsub.s32 %v2584, %v2586
    %v2588 = vrot.slane %v2574, %v2587
    %v2589 = vcombine.low %v2488, %v2496
    %v2590 = vcombine.high %v2488, %v2496
    %v2592 = vunpack.c.l.s4 1983009808
    %v2593 = vunpack.c.0.s8 %v2592
    %v2594 = vlaneseq
    %v2595 = vshrl.u32 %v2594, 7
    %v2596 = vsub.s32 %v2593, %v2595
    %v2597 = vrot.slane %v2589, %v2596
    %v2599 = vunpack.c.l.s4 1983009808
    %v2600 = vunpack.c.0.s8 %v2599
    %v2601 = vlaneseq
    %v2602 = vshrl.u32 %v2601, 7
    %v2603 = vsub.s32 %v2600, %v2602
    %v2604 = vrot.slane %v2590, %v2603
    %v2605 = vcombine.low %v2581, %v2597
    %v2606 = vcombine.high %v2581, %v2597
    %v2608 = vunpack.c.l.s4 1934713408
    %v2609 = vunpack.c.0.s8 %v2608
    %v2610 = vlaneseq
    %v2611 = vshrl.u32 %v2610, 7
    %v2612 = vsub.s32 %v2609, %v2611
    %v2613 = vrot.slane %v2605, %v2612
    %v2615 = vunpack.c.l.s4 1934713408
    %v2616 = vunpack.c.0.s8 %v2615
    %v2617 = vlaneseq
    %v2618 = vshrl.u32 %v2617, 7
    %v2619 = vsub.s32 %v2616, %v2618
    %v2620 = vrot.slane %v2606, %v2619
    %v2621 = vcombine.low %v2588, %v2604
    %v2622 = vcombine.high %v2588, %v2604
    %v2624 = vunpack.c.l.s4 1934713408
    %v2625 = vunpack.c.0.s8 %v2624
    %v2626 = vlaneseq
    %v2627 = vshrl.u32 %v2626, 7
    %v2628 = vsub.s32 %v2625, %v2627
    %v2629 = vrot.slane %v2621, %v2628
    %v2631 = vunpack.c.l.s4 1934713408
    %v2632 = vunpack.c.0.s8 %v2631
    %v2633 = vlaneseq
    %v2634 = vshrl.u32 %v2633, 7
    %v2635 = vsub.s32 %v2632, %v2634
    %v2636 = vrot.slane %v2622, %v2635
    %v2637 = vcombine.high %v2613, 0.0
    %v2638 = vcombine.high %v2620, 0.0
    %v2639 = vcombine.high %v2629, 0.0
    %v2640 = vcombine.high %v2636, 0.0
    %2642 = vrot.lane.b32.xlu0 %v2569, 16
    %v2643 = vpop.permute.xlu0 %2642
    %2646 = vrot.lane.b32.xlu0 %v2552, 32
    %v2647 = vpop.permute.xlu0 %2646
    %2650 = vrot.lane.b32.xlu0 %v2570, 48
    %v2651 = vpop.permute.xlu0 %2650
    %2654 = vrot.lane.b32.xlu0 %v2561, 64
    %v2655 = vpop.permute.xlu0 %2654
    %2658 = vrot.lane.b32.xlu0 %v2571, 80
    %v2659 = vpop.permute.xlu0 %2658
    %2662 = vrot.lane.b32.xlu0 %v2568, 96
    %v2663 = vpop.permute.xlu0 %2662
    %2666 = vrot.lane.b32.xlu0 %v2572, 112
    %v2667 = vpop.permute.xlu0 %2666
    %2670 = vrot.lane.b32.xlu0 %v2637, 16
    %v2671 = vpop.permute.xlu0 %2670
    %2674 = vrot.lane.b32.xlu0 %v2620, 32
    %v2675 = vpop.permute.xlu0 %2674
    %2678 = vrot.lane.b32.xlu0 %v2638, 48
    %v2679 = vpop.permute.xlu0 %2678
    %2682 = vrot.lane.b32.xlu0 %v2629, 64
    %v2683 = vpop.permute.xlu0 %2682
    %2686 = vrot.lane.b32.xlu0 %v2639, 80
    %v2687 = vpop.permute.xlu0 %2686
    %2690 = vrot.lane.b32.xlu0 %v2636, 96
    %v2691 = vpop.permute.xlu0 %2690
    %2694 = vrot.lane.b32.xlu0 %v2640, 112
    %v2695 = vpop.permute.xlu0 %2694
    %v2697 = vsel %vm372, %v2545, %v2643
    %v2698 = vsel %vm374, %v2697, %v2647
    %v2699 = vsel %vm376, %v2698, %v2651
    %v2700 = vsel %vm378, %v2699, %v2655
    %v2701 = vsel %vm380, %v2700, %v2659
    %v2702 = vsel %vm382, %v2701, %v2663
    %v2703 = vsel %vm384, %v2702, %v2667
    %v2704 = vsel %vm372, %v2613, %v2671
    %v2705 = vsel %vm374, %v2704, %v2675
    %v2706 = vsel %vm376, %v2705, %v2679
    %v2707 = vsel %vm378, %v2706, %v2683
    %v2708 = vsel %vm380, %v2707, %v2687
    %v2709 = vsel %vm382, %v2708, %v2691
    %v2710 = vsel %vm384, %v2709, %v2695
    %2711 = vrot.lane.b32.xlu0 %v2259, 126
    %v2712 = vpop.permute.xlu0 %2711
    %2713 = vrot.lane.b32.xlu0 %v2260, 126
    %v2714 = vpop.permute.xlu0 %2713
    %2715 = vrot.lane.b32.xlu0 %v2261, 126
    %v2716 = vpop.permute.xlu0 %2715
    %2717 = vrot.lane.b32.xlu0 %v2262, 126
    %v2718 = vpop.permute.xlu0 %2717
    %2719 = vrot.lane.b32.xlu0 %v2263, 126
    %v2720 = vpop.permute.xlu0 %2719
    %2721 = vrot.lane.b32.xlu0 %v2264, 126
    %v2722 = vpop.permute.xlu0 %2721
    %2723 = vrot.lane.b32.xlu0 %v2265, 126
    %v2724 = vpop.permute.xlu0 %2723
    %2725 = vrot.lane.b32.xlu0 %v2266, 126
    %v2726 = vpop.permute.xlu0 %2725
    %v2735 = vcombine.low %v2712, %v2720
    %v2736 = vcombine.high %v2712, %v2720
    %v2738 = vunpack.c.l.s4 1983009808
    %v2739 = vunpack.c.0.s8 %v2738
    %v2740 = vlaneseq
    %v2741 = vshrl.u32 %v2740, 7
    %v2742 = vsub.s32 %v2739, %v2741
    %v2743 = vrot.slane %v2735, %v2742
    %v2745 = vunpack.c.l.s4 1983009808
    %v2746 = vunpack.c.0.s8 %v2745
    %v2747 = vlaneseq
    %v2748 = vshrl.u32 %v2747, 7
    %v2749 = vsub.s32 %v2746, %v2748
    %v2750 = vrot.slane %v2736, %v2749
    %v2751 = vcombine.low %v2716, %v2724
    %v2752 = vcombine.high %v2716, %v2724
    %v2754 = vunpack.c.l.s4 1983009808
    %v2755 = vunpack.c.0.s8 %v2754
    %v2756 = vlaneseq
    %v2757 = vshrl.u32 %v2756, 7
    %v2758 = vsub.s32 %v2755, %v2757
    %v2759 = vrot.slane %v2751, %v2758
    %v2761 = vunpack.c.l.s4 1983009808
    %v2762 = vunpack.c.0.s8 %v2761
    %v2763 = vlaneseq
    %v2764 = vshrl.u32 %v2763, 7
    %v2765 = vsub.s32 %v2762, %v2764
    %v2766 = vrot.slane %v2752, %v2765
    %v2767 = vcombine.low %v2743, %v2759
    %v2768 = vcombine.high %v2743, %v2759
    %v2770 = vunpack.c.l.s4 1934713408
    %v2771 = vunpack.c.0.s8 %v2770
    %v2772 = vlaneseq
    %v2773 = vshrl.u32 %v2772, 7
    %v2774 = vsub.s32 %v2771, %v2773
    %v2775 = vrot.slane %v2767, %v2774
    %v2777 = vunpack.c.l.s4 1934713408
    %v2778 = vunpack.c.0.s8 %v2777
    %v2779 = vlaneseq
    %v2780 = vshrl.u32 %v2779, 7
    %v2781 = vsub.s32 %v2778, %v2780
    %v2782 = vrot.slane %v2768, %v2781
    %v2783 = vcombine.low %v2750, %v2766
    %v2784 = vcombine.high %v2750, %v2766
    %v2786 = vunpack.c.l.s4 1934713408
    %v2787 = vunpack.c.0.s8 %v2786
    %v2788 = vlaneseq
    %v2789 = vshrl.u32 %v2788, 7
    %v2790 = vsub.s32 %v2787, %v2789
    %v2791 = vrot.slane %v2783, %v2790
    %v2793 = vunpack.c.l.s4 1934713408
    %v2794 = vunpack.c.0.s8 %v2793
    %v2795 = vlaneseq
    %v2796 = vshrl.u32 %v2795, 7
    %v2797 = vsub.s32 %v2794, %v2796
    %v2798 = vrot.slane %v2784, %v2797
    %v2799 = vcombine.high %v2775, 0.0
    %v2800 = vcombine.high %v2782, 0.0
    %v2801 = vcombine.high %v2791, 0.0
    %v2802 = vcombine.high %v2798, 0.0
    %v2803 = vcombine.low %v2714, %v2722
    %v2804 = vcombine.high %v2714, %v2722
    %v2806 = vunpack.c.l.s4 1983009808
    %v2807 = vunpack.c.0.s8 %v2806
    %v2808 = vlaneseq
    %v2809 = vshrl.u32 %v2808, 7
    %v2810 = vsub.s32 %v2807, %v2809
    %v2811 = vrot.slane %v2803, %v2810
    %v2813 = vunpack.c.l.s4 1983009808
    %v2814 = vunpack.c.0.s8 %v2813
    %v2815 = vlaneseq
    %v2816 = vshrl.u32 %v2815, 7
    %v2817 = vsub.s32 %v2814, %v2816
    %v2818 = vrot.slane %v2804, %v2817
    %v2819 = vcombine.low %v2718, %v2726
    %v2820 = vcombine.high %v2718, %v2726
    %v2822 = vunpack.c.l.s4 1983009808
    %v2823 = vunpack.c.0.s8 %v2822
    %v2824 = vlaneseq
    %v2825 = vshrl.u32 %v2824, 7
    %v2826 = vsub.s32 %v2823, %v2825
    %v2827 = vrot.slane %v2819, %v2826
    %v2829 = vunpack.c.l.s4 1983009808
    %v2830 = vunpack.c.0.s8 %v2829
    %v2831 = vlaneseq
    %v2832 = vshrl.u32 %v2831, 7
    %v2833 = vsub.s32 %v2830, %v2832
    %v2834 = vrot.slane %v2820, %v2833
    %v2835 = vcombine.low %v2811, %v2827
    %v2836 = vcombine.high %v2811, %v2827
    %v2838 = vunpack.c.l.s4 1934713408
    %v2839 = vunpack.c.0.s8 %v2838
    %v2840 = vlaneseq
    %v2841 = vshrl.u32 %v2840, 7
    %v2842 = vsub.s32 %v2839, %v2841
    %v2843 = vrot.slane %v2835, %v2842
    %v2845 = vunpack.c.l.s4 1934713408
    %v2846 = vunpack.c.0.s8 %v2845
    %v2847 = vlaneseq
    %v2848 = vshrl.u32 %v2847, 7
    %v2849 = vsub.s32 %v2846, %v2848
    %v2850 = vrot.slane %v2836, %v2849
    %v2851 = vcombine.low %v2818, %v2834
    %v2852 = vcombine.high %v2818, %v2834
    %v2854 = vunpack.c.l.s4 1934713408
    %v2855 = vunpack.c.0.s8 %v2854
    %v2856 = vlaneseq
    %v2857 = vshrl.u32 %v2856, 7
    %v2858 = vsub.s32 %v2855, %v2857
    %v2859 = vrot.slane %v2851, %v2858
    %v2861 = vunpack.c.l.s4 1934713408
    %v2862 = vunpack.c.0.s8 %v2861
    %v2863 = vlaneseq
    %v2864 = vshrl.u32 %v2863, 7
    %v2865 = vsub.s32 %v2862, %v2864
    %v2866 = vrot.slane %v2852, %v2865
    %v2867 = vcombine.high %v2843, 0.0
    %v2868 = vcombine.high %v2850, 0.0
    %v2869 = vcombine.high %v2859, 0.0
    %v2870 = vcombine.high %v2866, 0.0
    %2872 = vrot.lane.b32.xlu0 %v2799, 16
    %v2873 = vpop.permute.xlu0 %2872
    %2876 = vrot.lane.b32.xlu0 %v2782, 32
    %v2877 = vpop.permute.xlu0 %2876
    %2880 = vrot.lane.b32.xlu0 %v2800, 48
    %v2881 = vpop.permute.xlu0 %2880
    %2884 = vrot.lane.b32.xlu0 %v2791, 64
    %v2885 = vpop.permute.xlu0 %2884
    %2888 = vrot.lane.b32.xlu0 %v2801, 80
    %v2889 = vpop.permute.xlu0 %2888
    %2892 = vrot.lane.b32.xlu0 %v2798, 96
    %v2893 = vpop.permute.xlu0 %2892
    %2896 = vrot.lane.b32.xlu0 %v2802, 112
    %v2897 = vpop.permute.xlu0 %2896
    %2900 = vrot.lane.b32.xlu0 %v2867, 16
    %v2901 = vpop.permute.xlu0 %2900
    %2904 = vrot.lane.b32.xlu0 %v2850, 32
    %v2905 = vpop.permute.xlu0 %2904
    %2908 = vrot.lane.b32.xlu0 %v2868, 48
    %v2909 = vpop.permute.xlu0 %2908
    %2912 = vrot.lane.b32.xlu0 %v2859, 64
    %v2913 = vpop.permute.xlu0 %2912
    %2916 = vrot.lane.b32.xlu0 %v2869, 80
    %v2917 = vpop.permute.xlu0 %2916
    %2920 = vrot.lane.b32.xlu0 %v2866, 96
    %v2921 = vpop.permute.xlu0 %2920
    %2924 = vrot.lane.b32.xlu0 %v2870, 112
    %v2925 = vpop.permute.xlu0 %2924
    %v2927 = vsel %vm372, %v2775, %v2873
    %v2928 = vsel %vm374, %v2927, %v2877
    %v2929 = vsel %vm376, %v2928, %v2881
    %v2930 = vsel %vm378, %v2929, %v2885
    %v2931 = vsel %vm380, %v2930, %v2889
    %v2932 = vsel %vm382, %v2931, %v2893
    %v2933 = vsel %vm384, %v2932, %v2897
    %v2934 = vsel %vm372, %v2843, %v2901
    %v2935 = vsel %vm374, %v2934, %v2905
    %v2936 = vsel %vm376, %v2935, %v2909
    %v2937 = vsel %vm378, %v2936, %v2913
    %v2938 = vsel %vm380, %v2937, %v2917
    %v2939 = vsel %vm382, %v2938, %v2921
    %v2940 = vsel %vm384, %v2939, %v2925
    %v2941 = vld [vmem:[%s2258 + $0x1] sm:$0xff]
    %v2942 = vld [vmem:[%s2258 + $0x9] sm:$0xff]
    %v2943 = vld [vmem:[%s2258 + $0x19] sm:$0xff]
    %v2944 = vld [vmem:[%s2258 + $0x21] sm:$0xff]
    %v2945 = vld [vmem:[%s2258 + $0x31] sm:$0xff]
    %v2946 = vld [vmem:[%s2258 + $0x39] sm:$0xff]
    %v2947 = vld [vmem:[%s2258 + $0x49] sm:$0xff]
    %v2948 = vld [vmem:[%s2258 + $0x51] sm:$0xff]
    %v2949 = vcombine.low %v2941, %v2945
    %v2950 = vcombine.high %v2941, %v2945
    %v2952 = vunpack.c.l.s4 1983009808
    %v2953 = vunpack.c.0.s8 %v2952
    %v2954 = vlaneseq
    %v2955 = vshrl.u32 %v2954, 7
    %v2956 = vsub.s32 %v2953, %v2955
    %v2957 = vrot.slane %v2949, %v2956
    %v2959 = vunpack.c.l.s4 1983009808
    %v2960 = vunpack.c.0.s8 %v2959
    %v2961 = vlaneseq
    %v2962 = vshrl.u32 %v2961, 7
    %v2963 = vsub.s32 %v2960, %v2962
    %v2964 = vrot.slane %v2950, %v2963
    %v2965 = vcombine.low %v2943, %v2947
    %v2966 = vcombine.high %v2943, %v2947
    %v2968 = vunpack.c.l.s4 1983009808
    %v2969 = vunpack.c.0.s8 %v2968
    %v2970 = vlaneseq
    %v2971 = vshrl.u32 %v2970, 7
    %v2972 = vsub.s32 %v2969, %v2971
    %v2973 = vrot.slane %v2965, %v2972
    %v2975 = vunpack.c.l.s4 1983009808
    %v2976 = vunpack.c.0.s8 %v2975
    %v2977 = vlaneseq
    %v2978 = vshrl.u32 %v2977, 7
    %v2979 = vsub.s32 %v2976, %v2978
    %v2980 = vrot.slane %v2966, %v2979
    %v2981 = vcombine.low %v2957, %v2973
    %v2982 = vcombine.high %v2957, %v2973
    %v2984 = vunpack.c.l.s4 1934713408
    %v2985 = vunpack.c.0.s8 %v2984
    %v2986 = vlaneseq
    %v2987 = vshrl.u32 %v2986, 7
    %v2988 = vsub.s32 %v2985, %v2987
    %v2989 = vrot.slane %v2981, %v2988
    %v2991 = vunpack.c.l.s4 1934713408
    %v2992 = vunpack.c.0.s8 %v2991
    %v2993 = vlaneseq
    %v2994 = vshrl.u32 %v2993, 7
    %v2995 = vsub.s32 %v2992, %v2994
    %v2996 = vrot.slane %v2982, %v2995
    %v2997 = vcombine.low %v2964, %v2980
    %v2998 = vcombine.high %v2964, %v2980
    %v3000 = vunpack.c.l.s4 1934713408
    %v3001 = vunpack.c.0.s8 %v3000
    %v3002 = vlaneseq
    %v3003 = vshrl.u32 %v3002, 7
    %v3004 = vsub.s32 %v3001, %v3003
    %v3005 = vrot.slane %v2997, %v3004
    %v3007 = vunpack.c.l.s4 1934713408
    %v3008 = vunpack.c.0.s8 %v3007
    %v3009 = vlaneseq
    %v3010 = vshrl.u32 %v3009, 7
    %v3011 = vsub.s32 %v3008, %v3010
    %v3012 = vrot.slane %v2998, %v3011
    %v3013 = vcombine.high %v2989, 0.0
    %v3014 = vcombine.high %v2996, 0.0
    %v3015 = vcombine.high %v3005, 0.0
    %v3016 = vcombine.high %v3012, 0.0
    %v3017 = vcombine.low %v2942, %v2946
    %v3018 = vcombine.high %v2942, %v2946
    %v3020 = vunpack.c.l.s4 1983009808
    %v3021 = vunpack.c.0.s8 %v3020
    %v3022 = vlaneseq
    %v3023 = vshrl.u32 %v3022, 7
    %v3024 = vsub.s32 %v3021, %v3023
    %v3025 = vrot.slane %v3017, %v3024
    %v3027 = vunpack.c.l.s4 1983009808
    %v3028 = vunpack.c.0.s8 %v3027
    %v3029 = vlaneseq
    %v3030 = vshrl.u32 %v3029, 7
    %v3031 = vsub.s32 %v3028, %v3030
    %v3032 = vrot.slane %v3018, %v3031
    %v3033 = vcombine.low %v2944, %v2948
    %v3034 = vcombine.high %v2944, %v2948
    %v3036 = vunpack.c.l.s4 1983009808
    %v3037 = vunpack.c.0.s8 %v3036
    %v3038 = vlaneseq
    %v3039 = vshrl.u32 %v3038, 7
    %v3040 = vsub.s32 %v3037, %v3039
    %v3041 = vrot.slane %v3033, %v3040
    %v3043 = vunpack.c.l.s4 1983009808
    %v3044 = vunpack.c.0.s8 %v3043
    %v3045 = vlaneseq
    %v3046 = vshrl.u32 %v3045, 7
    %v3047 = vsub.s32 %v3044, %v3046
    %v3048 = vrot.slane %v3034, %v3047
    %v3049 = vcombine.low %v3025, %v3041
    %v3050 = vcombine.high %v3025, %v3041
    %v3052 = vunpack.c.l.s4 1934713408
    %v3053 = vunpack.c.0.s8 %v3052
    %v3054 = vlaneseq
    %v3055 = vshrl.u32 %v3054, 7
    %v3056 = vsub.s32 %v3053, %v3055
    %v3057 = vrot.slane %v3049, %v3056
    %v3059 = vunpack.c.l.s4 1934713408
    %v3060 = vunpack.c.0.s8 %v3059
    %v3061 = vlaneseq
    %v3062 = vshrl.u32 %v3061, 7
    %v3063 = vsub.s32 %v3060, %v3062
    %v3064 = vrot.slane %v3050, %v3063
    %v3065 = vcombine.low %v3032, %v3048
    %v3066 = vcombine.high %v3032, %v3048
    %v3068 = vunpack.c.l.s4 1934713408
    %v3069 = vunpack.c.0.s8 %v3068
    %v3070 = vlaneseq
    %v3071 = vshrl.u32 %v3070, 7
    %v3072 = vsub.s32 %v3069, %v3071
    %v3073 = vrot.slane %v3065, %v3072
    %v3075 = vunpack.c.l.s4 1934713408
    %v3076 = vunpack.c.0.s8 %v3075
    %v3077 = vlaneseq
    %v3078 = vshrl.u32 %v3077, 7
    %v3079 = vsub.s32 %v3076, %v3078
    %v3080 = vrot.slane %v3066, %v3079
    %v3081 = vcombine.high %v3057, 0.0
    %v3082 = vcombine.high %v3064, 0.0
    %v3083 = vcombine.high %v3073, 0.0
    %v3084 = vcombine.high %v3080, 0.0
    %3086 = vrot.lane.b32.xlu0 %v3013, 16
    %v3087 = vpop.permute.xlu0 %3086
    %3090 = vrot.lane.b32.xlu0 %v2996, 32
    %v3091 = vpop.permute.xlu0 %3090
    %3094 = vrot.lane.b32.xlu0 %v3014, 48
    %v3095 = vpop.permute.xlu0 %3094
    %3098 = vrot.lane.b32.xlu0 %v3005, 64
    %v3099 = vpop.permute.xlu0 %3098
    %3102 = vrot.lane.b32.xlu0 %v3015, 80
    %v3103 = vpop.permute.xlu0 %3102
    %3106 = vrot.lane.b32.xlu0 %v3012, 96
    %v3107 = vpop.permute.xlu0 %3106
    %3110 = vrot.lane.b32.xlu0 %v3016, 112
    %v3111 = vpop.permute.xlu0 %3110
    %3114 = vrot.lane.b32.xlu0 %v3081, 16
    %v3115 = vpop.permute.xlu0 %3114
    %3118 = vrot.lane.b32.xlu0 %v3064, 32
    %v3119 = vpop.permute.xlu0 %3118
    %3122 = vrot.lane.b32.xlu0 %v3082, 48
    %v3123 = vpop.permute.xlu0 %3122
    %3126 = vrot.lane.b32.xlu0 %v3073, 64
    %v3127 = vpop.permute.xlu0 %3126
    %3130 = vrot.lane.b32.xlu0 %v3083, 80
    %v3131 = vpop.permute.xlu0 %3130
    %3134 = vrot.lane.b32.xlu0 %v3080, 96
    %v3135 = vpop.permute.xlu0 %3134
    %3138 = vrot.lane.b32.xlu0 %v3084, 112
    %v3139 = vpop.permute.xlu0 %3138
    %v3141 = vsel %vm372, %v2989, %v3087
    %v3142 = vsel %vm374, %v3141, %v3091
    %v3143 = vsel %vm376, %v3142, %v3095
    %v3144 = vsel %vm378, %v3143, %v3099
    %v3145 = vsel %vm380, %v3144, %v3103
    %v3146 = vsel %vm382, %v3145, %v3107
    %v3147 = vsel %vm384, %v3146, %v3111
    %v3148 = vsel %vm372, %v3057, %v3115
    %v3149 = vsel %vm374, %v3148, %v3119
    %v3150 = vsel %vm376, %v3149, %v3123
    %v3151 = vsel %vm378, %v3150, %v3127
    %v3152 = vsel %vm380, %v3151, %v3131
    %v3153 = vsel %vm382, %v3152, %v3135
    %v3154 = vsel %vm384, %v3153, %v3139
    %3163 = vrot.lane.b32.xlu0 %v2941, 127
    %v3164 = vpop.permute.xlu0 %3163
    %3165 = vrot.lane.b32.xlu0 %v2942, 127
    %v3166 = vpop.permute.xlu0 %3165
    %3167 = vrot.lane.b32.xlu0 %v2943, 127
    %v3168 = vpop.permute.xlu0 %3167
    %3169 = vrot.lane.b32.xlu0 %v2944, 127
    %v3170 = vpop.permute.xlu0 %3169
    %3171 = vrot.lane.b32.xlu0 %v2945, 127
    %v3172 = vpop.permute.xlu0 %3171
    %3173 = vrot.lane.b32.xlu0 %v2946, 127
    %v3174 = vpop.permute.xlu0 %3173
    %3175 = vrot.lane.b32.xlu0 %v2947, 127
    %v3176 = vpop.permute.xlu0 %3175
    %3177 = vrot.lane.b32.xlu0 %v2948, 127
    %v3178 = vpop.permute.xlu0 %3177
    %v3187 = vcombine.low %v3164, %v3172
    %v3188 = vcombine.high %v3164, %v3172
    %v3190 = vunpack.c.l.s4 1983009808
    %v3191 = vunpack.c.0.s8 %v3190
    %v3192 = vlaneseq
    %v3193 = vshrl.u32 %v3192, 7
    %v3194 = vsub.s32 %v3191, %v3193
    %v3195 = vrot.slane %v3187, %v3194
    %v3197 = vunpack.c.l.s4 1983009808
    %v3198 = vunpack.c.0.s8 %v3197
    %v3199 = vlaneseq
    %v3200 = vshrl.u32 %v3199, 7
    %v3201 = vsub.s32 %v3198, %v3200
    %v3202 = vrot.slane %v3188, %v3201
    %v3203 = vcombine.low %v3168, %v3176
    %v3204 = vcombine.high %v3168, %v3176
    %v3206 = vunpack.c.l.s4 1983009808
    %v3207 = vunpack.c.0.s8 %v3206
    %v3208 = vlaneseq
    %v3209 = vshrl.u32 %v3208, 7
    %v3210 = vsub.s32 %v3207, %v3209
    %v3211 = vrot.slane %v3203, %v3210
    %v3213 = vunpack.c.l.s4 1983009808
    %v3214 = vunpack.c.0.s8 %v3213
    %v3215 = vlaneseq
    %v3216 = vshrl.u32 %v3215, 7
    %v3217 = vsub.s32 %v3214, %v3216
    %v3218 = vrot.slane %v3204, %v3217
    %v3219 = vcombine.low %v3195, %v3211
    %v3220 = vcombine.high %v3195, %v3211
    %v3222 = vunpack.c.l.s4 1934713408
    %v3223 = vunpack.c.0.s8 %v3222
    %v3224 = vlaneseq
    %v3225 = vshrl.u32 %v3224, 7
    %v3226 = vsub.s32 %v3223, %v3225
    %v3227 = vrot.slane %v3219, %v3226
    %v3229 = vunpack.c.l.s4 1934713408
    %v3230 = vunpack.c.0.s8 %v3229
    %v3231 = vlaneseq
    %v3232 = vshrl.u32 %v3231, 7
    %v3233 = vsub.s32 %v3230, %v3232
    %v3234 = vrot.slane %v3220, %v3233
    %v3235 = vcombine.low %v3202, %v3218
    %v3236 = vcombine.high %v3202, %v3218
    %v3238 = vunpack.c.l.s4 1934713408
    %v3239 = vunpack.c.0.s8 %v3238
    %v3240 = vlaneseq
    %v3241 = vshrl.u32 %v3240, 7
    %v3242 = vsub.s32 %v3239, %v3241
    %v3243 = vrot.slane %v3235, %v3242
    %v3245 = vunpack.c.l.s4 1934713408
    %v3246 = vunpack.c.0.s8 %v3245
    %v3247 = vlaneseq
    %v3248 = vshrl.u32 %v3247, 7
    %v3249 = vsub.s32 %v3246, %v3248
    %v3250 = vrot.slane %v3236, %v3249
    %v3251 = vcombine.high %v3227, 0.0
    %v3252 = vcombine.high %v3234, 0.0
    %v3253 = vcombine.high %v3243, 0.0
    %v3254 = vcombine.high %v3250, 0.0
    %v3255 = vcombine.low %v3166, %v3174
    %v3256 = vcombine.high %v3166, %v3174
    %v3258 = vunpack.c.l.s4 1983009808
    %v3259 = vunpack.c.0.s8 %v3258
    %v3260 = vlaneseq
    %v3261 = vshrl.u32 %v3260, 7
    %v3262 = vsub.s32 %v3259, %v3261
    %v3263 = vrot.slane %v3255, %v3262
    %v3265 = vunpack.c.l.s4 1983009808
    %v3266 = vunpack.c.0.s8 %v3265
    %v3267 = vlaneseq
    %v3268 = vshrl.u32 %v3267, 7
    %v3269 = vsub.s32 %v3266, %v3268
    %v3270 = vrot.slane %v3256, %v3269
    %v3271 = vcombine.low %v3170, %v3178
    %v3272 = vcombine.high %v3170, %v3178
    %v3274 = vunpack.c.l.s4 1983009808
    %v3275 = vunpack.c.0.s8 %v3274
    %v3276 = vlaneseq
    %v3277 = vshrl.u32 %v3276, 7
    %v3278 = vsub.s32 %v3275, %v3277
    %v3279 = vrot.slane %v3271, %v3278
    %v3281 = vunpack.c.l.s4 1983009808
    %v3282 = vunpack.c.0.s8 %v3281
    %v3283 = vlaneseq
    %v3284 = vshrl.u32 %v3283, 7
    %v3285 = vsub.s32 %v3282, %v3284
    %v3286 = vrot.slane %v3272, %v3285
    %v3287 = vcombine.low %v3263, %v3279
    %v3288 = vcombine.high %v3263, %v3279
    %v3290 = vunpack.c.l.s4 1934713408
    %v3291 = vunpack.c.0.s8 %v3290
    %v3292 = vlaneseq
    %v3293 = vshrl.u32 %v3292, 7
    %v3294 = vsub.s32 %v3291, %v3293
    %v3295 = vrot.slane %v3287, %v3294
    %v3297 = vunpack.c.l.s4 1934713408
    %v3298 = vunpack.c.0.s8 %v3297
    %v3299 = vlaneseq
    %v3300 = vshrl.u32 %v3299, 7
    %v3301 = vsub.s32 %v3298, %v3300
    %v3302 = vrot.slane %v3288, %v3301
    %v3303 = vcombine.low %v3270, %v3286
    %v3304 = vcombine.high %v3270, %v3286
    %v3306 = vunpack.c.l.s4 1934713408
    %v3307 = vunpack.c.0.s8 %v3306
    %v3308 = vlaneseq
    %v3309 = vshrl.u32 %v3308, 7
    %v3310 = vsub.s32 %v3307, %v3309
    %v3311 = vrot.slane %v3303, %v3310
    %v3313 = vunpack.c.l.s4 1934713408
    %v3314 = vunpack.c.0.s8 %v3313
    %v3315 = vlaneseq
    %v3316 = vshrl.u32 %v3315, 7
    %v3317 = vsub.s32 %v3314, %v3316
    %v3318 = vrot.slane %v3304, %v3317
    %v3319 = vcombine.high %v3295, 0.0
    %v3320 = vcombine.high %v3302, 0.0
    %v3321 = vcombine.high %v3311, 0.0
    %v3322 = vcombine.high %v3318, 0.0
    %3324 = vrot.lane.b32.xlu0 %v3251, 16
    %v3325 = vpop.permute.xlu0 %3324
    %3328 = vrot.lane.b32.xlu0 %v3234, 32
    %v3329 = vpop.permute.xlu0 %3328
    %3332 = vrot.lane.b32.xlu0 %v3252, 48
    %v3333 = vpop.permute.xlu0 %3332
    %3336 = vrot.lane.b32.xlu0 %v3243, 64
    %v3337 = vpop.permute.xlu0 %3336
    %3340 = vrot.lane.b32.xlu0 %v3253, 80
    %v3341 = vpop.permute.xlu0 %3340
    %3344 = vrot.lane.b32.xlu0 %v3250, 96
    %v3345 = vpop.permute.xlu0 %3344
    %3348 = vrot.lane.b32.xlu0 %v3254, 112
    %v3349 = vpop.permute.xlu0 %3348
    %3352 = vrot.lane.b32.xlu0 %v3319, 16
    %v3353 = vpop.permute.xlu0 %3352
    %3356 = vrot.lane.b32.xlu0 %v3302, 32
    %v3357 = vpop.permute.xlu0 %3356
    %3360 = vrot.lane.b32.xlu0 %v3320, 48
    %v3361 = vpop.permute.xlu0 %3360
    %3364 = vrot.lane.b32.xlu0 %v3311, 64
    %v3365 = vpop.permute.xlu0 %3364
    %3368 = vrot.lane.b32.xlu0 %v3321, 80
    %v3369 = vpop.permute.xlu0 %3368
    %3372 = vrot.lane.b32.xlu0 %v3318, 96
    %v3373 = vpop.permute.xlu0 %3372
    %3376 = vrot.lane.b32.xlu0 %v3322, 112
    %v3377 = vpop.permute.xlu0 %3376
    %v3379 = vsel %vm372, %v3227, %v3325
    %v3380 = vsel %vm374, %v3379, %v3329
    %v3381 = vsel %vm376, %v3380, %v3333
    %v3382 = vsel %vm378, %v3381, %v3337
    %v3383 = vsel %vm380, %v3382, %v3341
    %v3384 = vsel %vm382, %v3383, %v3345
    %v3385 = vsel %vm384, %v3384, %v3349
    %v3386 = vsel %vm372, %v3295, %v3353
    %v3387 = vsel %vm374, %v3386, %v3357
    %v3388 = vsel %vm376, %v3387, %v3361
    %v3389 = vsel %vm378, %v3388, %v3365
    %v3390 = vsel %vm380, %v3389, %v3369
    %v3391 = vsel %vm382, %v3390, %v3373
    %v3392 = vsel %vm384, %v3391, %v3377
    %3393 = vrot.lane.b32.xlu0 %v2941, 126
    %v3394 = vpop.permute.xlu0 %3393
    %3395 = vrot.lane.b32.xlu0 %v2942, 126
    %v3396 = vpop.permute.xlu0 %3395
    %3397 = vrot.lane.b32.xlu0 %v2943, 126
    %v3398 = vpop.permute.xlu0 %3397
    %3399 = vrot.lane.b32.xlu0 %v2944, 126
    %v3400 = vpop.permute.xlu0 %3399
    %3401 = vrot.lane.b32.xlu0 %v2945, 126
    %v3402 = vpop.permute.xlu0 %3401
    %3403 = vrot.lane.b32.xlu0 %v2946, 126
    %v3404 = vpop.permute.xlu0 %3403
    %3405 = vrot.lane.b32.xlu0 %v2947, 126
    %v3406 = vpop.permute.xlu0 %3405
    %3407 = vrot.lane.b32.xlu0 %v2948, 126
    %v3408 = vpop.permute.xlu0 %3407
    %v3417 = vcombine.low %v3394, %v3402
    %v3418 = vcombine.high %v3394, %v3402
    %v3420 = vunpack.c.l.s4 1983009808
    %v3421 = vunpack.c.0.s8 %v3420
    %v3422 = vlaneseq
    %v3423 = vshrl.u32 %v3422, 7
    %v3424 = vsub.s32 %v3421, %v3423
    %v3425 = vrot.slane %v3417, %v3424
    %v3427 = vunpack.c.l.s4 1983009808
    %v3428 = vunpack.c.0.s8 %v3427
    %v3429 = vlaneseq
    %v3430 = vshrl.u32 %v3429, 7
    %v3431 = vsub.s32 %v3428, %v3430
    %v3432 = vrot.slane %v3418, %v3431
    %v3433 = vcombine.low %v3398, %v3406
    %v3434 = vcombine.high %v3398, %v3406
    %v3436 = vunpack.c.l.s4 1983009808
    %v3437 = vunpack.c.0.s8 %v3436
    %v3438 = vlaneseq
    %v3439 = vshrl.u32 %v3438, 7
    %v3440 = vsub.s32 %v3437, %v3439
    %v3441 = vrot.slane %v3433, %v3440
    %v3443 = vunpack.c.l.s4 1983009808
    %v3444 = vunpack.c.0.s8 %v3443
    %v3445 = vlaneseq
    %v3446 = vshrl.u32 %v3445, 7
    %v3447 = vsub.s32 %v3444, %v3446
    %v3448 = vrot.slane %v3434, %v3447
    %v3449 = vcombine.low %v3425, %v3441
    %v3450 = vcombine.high %v3425, %v3441
    %v3452 = vunpack.c.l.s4 1934713408
    %v3453 = vunpack.c.0.s8 %v3452
    %v3454 = vlaneseq
    %v3455 = vshrl.u32 %v3454, 7
    %v3456 = vsub.s32 %v3453, %v3455
    %v3457 = vrot.slane %v3449, %v3456
    %v3459 = vunpack.c.l.s4 1934713408
    %v3460 = vunpack.c.0.s8 %v3459
    %v3461 = vlaneseq
    %v3462 = vshrl.u32 %v3461, 7
    %v3463 = vsub.s32 %v3460, %v3462
    %v3464 = vrot.slane %v3450, %v3463
    %v3465 = vcombine.low %v3432, %v3448
    %v3466 = vcombine.high %v3432, %v3448
    %v3468 = vunpack.c.l.s4 1934713408
    %v3469 = vunpack.c.0.s8 %v3468
    %v3470 = vlaneseq
    %v3471 = vshrl.u32 %v3470, 7
    %v3472 = vsub.s32 %v3469, %v3471
    %v3473 = vrot.slane %v3465, %v3472
    %v3475 = vunpack.c.l.s4 1934713408
    %v3476 = vunpack.c.0.s8 %v3475
    %v3477 = vlaneseq
    %v3478 = vshrl.u32 %v3477, 7
    %v3479 = vsub.s32 %v3476, %v3478
    %v3480 = vrot.slane %v3466, %v3479
    %v3481 = vcombine.high %v3457, 0.0
    %v3482 = vcombine.high %v3464, 0.0
    %v3483 = vcombine.high %v3473, 0.0
    %v3484 = vcombine.high %v3480, 0.0
    %v3485 = vcombine.low %v3396, %v3404
    %v3486 = vcombine.high %v3396, %v3404
    %v3488 = vunpack.c.l.s4 1983009808
    %v3489 = vunpack.c.0.s8 %v3488
    %v3490 = vlaneseq
    %v3491 = vshrl.u32 %v3490, 7
    %v3492 = vsub.s32 %v3489, %v3491
    %v3493 = vrot.slane %v3485, %v3492
    %v3495 = vunpack.c.l.s4 1983009808
    %v3496 = vunpack.c.0.s8 %v3495
    %v3497 = vlaneseq
    %v3498 = vshrl.u32 %v3497, 7
    %v3499 = vsub.s32 %v3496, %v3498
    %v3500 = vrot.slane %v3486, %v3499
    %v3501 = vcombine.low %v3400, %v3408
    %v3502 = vcombine.high %v3400, %v3408
    %v3504 = vunpack.c.l.s4 1983009808
    %v3505 = vunpack.c.0.s8 %v3504
    %v3506 = vlaneseq
    %v3507 = vshrl.u32 %v3506, 7
    %v3508 = vsub.s32 %v3505, %v3507
    %v3509 = vrot.slane %v3501, %v3508
    %v3511 = vunpack.c.l.s4 1983009808
    %v3512 = vunpack.c.0.s8 %v3511
    %v3513 = vlaneseq
    %v3514 = vshrl.u32 %v3513, 7
    %v3515 = vsub.s32 %v3512, %v3514
    %v3516 = vrot.slane %v3502, %v3515
    %v3517 = vcombine.low %v3493, %v3509
    %v3518 = vcombine.high %v3493, %v3509
    %v3520 = vunpack.c.l.s4 1934713408
    %v3521 = vunpack.c.0.s8 %v3520
    %v3522 = vlaneseq
    %v3523 = vshrl.u32 %v3522, 7
    %v3524 = vsub.s32 %v3521, %v3523
    %v3525 = vrot.slane %v3517, %v3524
    %v3527 = vunpack.c.l.s4 1934713408
    %v3528 = vunpack.c.0.s8 %v3527
    %v3529 = vlaneseq
    %v3530 = vshrl.u32 %v3529, 7
    %v3531 = vsub.s32 %v3528, %v3530
    %v3532 = vrot.slane %v3518, %v3531
    %v3533 = vcombine.low %v3500, %v3516
    %v3534 = vcombine.high %v3500, %v3516
    %v3536 = vunpack.c.l.s4 1934713408
    %v3537 = vunpack.c.0.s8 %v3536
    %v3538 = vlaneseq
    %v3539 = vshrl.u32 %v3538, 7
    %v3540 = vsub.s32 %v3537, %v3539
    %v3541 = vrot.slane %v3533, %v3540
    %v3543 = vunpack.c.l.s4 1934713408
    %v3544 = vunpack.c.0.s8 %v3543
    %v3545 = vlaneseq
    %v3546 = vshrl.u32 %v3545, 7
    %v3547 = vsub.s32 %v3544, %v3546
    %v3548 = vrot.slane %v3534, %v3547
    %v3549 = vcombine.high %v3525, 0.0
    %v3550 = vcombine.high %v3532, 0.0
    %v3551 = vcombine.high %v3541, 0.0
    %v3552 = vcombine.high %v3548, 0.0
    %3554 = vrot.lane.b32.xlu0 %v3481, 16
    %v3555 = vpop.permute.xlu0 %3554
    %3558 = vrot.lane.b32.xlu0 %v3464, 32
    %v3559 = vpop.permute.xlu0 %3558
    %3562 = vrot.lane.b32.xlu0 %v3482, 48
    %v3563 = vpop.permute.xlu0 %3562
    %3566 = vrot.lane.b32.xlu0 %v3473, 64
    %v3567 = vpop.permute.xlu0 %3566
    %3570 = vrot.lane.b32.xlu0 %v3483, 80
    %v3571 = vpop.permute.xlu0 %3570
    %3574 = vrot.lane.b32.xlu0 %v3480, 96
    %v3575 = vpop.permute.xlu0 %3574
    %3578 = vrot.lane.b32.xlu0 %v3484, 112
    %v3579 = vpop.permute.xlu0 %3578
    %3582 = vrot.lane.b32.xlu0 %v3549, 16
    %v3583 = vpop.permute.xlu0 %3582
    %3586 = vrot.lane.b32.xlu0 %v3532, 32
    %v3587 = vpop.permute.xlu0 %3586
    %3590 = vrot.lane.b32.xlu0 %v3550, 48
    %v3591 = vpop.permute.xlu0 %3590
    %3594 = vrot.lane.b32.xlu0 %v3541, 64
    %v3595 = vpop.permute.xlu0 %3594
    %3598 = vrot.lane.b32.xlu0 %v3551, 80
    %v3599 = vpop.permute.xlu0 %3598
    %3602 = vrot.lane.b32.xlu0 %v3548, 96
    %v3603 = vpop.permute.xlu0 %3602
    %3606 = vrot.lane.b32.xlu0 %v3552, 112
    %v3607 = vpop.permute.xlu0 %3606
    %v3609 = vsel %vm372, %v3457, %v3555
    %v3610 = vsel %vm374, %v3609, %v3559
    %v3611 = vsel %vm376, %v3610, %v3563
    %v3612 = vsel %vm378, %v3611, %v3567
    %v3613 = vsel %vm380, %v3612, %v3571
    %v3614 = vsel %vm382, %v3613, %v3575
    %v3615 = vsel %vm384, %v3614, %v3579
    %v3616 = vsel %vm372, %v3525, %v3583
    %v3617 = vsel %vm374, %v3616, %v3587
    %v3618 = vsel %vm376, %v3617, %v3591
    %v3619 = vsel %vm378, %v3618, %v3595
    %v3620 = vsel %vm380, %v3619, %v3599
    %v3621 = vsel %vm382, %v3620, %v3603
    %v3622 = vsel %vm384, %v3621, %v3607
    %v3623 = vld [vmem:[%s2258 + $0x2] sm:$0xff]
    %v3624 = vld [vmem:[%s2258 + $0xa] sm:$0xff]
    %v3625 = vld [vmem:[%s2258 + $0x1a] sm:$0xff]
    %v3626 = vld [vmem:[%s2258 + $0x22] sm:$0xff]
    %v3627 = vld [vmem:[%s2258 + $0x32] sm:$0xff]
    %v3628 = vld [vmem:[%s2258 + $0x3a] sm:$0xff]
    %v3629 = vld [vmem:[%s2258 + $0x4a] sm:$0xff]
    %v3630 = vld [vmem:[%s2258 + $0x52] sm:$0xff]
    %v3631 = vcombine.low %v3623, %v3627
    %v3632 = vcombine.high %v3623, %v3627
    %v3634 = vunpack.c.l.s4 1983009808
    %v3635 = vunpack.c.0.s8 %v3634
    %v3636 = vlaneseq
    %v3637 = vshrl.u32 %v3636, 7
    %v3638 = vsub.s32 %v3635, %v3637
    %v3639 = vrot.slane %v3631, %v3638
    %v3641 = vunpack.c.l.s4 1983009808
    %v3642 = vunpack.c.0.s8 %v3641
    %v3643 = vlaneseq
    %v3644 = vshrl.u32 %v3643, 7
    %v3645 = vsub.s32 %v3642, %v3644
    %v3646 = vrot.slane %v3632, %v3645
    %v3647 = vcombine.low %v3625, %v3629
    %v3648 = vcombine.high %v3625, %v3629
    %v3650 = vunpack.c.l.s4 1983009808
    %v3651 = vunpack.c.0.s8 %v3650
    %v3652 = vlaneseq
    %v3653 = vshrl.u32 %v3652, 7
    %v3654 = vsub.s32 %v3651, %v3653
    %v3655 = vrot.slane %v3647, %v3654
    %v3657 = vunpack.c.l.s4 1983009808
    %v3658 = vunpack.c.0.s8 %v3657
    %v3659 = vlaneseq
    %v3660 = vshrl.u32 %v3659, 7
    %v3661 = vsub.s32 %v3658, %v3660
    %v3662 = vrot.slane %v3648, %v3661
    %v3663 = vcombine.low %v3639, %v3655
    %v3664 = vcombine.high %v3639, %v3655
    %v3666 = vunpack.c.l.s4 1934713408
    %v3667 = vunpack.c.0.s8 %v3666
    %v3668 = vlaneseq
    %v3669 = vshrl.u32 %v3668, 7
    %v3670 = vsub.s32 %v3667, %v3669
    %v3671 = vrot.slane %v3663, %v3670
    %v3673 = vunpack.c.l.s4 1934713408
    %v3674 = vunpack.c.0.s8 %v3673
    %v3675 = vlaneseq
    %v3676 = vshrl.u32 %v3675, 7
    %v3677 = vsub.s32 %v3674, %v3676
    %v3678 = vrot.slane %v3664, %v3677
    %v3679 = vcombine.low %v3646, %v3662
    %v3680 = vcombine.high %v3646, %v3662
    %v3682 = vunpack.c.l.s4 1934713408
    %v3683 = vunpack.c.0.s8 %v3682
    %v3684 = vlaneseq
    %v3685 = vshrl.u32 %v3684, 7
    %v3686 = vsub.s32 %v3683, %v3685
    %v3687 = vrot.slane %v3679, %v3686
    %v3689 = vunpack.c.l.s4 1934713408
    %v3690 = vunpack.c.0.s8 %v3689
    %v3691 = vlaneseq
    %v3692 = vshrl.u32 %v3691, 7
    %v3693 = vsub.s32 %v3690, %v3692
    %v3694 = vrot.slane %v3680, %v3693
    %v3695 = vcombine.high %v3671, 0.0
    %v3696 = vcombine.high %v3678, 0.0
    %v3697 = vcombine.high %v3687, 0.0
    %v3698 = vcombine.high %v3694, 0.0
    %v3699 = vcombine.low %v3624, %v3628
    %v3700 = vcombine.high %v3624, %v3628
    %v3702 = vunpack.c.l.s4 1983009808
    %v3703 = vunpack.c.0.s8 %v3702
    %v3704 = vlaneseq
    %v3705 = vshrl.u32 %v3704, 7
    %v3706 = vsub.s32 %v3703, %v3705
    %v3707 = vrot.slane %v3699, %v3706
    %v3709 = vunpack.c.l.s4 1983009808
    %v3710 = vunpack.c.0.s8 %v3709
    %v3711 = vlaneseq
    %v3712 = vshrl.u32 %v3711, 7
    %v3713 = vsub.s32 %v3710, %v3712
    %v3714 = vrot.slane %v3700, %v3713
    %v3715 = vcombine.low %v3626, %v3630
    %v3716 = vcombine.high %v3626, %v3630
    %v3718 = vunpack.c.l.s4 1983009808
    %v3719 = vunpack.c.0.s8 %v3718
    %v3720 = vlaneseq
    %v3721 = vshrl.u32 %v3720, 7
    %v3722 = vsub.s32 %v3719, %v3721
    %v3723 = vrot.slane %v3715, %v3722
    %v3725 = vunpack.c.l.s4 1983009808
    %v3726 = vunpack.c.0.s8 %v3725
    %v3727 = vlaneseq
    %v3728 = vshrl.u32 %v3727, 7
    %v3729 = vsub.s32 %v3726, %v3728
    %v3730 = vrot.slane %v3716, %v3729
    %v3731 = vcombine.low %v3707, %v3723
    %v3732 = vcombine.high %v3707, %v3723
    %v3734 = vunpack.c.l.s4 1934713408
    %v3735 = vunpack.c.0.s8 %v3734
    %v3736 = vlaneseq
    %v3737 = vshrl.u32 %v3736, 7
    %v3738 = vsub.s32 %v3735, %v3737
    %v3739 = vrot.slane %v3731, %v3738
    %v3741 = vunpack.c.l.s4 1934713408
    %v3742 = vunpack.c.0.s8 %v3741
    %v3743 = vlaneseq
    %v3744 = vshrl.u32 %v3743, 7
    %v3745 = vsub.s32 %v3742, %v3744
    %v3746 = vrot.slane %v3732, %v3745
    %v3747 = vcombine.low %v3714, %v3730
    %v3748 = vcombine.high %v3714, %v3730
    %v3750 = vunpack.c.l.s4 1934713408
    %v3751 = vunpack.c.0.s8 %v3750
    %v3752 = vlaneseq
    %v3753 = vshrl.u32 %v3752, 7
    %v3754 = vsub.s32 %v3751, %v3753
    %v3755 = vrot.slane %v3747, %v3754
    %v3757 = vunpack.c.l.s4 1934713408
    %v3758 = vunpack.c.0.s8 %v3757
    %v3759 = vlaneseq
    %v3760 = vshrl.u32 %v3759, 7
    %v3761 = vsub.s32 %v3758, %v3760
    %v3762 = vrot.slane %v3748, %v3761
    %v3763 = vcombine.high %v3739, 0.0
    %v3764 = vcombine.high %v3746, 0.0
    %v3765 = vcombine.high %v3755, 0.0
    %v3766 = vcombine.high %v3762, 0.0
    %3768 = vrot.lane.b32.xlu0 %v3695, 16
    %v3769 = vpop.permute.xlu0 %3768
    %3772 = vrot.lane.b32.xlu0 %v3678, 32
    %v3773 = vpop.permute.xlu0 %3772
    %3776 = vrot.lane.b32.xlu0 %v3696, 48
    %v3777 = vpop.permute.xlu0 %3776
    %3780 = vrot.lane.b32.xlu0 %v3687, 64
    %v3781 = vpop.permute.xlu0 %3780
    %3784 = vrot.lane.b32.xlu0 %v3697, 80
    %v3785 = vpop.permute.xlu0 %3784
    %3788 = vrot.lane.b32.xlu0 %v3694, 96
    %v3789 = vpop.permute.xlu0 %3788
    %3792 = vrot.lane.b32.xlu0 %v3698, 112
    %v3793 = vpop.permute.xlu0 %3792
    %3796 = vrot.lane.b32.xlu0 %v3763, 16
    %v3797 = vpop.permute.xlu0 %3796
    %3800 = vrot.lane.b32.xlu0 %v3746, 32
    %v3801 = vpop.permute.xlu0 %3800
    %3804 = vrot.lane.b32.xlu0 %v3764, 48
    %v3805 = vpop.permute.xlu0 %3804
    %3808 = vrot.lane.b32.xlu0 %v3755, 64
    %v3809 = vpop.permute.xlu0 %3808
    %3812 = vrot.lane.b32.xlu0 %v3765, 80
    %v3813 = vpop.permute.xlu0 %3812
    %3816 = vrot.lane.b32.xlu0 %v3762, 96
    %v3817 = vpop.permute.xlu0 %3816
    %3820 = vrot.lane.b32.xlu0 %v3766, 112
    %v3821 = vpop.permute.xlu0 %3820
    %v3823 = vsel %vm372, %v3671, %v3769
    %v3824 = vsel %vm374, %v3823, %v3773
    %v3825 = vsel %vm376, %v3824, %v3777
    %v3826 = vsel %vm378, %v3825, %v3781
    %v3827 = vsel %vm380, %v3826, %v3785
    %v3828 = vsel %vm382, %v3827, %v3789
    %v3829 = vsel %vm384, %v3828, %v3793
    %v3830 = vsel %vm372, %v3739, %v3797
    %v3831 = vsel %vm374, %v3830, %v3801
    %v3832 = vsel %vm376, %v3831, %v3805
    %v3833 = vsel %vm378, %v3832, %v3809
    %v3834 = vsel %vm380, %v3833, %v3813
    %v3835 = vsel %vm382, %v3834, %v3817
    %v3836 = vsel %vm384, %v3835, %v3821
    %3845 = vrot.lane.b32.xlu0 %v3623, 127
    %v3846 = vpop.permute.xlu0 %3845
    %3847 = vrot.lane.b32.xlu0 %v3624, 127
    %v3848 = vpop.permute.xlu0 %3847
    %3849 = vrot.lane.b32.xlu0 %v3625, 127
    %v3850 = vpop.permute.xlu0 %3849
    %3851 = vrot.lane.b32.xlu0 %v3626, 127
    %v3852 = vpop.permute.xlu0 %3851
    %3853 = vrot.lane.b32.xlu0 %v3627, 127
    %v3854 = vpop.permute.xlu0 %3853
    %3855 = vrot.lane.b32.xlu0 %v3628, 127
    %v3856 = vpop.permute.xlu0 %3855
    %3857 = vrot.lane.b32.xlu0 %v3629, 127
    %v3858 = vpop.permute.xlu0 %3857
    %3859 = vrot.lane.b32.xlu0 %v3630, 127
    %v3860 = vpop.permute.xlu0 %3859
    %v3869 = vcombine.low %v3846, %v3854
    %v3870 = vcombine.high %v3846, %v3854
    %v3872 = vunpack.c.l.s4 1983009808
    %v3873 = vunpack.c.0.s8 %v3872
    %v3874 = vlaneseq
    %v3875 = vshrl.u32 %v3874, 7
    %v3876 = vsub.s32 %v3873, %v3875
    %v3877 = vrot.slane %v3869, %v3876
    %v3879 = vunpack.c.l.s4 1983009808
    %v3880 = vunpack.c.0.s8 %v3879
    %v3881 = vlaneseq
    %v3882 = vshrl.u32 %v3881, 7
    %v3883 = vsub.s32 %v3880, %v3882
    %v3884 = vrot.slane %v3870, %v3883
    %v3885 = vcombine.low %v3850, %v3858
    %v3886 = vcombine.high %v3850, %v3858
    %v3888 = vunpack.c.l.s4 1983009808
    %v3889 = vunpack.c.0.s8 %v3888
    %v3890 = vlaneseq
    %v3891 = vshrl.u32 %v3890, 7
    %v3892 = vsub.s32 %v3889, %v3891
    %v3893 = vrot.slane %v3885, %v3892
    %v3895 = vunpack.c.l.s4 1983009808
    %v3896 = vunpack.c.0.s8 %v3895
    %v3897 = vlaneseq
    %v3898 = vshrl.u32 %v3897, 7
    %v3899 = vsub.s32 %v3896, %v3898
    %v3900 = vrot.slane %v3886, %v3899
    %v3901 = vcombine.low %v3877, %v3893
    %v3902 = vcombine.high %v3877, %v3893
    %v3904 = vunpack.c.l.s4 1934713408
    %v3905 = vunpack.c.0.s8 %v3904
    %v3906 = vlaneseq
    %v3907 = vshrl.u32 %v3906, 7
    %v3908 = vsub.s32 %v3905, %v3907
    %v3909 = vrot.slane %v3901, %v3908
    %v3911 = vunpack.c.l.s4 1934713408
    %v3912 = vunpack.c.0.s8 %v3911
    %v3913 = vlaneseq
    %v3914 = vshrl.u32 %v3913, 7
    %v3915 = vsub.s32 %v3912, %v3914
    %v3916 = vrot.slane %v3902, %v3915
    %v3917 = vcombine.low %v3884, %v3900
    %v3918 = vcombine.high %v3884, %v3900
    %v3920 = vunpack.c.l.s4 1934713408
    %v3921 = vunpack.c.0.s8 %v3920
    %v3922 = vlaneseq
    %v3923 = vshrl.u32 %v3922, 7
    %v3924 = vsub.s32 %v3921, %v3923
    %v3925 = vrot.slane %v3917, %v3924
    %v3927 = vunpack.c.l.s4 1934713408
    %v3928 = vunpack.c.0.s8 %v3927
    %v3929 = vlaneseq
    %v3930 = vshrl.u32 %v3929, 7
    %v3931 = vsub.s32 %v3928, %v3930
    %v3932 = vrot.slane %v3918, %v3931
    %v3933 = vcombine.high %v3909, 0.0
    %v3934 = vcombine.high %v3916, 0.0
    %v3935 = vcombine.high %v3925, 0.0
    %v3936 = vcombine.high %v3932, 0.0
    %v3937 = vcombine.low %v3848, %v3856
    %v3938 = vcombine.high %v3848, %v3856
    %v3940 = vunpack.c.l.s4 1983009808
    %v3941 = vunpack.c.0.s8 %v3940
    %v3942 = vlaneseq
    %v3943 = vshrl.u32 %v3942, 7
    %v3944 = vsub.s32 %v3941, %v3943
    %v3945 = vrot.slane %v3937, %v3944
    %v3947 = vunpack.c.l.s4 1983009808
    %v3948 = vunpack.c.0.s8 %v3947
    %v3949 = vlaneseq
    %v3950 = vshrl.u32 %v3949, 7
    %v3951 = vsub.s32 %v3948, %v3950
    %v3952 = vrot.slane %v3938, %v3951
    %v3953 = vcombine.low %v3852, %v3860
    %v3954 = vcombine.high %v3852, %v3860
    %v3956 = vunpack.c.l.s4 1983009808
    %v3957 = vunpack.c.0.s8 %v3956
    %v3958 = vlaneseq
    %v3959 = vshrl.u32 %v3958, 7
    %v3960 = vsub.s32 %v3957, %v3959
    %v3961 = vrot.slane %v3953, %v3960
    %v3963 = vunpack.c.l.s4 1983009808
    %v3964 = vunpack.c.0.s8 %v3963
    %v3965 = vlaneseq
    %v3966 = vshrl.u32 %v3965, 7
    %v3967 = vsub.s32 %v3964, %v3966
    %v3968 = vrot.slane %v3954, %v3967
    %v3969 = vcombine.low %v3945, %v3961
    %v3970 = vcombine.high %v3945, %v3961
    %v3972 = vunpack.c.l.s4 1934713408
    %v3973 = vunpack.c.0.s8 %v3972
    %v3974 = vlaneseq
    %v3975 = vshrl.u32 %v3974, 7
    %v3976 = vsub.s32 %v3973, %v3975
    %v3977 = vrot.slane %v3969, %v3976
    %v3979 = vunpack.c.l.s4 1934713408
    %v3980 = vunpack.c.0.s8 %v3979
    %v3981 = vlaneseq
    %v3982 = vshrl.u32 %v3981, 7
    %v3983 = vsub.s32 %v3980, %v3982
    %v3984 = vrot.slane %v3970, %v3983
    %v3985 = vcombine.low %v3952, %v3968
    %v3986 = vcombine.high %v3952, %v3968
    %v3988 = vunpack.c.l.s4 1934713408
    %v3989 = vunpack.c.0.s8 %v3988
    %v3990 = vlaneseq
    %v3991 = vshrl.u32 %v3990, 7
    %v3992 = vsub.s32 %v3989, %v3991
    %v3993 = vrot.slane %v3985, %v3992
    %v3995 = vunpack.c.l.s4 1934713408
    %v3996 = vunpack.c.0.s8 %v3995
    %v3997 = vlaneseq
    %v3998 = vshrl.u32 %v3997, 7
    %v3999 = vsub.s32 %v3996, %v3998
    %v4000 = vrot.slane %v3986, %v3999
    %v4001 = vcombine.high %v3977, 0.0
    %v4002 = vcombine.high %v3984, 0.0
    %v4003 = vcombine.high %v3993, 0.0
    %v4004 = vcombine.high %v4000, 0.0
    %4006 = vrot.lane.b32.xlu0 %v3933, 16
    %v4007 = vpop.permute.xlu0 %4006
    %4010 = vrot.lane.b32.xlu0 %v3916, 32
    %v4011 = vpop.permute.xlu0 %4010
    %4014 = vrot.lane.b32.xlu0 %v3934, 48
    %v4015 = vpop.permute.xlu0 %4014
    %4018 = vrot.lane.b32.xlu0 %v3925, 64
    %v4019 = vpop.permute.xlu0 %4018
    %4022 = vrot.lane.b32.xlu0 %v3935, 80
    %v4023 = vpop.permute.xlu0 %4022
    %4026 = vrot.lane.b32.xlu0 %v3932, 96
    %v4027 = vpop.permute.xlu0 %4026
    %4030 = vrot.lane.b32.xlu0 %v3936, 112
    %v4031 = vpop.permute.xlu0 %4030
    %4034 = vrot.lane.b32.xlu0 %v4001, 16
    %v4035 = vpop.permute.xlu0 %4034
    %4038 = vrot.lane.b32.xlu0 %v3984, 32
    %v4039 = vpop.permute.xlu0 %4038
    %4042 = vrot.lane.b32.xlu0 %v4002, 48
    %v4043 = vpop.permute.xlu0 %4042
    %4046 = vrot.lane.b32.xlu0 %v3993, 64
    %v4047 = vpop.permute.xlu0 %4046
    %4050 = vrot.lane.b32.xlu0 %v4003, 80
    %v4051 = vpop.permute.xlu0 %4050
    %4054 = vrot.lane.b32.xlu0 %v4000, 96
    %v4055 = vpop.permute.xlu0 %4054
    %4058 = vrot.lane.b32.xlu0 %v4004, 112
    %v4059 = vpop.permute.xlu0 %4058
    %v4061 = vsel %vm372, %v3909, %v4007
    %v4062 = vsel %vm374, %v4061, %v4011
    %v4063 = vsel %vm376, %v4062, %v4015
    %v4064 = vsel %vm378, %v4063, %v4019
    %v4065 = vsel %vm380, %v4064, %v4023
    %v4066 = vsel %vm382, %v4065, %v4027
    %v4067 = vsel %vm384, %v4066, %v4031
    %v4068 = vsel %vm372, %v3977, %v4035
    %v4069 = vsel %vm374, %v4068, %v4039
    %v4070 = vsel %vm376, %v4069, %v4043
    %v4071 = vsel %vm378, %v4070, %v4047
    %v4072 = vsel %vm380, %v4071, %v4051
    %v4073 = vsel %vm382, %v4072, %v4055
    %v4074 = vsel %vm384, %v4073, %v4059
    %4075 = vrot.lane.b32.xlu0 %v3623, 126
    %v4076 = vpop.permute.xlu0 %4075
    %4077 = vrot.lane.b32.xlu0 %v3624, 126
    %v4078 = vpop.permute.xlu0 %4077
    %4079 = vrot.lane.b32.xlu0 %v3625, 126
    %v4080 = vpop.permute.xlu0 %4079
    %4081 = vrot.lane.b32.xlu0 %v3626, 126
    %v4082 = vpop.permute.xlu0 %4081
    %4083 = vrot.lane.b32.xlu0 %v3627, 126
    %v4084 = vpop.permute.xlu0 %4083
    %4085 = vrot.lane.b32.xlu0 %v3628, 126
    %v4086 = vpop.permute.xlu0 %4085
    %4087 = vrot.lane.b32.xlu0 %v3629, 126
    %v4088 = vpop.permute.xlu0 %4087
    %4089 = vrot.lane.b32.xlu0 %v3630, 126
    %v4090 = vpop.permute.xlu0 %4089
    %v4099 = vcombine.low %v4076, %v4084
    %v4100 = vcombine.high %v4076, %v4084
    %v4102 = vunpack.c.l.s4 1983009808
    %v4103 = vunpack.c.0.s8 %v4102
    %v4104 = vlaneseq
    %v4105 = vshrl.u32 %v4104, 7
    %v4106 = vsub.s32 %v4103, %v4105
    %v4107 = vrot.slane %v4099, %v4106
    %v4109 = vunpack.c.l.s4 1983009808
    %v4110 = vunpack.c.0.s8 %v4109
    %v4111 = vlaneseq
    %v4112 = vshrl.u32 %v4111, 7
    %v4113 = vsub.s32 %v4110, %v4112
    %v4114 = vrot.slane %v4100, %v4113
    %v4115 = vcombine.low %v4080, %v4088
    %v4116 = vcombine.high %v4080, %v4088
    %v4118 = vunpack.c.l.s4 1983009808
    %v4119 = vunpack.c.0.s8 %v4118
    %v4120 = vlaneseq
    %v4121 = vshrl.u32 %v4120, 7
    %v4122 = vsub.s32 %v4119, %v4121
    %v4123 = vrot.slane %v4115, %v4122
    %v4125 = vunpack.c.l.s4 1983009808
    %v4126 = vunpack.c.0.s8 %v4125
    %v4127 = vlaneseq
    %v4128 = vshrl.u32 %v4127, 7
    %v4129 = vsub.s32 %v4126, %v4128
    %v4130 = vrot.slane %v4116, %v4129
    %v4131 = vcombine.low %v4107, %v4123
    %v4132 = vcombine.high %v4107, %v4123
    %v4134 = vunpack.c.l.s4 1934713408
    %v4135 = vunpack.c.0.s8 %v4134
    %v4136 = vlaneseq
    %v4137 = vshrl.u32 %v4136, 7
    %v4138 = vsub.s32 %v4135, %v4137
    %v4139 = vrot.slane %v4131, %v4138
    %v4141 = vunpack.c.l.s4 1934713408
    %v4142 = vunpack.c.0.s8 %v4141
    %v4143 = vlaneseq
    %v4144 = vshrl.u32 %v4143, 7
    %v4145 = vsub.s32 %v4142, %v4144
    %v4146 = vrot.slane %v4132, %v4145
    %v4147 = vcombine.low %v4114, %v4130
    %v4148 = vcombine.high %v4114, %v4130
    %v4150 = vunpack.c.l.s4 1934713408
    %v4151 = vunpack.c.0.s8 %v4150
    %v4152 = vlaneseq
    %v4153 = vshrl.u32 %v4152, 7
    %v4154 = vsub.s32 %v4151, %v4153
    %v4155 = vrot.slane %v4147, %v4154
    %v4157 = vunpack.c.l.s4 1934713408
    %v4158 = vunpack.c.0.s8 %v4157
    %v4159 = vlaneseq
    %v4160 = vshrl.u32 %v4159, 7
    %v4161 = vsub.s32 %v4158, %v4160
    %v4162 = vrot.slane %v4148, %v4161
    %v4163 = vcombine.high %v4139, 0.0
    %v4164 = vcombine.high %v4146, 0.0
    %v4165 = vcombine.high %v4155, 0.0
    %v4166 = vcombine.high %v4162, 0.0
    %v4167 = vcombine.low %v4078, %v4086
    %v4168 = vcombine.high %v4078, %v4086
    %v4170 = vunpack.c.l.s4 1983009808
    %v4171 = vunpack.c.0.s8 %v4170
    %v4172 = vlaneseq
    %v4173 = vshrl.u32 %v4172, 7
    %v4174 = vsub.s32 %v4171, %v4173
    %v4175 = vrot.slane %v4167, %v4174
    %v4177 = vunpack.c.l.s4 1983009808
    %v4178 = vunpack.c.0.s8 %v4177
    %v4179 = vlaneseq
    %v4180 = vshrl.u32 %v4179, 7
    %v4181 = vsub.s32 %v4178, %v4180
    %v4182 = vrot.slane %v4168, %v4181
    %v4183 = vcombine.low %v4082, %v4090
    %v4184 = vcombine.high %v4082, %v4090
    %v4186 = vunpack.c.l.s4 1983009808
    %v4187 = vunpack.c.0.s8 %v4186
    %v4188 = vlaneseq
    %v4189 = vshrl.u32 %v4188, 7
    %v4190 = vsub.s32 %v4187, %v4189
    %v4191 = vrot.slane %v4183, %v4190
    %v4193 = vunpack.c.l.s4 1983009808
    %v4194 = vunpack.c.0.s8 %v4193
    %v4195 = vlaneseq
    %v4196 = vshrl.u32 %v4195, 7
    %v4197 = vsub.s32 %v4194, %v4196
    %v4198 = vrot.slane %v4184, %v4197
    %v4199 = vcombine.low %v4175, %v4191
    %v4200 = vcombine.high %v4175, %v4191
    %v4202 = vunpack.c.l.s4 1934713408
    %v4203 = vunpack.c.0.s8 %v4202
    %v4204 = vlaneseq
    %v4205 = vshrl.u32 %v4204, 7
    %v4206 = vsub.s32 %v4203, %v4205
    %v4207 = vrot.slane %v4199, %v4206
    %v4209 = vunpack.c.l.s4 1934713408
    %v4210 = vunpack.c.0.s8 %v4209
    %v4211 = vlaneseq
    %v4212 = vshrl.u32 %v4211, 7
    %v4213 = vsub.s32 %v4210, %v4212
    %v4214 = vrot.slane %v4200, %v4213
    %v4215 = vcombine.low %v4182, %v4198
    %v4216 = vcombine.high %v4182, %v4198
    %v4218 = vunpack.c.l.s4 1934713408
    %v4219 = vunpack.c.0.s8 %v4218
    %v4220 = vlaneseq
    %v4221 = vshrl.u32 %v4220, 7
    %v4222 = vsub.s32 %v4219, %v4221
    %v4223 = vrot.slane %v4215, %v4222
    %v4225 = vunpack.c.l.s4 1934713408
    %v4226 = vunpack.c.0.s8 %v4225
    %v4227 = vlaneseq
    %v4228 = vshrl.u32 %v4227, 7
    %v4229 = vsub.s32 %v4226, %v4228
    %v4230 = vrot.slane %v4216, %v4229
    %v4231 = vcombine.high %v4207, 0.0
    %v4232 = vcombine.high %v4214, 0.0
    %v4233 = vcombine.high %v4223, 0.0
    %v4234 = vcombine.high %v4230, 0.0
    %4236 = vrot.lane.b32.xlu0 %v4163, 16
    %v4237 = vpop.permute.xlu0 %4236
    %4240 = vrot.lane.b32.xlu0 %v4146, 32
    %v4241 = vpop.permute.xlu0 %4240
    %4244 = vrot.lane.b32.xlu0 %v4164, 48
    %v4245 = vpop.permute.xlu0 %4244
    %4248 = vrot.lane.b32.xlu0 %v4155, 64
    %v4249 = vpop.permute.xlu0 %4248
    %4252 = vrot.lane.b32.xlu0 %v4165, 80
    %v4253 = vpop.permute.xlu0 %4252
    %4256 = vrot.lane.b32.xlu0 %v4162, 96
    %v4257 = vpop.permute.xlu0 %4256
    %4260 = vrot.lane.b32.xlu0 %v4166, 112
    %v4261 = vpop.permute.xlu0 %4260
    %4264 = vrot.lane.b32.xlu0 %v4231, 16
    %v4265 = vpop.permute.xlu0 %4264
    %4268 = vrot.lane.b32.xlu0 %v4214, 32
    %v4269 = vpop.permute.xlu0 %4268
    %4272 = vrot.lane.b32.xlu0 %v4232, 48
    %v4273 = vpop.permute.xlu0 %4272
    %4276 = vrot.lane.b32.xlu0 %v4223, 64
    %v4277 = vpop.permute.xlu0 %4276
    %4280 = vrot.lane.b32.xlu0 %v4233, 80
    %v4281 = vpop.permute.xlu0 %4280
    %4284 = vrot.lane.b32.xlu0 %v4230, 96
    %v4285 = vpop.permute.xlu0 %4284
    %4288 = vrot.lane.b32.xlu0 %v4234, 112
    %v4289 = vpop.permute.xlu0 %4288
    %v4291 = vsel %vm372, %v4139, %v4237
    %v4292 = vsel %vm374, %v4291, %v4241
    %v4293 = vsel %vm376, %v4292, %v4245
    %v4294 = vsel %vm378, %v4293, %v4249
    %v4295 = vsel %vm380, %v4294, %v4253
    %v4296 = vsel %vm382, %v4295, %v4257
    %v4297 = vsel %vm384, %v4296, %v4261
    %v4298 = vsel %vm372, %v4207, %v4265
    %v4299 = vsel %vm374, %v4298, %v4269
    %v4300 = vsel %vm376, %v4299, %v4273
    %v4301 = vsel %vm378, %v4300, %v4277
    %v4302 = vsel %vm380, %v4301, %v4281
    %v4303 = vsel %vm382, %v4302, %v4285
    %v4304 = vsel %vm384, %v4303, %v4289
    %v4307 = vrot.slane %v2703, 4
    %v4308 = vrot.slane %v2710, 4
    %v4313 = vrot.slane %v3147, 4
    %v4314 = vrot.slane %v3154, 4
    %v4319 = vrot.slane %v3615, 4
    %v4320 = vrot.slane %v3622, 4
    %v4325 = vrot.slane %v4067, 4
    %v4326 = vrot.slane %v4074, 4
    %v4329 = vsel %vm2249, %v2465, %v4307
    %v4330 = vsel %vm2249, %v2472, %v4308
    %v4331 = vsel %vm2249, %v2933, %v4313
    %v4332 = vsel %vm2249, %v2940, %v4314
    %v4333 = vsel %vm2249, %v3385, %v4319
    %v4334 = vsel %vm2249, %v3392, %v4320
    %v4335 = vsel %vm2249, %v3829, %v4325
    %v4336 = vsel %vm2249, %v3836, %v4326
    %v4337 = vpack.c.bf16 %v2252, %v2250
    %v4338 = vpack.c.bf16 %v2253, %v2251
    %v4339 = vpack.c.bf16 %v4331, %v4329
    %v4340 = vpack.c.bf16 %v4332, %v4330
    %v4341 = vpack.c.bf16 %v2256, %v2254
    %v4342 = vpack.c.bf16 %v2257, %v2255
    %v4343 = vpack.c.bf16 %v4335, %v4333
    %v4344 = vpack.c.bf16 %v4336, %v4334
    %v4345 = vpack.c.bf16 %v2217, %v2217
    %v4346 = vpack.c.bf16 %v2224, %v2224
    %v4347 = vpack.c.bf16 %v4297, %v4297
    %v4348 = vpack.c.bf16 %v4304, %v4304
    %v4349 = vld [vmem:[%s2] sm:$0xff]
    %4351 = vset.pattern.permute.xlu0 0
    %4352 = vperm.xlu0 %4351, %v4349
    %v4353 = vpop.permute.xlu0 %4352
    %vm4355 = vcmask 293888
    %v4357 = vsel %vm4355, %v171, 0
    %vm4359 = vcmask 1041408
    %v4361 = vsel %vm4359, %v4345, 0
    %v4364 = vsel %vm4359, %v4346, 0
    %v4367 = vsel %vm4359, %v4347, 0
    %v4370 = vsel %vm4359, %v4348, 0
    %4372 = vmatprep.subr.bf16.mxu0 %v4338
    %4373 = vmatpush1.bf16.msra.mxu0 %v4337
    %4374 = vmatprep.subr.bf16.mxu0 %v4342
    %4375 = vmatpush1.bf16.msra.mxu0 %v4341
    %4376 = vmatprep.subr.bf16.mxu0 %v4364
    %4377 = vmatpush1.bf16.msra.mxu0 %v4361
    %4378 = vmatprep.subr.bf16.mxu0 0
    %4379 = vmatpush1.bf16.msra.mxu0 0
    %4380 = vmatprep.subr.bf16.mxu0 0
    %4381 = vmatpush1.bf16.msra.mxu0 0
    %4382 = vmatprep.subr.bf16.mxu0 0
    %4383 = vmatpush1.bf16.msra.mxu0 0
    %4384 = vmatprep.subr.bf16.mxu0 0
    %4385 = vmatpush1.bf16.msra.mxu0 0
    %4386 = vmatprep.subr.bf16.mxu0 0
    %4387 = vmatpush1.bf16.msra.mxu0 0
    %4388 = vmatprep.subr.bf16.mxu0 0
    %4389 = vmatpush1.bf16.msra.mxu0 0
    %4390 = vmatprep.subr.bf16.mxu0 0
    %4391 = vmatpush1.bf16.msra.mxu0 0
    %4392 = vmatprep.subr.bf16.mxu0 0
    %4393 = vmatpush1.bf16.msra.mxu0 0
    %4394 = vmatprep.subr.bf16.mxu0 0
    %4395 = vmatpush1.bf16.msra.mxu0 0
    %4396 = vmatprep.subr.bf16.mxu0 0
    %4397 = vmatpush1.bf16.msra.mxu0 0
    %4398 = vmatprep.subr.bf16.mxu0 0
    %4399 = vmatpush1.bf16.msra.mxu0 0
    %4400 = vmatprep.subr.bf16.mxu0 0
    %4401 = vmatpush1.bf16.msra.mxu0 0
    %4402 = vmatprep.subr.bf16.mxu0 0
    %4403 = vmatpush1.bf16.msra.mxu0 0
    %4404 = vmatprep.mubr.bf16.mxu0 0
    %4405 = vmatmul.mubr.bf16.gmra.mrb[0].mxu0 %v4357
    %v4406 = vpop.f32.mrb[0].mxu0
    %v4407 = vadd.f32 %v4353, %v4406
    %v4408 = vpop.f32.mrb[0].mxu0
    %v4409 = vadd.f32 %v4353, %v4408
    %v4410 = vpop.f32.mrb[0].mxu0
    %v4411 = vpop.f32.mrb[0].mxu0
    %4412 = vdwg.mxu0
    %4413 = vmatprep.subr.bf16.mxu0 %v4340
    %4414 = vmatpush1.bf16.msra.mxu0 %v4339
    %4415 = vmatprep.subr.bf16.mxu0 %v4344
    %4416 = vmatpush1.bf16.msra.mxu0 %v4343
    %4417 = vmatprep.subr.bf16.mxu0 %v4370
    %4418 = vmatpush1.bf16.msra.mxu0 %v4367
    %4419 = vmatprep.subr.bf16.mxu0 0
    %4420 = vmatpush1.bf16.msra.mxu0 0
    %4421 = vmatprep.subr.bf16.mxu0 0
    %4422 = vmatpush1.bf16.msra.mxu0 0
    %4423 = vmatprep.subr.bf16.mxu0 0
    %4424 = vmatpush1.bf16.msra.mxu0 0
    %4425 = vmatprep.subr.bf16.mxu0 0
    %4426 = vmatpush1.bf16.msra.mxu0 0
    %4427 = vmatprep.subr.bf16.mxu0 0
    %4428 = vmatpush1.bf16.msra.mxu0 0
    %4429 = vmatprep.subr.bf16.mxu0 0
    %4430 = vmatpush1.bf16.msra.mxu0 0
    %4431 = vmatprep.subr.bf16.mxu0 0
    %4432 = vmatpush1.bf16.msra.mxu0 0
    %4433 = vmatprep.subr.bf16.mxu0 0
    %4434 = vmatpush1.bf16.msra.mxu0 0
    %4435 = vmatprep.subr.bf16.mxu0 0
    %4436 = vmatpush1.bf16.msra.mxu0 0
    %4437 = vmatprep.subr.bf16.mxu0 0
    %4438 = vmatpush1.bf16.msra.mxu0 0
    %4439 = vmatprep.subr.bf16.mxu0 0
    %4440 = vmatpush1.bf16.msra.mxu0 0
    %4441 = vmatprep.subr.bf16.mxu0 0
    %4442 = vmatpush1.bf16.msra.mxu0 0
    %4443 = vmatprep.subr.bf16.mxu0 0
    %4444 = vmatpush1.bf16.msra.mxu0 0
    %4445 = vmatprep.mubr.bf16.mxu0 0
    %4446 = vmatmul.mubr.bf16.gmra.mrb[0].mxu0 %v4357
    %v4447 = vpop.f32.mrb[0].mxu0
    %v4448 = vadd.f32 %v4353, %v4447
    %v4449 = vpop.f32.mrb[0].mxu0
    %v4450 = vadd.f32 %v4353, %v4449
    %v4451 = vpop.f32.mrb[0].mxu0
    %v4452 = vpop.f32.mrb[0].mxu0
    %4453 = vdwg.mxu0
    %v4454 = vld [vmem:[%s3] sm:$0xff]
    %v4455 = vld [vmem:[%s4] sm:$0xff]
    %v4456 = vadd.f32 %v4407, %v4409
    %v4457 = vadd.f32 %v4456, %v4448
    %v4458 = vadd.f32 %v4457, %v4450
    %4459 = vadd.xlane.f32.xlu0 %v4458
    %v4460 = vpop.xlane.xlu0 %4459
    %v4461 = vmul.f32 %v4460, 0.001953125
    %v4462 = vsub.f32 %v4407, %v4461
    %v4463 = vsub.f32 %v4409, %v4461
    %v4464 = vsub.f32 %v4448, %v4461
    %v4465 = vsub.f32 %v4450, %v4461
    %v4466 = vmul.f32 %v4462, %v4462
    %v4467 = vmul.f32 %v4463, %v4463
    %v4468 = vmul.f32 %v4464, %v4464
    %v4469 = vmul.f32 %v4465, %v4465
    %v4470 = vadd.f32 %v4466, %v4467
    %v4471 = vadd.f32 %v4470, %v4468
    %v4472 = vadd.f32 %v4471, %v4469
    %4473 = vadd.xlane.f32.xlu0 %v4472
    %v4474 = vpop.xlane.xlu0 %4473
    %v4475 = vmul.f32 %v4474, 0.001953125
    %v4476 = vadd.f32 %v4475, 1e-05
    %v4477 = vrsqrt.pop %v4476
    %v4478 = vmul.f32 %v4454, %v4477
    %v4479 = vmul.f32 %v4461, %v4478
    %v4480 = vsub.f32 %v4455, %v4479
    %4482 = vset.pattern.permute.xlu0 0
    %4483 = vperm.xlu0 %4482, %v4478
    %v4484 = vpop.permute.xlu0 %4483
    %v4486 = vmul.f32 %v4407, %v4484
    %v4487 = vmul.f32 %v4409, %v4484
    %v4488 = vmul.f32 %v4448, %v4484
    %v4489 = vmul.f32 %v4450, %v4484
    %4491 = vset.pattern.permute.xlu0 0
    %4492 = vperm.xlu0 %4491, %v4480
    %v4493 = vpop.permute.xlu0 %4492
    %v4495 = vadd.f32 %v4486, %v4493
    %v4496 = vadd.f32 %v4487, %v4493
    %v4497 = vadd.f32 %v4488, %v4493
    %v4498 = vadd.f32 %v4489, %v4493
    %v4499 = vmax.f32 %v4495, 0.0
    %v4500 = vmax.f32 %v4496, 0.0
    %v4501 = vmax.f32 %v4497, 0.0
    %v4502 = vmax.f32 %v4498, 0.0
    %4503 = vst.msk [vmem:[#allocation3] sm:$0xff] %vm48, 0.0
    %4504 = vst.msk [vmem:[#allocation3 + $0x8] sm:$0xff] %vm48, 0.0
    %4505 = vst.msk [vmem:[#allocation3 + $0x10] sm:$0x3] %vm51, 0.0
    %4506 = vst.msk [vmem:[#allocation3 + $0x18] sm:$0xff] %vm48, 0.0
    %4507 = vst.msk [vmem:[#allocation3 + $0x20] sm:$0xff] %vm48, 0.0
    %4508 = vst.msk [vmem:[#allocation3 + $0x28] sm:$0x3] %vm51, 0.0
    %4509 = vst.msk [vmem:[#allocation3 + $0x30] sm:$0xff] %vm48, 0.0
    %4510 = vst.msk [vmem:[#allocation3 + $0x38] sm:$0xff] %vm48, 0.0
    %4511 = vst.msk [vmem:[#allocation3 + $0x40] sm:$0x3] %vm51, 0.0
    %4512 = vst.msk [vmem:[#allocation3 + $0x48] sm:$0xff] %vm48, 0.0
    %4513 = vst.msk [vmem:[#allocation3 + $0x50] sm:$0xff] %vm48, 0.0
    %4514 = vst.msk [vmem:[#allocation3 + $0x58] sm:$0x3] %vm51, 0.0
    %4515 = vst.msk [vmem:[#allocation3 + $0x60] sm:$0xff] %vm48, 0.0
    %4516 = vst.msk [vmem:[#allocation3 + $0x68] sm:$0xff] %vm48, 0.0
    %4517 = vst.msk [vmem:[#allocation3 + $0x70] sm:$0x3] %vm51, 0.0
    %4518 = vst.msk [vmem:[#allocation3 + $0x78] sm:$0xff] %vm48, 0.0
    %4519 = vst.msk [vmem:[#allocation3 + $0x80] sm:$0xff] %vm48, 0.0
    %4520 = vst.msk [vmem:[#allocation3 + $0x88] sm:$0x3] %vm51, 0.0
    %4521 = vst.msk [vmem:[#allocation3 + $0x90] sm:$0xff] %vm48, 0.0
    %4522 = vst.msk [vmem:[#allocation3 + $0x98] sm:$0xff] %vm48, 0.0
    %4523 = vst.msk [vmem:[#allocation3 + $0xa0] sm:$0x3] %vm51, 0.0
    %4524 = vst.msk [vmem:[#allocation3 + $0xa8] sm:$0xff] %vm48, 0.0
    %4525 = vst.msk [vmem:[#allocation3 + $0xb0] sm:$0xff] %vm48, 0.0
    %4526 = vst.msk [vmem:[#allocation3 + $0xb8] sm:$0x3] %vm51, 0.0
    %4527 = vst.msk [vmem:[#allocation3 + $0xc0] sm:$0xff] %vm48, 0.0
    %4528 = vst.msk [vmem:[#allocation3 + $0xc8] sm:$0xff] %vm48, 0.0
    %4529 = vst.msk [vmem:[#allocation3 + $0xd0] sm:$0x3] %vm51, 0.0
    %4530 = vst.msk [vmem:[#allocation3 + $0xd8] sm:$0xff] %vm48, 0.0
    %4531 = vst.msk [vmem:[#allocation3 + $0xe0] sm:$0xff] %vm48, 0.0
    %4532 = vst.msk [vmem:[#allocation3 + $0xe8] sm:$0x3] %vm51, 0.0
    %4533 = vst.msk [vmem:[#allocation3 + $0xf0] sm:$0xff] %vm48, 0.0
    %4534 = vst.msk [vmem:[#allocation3 + $0xf8] sm:$0xff] %vm48, 0.0
    %4535 = vst.msk [vmem:[#allocation3 + $0x100] sm:$0x3] %vm51, 0.0
    %4536 = vst.msk [vmem:[#allocation3 + $0x108] sm:$0xff] %vm48, 0.0
    %4537 = vst.msk [vmem:[#allocation3 + $0x110] sm:$0xff] %vm48, 0.0
    %4538 = vst.msk [vmem:[#allocation3 + $0x118] sm:$0x3] %vm51, 0.0
    %4539 = vst.msk [vmem:[#allocation3 + $0x120] sm:$0xff] %vm48, 0.0
    %4540 = vst.msk [vmem:[#allocation3 + $0x128] sm:$0xff] %vm48, 0.0
    %4541 = vst.msk [vmem:[#allocation3 + $0x130] sm:$0x3] %vm51, 0.0
    %4542 = vst.msk [vmem:[#allocation3 + $0x138] sm:$0xff] %vm48, 0.0
    %4543 = vst.msk [vmem:[#allocation3 + $0x140] sm:$0xff] %vm48, 0.0
    %4544 = vst.msk [vmem:[#allocation3 + $0x148] sm:$0x3] %vm51, 0.0
    %4545 = vst.msk [vmem:[#allocation3 + $0x150] sm:$0xff] %vm48, 0.0
    %4546 = vst.msk [vmem:[#allocation3 + $0x158] sm:$0xff] %vm48, 0.0
    %4547 = vst.msk [vmem:[#allocation3 + $0x160] sm:$0x3] %vm51, 0.0
    %4548 = vst.msk [vmem:[#allocation3 + $0x168] sm:$0xff] %vm48, 0.0
    %4549 = vst.msk [vmem:[#allocation3 + $0x170] sm:$0xff] %vm48, 0.0
    %4550 = vst.msk [vmem:[#allocation3 + $0x178] sm:$0x3] %vm51, 0.0
    %4552 = vrot.lane.b32.xlu0 %v4499, 112
    %v4553 = vpop.permute.xlu0 %4552
    %4555 = vrot.lane.b32.xlu0 %v4499, 96
    %v4556 = vpop.permute.xlu0 %4555
    %4558 = vrot.lane.b32.xlu0 %v4499, 80
    %v4559 = vpop.permute.xlu0 %4558
    %4561 = vrot.lane.b32.xlu0 %v4499, 64
    %v4562 = vpop.permute.xlu0 %4561
    %4564 = vrot.lane.b32.xlu0 %v4499, 48
    %v4565 = vpop.permute.xlu0 %4564
    %4567 = vrot.lane.b32.xlu0 %v4499, 32
    %v4568 = vpop.permute.xlu0 %4567
    %4570 = vrot.lane.b32.xlu0 %v4499, 16
    %v4571 = vpop.permute.xlu0 %4570
    %4574 = vrot.lane.b32.xlu0 %v4500, 112
    %v4575 = vpop.permute.xlu0 %4574
    %4577 = vrot.lane.b32.xlu0 %v4500, 96
    %v4578 = vpop.permute.xlu0 %4577
    %4580 = vrot.lane.b32.xlu0 %v4500, 80
    %v4581 = vpop.permute.xlu0 %4580
    %4583 = vrot.lane.b32.xlu0 %v4500, 64
    %v4584 = vpop.permute.xlu0 %4583
    %4586 = vrot.lane.b32.xlu0 %v4500, 48
    %v4587 = vpop.permute.xlu0 %4586
    %4589 = vrot.lane.b32.xlu0 %v4500, 32
    %v4590 = vpop.permute.xlu0 %4589
    %4592 = vrot.lane.b32.xlu0 %v4500, 16
    %v4593 = vpop.permute.xlu0 %4592
    %v4595 = vcombine.low %v4499, %v4556
    %v4596 = vcombine.high %v4499, %v4556
    %v4598 = vunpack.c.l.s4 1983009808
    %v4599 = vunpack.c.0.s8 %v4598
    %v4600 = vlaneseq
    %v4601 = vshrl.u32 %v4600, 7
    %v4602 = vsub.s32 %v4599, %v4601
    %v4603 = vrot.slane %v4595, %v4602
    %v4605 = vunpack.c.l.s4 1983009808
    %v4606 = vunpack.c.0.s8 %v4605
    %v4607 = vlaneseq
    %v4608 = vshrl.u32 %v4607, 7
    %v4609 = vsub.s32 %v4606, %v4608
    %v4610 = vrot.slane %v4596, %v4609
    %v4611 = vcombine.low %v4553, %v4559
    %v4612 = vcombine.high %v4553, %v4559
    %v4614 = vunpack.c.l.s4 1983009808
    %v4615 = vunpack.c.0.s8 %v4614
    %v4616 = vlaneseq
    %v4617 = vshrl.u32 %v4616, 7
    %v4618 = vsub.s32 %v4615, %v4617
    %v4619 = vrot.slane %v4611, %v4618
    %v4621 = vunpack.c.l.s4 1983009808
    %v4622 = vunpack.c.0.s8 %v4621
    %v4623 = vlaneseq
    %v4624 = vshrl.u32 %v4623, 7
    %v4625 = vsub.s32 %v4622, %v4624
    %v4626 = vrot.slane %v4612, %v4625
    %v4627 = vcombine.low %v4562, %v4568
    %v4628 = vcombine.high %v4562, %v4568
    %v4630 = vunpack.c.l.s4 1983009808
    %v4631 = vunpack.c.0.s8 %v4630
    %v4632 = vlaneseq
    %v4633 = vshrl.u32 %v4632, 7
    %v4634 = vsub.s32 %v4631, %v4633
    %v4635 = vrot.slane %v4627, %v4634
    %v4637 = vunpack.c.l.s4 1983009808
    %v4638 = vunpack.c.0.s8 %v4637
    %v4639 = vlaneseq
    %v4640 = vshrl.u32 %v4639, 7
    %v4641 = vsub.s32 %v4638, %v4640
    %v4642 = vrot.slane %v4628, %v4641
    %v4643 = vcombine.low %v4565, %v4571
    %v4644 = vcombine.high %v4565, %v4571
    %v4646 = vunpack.c.l.s4 1983009808
    %v4647 = vunpack.c.0.s8 %v4646
    %v4648 = vlaneseq
    %v4649 = vshrl.u32 %v4648, 7
    %v4650 = vsub.s32 %v4647, %v4649
    %v4651 = vrot.slane %v4643, %v4650
    %v4653 = vunpack.c.l.s4 1983009808
    %v4654 = vunpack.c.0.s8 %v4653
    %v4655 = vlaneseq
    %v4656 = vshrl.u32 %v4655, 7
    %v4657 = vsub.s32 %v4654, %v4656
    %v4658 = vrot.slane %v4644, %v4657
    %v4659 = vcombine.low %v4603, %v4619
    %v4660 = vcombine.high %v4603, %v4619
    %v4662 = vunpack.c.l.s4 1934713408
    %v4663 = vunpack.c.0.s8 %v4662
    %v4664 = vlaneseq
    %v4665 = vshrl.u32 %v4664, 7
    %v4666 = vsub.s32 %v4663, %v4665
    %v4667 = vrot.slane %v4659, %v4666
    %v4669 = vunpack.c.l.s4 1934713408
    %v4670 = vunpack.c.0.s8 %v4669
    %v4671 = vlaneseq
    %v4672 = vshrl.u32 %v4671, 7
    %v4673 = vsub.s32 %v4670, %v4672
    %v4674 = vrot.slane %v4660, %v4673
    %v4675 = vcombine.low %v4610, %v4626
    %v4676 = vcombine.high %v4610, %v4626
    %v4678 = vunpack.c.l.s4 1934713408
    %v4679 = vunpack.c.0.s8 %v4678
    %v4680 = vlaneseq
    %v4681 = vshrl.u32 %v4680, 7
    %v4682 = vsub.s32 %v4679, %v4681
    %v4683 = vrot.slane %v4675, %v4682
    %v4685 = vunpack.c.l.s4 1934713408
    %v4686 = vunpack.c.0.s8 %v4685
    %v4687 = vlaneseq
    %v4688 = vshrl.u32 %v4687, 7
    %v4689 = vsub.s32 %v4686, %v4688
    %v4690 = vrot.slane %v4676, %v4689
    %v4691 = vcombine.low %v4635, %v4651
    %v4692 = vcombine.high %v4635, %v4651
    %v4694 = vunpack.c.l.s4 1934713408
    %v4695 = vunpack.c.0.s8 %v4694
    %v4696 = vlaneseq
    %v4697 = vshrl.u32 %v4696, 7
    %v4698 = vsub.s32 %v4695, %v4697
    %v4699 = vrot.slane %v4691, %v4698
    %v4701 = vunpack.c.l.s4 1934713408
    %v4702 = vunpack.c.0.s8 %v4701
    %v4703 = vlaneseq
    %v4704 = vshrl.u32 %v4703, 7
    %v4705 = vsub.s32 %v4702, %v4704
    %v4706 = vrot.slane %v4692, %v4705
    %v4707 = vcombine.low %v4642, %v4658
    %v4708 = vcombine.high %v4642, %v4658
    %v4710 = vunpack.c.l.s4 1934713408
    %v4711 = vunpack.c.0.s8 %v4710
    %v4712 = vlaneseq
    %v4713 = vshrl.u32 %v4712, 7
    %v4714 = vsub.s32 %v4711, %v4713
    %v4715 = vrot.slane %v4707, %v4714
    %v4717 = vunpack.c.l.s4 1934713408
    %v4718 = vunpack.c.0.s8 %v4717
    %v4719 = vlaneseq
    %v4720 = vshrl.u32 %v4719, 7
    %v4721 = vsub.s32 %v4718, %v4720
    %v4722 = vrot.slane %v4708, %v4721
    %v4723 = vcombine.low %v4667, %v4699
    %v4724 = vcombine.high %v4667, %v4699
    %v4725 = vcombine.low %v4674, %v4706
    %v4726 = vcombine.high %v4674, %v4706
    %v4727 = vcombine.low %v4683, %v4715
    %v4728 = vcombine.high %v4683, %v4715
    %v4729 = vcombine.low %v4690, %v4722
    %v4730 = vcombine.high %v4690, %v4722
    %v4731 = vcombine.low %v4500, %v4578
    %v4732 = vcombine.high %v4500, %v4578
    %v4734 = vunpack.c.l.s4 1983009808
    %v4735 = vunpack.c.0.s8 %v4734
    %v4736 = vlaneseq
    %v4737 = vshrl.u32 %v4736, 7
    %v4738 = vsub.s32 %v4735, %v4737
    %v4739 = vrot.slane %v4731, %v4738
    %v4741 = vunpack.c.l.s4 1983009808
    %v4742 = vunpack.c.0.s8 %v4741
    %v4743 = vlaneseq
    %v4744 = vshrl.u32 %v4743, 7
    %v4745 = vsub.s32 %v4742, %v4744
    %v4746 = vrot.slane %v4732, %v4745
    %v4747 = vcombine.low %v4575, %v4581
    %v4748 = vcombine.high %v4575, %v4581
    %v4750 = vunpack.c.l.s4 1983009808
    %v4751 = vunpack.c.0.s8 %v4750
    %v4752 = vlaneseq
    %v4753 = vshrl.u32 %v4752, 7
    %v4754 = vsub.s32 %v4751, %v4753
    %v4755 = vrot.slane %v4747, %v4754
    %v4757 = vunpack.c.l.s4 1983009808
    %v4758 = vunpack.c.0.s8 %v4757
    %v4759 = vlaneseq
    %v4760 = vshrl.u32 %v4759, 7
    %v4761 = vsub.s32 %v4758, %v4760
    %v4762 = vrot.slane %v4748, %v4761
    %v4763 = vcombine.low %v4584, %v4590
    %v4764 = vcombine.high %v4584, %v4590
    %v4766 = vunpack.c.l.s4 1983009808
    %v4767 = vunpack.c.0.s8 %v4766
    %v4768 = vlaneseq
    %v4769 = vshrl.u32 %v4768, 7
    %v4770 = vsub.s32 %v4767, %v4769
    %v4771 = vrot.slane %v4763, %v4770
    %v4773 = vunpack.c.l.s4 1983009808
    %v4774 = vunpack.c.0.s8 %v4773
    %v4775 = vlaneseq
    %v4776 = vshrl.u32 %v4775, 7
    %v4777 = vsub.s32 %v4774, %v4776
    %v4778 = vrot.slane %v4764, %v4777
    %v4779 = vcombine.low %v4587, %v4593
    %v4780 = vcombine.high %v4587, %v4593
    %v4782 = vunpack.c.l.s4 1983009808
    %v4783 = vunpack.c.0.s8 %v4782
    %v4784 = vlaneseq
    %v4785 = vshrl.u32 %v4784, 7
    %v4786 = vsub.s32 %v4783, %v4785
    %v4787 = vrot.slane %v4779, %v4786
    %v4789 = vunpack.c.l.s4 1983009808
    %v4790 = vunpack.c.0.s8 %v4789
    %v4791 = vlaneseq
    %v4792 = vshrl.u32 %v4791, 7
    %v4793 = vsub.s32 %v4790, %v4792
    %v4794 = vrot.slane %v4780, %v4793
    %v4795 = vcombine.low %v4739, %v4755
    %v4796 = vcombine.high %v4739, %v4755
    %v4798 = vunpack.c.l.s4 1934713408
    %v4799 = vunpack.c.0.s8 %v4798
    %v4800 = vlaneseq
    %v4801 = vshrl.u32 %v4800, 7
    %v4802 = vsub.s32 %v4799, %v4801
    %v4803 = vrot.slane %v4795, %v4802
    %v4805 = vunpack.c.l.s4 1934713408
    %v4806 = vunpack.c.0.s8 %v4805
    %v4807 = vlaneseq
    %v4808 = vshrl.u32 %v4807, 7
    %v4809 = vsub.s32 %v4806, %v4808
    %v4810 = vrot.slane %v4796, %v4809
    %v4811 = vcombine.low %v4746, %v4762
    %v4812 = vcombine.high %v4746, %v4762
    %v4814 = vunpack.c.l.s4 1934713408
    %v4815 = vunpack.c.0.s8 %v4814
    %v4816 = vlaneseq
    %v4817 = vshrl.u32 %v4816, 7
    %v4818 = vsub.s32 %v4815, %v4817
    %v4819 = vrot.slane %v4811, %v4818
    %v4821 = vunpack.c.l.s4 1934713408
    %v4822 = vunpack.c.0.s8 %v4821
    %v4823 = vlaneseq
    %v4824 = vshrl.u32 %v4823, 7
    %v4825 = vsub.s32 %v4822, %v4824
    %v4826 = vrot.slane %v4812, %v4825
    %v4827 = vcombine.low %v4771, %v4787
    %v4828 = vcombine.high %v4771, %v4787
    %v4830 = vunpack.c.l.s4 1934713408
    %v4831 = vunpack.c.0.s8 %v4830
    %v4832 = vlaneseq
    %v4833 = vshrl.u32 %v4832, 7
    %v4834 = vsub.s32 %v4831, %v4833
    %v4835 = vrot.slane %v4827, %v4834
    %v4837 = vunpack.c.l.s4 1934713408
    %v4838 = vunpack.c.0.s8 %v4837
    %v4839 = vlaneseq
    %v4840 = vshrl.u32 %v4839, 7
    %v4841 = vsub.s32 %v4838, %v4840
    %v4842 = vrot.slane %v4828, %v4841
    %v4843 = vcombine.low %v4778, %v4794
    %v4844 = vcombine.high %v4778, %v4794
    %v4846 = vunpack.c.l.s4 1934713408
    %v4847 = vunpack.c.0.s8 %v4846
    %v4848 = vlaneseq
    %v4849 = vshrl.u32 %v4848, 7
    %v4850 = vsub.s32 %v4847, %v4849
    %v4851 = vrot.slane %v4843, %v4850
    %v4853 = vunpack.c.l.s4 1934713408
    %v4854 = vunpack.c.0.s8 %v4853
    %v4855 = vlaneseq
    %v4856 = vshrl.u32 %v4855, 7
    %v4857 = vsub.s32 %v4854, %v4856
    %v4858 = vrot.slane %v4844, %v4857
    %v4859 = vcombine.low %v4803, %v4835
    %v4860 = vcombine.high %v4803, %v4835
    %v4861 = vcombine.low %v4810, %v4842
    %v4862 = vcombine.high %v4810, %v4842
    %v4863 = vcombine.low %v4819, %v4851
    %v4864 = vcombine.high %v4819, %v4851
    %v4865 = vcombine.low %v4826, %v4858
    %v4866 = vcombine.high %v4826, %v4858
    %4883 = vrot.lane.b32.xlu0 %v4723, 1
    %v4884 = vpop.permute.xlu0 %4883
    %4885 = vrot.lane.b32.xlu0 %v4859, 1
    %v4886 = vpop.permute.xlu0 %4885
    %4887 = vrot.lane.b32.xlu0 %v4724, 1
    %v4888 = vpop.permute.xlu0 %4887
    %4889 = vrot.lane.b32.xlu0 %v4860, 1
    %v4890 = vpop.permute.xlu0 %4889
    %4891 = vrot.lane.b32.xlu0 %v4725, 1
    %v4892 = vpop.permute.xlu0 %4891
    %4893 = vrot.lane.b32.xlu0 %v4861, 1
    %v4894 = vpop.permute.xlu0 %4893
    %4895 = vrot.lane.b32.xlu0 %v4726, 1
    %v4896 = vpop.permute.xlu0 %4895
    %4897 = vrot.lane.b32.xlu0 %v4862, 1
    %v4898 = vpop.permute.xlu0 %4897
    %4899 = vrot.lane.b32.xlu0 %v4727, 1
    %v4900 = vpop.permute.xlu0 %4899
    %4901 = vrot.lane.b32.xlu0 %v4863, 1
    %v4902 = vpop.permute.xlu0 %4901
    %4903 = vrot.lane.b32.xlu0 %v4728, 1
    %v4904 = vpop.permute.xlu0 %4903
    %4905 = vrot.lane.b32.xlu0 %v4864, 1
    %v4906 = vpop.permute.xlu0 %4905
    %4907 = vrot.lane.b32.xlu0 %v4729, 1
    %v4908 = vpop.permute.xlu0 %4907
    %4909 = vrot.lane.b32.xlu0 %v4865, 1
    %v4910 = vpop.permute.xlu0 %4909
    %4911 = vrot.lane.b32.xlu0 %v4730, 1
    %v4912 = vpop.permute.xlu0 %4911
    %4913 = vrot.lane.b32.xlu0 %v4866, 1
    %v4914 = vpop.permute.xlu0 %4913
    %4931 = vst.msk [vmem:[#allocation3 + $0x1] sm:$0xff] %vm154, %v4884
    %4932 = vst.msk [vmem:[#allocation3 + $0x9] sm:$0xff] %vm154, %v4886
    %4933 = vst.msk [vmem:[#allocation3 + $0x19] sm:$0xff] %vm154, %v4888
    %4934 = vst.msk [vmem:[#allocation3 + $0x21] sm:$0xff] %vm154, %v4890
    %4935 = vst.msk [vmem:[#allocation3 + $0x31] sm:$0xff] %vm154, %v4892
    %4936 = vst.msk [vmem:[#allocation3 + $0x39] sm:$0xff] %vm154, %v4894
    %4937 = vst.msk [vmem:[#allocation3 + $0x49] sm:$0xff] %vm154, %v4896
    %4938 = vst.msk [vmem:[#allocation3 + $0x51] sm:$0xff] %vm154, %v4898
    %4939 = vst.msk [vmem:[#allocation3 + $0x61] sm:$0xff] %vm154, %v4900
    %4940 = vst.msk [vmem:[#allocation3 + $0x69] sm:$0xff] %vm154, %v4902
    %4941 = vst.msk [vmem:[#allocation3 + $0x79] sm:$0xff] %vm154, %v4904
    %4942 = vst.msk [vmem:[#allocation3 + $0x81] sm:$0xff] %vm154, %v4906
    %4943 = vst.msk [vmem:[#allocation3 + $0x91] sm:$0xff] %vm154, %v4908
    %4944 = vst.msk [vmem:[#allocation3 + $0x99] sm:$0xff] %vm154, %v4910
    %4945 = vst.msk [vmem:[#allocation3 + $0xa9] sm:$0xff] %vm154, %v4912
    %4946 = vst.msk [vmem:[#allocation3 + $0xb1] sm:$0xff] %vm154, %v4914
    %4948 = vrot.lane.b32.xlu0 %v4501, 112
    %v4949 = vpop.permute.xlu0 %4948
    %4951 = vrot.lane.b32.xlu0 %v4501, 96
    %v4952 = vpop.permute.xlu0 %4951
    %4954 = vrot.lane.b32.xlu0 %v4501, 80
    %v4955 = vpop.permute.xlu0 %4954
    %4957 = vrot.lane.b32.xlu0 %v4501, 64
    %v4958 = vpop.permute.xlu0 %4957
    %4960 = vrot.lane.b32.xlu0 %v4501, 48
    %v4961 = vpop.permute.xlu0 %4960
    %4963 = vrot.lane.b32.xlu0 %v4501, 32
    %v4964 = vpop.permute.xlu0 %4963
    %4966 = vrot.lane.b32.xlu0 %v4501, 16
    %v4967 = vpop.permute.xlu0 %4966
    %4970 = vrot.lane.b32.xlu0 %v4502, 112
    %v4971 = vpop.permute.xlu0 %4970
    %4973 = vrot.lane.b32.xlu0 %v4502, 96
    %v4974 = vpop.permute.xlu0 %4973
    %4976 = vrot.lane.b32.xlu0 %v4502, 80
    %v4977 = vpop.permute.xlu0 %4976
    %4979 = vrot.lane.b32.xlu0 %v4502, 64
    %v4980 = vpop.permute.xlu0 %4979
    %4982 = vrot.lane.b32.xlu0 %v4502, 48
    %v4983 = vpop.permute.xlu0 %4982
    %4985 = vrot.lane.b32.xlu0 %v4502, 32
    %v4986 = vpop.permute.xlu0 %4985
    %4988 = vrot.lane.b32.xlu0 %v4502, 16
    %v4989 = vpop.permute.xlu0 %4988
    %v4991 = vcombine.low %v4501, %v4952
    %v4992 = vcombine.high %v4501, %v4952
    %v4994 = vunpack.c.l.s4 1983009808
    %v4995 = vunpack.c.0.s8 %v4994
    %v4996 = vlaneseq
    %v4997 = vshrl.u32 %v4996, 7
    %v4998 = vsub.s32 %v4995, %v4997
    %v4999 = vrot.slane %v4991, %v4998
    %v5001 = vunpack.c.l.s4 1983009808
    %v5002 = vunpack.c.0.s8 %v5001
    %v5003 = vlaneseq
    %v5004 = vshrl.u32 %v5003, 7
    %v5005 = vsub.s32 %v5002, %v5004
    %v5006 = vrot.slane %v4992, %v5005
    %v5007 = vcombine.low %v4949, %v4955
    %v5008 = vcombine.high %v4949, %v4955
    %v5010 = vunpack.c.l.s4 1983009808
    %v5011 = vunpack.c.0.s8 %v5010
    %v5012 = vlaneseq
    %v5013 = vshrl.u32 %v5012, 7
    %v5014 = vsub.s32 %v5011, %v5013
    %v5015 = vrot.slane %v5007, %v5014
    %v5017 = vunpack.c.l.s4 1983009808
    %v5018 = vunpack.c.0.s8 %v5017
    %v5019 = vlaneseq
    %v5020 = vshrl.u32 %v5019, 7
    %v5021 = vsub.s32 %v5018, %v5020
    %v5022 = vrot.slane %v5008, %v5021
    %v5023 = vcombine.low %v4958, %v4964
    %v5024 = vcombine.high %v4958, %v4964
    %v5026 = vunpack.c.l.s4 1983009808
    %v5027 = vunpack.c.0.s8 %v5026
    %v5028 = vlaneseq
    %v5029 = vshrl.u32 %v5028, 7
    %v5030 = vsub.s32 %v5027, %v5029
    %v5031 = vrot.slane %v5023, %v5030
    %v5033 = vunpack.c.l.s4 1983009808
    %v5034 = vunpack.c.0.s8 %v5033
    %v5035 = vlaneseq
    %v5036 = vshrl.u32 %v5035, 7
    %v5037 = vsub.s32 %v5034, %v5036
    %v5038 = vrot.slane %v5024, %v5037
    %v5039 = vcombine.low %v4961, %v4967
    %v5040 = vcombine.high %v4961, %v4967
    %v5042 = vunpack.c.l.s4 1983009808
    %v5043 = vunpack.c.0.s8 %v5042
    %v5044 = vlaneseq
    %v5045 = vshrl.u32 %v5044, 7
    %v5046 = vsub.s32 %v5043, %v5045
    %v5047 = vrot.slane %v5039, %v5046
    %v5049 = vunpack.c.l.s4 1983009808
    %v5050 = vunpack.c.0.s8 %v5049
    %v5051 = vlaneseq
    %v5052 = vshrl.u32 %v5051, 7
    %v5053 = vsub.s32 %v5050, %v5052
    %v5054 = vrot.slane %v5040, %v5053
    %v5055 = vcombine.low %v4999, %v5015
    %v5056 = vcombine.high %v4999, %v5015
    %v5058 = vunpack.c.l.s4 1934713408
    %v5059 = vunpack.c.0.s8 %v5058
    %v5060 = vlaneseq
    %v5061 = vshrl.u32 %v5060, 7
    %v5062 = vsub.s32 %v5059, %v5061
    %v5063 = vrot.slane %v5055, %v5062
    %v5065 = vunpack.c.l.s4 1934713408
    %v5066 = vunpack.c.0.s8 %v5065
    %v5067 = vlaneseq
    %v5068 = vshrl.u32 %v5067, 7
    %v5069 = vsub.s32 %v5066, %v5068
    %v5070 = vrot.slane %v5056, %v5069
    %v5071 = vcombine.low %v5006, %v5022
    %v5072 = vcombine.high %v5006, %v5022
    %v5074 = vunpack.c.l.s4 1934713408
    %v5075 = vunpack.c.0.s8 %v5074
    %v5076 = vlaneseq
    %v5077 = vshrl.u32 %v5076, 7
    %v5078 = vsub.s32 %v5075, %v5077
    %v5079 = vrot.slane %v5071, %v5078
    %v5081 = vunpack.c.l.s4 1934713408
    %v5082 = vunpack.c.0.s8 %v5081
    %v5083 = vlaneseq
    %v5084 = vshrl.u32 %v5083, 7
    %v5085 = vsub.s32 %v5082, %v5084
    %v5086 = vrot.slane %v5072, %v5085
    %v5087 = vcombine.low %v5031, %v5047
    %v5088 = vcombine.high %v5031, %v5047
    %v5090 = vunpack.c.l.s4 1934713408
    %v5091 = vunpack.c.0.s8 %v5090
    %v5092 = vlaneseq
    %v5093 = vshrl.u32 %v5092, 7
    %v5094 = vsub.s32 %v5091, %v5093
    %v5095 = vrot.slane %v5087, %v5094
    %v5097 = vunpack.c.l.s4 1934713408
    %v5098 = vunpack.c.0.s8 %v5097
    %v5099 = vlaneseq
    %v5100 = vshrl.u32 %v5099, 7
    %v5101 = vsub.s32 %v5098, %v5100
    %v5102 = vrot.slane %v5088, %v5101
    %v5103 = vcombine.low %v5038, %v5054
    %v5104 = vcombine.high %v5038, %v5054
    %v5106 = vunpack.c.l.s4 1934713408
    %v5107 = vunpack.c.0.s8 %v5106
    %v5108 = vlaneseq
    %v5109 = vshrl.u32 %v5108, 7
    %v5110 = vsub.s32 %v5107, %v5109
    %v5111 = vrot.slane %v5103, %v5110
    %v5113 = vunpack.c.l.s4 1934713408
    %v5114 = vunpack.c.0.s8 %v5113
    %v5115 = vlaneseq
    %v5116 = vshrl.u32 %v5115, 7
    %v5117 = vsub.s32 %v5114, %v5116
    %v5118 = vrot.slane %v5104, %v5117
    %v5119 = vcombine.low %v5063, %v5095
    %v5120 = vcombine.high %v5063, %v5095
    %v5121 = vcombine.low %v5070, %v5102
    %v5122 = vcombine.high %v5070, %v5102
    %v5123 = vcombine.low %v5079, %v5111
    %v5124 = vcombine.high %v5079, %v5111
    %v5125 = vcombine.low %v5086, %v5118
    %v5126 = vcombine.high %v5086, %v5118
    %v5127 = vcombine.low %v4502, %v4974
    %v5128 = vcombine.high %v4502, %v4974
    %v5130 = vunpack.c.l.s4 1983009808
    %v5131 = vunpack.c.0.s8 %v5130
    %v5132 = vlaneseq
    %v5133 = vshrl.u32 %v5132, 7
    %v5134 = vsub.s32 %v5131, %v5133
    %v5135 = vrot.slane %v5127, %v5134
    %v5137 = vunpack.c.l.s4 1983009808
    %v5138 = vunpack.c.0.s8 %v5137
    %v5139 = vlaneseq
    %v5140 = vshrl.u32 %v5139, 7
    %v5141 = vsub.s32 %v5138, %v5140
    %v5142 = vrot.slane %v5128, %v5141
    %v5143 = vcombine.low %v4971, %v4977
    %v5144 = vcombine.high %v4971, %v4977
    %v5146 = vunpack.c.l.s4 1983009808
    %v5147 = vunpack.c.0.s8 %v5146
    %v5148 = vlaneseq
    %v5149 = vshrl.u32 %v5148, 7
    %v5150 = vsub.s32 %v5147, %v5149
    %v5151 = vrot.slane %v5143, %v5150
    %v5153 = vunpack.c.l.s4 1983009808
    %v5154 = vunpack.c.0.s8 %v5153
    %v5155 = vlaneseq
    %v5156 = vshrl.u32 %v5155, 7
    %v5157 = vsub.s32 %v5154, %v5156
    %v5158 = vrot.slane %v5144, %v5157
    %v5159 = vcombine.low %v4980, %v4986
    %v5160 = vcombine.high %v4980, %v4986
    %v5162 = vunpack.c.l.s4 1983009808
    %v5163 = vunpack.c.0.s8 %v5162
    %v5164 = vlaneseq
    %v5165 = vshrl.u32 %v5164, 7
    %v5166 = vsub.s32 %v5163, %v5165
    %v5167 = vrot.slane %v5159, %v5166
    %v5169 = vunpack.c.l.s4 1983009808
    %v5170 = vunpack.c.0.s8 %v5169
    %v5171 = vlaneseq
    %v5172 = vshrl.u32 %v5171, 7
    %v5173 = vsub.s32 %v5170, %v5172
    %v5174 = vrot.slane %v5160, %v5173
    %v5175 = vcombine.low %v4983, %v4989
    %v5176 = vcombine.high %v4983, %v4989
    %v5178 = vunpack.c.l.s4 1983009808
    %v5179 = vunpack.c.0.s8 %v5178
    %v5180 = vlaneseq
    %v5181 = vshrl.u32 %v5180, 7
    %v5182 = vsub.s32 %v5179, %v5181
    %v5183 = vrot.slane %v5175, %v5182
    %v5185 = vunpack.c.l.s4 1983009808
    %v5186 = vunpack.c.0.s8 %v5185
    %v5187 = vlaneseq
    %v5188 = vshrl.u32 %v5187, 7
    %v5189 = vsub.s32 %v5186, %v5188
    %v5190 = vrot.slane %v5176, %v5189
    %v5191 = vcombine.low %v5135, %v5151
    %v5192 = vcombine.high %v5135, %v5151
    %v5194 = vunpack.c.l.s4 1934713408
    %v5195 = vunpack.c.0.s8 %v5194
    %v5196 = vlaneseq
    %v5197 = vshrl.u32 %v5196, 7
    %v5198 = vsub.s32 %v5195, %v5197
    %v5199 = vrot.slane %v5191, %v5198
    %v5201 = vunpack.c.l.s4 1934713408
    %v5202 = vunpack.c.0.s8 %v5201
    %v5203 = vlaneseq
    %v5204 = vshrl.u32 %v5203, 7
    %v5205 = vsub.s32 %v5202, %v5204
    %v5206 = vrot.slane %v5192, %v5205
    %v5207 = vcombine.low %v5142, %v5158
    %v5208 = vcombine.high %v5142, %v5158
    %v5210 = vunpack.c.l.s4 1934713408
    %v5211 = vunpack.c.0.s8 %v5210
    %v5212 = vlaneseq
    %v5213 = vshrl.u32 %v5212, 7
    %v5214 = vsub.s32 %v5211, %v5213
    %v5215 = vrot.slane %v5207, %v5214
    %v5217 = vunpack.c.l.s4 1934713408
    %v5218 = vunpack.c.0.s8 %v5217
    %v5219 = vlaneseq
    %v5220 = vshrl.u32 %v5219, 7
    %v5221 = vsub.s32 %v5218, %v5220
    %v5222 = vrot.slane %v5208, %v5221
    %v5223 = vcombine.low %v5167, %v5183
    %v5224 = vcombine.high %v5167, %v5183
    %v5226 = vunpack.c.l.s4 1934713408
    %v5227 = vunpack.c.0.s8 %v5226
    %v5228 = vlaneseq
    %v5229 = vshrl.u32 %v5228, 7
    %v5230 = vsub.s32 %v5227, %v5229
    %v5231 = vrot.slane %v5223, %v5230
    %v5233 = vunpack.c.l.s4 1934713408
    %v5234 = vunpack.c.0.s8 %v5233
    %v5235 = vlaneseq
    %v5236 = vshrl.u32 %v5235, 7
    %v5237 = vsub.s32 %v5234, %v5236
    %v5238 = vrot.slane %v5224, %v5237
    %v5239 = vcombine.low %v5174, %v5190
    %v5240 = vcombine.high %v5174, %v5190
    %v5242 = vunpack.c.l.s4 1934713408
    %v5243 = vunpack.c.0.s8 %v5242
    %v5244 = vlaneseq
    %v5245 = vshrl.u32 %v5244, 7
    %v5246 = vsub.s32 %v5243, %v5245
    %v5247 = vrot.slane %v5239, %v5246
    %v5249 = vunpack.c.l.s4 1934713408
    %v5250 = vunpack.c.0.s8 %v5249
    %v5251 = vlaneseq
    %v5252 = vshrl.u32 %v5251, 7
    %v5253 = vsub.s32 %v5250, %v5252
    %v5254 = vrot.slane %v5240, %v5253
    %v5255 = vcombine.low %v5199, %v5231
    %v5256 = vcombine.high %v5199, %v5231
    %v5257 = vcombine.low %v5206, %v5238
    %v5258 = vcombine.high %v5206, %v5238
    %v5259 = vcombine.low %v5215, %v5247
    %v5260 = vcombine.high %v5215, %v5247
    %v5261 = vcombine.low %v5222, %v5254
    %v5262 = vcombine.high %v5222, %v5254
    %5279 = vrot.lane.b32.xlu0 %v5119, 1
    %v5280 = vpop.permute.xlu0 %5279
    %5281 = vrot.lane.b32.xlu0 %v5255, 1
    %v5282 = vpop.permute.xlu0 %5281
    %5283 = vrot.lane.b32.xlu0 %v5120, 1
    %v5284 = vpop.permute.xlu0 %5283
    %5285 = vrot.lane.b32.xlu0 %v5256, 1
    %v5286 = vpop.permute.xlu0 %5285
    %5287 = vrot.lane.b32.xlu0 %v5121, 1
    %v5288 = vpop.permute.xlu0 %5287
    %5289 = vrot.lane.b32.xlu0 %v5257, 1
    %v5290 = vpop.permute.xlu0 %5289
    %5291 = vrot.lane.b32.xlu0 %v5122, 1
    %v5292 = vpop.permute.xlu0 %5291
    %5293 = vrot.lane.b32.xlu0 %v5258, 1
    %v5294 = vpop.permute.xlu0 %5293
    %5295 = vrot.lane.b32.xlu0 %v5123, 1
    %v5296 = vpop.permute.xlu0 %5295
    %5297 = vrot.lane.b32.xlu0 %v5259, 1
    %v5298 = vpop.permute.xlu0 %5297
    %5299 = vrot.lane.b32.xlu0 %v5124, 1
    %v5300 = vpop.permute.xlu0 %5299
    %5301 = vrot.lane.b32.xlu0 %v5260, 1
    %v5302 = vpop.permute.xlu0 %5301
    %5303 = vrot.lane.b32.xlu0 %v5125, 1
    %v5304 = vpop.permute.xlu0 %5303
    %5305 = vrot.lane.b32.xlu0 %v5261, 1
    %v5306 = vpop.permute.xlu0 %5305
    %5307 = vrot.lane.b32.xlu0 %v5126, 1
    %v5308 = vpop.permute.xlu0 %5307
    %5309 = vrot.lane.b32.xlu0 %v5262, 1
    %v5310 = vpop.permute.xlu0 %5309
    %s5327 = scalar_lea.vmem [#allocation3], 192
    %5328 = vst.msk [vmem:[%s5327 + $0x1] sm:$0xff] %vm154, %v5280
    %5329 = vst.msk [vmem:[%s5327 + $0x9] sm:$0xff] %vm154, %v5282
    %5330 = vst.msk [vmem:[%s5327 + $0x19] sm:$0xff] %vm154, %v5284
    %5331 = vst.msk [vmem:[%s5327 + $0x21] sm:$0xff] %vm154, %v5286
    %5332 = vst.msk [vmem:[%s5327 + $0x31] sm:$0xff] %vm154, %v5288
    %5333 = vst.msk [vmem:[%s5327 + $0x39] sm:$0xff] %vm154, %v5290
    %5334 = vst.msk [vmem:[%s5327 + $0x49] sm:$0xff] %vm154, %v5292
    %5335 = vst.msk [vmem:[%s5327 + $0x51] sm:$0xff] %vm154, %v5294
    %5336 = vst.msk [vmem:[%s5327 + $0x61] sm:$0xff] %vm154, %v5296
    %5337 = vst.msk [vmem:[%s5327 + $0x69] sm:$0xff] %vm154, %v5298
    %5338 = vst.msk [vmem:[%s5327 + $0x79] sm:$0xff] %vm154, %v5300
    %5339 = vst.msk [vmem:[%s5327 + $0x81] sm:$0xff] %vm154, %v5302
    %5340 = vst.msk [vmem:[%s5327 + $0x91] sm:$0xff] %vm154, %v5304
    %5341 = vst.msk [vmem:[%s5327 + $0x99] sm:$0xff] %vm154, %v5306
    %5342 = vst.msk [vmem:[%s5327 + $0xa9] sm:$0xff] %vm154, %v5308
    %5343 = vst.msk [vmem:[%s5327 + $0xb1] sm:$0xff] %vm154, %v5310
    %v5344 = vld [vmem:[%s5] sm:$0xf]
    %v5345 = vld [vmem:[#allocation3] sm:$0xff]
    %v5346 = vld [vmem:[#allocation3 + $0x8] sm:$0xff]
    %v5347 = vld [vmem:[#allocation3 + $0x18] sm:$0xff]
    %v5348 = vld [vmem:[#allocation3 + $0x20] sm:$0xff]
    %v5349 = vld [vmem:[#allocation3 + $0x30] sm:$0xff]
    %v5350 = vld [vmem:[#allocation3 + $0x38] sm:$0xff]
    %v5351 = vld [vmem:[#allocation3 + $0x48] sm:$0xff]
    %v5352 = vld [vmem:[#allocation3 + $0x50] sm:$0xff]
    %v5353 = vld [vmem:[#allocation3 + $0x60] sm:$0xff]
    %v5354 = vld [vmem:[#allocation3 + $0x68] sm:$0xff]
    %v5355 = vld [vmem:[#allocation3 + $0x78] sm:$0xff]
    %v5356 = vld [vmem:[#allocation3 + $0x80] sm:$0xff]
    %v5357 = vld [vmem:[#allocation3 + $0x90] sm:$0xff]
    %v5358 = vld [vmem:[#allocation3 + $0x98] sm:$0xff]
    %v5359 = vld [vmem:[#allocation3 + $0xa8] sm:$0xff]
    %v5360 = vld [vmem:[#allocation3 + $0xb0] sm:$0xff]
    %v5361 = vcombine.low %v5345, %v5349
    %v5362 = vcombine.high %v5345, %v5349
    %v5364 = vunpack.c.l.s4 1983009808
    %v5365 = vunpack.c.0.s8 %v5364
    %v5366 = vlaneseq
    %v5367 = vshrl.u32 %v5366, 7
    %v5368 = vsub.s32 %v5365, %v5367
    %v5369 = vrot.slane %v5361, %v5368
    %v5371 = vunpack.c.l.s4 1983009808
    %v5372 = vunpack.c.0.s8 %v5371
    %v5373 = vlaneseq
    %v5374 = vshrl.u32 %v5373, 7
    %v5375 = vsub.s32 %v5372, %v5374
    %v5376 = vrot.slane %v5362, %v5375
    %v5377 = vcombine.low %v5347, %v5351
    %v5378 = vcombine.high %v5347, %v5351
    %v5380 = vunpack.c.l.s4 1983009808
    %v5381 = vunpack.c.0.s8 %v5380
    %v5382 = vlaneseq
    %v5383 = vshrl.u32 %v5382, 7
    %v5384 = vsub.s32 %v5381, %v5383
    %v5385 = vrot.slane %v5377, %v5384
    %v5387 = vunpack.c.l.s4 1983009808
    %v5388 = vunpack.c.0.s8 %v5387
    %v5389 = vlaneseq
    %v5390 = vshrl.u32 %v5389, 7
    %v5391 = vsub.s32 %v5388, %v5390
    %v5392 = vrot.slane %v5378, %v5391
    %v5393 = vcombine.low %v5353, %v5357
    %v5394 = vcombine.high %v5353, %v5357
    %v5396 = vunpack.c.l.s4 1983009808
    %v5397 = vunpack.c.0.s8 %v5396
    %v5398 = vlaneseq
    %v5399 = vshrl.u32 %v5398, 7
    %v5400 = vsub.s32 %v5397, %v5399
    %v5401 = vrot.slane %v5393, %v5400
    %v5403 = vunpack.c.l.s4 1983009808
    %v5404 = vunpack.c.0.s8 %v5403
    %v5405 = vlaneseq
    %v5406 = vshrl.u32 %v5405, 7
    %v5407 = vsub.s32 %v5404, %v5406
    %v5408 = vrot.slane %v5394, %v5407
    %v5409 = vcombine.low %v5355, %v5359
    %v5410 = vcombine.high %v5355, %v5359
    %v5412 = vunpack.c.l.s4 1983009808
    %v5413 = vunpack.c.0.s8 %v5412
    %v5414 = vlaneseq
    %v5415 = vshrl.u32 %v5414, 7
    %v5416 = vsub.s32 %v5413, %v5415
    %v5417 = vrot.slane %v5409, %v5416
    %v5419 = vunpack.c.l.s4 1983009808
    %v5420 = vunpack.c.0.s8 %v5419
    %v5421 = vlaneseq
    %v5422 = vshrl.u32 %v5421, 7
    %v5423 = vsub.s32 %v5420, %v5422
    %v5424 = vrot.slane %v5410, %v5423
    %v5425 = vcombine.low %v5369, %v5385
    %v5426 = vcombine.high %v5369, %v5385
    %v5428 = vunpack.c.l.s4 1934713408
    %v5429 = vunpack.c.0.s8 %v5428
    %v5430 = vlaneseq
    %v5431 = vshrl.u32 %v5430, 7
    %v5432 = vsub.s32 %v5429, %v5431
    %v5433 = vrot.slane %v5425, %v5432
    %v5435 = vunpack.c.l.s4 1934713408
    %v5436 = vunpack.c.0.s8 %v5435
    %v5437 = vlaneseq
    %v5438 = vshrl.u32 %v5437, 7
    %v5439 = vsub.s32 %v5436, %v5438
    %v5440 = vrot.slane %v5426, %v5439
    %v5441 = vcombine.low %v5376, %v5392
    %v5442 = vcombine.high %v5376, %v5392
    %v5444 = vunpack.c.l.s4 1934713408
    %v5445 = vunpack.c.0.s8 %v5444
    %v5446 = vlaneseq
    %v5447 = vshrl.u32 %v5446, 7
    %v5448 = vsub.s32 %v5445, %v5447
    %v5449 = vrot.slane %v5441, %v5448
    %v5451 = vunpack.c.l.s4 1934713408
    %v5452 = vunpack.c.0.s8 %v5451
    %v5453 = vlaneseq
    %v5454 = vshrl.u32 %v5453, 7
    %v5455 = vsub.s32 %v5452, %v5454
    %v5456 = vrot.slane %v5442, %v5455
    %v5457 = vcombine.low %v5401, %v5417
    %v5458 = vcombine.high %v5401, %v5417
    %v5460 = vunpack.c.l.s4 1934713408
    %v5461 = vunpack.c.0.s8 %v5460
    %v5462 = vlaneseq
    %v5463 = vshrl.u32 %v5462, 7
    %v5464 = vsub.s32 %v5461, %v5463
    %v5465 = vrot.slane %v5457, %v5464
    %v5467 = vunpack.c.l.s4 1934713408
    %v5468 = vunpack.c.0.s8 %v5467
    %v5469 = vlaneseq
    %v5470 = vshrl.u32 %v5469, 7
    %v5471 = vsub.s32 %v5468, %v5470
    %v5472 = vrot.slane %v5458, %v5471
    %v5473 = vcombine.low %v5408, %v5424
    %v5474 = vcombine.high %v5408, %v5424
    %v5476 = vunpack.c.l.s4 1934713408
    %v5477 = vunpack.c.0.s8 %v5476
    %v5478 = vlaneseq
    %v5479 = vshrl.u32 %v5478, 7
    %v5480 = vsub.s32 %v5477, %v5479
    %v5481 = vrot.slane %v5473, %v5480
    %v5483 = vunpack.c.l.s4 1934713408
    %v5484 = vunpack.c.0.s8 %v5483
    %v5485 = vlaneseq
    %v5486 = vshrl.u32 %v5485, 7
    %v5487 = vsub.s32 %v5484, %v5486
    %v5488 = vrot.slane %v5474, %v5487
    %v5489 = vcombine.low %v5433, %v5465
    %v5490 = vcombine.high %v5433, %v5465
    %v5491 = vcombine.low %v5440, %v5472
    %v5492 = vcombine.high %v5440, %v5472
    %v5493 = vcombine.low %v5449, %v5481
    %v5494 = vcombine.high %v5449, %v5481
    %v5495 = vcombine.low %v5456, %v5488
    %v5496 = vcombine.high %v5456, %v5488
    %v5497 = vcombine.low %v5346, %v5350
    %v5498 = vcombine.high %v5346, %v5350
    %v5500 = vunpack.c.l.s4 1983009808
    %v5501 = vunpack.c.0.s8 %v5500
    %v5502 = vlaneseq
    %v5503 = vshrl.u32 %v5502, 7
    %v5504 = vsub.s32 %v5501, %v5503
    %v5505 = vrot.slane %v5497, %v5504
    %v5507 = vunpack.c.l.s4 1983009808
    %v5508 = vunpack.c.0.s8 %v5507
    %v5509 = vlaneseq
    %v5510 = vshrl.u32 %v5509, 7
    %v5511 = vsub.s32 %v5508, %v5510
    %v5512 = vrot.slane %v5498, %v5511
    %v5513 = vcombine.low %v5348, %v5352
    %v5514 = vcombine.high %v5348, %v5352
    %v5516 = vunpack.c.l.s4 1983009808
    %v5517 = vunpack.c.0.s8 %v5516
    %v5518 = vlaneseq
    %v5519 = vshrl.u32 %v5518, 7
    %v5520 = vsub.s32 %v5517, %v5519
    %v5521 = vrot.slane %v5513, %v5520
    %v5523 = vunpack.c.l.s4 1983009808
    %v5524 = vunpack.c.0.s8 %v5523
    %v5525 = vlaneseq
    %v5526 = vshrl.u32 %v5525, 7
    %v5527 = vsub.s32 %v5524, %v5526
    %v5528 = vrot.slane %v5514, %v5527
    %v5529 = vcombine.low %v5354, %v5358
    %v5530 = vcombine.high %v5354, %v5358
    %v5532 = vunpack.c.l.s4 1983009808
    %v5533 = vunpack.c.0.s8 %v5532
    %v5534 = vlaneseq
    %v5535 = vshrl.u32 %v5534, 7
    %v5536 = vsub.s32 %v5533, %v5535
    %v5537 = vrot.slane %v5529, %v5536
    %v5539 = vunpack.c.l.s4 1983009808
    %v5540 = vunpack.c.0.s8 %v5539
    %v5541 = vlaneseq
    %v5542 = vshrl.u32 %v5541, 7
    %v5543 = vsub.s32 %v5540, %v5542
    %v5544 = vrot.slane %v5530, %v5543
    %v5545 = vcombine.low %v5356, %v5360
    %v5546 = vcombine.high %v5356, %v5360
    %v5548 = vunpack.c.l.s4 1983009808
    %v5549 = vunpack.c.0.s8 %v5548
    %v5550 = vlaneseq
    %v5551 = vshrl.u32 %v5550, 7
    %v5552 = vsub.s32 %v5549, %v5551
    %v5553 = vrot.slane %v5545, %v5552
    %v5555 = vunpack.c.l.s4 1983009808
    %v5556 = vunpack.c.0.s8 %v5555
    %v5557 = vlaneseq
    %v5558 = vshrl.u32 %v5557, 7
    %v5559 = vsub.s32 %v5556, %v5558
    %v5560 = vrot.slane %v5546, %v5559
    %v5561 = vcombine.low %v5505, %v5521
    %v5562 = vcombine.high %v5505, %v5521
    %v5564 = vunpack.c.l.s4 1934713408
    %v5565 = vunpack.c.0.s8 %v5564
    %v5566 = vlaneseq
    %v5567 = vshrl.u32 %v5566, 7
    %v5568 = vsub.s32 %v5565, %v5567
    %v5569 = vrot.slane %v5561, %v5568
    %v5571 = vunpack.c.l.s4 1934713408
    %v5572 = vunpack.c.0.s8 %v5571
    %v5573 = vlaneseq
    %v5574 = vshrl.u32 %v5573, 7
    %v5575 = vsub.s32 %v5572, %v5574
    %v5576 = vrot.slane %v5562, %v5575
    %v5577 = vcombine.low %v5512, %v5528
    %v5578 = vcombine.high %v5512, %v5528
    %v5580 = vunpack.c.l.s4 1934713408
    %v5581 = vunpack.c.0.s8 %v5580
    %v5582 = vlaneseq
    %v5583 = vshrl.u32 %v5582, 7
    %v5584 = vsub.s32 %v5581, %v5583
    %v5585 = vrot.slane %v5577, %v5584
    %v5587 = vunpack.c.l.s4 1934713408
    %v5588 = vunpack.c.0.s8 %v5587
    %v5589 = vlaneseq
    %v5590 = vshrl.u32 %v5589, 7
    %v5591 = vsub.s32 %v5588, %v5590
    %v5592 = vrot.slane %v5578, %v5591
    %v5593 = vcombine.low %v5537, %v5553
    %v5594 = vcombine.high %v5537, %v5553
    %v5596 = vunpack.c.l.s4 1934713408
    %v5597 = vunpack.c.0.s8 %v5596
    %v5598 = vlaneseq
    %v5599 = vshrl.u32 %v5598, 7
    %v5600 = vsub.s32 %v5597, %v5599
    %v5601 = vrot.slane %v5593, %v5600
    %v5603 = vunpack.c.l.s4 1934713408
    %v5604 = vunpack.c.0.s8 %v5603
    %v5605 = vlaneseq
    %v5606 = vshrl.u32 %v5605, 7
    %v5607 = vsub.s32 %v5604, %v5606
    %v5608 = vrot.slane %v5594, %v5607
    %v5609 = vcombine.low %v5544, %v5560
    %v5610 = vcombine.high %v5544, %v5560
    %v5612 = vunpack.c.l.s4 1934713408
    %v5613 = vunpack.c.0.s8 %v5612
    %v5614 = vlaneseq
    %v5615 = vshrl.u32 %v5614, 7
    %v5616 = vsub.s32 %v5613, %v5615
    %v5617 = vrot.slane %v5609, %v5616
    %v5619 = vunpack.c.l.s4 1934713408
    %v5620 = vunpack.c.0.s8 %v5619
    %v5621 = vlaneseq
    %v5622 = vshrl.u32 %v5621, 7
    %v5623 = vsub.s32 %v5620, %v5622
    %v5624 = vrot.slane %v5610, %v5623
    %v5625 = vcombine.low %v5569, %v5601
    %v5626 = vcombine.high %v5569, %v5601
    %v5627 = vcombine.low %v5576, %v5608
    %v5628 = vcombine.high %v5576, %v5608
    %v5629 = vcombine.low %v5585, %v5617
    %v5630 = vcombine.high %v5585, %v5617
    %v5631 = vcombine.low %v5592, %v5624
    %v5632 = vcombine.high %v5592, %v5624
    %5634 = vrot.lane.b32.xlu0 %v5490, 16
    %v5635 = vpop.permute.xlu0 %5634
    %5638 = vrot.lane.b32.xlu0 %v5491, 32
    %v5639 = vpop.permute.xlu0 %5638
    %5642 = vrot.lane.b32.xlu0 %v5492, 48
    %v5643 = vpop.permute.xlu0 %5642
    %5646 = vrot.lane.b32.xlu0 %v5493, 64
    %v5647 = vpop.permute.xlu0 %5646
    %5650 = vrot.lane.b32.xlu0 %v5494, 80
    %v5651 = vpop.permute.xlu0 %5650
    %5654 = vrot.lane.b32.xlu0 %v5495, 96
    %v5655 = vpop.permute.xlu0 %5654
    %5658 = vrot.lane.b32.xlu0 %v5496, 112
    %v5659 = vpop.permute.xlu0 %5658
    %5662 = vrot.lane.b32.xlu0 %v5626, 16
    %v5663 = vpop.permute.xlu0 %5662
    %5666 = vrot.lane.b32.xlu0 %v5627, 32
    %v5667 = vpop.permute.xlu0 %5666
    %5670 = vrot.lane.b32.xlu0 %v5628, 48
    %v5671 = vpop.permute.xlu0 %5670
    %5674 = vrot.lane.b32.xlu0 %v5629, 64
    %v5675 = vpop.permute.xlu0 %5674
    %5678 = vrot.lane.b32.xlu0 %v5630, 80
    %v5679 = vpop.permute.xlu0 %5678
    %5682 = vrot.lane.b32.xlu0 %v5631, 96
    %v5683 = vpop.permute.xlu0 %5682
    %5686 = vrot.lane.b32.xlu0 %v5632, 112
    %v5687 = vpop.permute.xlu0 %5686
    %v5689 = vsel %vm372, %v5489, %v5635
    %v5690 = vsel %vm374, %v5689, %v5639
    %v5691 = vsel %vm376, %v5690, %v5643
    %v5692 = vsel %vm378, %v5691, %v5647
    %v5693 = vsel %vm380, %v5692, %v5651
    %v5694 = vsel %vm382, %v5693, %v5655
    %v5695 = vsel %vm384, %v5694, %v5659
    %v5696 = vsel %vm372, %v5625, %v5663
    %v5697 = vsel %vm374, %v5696, %v5667
    %v5698 = vsel %vm376, %v5697, %v5671
    %v5699 = vsel %vm378, %v5698, %v5675
    %v5700 = vsel %vm380, %v5699, %v5679
    %v5701 = vsel %vm382, %v5700, %v5683
    %v5702 = vsel %vm384, %v5701, %v5687
    %5719 = vrot.lane.b32.xlu0 %v5345, 127
    %v5720 = vpop.permute.xlu0 %5719
    %5721 = vrot.lane.b32.xlu0 %v5346, 127
    %v5722 = vpop.permute.xlu0 %5721
    %5723 = vrot.lane.b32.xlu0 %v5347, 127
    %v5724 = vpop.permute.xlu0 %5723
    %5725 = vrot.lane.b32.xlu0 %v5348, 127
    %v5726 = vpop.permute.xlu0 %5725
    %5727 = vrot.lane.b32.xlu0 %v5349, 127
    %v5728 = vpop.permute.xlu0 %5727
    %5729 = vrot.lane.b32.xlu0 %v5350, 127
    %v5730 = vpop.permute.xlu0 %5729
    %5731 = vrot.lane.b32.xlu0 %v5351, 127
    %v5732 = vpop.permute.xlu0 %5731
    %5733 = vrot.lane.b32.xlu0 %v5352, 127
    %v5734 = vpop.permute.xlu0 %5733
    %5735 = vrot.lane.b32.xlu0 %v5353, 127
    %v5736 = vpop.permute.xlu0 %5735
    %5737 = vrot.lane.b32.xlu0 %v5354, 127
    %v5738 = vpop.permute.xlu0 %5737
    %5739 = vrot.lane.b32.xlu0 %v5355, 127
    %v5740 = vpop.permute.xlu0 %5739
    %5741 = vrot.lane.b32.xlu0 %v5356, 127
    %v5742 = vpop.permute.xlu0 %5741
    %5743 = vrot.lane.b32.xlu0 %v5357, 127
    %v5744 = vpop.permute.xlu0 %5743
    %5745 = vrot.lane.b32.xlu0 %v5358, 127
    %v5746 = vpop.permute.xlu0 %5745
    %5747 = vrot.lane.b32.xlu0 %v5359, 127
    %v5748 = vpop.permute.xlu0 %5747
    %5749 = vrot.lane.b32.xlu0 %v5360, 127
    %v5750 = vpop.permute.xlu0 %5749
    %v5767 = vcombine.low %v5720, %v5728
    %v5768 = vcombine.high %v5720, %v5728
    %v5770 = vunpack.c.l.s4 1983009808
    %v5771 = vunpack.c.0.s8 %v5770
    %v5772 = vlaneseq
    %v5773 = vshrl.u32 %v5772, 7
    %v5774 = vsub.s32 %v5771, %v5773
    %v5775 = vrot.slane %v5767, %v5774
    %v5777 = vunpack.c.l.s4 1983009808
    %v5778 = vunpack.c.0.s8 %v5777
    %v5779 = vlaneseq
    %v5780 = vshrl.u32 %v5779, 7
    %v5781 = vsub.s32 %v5778, %v5780
    %v5782 = vrot.slane %v5768, %v5781
    %v5783 = vcombine.low %v5724, %v5732
    %v5784 = vcombine.high %v5724, %v5732
    %v5786 = vunpack.c.l.s4 1983009808
    %v5787 = vunpack.c.0.s8 %v5786
    %v5788 = vlaneseq
    %v5789 = vshrl.u32 %v5788, 7
    %v5790 = vsub.s32 %v5787, %v5789
    %v5791 = vrot.slane %v5783, %v5790
    %v5793 = vunpack.c.l.s4 1983009808
    %v5794 = vunpack.c.0.s8 %v5793
    %v5795 = vlaneseq
    %v5796 = vshrl.u32 %v5795, 7
    %v5797 = vsub.s32 %v5794, %v5796
    %v5798 = vrot.slane %v5784, %v5797
    %v5799 = vcombine.low %v5736, %v5744
    %v5800 = vcombine.high %v5736, %v5744
    %v5802 = vunpack.c.l.s4 1983009808
    %v5803 = vunpack.c.0.s8 %v5802
    %v5804 = vlaneseq
    %v5805 = vshrl.u32 %v5804, 7
    %v5806 = vsub.s32 %v5803, %v5805
    %v5807 = vrot.slane %v5799, %v5806
    %v5809 = vunpack.c.l.s4 1983009808
    %v5810 = vunpack.c.0.s8 %v5809
    %v5811 = vlaneseq
    %v5812 = vshrl.u32 %v5811, 7
    %v5813 = vsub.s32 %v5810, %v5812
    %v5814 = vrot.slane %v5800, %v5813
    %v5815 = vcombine.low %v5740, %v5748
    %v5816 = vcombine.high %v5740, %v5748
    %v5818 = vunpack.c.l.s4 1983009808
    %v5819 = vunpack.c.0.s8 %v5818
    %v5820 = vlaneseq
    %v5821 = vshrl.u32 %v5820, 7
    %v5822 = vsub.s32 %v5819, %v5821
    %v5823 = vrot.slane %v5815, %v5822
    %v5825 = vunpack.c.l.s4 1983009808
    %v5826 = vunpack.c.0.s8 %v5825
    %v5827 = vlaneseq
    %v5828 = vshrl.u32 %v5827, 7
    %v5829 = vsub.s32 %v5826, %v5828
    %v5830 = vrot.slane %v5816, %v5829
    %v5831 = vcombine.low %v5775, %v5791
    %v5832 = vcombine.high %v5775, %v5791
    %v5834 = vunpack.c.l.s4 1934713408
    %v5835 = vunpack.c.0.s8 %v5834
    %v5836 = vlaneseq
    %v5837 = vshrl.u32 %v5836, 7
    %v5838 = vsub.s32 %v5835, %v5837
    %v5839 = vrot.slane %v5831, %v5838
    %v5841 = vunpack.c.l.s4 1934713408
    %v5842 = vunpack.c.0.s8 %v5841
    %v5843 = vlaneseq
    %v5844 = vshrl.u32 %v5843, 7
    %v5845 = vsub.s32 %v5842, %v5844
    %v5846 = vrot.slane %v5832, %v5845
    %v5847 = vcombine.low %v5782, %v5798
    %v5848 = vcombine.high %v5782, %v5798
    %v5850 = vunpack.c.l.s4 1934713408
    %v5851 = vunpack.c.0.s8 %v5850
    %v5852 = vlaneseq
    %v5853 = vshrl.u32 %v5852, 7
    %v5854 = vsub.s32 %v5851, %v5853
    %v5855 = vrot.slane %v5847, %v5854
    %v5857 = vunpack.c.l.s4 1934713408
    %v5858 = vunpack.c.0.s8 %v5857
    %v5859 = vlaneseq
    %v5860 = vshrl.u32 %v5859, 7
    %v5861 = vsub.s32 %v5858, %v5860
    %v5862 = vrot.slane %v5848, %v5861
    %v5863 = vcombine.low %v5807, %v5823
    %v5864 = vcombine.high %v5807, %v5823
    %v5866 = vunpack.c.l.s4 1934713408
    %v5867 = vunpack.c.0.s8 %v5866
    %v5868 = vlaneseq
    %v5869 = vshrl.u32 %v5868, 7
    %v5870 = vsub.s32 %v5867, %v5869
    %v5871 = vrot.slane %v5863, %v5870
    %v5873 = vunpack.c.l.s4 1934713408
    %v5874 = vunpack.c.0.s8 %v5873
    %v5875 = vlaneseq
    %v5876 = vshrl.u32 %v5875, 7
    %v5877 = vsub.s32 %v5874, %v5876
    %v5878 = vrot.slane %v5864, %v5877
    %v5879 = vcombine.low %v5814, %v5830
    %v5880 = vcombine.high %v5814, %v5830
    %v5882 = vunpack.c.l.s4 1934713408
    %v5883 = vunpack.c.0.s8 %v5882
    %v5884 = vlaneseq
    %v5885 = vshrl.u32 %v5884, 7
    %v5886 = vsub.s32 %v5883, %v5885
    %v5887 = vrot.slane %v5879, %v5886
    %v5889 = vunpack.c.l.s4 1934713408
    %v5890 = vunpack.c.0.s8 %v5889
    %v5891 = vlaneseq
    %v5892 = vshrl.u32 %v5891, 7
    %v5893 = vsub.s32 %v5890, %v5892
    %v5894 = vrot.slane %v5880, %v5893
    %v5895 = vcombine.low %v5839, %v5871
    %v5896 = vcombine.high %v5839, %v5871
    %v5897 = vcombine.low %v5846, %v5878
    %v5898 = vcombine.high %v5846, %v5878
    %v5899 = vcombine.low %v5855, %v5887
    %v5900 = vcombine.high %v5855, %v5887
    %v5901 = vcombine.low %v5862, %v5894
    %v5902 = vcombine.high %v5862, %v5894
    %v5903 = vcombine.low %v5722, %v5730
    %v5904 = vcombine.high %v5722, %v5730
    %v5906 = vunpack.c.l.s4 1983009808
    %v5907 = vunpack.c.0.s8 %v5906
    %v5908 = vlaneseq
    %v5909 = vshrl.u32 %v5908, 7
    %v5910 = vsub.s32 %v5907, %v5909
    %v5911 = vrot.slane %v5903, %v5910
    %v5913 = vunpack.c.l.s4 1983009808
    %v5914 = vunpack.c.0.s8 %v5913
    %v5915 = vlaneseq
    %v5916 = vshrl.u32 %v5915, 7
    %v5917 = vsub.s32 %v5914, %v5916
    %v5918 = vrot.slane %v5904, %v5917
    %v5919 = vcombine.low %v5726, %v5734
    %v5920 = vcombine.high %v5726, %v5734
    %v5922 = vunpack.c.l.s4 1983009808
    %v5923 = vunpack.c.0.s8 %v5922
    %v5924 = vlaneseq
    %v5925 = vshrl.u32 %v5924, 7
    %v5926 = vsub.s32 %v5923, %v5925
    %v5927 = vrot.slane %v5919, %v5926
    %v5929 = vunpack.c.l.s4 1983009808
    %v5930 = vunpack.c.0.s8 %v5929
    %v5931 = vlaneseq
    %v5932 = vshrl.u32 %v5931, 7
    %v5933 = vsub.s32 %v5930, %v5932
    %v5934 = vrot.slane %v5920, %v5933
    %v5935 = vcombine.low %v5738, %v5746
    %v5936 = vcombine.high %v5738, %v5746
    %v5938 = vunpack.c.l.s4 1983009808
    %v5939 = vunpack.c.0.s8 %v5938
    %v5940 = vlaneseq
    %v5941 = vshrl.u32 %v5940, 7
    %v5942 = vsub.s32 %v5939, %v5941
    %v5943 = vrot.slane %v5935, %v5942
    %v5945 = vunpack.c.l.s4 1983009808
    %v5946 = vunpack.c.0.s8 %v5945
    %v5947 = vlaneseq
    %v5948 = vshrl.u32 %v5947, 7
    %v5949 = vsub.s32 %v5946, %v5948
    %v5950 = vrot.slane %v5936, %v5949
    %v5951 = vcombine.low %v5742, %v5750
    %v5952 = vcombine.high %v5742, %v5750
    %v5954 = vunpack.c.l.s4 1983009808
    %v5955 = vunpack.c.0.s8 %v5954
    %v5956 = vlaneseq
    %v5957 = vshrl.u32 %v5956, 7
    %v5958 = vsub.s32 %v5955, %v5957
    %v5959 = vrot.slane %v5951, %v5958
    %v5961 = vunpack.c.l.s4 1983009808
    %v5962 = vunpack.c.0.s8 %v5961
    %v5963 = vlaneseq
    %v5964 = vshrl.u32 %v5963, 7
    %v5965 = vsub.s32 %v5962, %v5964
    %v5966 = vrot.slane %v5952, %v5965
    %v5967 = vcombine.low %v5911, %v5927
    %v5968 = vcombine.high %v5911, %v5927
    %v5970 = vunpack.c.l.s4 1934713408
    %v5971 = vunpack.c.0.s8 %v5970
    %v5972 = vlaneseq
    %v5973 = vshrl.u32 %v5972, 7
    %v5974 = vsub.s32 %v5971, %v5973
    %v5975 = vrot.slane %v5967, %v5974
    %v5977 = vunpack.c.l.s4 1934713408
    %v5978 = vunpack.c.0.s8 %v5977
    %v5979 = vlaneseq
    %v5980 = vshrl.u32 %v5979, 7
    %v5981 = vsub.s32 %v5978, %v5980
    %v5982 = vrot.slane %v5968, %v5981
    %v5983 = vcombine.low %v5918, %v5934
    %v5984 = vcombine.high %v5918, %v5934
    %v5986 = vunpack.c.l.s4 1934713408
    %v5987 = vunpack.c.0.s8 %v5986
    %v5988 = vlaneseq
    %v5989 = vshrl.u32 %v5988, 7
    %v5990 = vsub.s32 %v5987, %v5989
    %v5991 = vrot.slane %v5983, %v5990
    %v5993 = vunpack.c.l.s4 1934713408
    %v5994 = vunpack.c.0.s8 %v5993
    %v5995 = vlaneseq
    %v5996 = vshrl.u32 %v5995, 7
    %v5997 = vsub.s32 %v5994, %v5996
    %v5998 = vrot.slane %v5984, %v5997
    %v5999 = vcombine.low %v5943, %v5959
    %v6000 = vcombine.high %v5943, %v5959
    %v6002 = vunpack.c.l.s4 1934713408
    %v6003 = vunpack.c.0.s8 %v6002
    %v6004 = vlaneseq
    %v6005 = vshrl.u32 %v6004, 7
    %v6006 = vsub.s32 %v6003, %v6005
    %v6007 = vrot.slane %v5999, %v6006
    %v6009 = vunpack.c.l.s4 1934713408
    %v6010 = vunpack.c.0.s8 %v6009
    %v6011 = vlaneseq
    %v6012 = vshrl.u32 %v6011, 7
    %v6013 = vsub.s32 %v6010, %v6012
    %v6014 = vrot.slane %v6000, %v6013
    %v6015 = vcombine.low %v5950, %v5966
    %v6016 = vcombine.high %v5950, %v5966
    %v6018 = vunpack.c.l.s4 1934713408
    %v6019 = vunpack.c.0.s8 %v6018
    %v6020 = vlaneseq
    %v6021 = vshrl.u32 %v6020, 7
    %v6022 = vsub.s32 %v6019, %v6021
    %v6023 = vrot.slane %v6015, %v6022
    %v6025 = vunpack.c.l.s4 1934713408
    %v6026 = vunpack.c.0.s8 %v6025
    %v6027 = vlaneseq
    %v6028 = vshrl.u32 %v6027, 7
    %v6029 = vsub.s32 %v6026, %v6028
    %v6030 = vrot.slane %v6016, %v6029
    %v6031 = vcombine.low %v5975, %v6007
    %v6032 = vcombine.high %v5975, %v6007
    %v6033 = vcombine.low %v5982, %v6014
    %v6034 = vcombine.high %v5982, %v6014
    %v6035 = vcombine.low %v5991, %v6023
    %v6036 = vcombine.high %v5991, %v6023
    %v6037 = vcombine.low %v5998, %v6030
    %v6038 = vcombine.high %v5998, %v6030
    %6040 = vrot.lane.b32.xlu0 %v5896, 16
    %v6041 = vpop.permute.xlu0 %6040
    %6044 = vrot.lane.b32.xlu0 %v5897, 32
    %v6045 = vpop.permute.xlu0 %6044
    %6048 = vrot.lane.b32.xlu0 %v5898, 48
    %v6049 = vpop.permute.xlu0 %6048
    %6052 = vrot.lane.b32.xlu0 %v5899, 64
    %v6053 = vpop.permute.xlu0 %6052
    %6056 = vrot.lane.b32.xlu0 %v5900, 80
    %v6057 = vpop.permute.xlu0 %6056
    %6060 = vrot.lane.b32.xlu0 %v5901, 96
    %v6061 = vpop.permute.xlu0 %6060
    %6064 = vrot.lane.b32.xlu0 %v5902, 112
    %v6065 = vpop.permute.xlu0 %6064
    %6068 = vrot.lane.b32.xlu0 %v6032, 16
    %v6069 = vpop.permute.xlu0 %6068
    %6072 = vrot.lane.b32.xlu0 %v6033, 32
    %v6073 = vpop.permute.xlu0 %6072
    %6076 = vrot.lane.b32.xlu0 %v6034, 48
    %v6077 = vpop.permute.xlu0 %6076
    %6080 = vrot.lane.b32.xlu0 %v6035, 64
    %v6081 = vpop.permute.xlu0 %6080
    %6084 = vrot.lane.b32.xlu0 %v6036, 80
    %v6085 = vpop.permute.xlu0 %6084
    %6088 = vrot.lane.b32.xlu0 %v6037, 96
    %v6089 = vpop.permute.xlu0 %6088
    %6092 = vrot.lane.b32.xlu0 %v6038, 112
    %v6093 = vpop.permute.xlu0 %6092
    %v6095 = vsel %vm372, %v5895, %v6041
    %v6096 = vsel %vm374, %v6095, %v6045
    %v6097 = vsel %vm376, %v6096, %v6049
    %v6098 = vsel %vm378, %v6097, %v6053
    %v6099 = vsel %vm380, %v6098, %v6057
    %v6100 = vsel %vm382, %v6099, %v6061
    %v6101 = vsel %vm384, %v6100, %v6065
    %v6102 = vsel %vm372, %v6031, %v6069
    %v6103 = vsel %vm374, %v6102, %v6073
    %v6104 = vsel %vm376, %v6103, %v6077
    %v6105 = vsel %vm378, %v6104, %v6081
    %v6106 = vsel %vm380, %v6105, %v6085
    %v6107 = vsel %vm382, %v6106, %v6089
    %v6108 = vsel %vm384, %v6107, %v6093
    %6109 = vrot.lane.b32.xlu0 %v5345, 126
    %v6110 = vpop.permute.xlu0 %6109
    %6111 = vrot.lane.b32.xlu0 %v5346, 126
    %v6112 = vpop.permute.xlu0 %6111
    %6113 = vrot.lane.b32.xlu0 %v5347, 126
    %v6114 = vpop.permute.xlu0 %6113
    %6115 = vrot.lane.b32.xlu0 %v5348, 126
    %v6116 = vpop.permute.xlu0 %6115
    %6117 = vrot.lane.b32.xlu0 %v5349, 126
    %v6118 = vpop.permute.xlu0 %6117
    %6119 = vrot.lane.b32.xlu0 %v5350, 126
    %v6120 = vpop.permute.xlu0 %6119
    %6121 = vrot.lane.b32.xlu0 %v5351, 126
    %v6122 = vpop.permute.xlu0 %6121
    %6123 = vrot.lane.b32.xlu0 %v5352, 126
    %v6124 = vpop.permute.xlu0 %6123
    %6125 = vrot.lane.b32.xlu0 %v5353, 126
    %v6126 = vpop.permute.xlu0 %6125
    %6127 = vrot.lane.b32.xlu0 %v5354, 126
    %v6128 = vpop.permute.xlu0 %6127
    %6129 = vrot.lane.b32.xlu0 %v5355, 126
    %v6130 = vpop.permute.xlu0 %6129
    %6131 = vrot.lane.b32.xlu0 %v5356, 126
    %v6132 = vpop.permute.xlu0 %6131
    %6133 = vrot.lane.b32.xlu0 %v5357, 126
    %v6134 = vpop.permute.xlu0 %6133
    %6135 = vrot.lane.b32.xlu0 %v5358, 126
    %v6136 = vpop.permute.xlu0 %6135
    %6137 = vrot.lane.b32.xlu0 %v5359, 126
    %v6138 = vpop.permute.xlu0 %6137
    %6139 = vrot.lane.b32.xlu0 %v5360, 126
    %v6140 = vpop.permute.xlu0 %6139
    %v6157 = vcombine.low %v6110, %v6118
    %v6158 = vcombine.high %v6110, %v6118
    %v6160 = vunpack.c.l.s4 1983009808
    %v6161 = vunpack.c.0.s8 %v6160
    %v6162 = vlaneseq
    %v6163 = vshrl.u32 %v6162, 7
    %v6164 = vsub.s32 %v6161, %v6163
    %v6165 = vrot.slane %v6157, %v6164
    %v6167 = vunpack.c.l.s4 1983009808
    %v6168 = vunpack.c.0.s8 %v6167
    %v6169 = vlaneseq
    %v6170 = vshrl.u32 %v6169, 7
    %v6171 = vsub.s32 %v6168, %v6170
    %v6172 = vrot.slane %v6158, %v6171
    %v6173 = vcombine.low %v6114, %v6122
    %v6174 = vcombine.high %v6114, %v6122
    %v6176 = vunpack.c.l.s4 1983009808
    %v6177 = vunpack.c.0.s8 %v6176
    %v6178 = vlaneseq
    %v6179 = vshrl.u32 %v6178, 7
    %v6180 = vsub.s32 %v6177, %v6179
    %v6181 = vrot.slane %v6173, %v6180
    %v6183 = vunpack.c.l.s4 1983009808
    %v6184 = vunpack.c.0.s8 %v6183
    %v6185 = vlaneseq
    %v6186 = vshrl.u32 %v6185, 7
    %v6187 = vsub.s32 %v6184, %v6186
    %v6188 = vrot.slane %v6174, %v6187
    %v6189 = vcombine.low %v6126, %v6134
    %v6190 = vcombine.high %v6126, %v6134
    %v6192 = vunpack.c.l.s4 1983009808
    %v6193 = vunpack.c.0.s8 %v6192
    %v6194 = vlaneseq
    %v6195 = vshrl.u32 %v6194, 7
    %v6196 = vsub.s32 %v6193, %v6195
    %v6197 = vrot.slane %v6189, %v6196
    %v6199 = vunpack.c.l.s4 1983009808
    %v6200 = vunpack.c.0.s8 %v6199
    %v6201 = vlaneseq
    %v6202 = vshrl.u32 %v6201, 7
    %v6203 = vsub.s32 %v6200, %v6202
    %v6204 = vrot.slane %v6190, %v6203
    %v6205 = vcombine.low %v6130, %v6138
    %v6206 = vcombine.high %v6130, %v6138
    %v6208 = vunpack.c.l.s4 1983009808
    %v6209 = vunpack.c.0.s8 %v6208
    %v6210 = vlaneseq
    %v6211 = vshrl.u32 %v6210, 7
    %v6212 = vsub.s32 %v6209, %v6211
    %v6213 = vrot.slane %v6205, %v6212
    %v6215 = vunpack.c.l.s4 1983009808
    %v6216 = vunpack.c.0.s8 %v6215
    %v6217 = vlaneseq
    %v6218 = vshrl.u32 %v6217, 7
    %v6219 = vsub.s32 %v6216, %v6218
    %v6220 = vrot.slane %v6206, %v6219
    %v6221 = vcombine.low %v6165, %v6181
    %v6222 = vcombine.high %v6165, %v6181
    %v6224 = vunpack.c.l.s4 1934713408
    %v6225 = vunpack.c.0.s8 %v6224
    %v6226 = vlaneseq
    %v6227 = vshrl.u32 %v6226, 7
    %v6228 = vsub.s32 %v6225, %v6227
    %v6229 = vrot.slane %v6221, %v6228
    %v6231 = vunpack.c.l.s4 1934713408
    %v6232 = vunpack.c.0.s8 %v6231
    %v6233 = vlaneseq
    %v6234 = vshrl.u32 %v6233, 7
    %v6235 = vsub.s32 %v6232, %v6234
    %v6236 = vrot.slane %v6222, %v6235
    %v6237 = vcombine.low %v6172, %v6188
    %v6238 = vcombine.high %v6172, %v6188
    %v6240 = vunpack.c.l.s4 1934713408
    %v6241 = vunpack.c.0.s8 %v6240
    %v6242 = vlaneseq
    %v6243 = vshrl.u32 %v6242, 7
    %v6244 = vsub.s32 %v6241, %v6243
    %v6245 = vrot.slane %v6237, %v6244
    %v6247 = vunpack.c.l.s4 1934713408
    %v6248 = vunpack.c.0.s8 %v6247
    %v6249 = vlaneseq
    %v6250 = vshrl.u32 %v6249, 7
    %v6251 = vsub.s32 %v6248, %v6250
    %v6252 = vrot.slane %v6238, %v6251
    %v6253 = vcombine.low %v6197, %v6213
    %v6254 = vcombine.high %v6197, %v6213
    %v6256 = vunpack.c.l.s4 1934713408
    %v6257 = vunpack.c.0.s8 %v6256
    %v6258 = vlaneseq
    %v6259 = vshrl.u32 %v6258, 7
    %v6260 = vsub.s32 %v6257, %v6259
    %v6261 = vrot.slane %v6253, %v6260
    %v6263 = vunpack.c.l.s4 1934713408
    %v6264 = vunpack.c.0.s8 %v6263
    %v6265 = vlaneseq
    %v6266 = vshrl.u32 %v6265, 7
    %v6267 = vsub.s32 %v6264, %v6266
    %v6268 = vrot.slane %v6254, %v6267
    %v6269 = vcombine.low %v6204, %v6220
    %v6270 = vcombine.high %v6204, %v6220
    %v6272 = vunpack.c.l.s4 1934713408
    %v6273 = vunpack.c.0.s8 %v6272
    %v6274 = vlaneseq
    %v6275 = vshrl.u32 %v6274, 7
    %v6276 = vsub.s32 %v6273, %v6275
    %v6277 = vrot.slane %v6269, %v6276
    %v6279 = vunpack.c.l.s4 1934713408
    %v6280 = vunpack.c.0.s8 %v6279
    %v6281 = vlaneseq
    %v6282 = vshrl.u32 %v6281, 7
    %v6283 = vsub.s32 %v6280, %v6282
    %v6284 = vrot.slane %v6270, %v6283
    %v6285 = vcombine.low %v6229, %v6261
    %v6286 = vcombine.high %v6229, %v6261
    %v6287 = vcombine.low %v6236, %v6268
    %v6288 = vcombine.high %v6236, %v6268
    %v6289 = vcombine.low %v6245, %v6277
    %v6290 = vcombine.high %v6245, %v6277
    %v6291 = vcombine.low %v6252, %v6284
    %v6292 = vcombine.high %v6252, %v6284
    %v6293 = vcombine.low %v6112, %v6120
    %v6294 = vcombine.high %v6112, %v6120
    %v6296 = vunpack.c.l.s4 1983009808
    %v6297 = vunpack.c.0.s8 %v6296
    %v6298 = vlaneseq
    %v6299 = vshrl.u32 %v6298, 7
    %v6300 = vsub.s32 %v6297, %v6299
    %v6301 = vrot.slane %v6293, %v6300
    %v6303 = vunpack.c.l.s4 1983009808
    %v6304 = vunpack.c.0.s8 %v6303
    %v6305 = vlaneseq
    %v6306 = vshrl.u32 %v6305, 7
    %v6307 = vsub.s32 %v6304, %v6306
    %v6308 = vrot.slane %v6294, %v6307
    %v6309 = vcombine.low %v6116, %v6124
    %v6310 = vcombine.high %v6116, %v6124
    %v6312 = vunpack.c.l.s4 1983009808
    %v6313 = vunpack.c.0.s8 %v6312
    %v6314 = vlaneseq
    %v6315 = vshrl.u32 %v6314, 7
    %v6316 = vsub.s32 %v6313, %v6315
    %v6317 = vrot.slane %v6309, %v6316
    %v6319 = vunpack.c.l.s4 1983009808
    %v6320 = vunpack.c.0.s8 %v6319
    %v6321 = vlaneseq
    %v6322 = vshrl.u32 %v6321, 7
    %v6323 = vsub.s32 %v6320, %v6322
    %v6324 = vrot.slane %v6310, %v6323
    %v6325 = vcombine.low %v6128, %v6136
    %v6326 = vcombine.high %v6128, %v6136
    %v6328 = vunpack.c.l.s4 1983009808
    %v6329 = vunpack.c.0.s8 %v6328
    %v6330 = vlaneseq
    %v6331 = vshrl.u32 %v6330, 7
    %v6332 = vsub.s32 %v6329, %v6331
    %v6333 = vrot.slane %v6325, %v6332
    %v6335 = vunpack.c.l.s4 1983009808
    %v6336 = vunpack.c.0.s8 %v6335
    %v6337 = vlaneseq
    %v6338 = vshrl.u32 %v6337, 7
    %v6339 = vsub.s32 %v6336, %v6338
    %v6340 = vrot.slane %v6326, %v6339
    %v6341 = vcombine.low %v6132, %v6140
    %v6342 = vcombine.high %v6132, %v6140
    %v6344 = vunpack.c.l.s4 1983009808
    %v6345 = vunpack.c.0.s8 %v6344
    %v6346 = vlaneseq
    %v6347 = vshrl.u32 %v6346, 7
    %v6348 = vsub.s32 %v6345, %v6347
    %v6349 = vrot.slane %v6341, %v6348
    %v6351 = vunpack.c.l.s4 1983009808
    %v6352 = vunpack.c.0.s8 %v6351
    %v6353 = vlaneseq
    %v6354 = vshrl.u32 %v6353, 7
    %v6355 = vsub.s32 %v6352, %v6354
    %v6356 = vrot.slane %v6342, %v6355
    %v6357 = vcombine.low %v6301, %v6317
    %v6358 = vcombine.high %v6301, %v6317
    %v6360 = vunpack.c.l.s4 1934713408
    %v6361 = vunpack.c.0.s8 %v6360
    %v6362 = vlaneseq
    %v6363 = vshrl.u32 %v6362, 7
    %v6364 = vsub.s32 %v6361, %v6363
    %v6365 = vrot.slane %v6357, %v6364
    %v6367 = vunpack.c.l.s4 1934713408
    %v6368 = vunpack.c.0.s8 %v6367
    %v6369 = vlaneseq
    %v6370 = vshrl.u32 %v6369, 7
    %v6371 = vsub.s32 %v6368, %v6370
    %v6372 = vrot.slane %v6358, %v6371
    %v6373 = vcombine.low %v6308, %v6324
    %v6374 = vcombine.high %v6308, %v6324
    %v6376 = vunpack.c.l.s4 1934713408
    %v6377 = vunpack.c.0.s8 %v6376
    %v6378 = vlaneseq
    %v6379 = vshrl.u32 %v6378, 7
    %v6380 = vsub.s32 %v6377, %v6379
    %v6381 = vrot.slane %v6373, %v6380
    %v6383 = vunpack.c.l.s4 1934713408
    %v6384 = vunpack.c.0.s8 %v6383
    %v6385 = vlaneseq
    %v6386 = vshrl.u32 %v6385, 7
    %v6387 = vsub.s32 %v6384, %v6386
    %v6388 = vrot.slane %v6374, %v6387
    %v6389 = vcombine.low %v6333, %v6349
    %v6390 = vcombine.high %v6333, %v6349
    %v6392 = vunpack.c.l.s4 1934713408
    %v6393 = vunpack.c.0.s8 %v6392
    %v6394 = vlaneseq
    %v6395 = vshrl.u32 %v6394, 7
    %v6396 = vsub.s32 %v6393, %v6395
    %v6397 = vrot.slane %v6389, %v6396
    %v6399 = vunpack.c.l.s4 1934713408
    %v6400 = vunpack.c.0.s8 %v6399
    %v6401 = vlaneseq
    %v6402 = vshrl.u32 %v6401, 7
    %v6403 = vsub.s32 %v6400, %v6402
    %v6404 = vrot.slane %v6390, %v6403
    %v6405 = vcombine.low %v6340, %v6356
    %v6406 = vcombine.high %v6340, %v6356
    %v6408 = vunpack.c.l.s4 1934713408
    %v6409 = vunpack.c.0.s8 %v6408
    %v6410 = vlaneseq
    %v6411 = vshrl.u32 %v6410, 7
    %v6412 = vsub.s32 %v6409, %v6411
    %v6413 = vrot.slane %v6405, %v6412
    %v6415 = vunpack.c.l.s4 1934713408
    %v6416 = vunpack.c.0.s8 %v6415
    %v6417 = vlaneseq
    %v6418 = vshrl.u32 %v6417, 7
    %v6419 = vsub.s32 %v6416, %v6418
    %v6420 = vrot.slane %v6406, %v6419
    %v6421 = vcombine.low %v6365, %v6397
    %v6422 = vcombine.high %v6365, %v6397
    %v6423 = vcombine.low %v6372, %v6404
    %v6424 = vcombine.high %v6372, %v6404
    %v6425 = vcombine.low %v6381, %v6413
    %v6426 = vcombine.high %v6381, %v6413
    %v6427 = vcombine.low %v6388, %v6420
    %v6428 = vcombine.high %v6388, %v6420
    %6430 = vrot.lane.b32.xlu0 %v6286, 16
    %v6431 = vpop.permute.xlu0 %6430
    %6434 = vrot.lane.b32.xlu0 %v6287, 32
    %v6435 = vpop.permute.xlu0 %6434
    %6438 = vrot.lane.b32.xlu0 %v6288, 48
    %v6439 = vpop.permute.xlu0 %6438
    %6442 = vrot.lane.b32.xlu0 %v6289, 64
    %v6443 = vpop.permute.xlu0 %6442
    %6446 = vrot.lane.b32.xlu0 %v6290, 80
    %v6447 = vpop.permute.xlu0 %6446
    %6450 = vrot.lane.b32.xlu0 %v6291, 96
    %v6451 = vpop.permute.xlu0 %6450
    %6454 = vrot.lane.b32.xlu0 %v6292, 112
    %v6455 = vpop.permute.xlu0 %6454
    %6458 = vrot.lane.b32.xlu0 %v6422, 16
    %v6459 = vpop.permute.xlu0 %6458
    %6462 = vrot.lane.b32.xlu0 %v6423, 32
    %v6463 = vpop.permute.xlu0 %6462
    %6466 = vrot.lane.b32.xlu0 %v6424, 48
    %v6467 = vpop.permute.xlu0 %6466
    %6470 = vrot.lane.b32.xlu0 %v6425, 64
    %v6471 = vpop.permute.xlu0 %6470
    %6474 = vrot.lane.b32.xlu0 %v6426, 80
    %v6475 = vpop.permute.xlu0 %6474
    %6478 = vrot.lane.b32.xlu0 %v6427, 96
    %v6479 = vpop.permute.xlu0 %6478
    %6482 = vrot.lane.b32.xlu0 %v6428, 112
    %v6483 = vpop.permute.xlu0 %6482
    %v6485 = vsel %vm372, %v6285, %v6431
    %v6486 = vsel %vm374, %v6485, %v6435
    %v6487 = vsel %vm376, %v6486, %v6439
    %v6488 = vsel %vm378, %v6487, %v6443
    %v6489 = vsel %vm380, %v6488, %v6447
    %v6490 = vsel %vm382, %v6489, %v6451
    %v6491 = vsel %vm384, %v6490, %v6455
    %v6492 = vsel %vm372, %v6421, %v6459
    %v6493 = vsel %vm374, %v6492, %v6463
    %v6494 = vsel %vm376, %v6493, %v6467
    %v6495 = vsel %vm378, %v6494, %v6471
    %v6496 = vsel %vm380, %v6495, %v6475
    %v6497 = vsel %vm382, %v6496, %v6479
    %v6498 = vsel %vm384, %v6497, %v6483
    %v6499 = vld [vmem:[#allocation3 + $0x1] sm:$0xff]
    %v6500 = vld [vmem:[#allocation3 + $0x9] sm:$0xff]
    %v6501 = vld [vmem:[#allocation3 + $0x19] sm:$0xff]
    %v6502 = vld [vmem:[#allocation3 + $0x21] sm:$0xff]
    %v6503 = vld [vmem:[#allocation3 + $0x31] sm:$0xff]
    %v6504 = vld [vmem:[#allocation3 + $0x39] sm:$0xff]
    %v6505 = vld [vmem:[#allocation3 + $0x49] sm:$0xff]
    %v6506 = vld [vmem:[#allocation3 + $0x51] sm:$0xff]
    %v6507 = vld [vmem:[#allocation3 + $0x61] sm:$0xff]
    %v6508 = vld [vmem:[#allocation3 + $0x69] sm:$0xff]
    %v6509 = vld [vmem:[#allocation3 + $0x79] sm:$0xff]
    %v6510 = vld [vmem:[#allocation3 + $0x81] sm:$0xff]
    %v6511 = vld [vmem:[#allocation3 + $0x91] sm:$0xff]
    %v6512 = vld [vmem:[#allocation3 + $0x99] sm:$0xff]
    %v6513 = vld [vmem:[#allocation3 + $0xa9] sm:$0xff]
    %v6514 = vld [vmem:[#allocation3 + $0xb1] sm:$0xff]
    %v6515 = vcombine.low %v6499, %v6503
    %v6516 = vcombine.high %v6499, %v6503
    %v6518 = vunpack.c.l.s4 1983009808
    %v6519 = vunpack.c.0.s8 %v6518
    %v6520 = vlaneseq
    %v6521 = vshrl.u32 %v6520, 7
    %v6522 = vsub.s32 %v6519, %v6521
    %v6523 = vrot.slane %v6515, %v6522
    %v6525 = vunpack.c.l.s4 1983009808
    %v6526 = vunpack.c.0.s8 %v6525
    %v6527 = vlaneseq
    %v6528 = vshrl.u32 %v6527, 7
    %v6529 = vsub.s32 %v6526, %v6528
    %v6530 = vrot.slane %v6516, %v6529
    %v6531 = vcombine.low %v6501, %v6505
    %v6532 = vcombine.high %v6501, %v6505
    %v6534 = vunpack.c.l.s4 1983009808
    %v6535 = vunpack.c.0.s8 %v6534
    %v6536 = vlaneseq
    %v6537 = vshrl.u32 %v6536, 7
    %v6538 = vsub.s32 %v6535, %v6537
    %v6539 = vrot.slane %v6531, %v6538
    %v6541 = vunpack.c.l.s4 1983009808
    %v6542 = vunpack.c.0.s8 %v6541
    %v6543 = vlaneseq
    %v6544 = vshrl.u32 %v6543, 7
    %v6545 = vsub.s32 %v6542, %v6544
    %v6546 = vrot.slane %v6532, %v6545
    %v6547 = vcombine.low %v6507, %v6511
    %v6548 = vcombine.high %v6507, %v6511
    %v6550 = vunpack.c.l.s4 1983009808
    %v6551 = vunpack.c.0.s8 %v6550
    %v6552 = vlaneseq
    %v6553 = vshrl.u32 %v6552, 7
    %v6554 = vsub.s32 %v6551, %v6553
    %v6555 = vrot.slane %v6547, %v6554
    %v6557 = vunpack.c.l.s4 1983009808
    %v6558 = vunpack.c.0.s8 %v6557
    %v6559 = vlaneseq
    %v6560 = vshrl.u32 %v6559, 7
    %v6561 = vsub.s32 %v6558, %v6560
    %v6562 = vrot.slane %v6548, %v6561
    %v6563 = vcombine.low %v6509, %v6513
    %v6564 = vcombine.high %v6509, %v6513
    %v6566 = vunpack.c.l.s4 1983009808
    %v6567 = vunpack.c.0.s8 %v6566
    %v6568 = vlaneseq
    %v6569 = vshrl.u32 %v6568, 7
    %v6570 = vsub.s32 %v6567, %v6569
    %v6571 = vrot.slane %v6563, %v6570
    %v6573 = vunpack.c.l.s4 1983009808
    %v6574 = vunpack.c.0.s8 %v6573
    %v6575 = vlaneseq
    %v6576 = vshrl.u32 %v6575, 7
    %v6577 = vsub.s32 %v6574, %v6576
    %v6578 = vrot.slane %v6564, %v6577
    %v6579 = vcombine.low %v6523, %v6539
    %v6580 = vcombine.high %v6523, %v6539
    %v6582 = vunpack.c.l.s4 1934713408
    %v6583 = vunpack.c.0.s8 %v6582
    %v6584 = vlaneseq
    %v6585 = vshrl.u32 %v6584, 7
    %v6586 = vsub.s32 %v6583, %v6585
    %v6587 = vrot.slane %v6579, %v6586
    %v6589 = vunpack.c.l.s4 1934713408
    %v6590 = vunpack.c.0.s8 %v6589
    %v6591 = vlaneseq
    %v6592 = vshrl.u32 %v6591, 7
    %v6593 = vsub.s32 %v6590, %v6592
    %v6594 = vrot.slane %v6580, %v6593
    %v6595 = vcombine.low %v6530, %v6546
    %v6596 = vcombine.high %v6530, %v6546
    %v6598 = vunpack.c.l.s4 1934713408
    %v6599 = vunpack.c.0.s8 %v6598
    %v6600 = vlaneseq
    %v6601 = vshrl.u32 %v6600, 7
    %v6602 = vsub.s32 %v6599, %v6601
    %v6603 = vrot.slane %v6595, %v6602
    %v6605 = vunpack.c.l.s4 1934713408
    %v6606 = vunpack.c.0.s8 %v6605
    %v6607 = vlaneseq
    %v6608 = vshrl.u32 %v6607, 7
    %v6609 = vsub.s32 %v6606, %v6608
    %v6610 = vrot.slane %v6596, %v6609
    %v6611 = vcombine.low %v6555, %v6571
    %v6612 = vcombine.high %v6555, %v6571
    %v6614 = vunpack.c.l.s4 1934713408
    %v6615 = vunpack.c.0.s8 %v6614
    %v6616 = vlaneseq
    %v6617 = vshrl.u32 %v6616, 7
    %v6618 = vsub.s32 %v6615, %v6617
    %v6619 = vrot.slane %v6611, %v6618
    %v6621 = vunpack.c.l.s4 1934713408
    %v6622 = vunpack.c.0.s8 %v6621
    %v6623 = vlaneseq
    %v6624 = vshrl.u32 %v6623, 7
    %v6625 = vsub.s32 %v6622, %v6624
    %v6626 = vrot.slane %v6612, %v6625
    %v6627 = vcombine.low %v6562, %v6578
    %v6628 = vcombine.high %v6562, %v6578
    %v6630 = vunpack.c.l.s4 1934713408
    %v6631 = vunpack.c.0.s8 %v6630
    %v6632 = vlaneseq
    %v6633 = vshrl.u32 %v6632, 7
    %v6634 = vsub.s32 %v6631, %v6633
    %v6635 = vrot.slane %v6627, %v6634
    %v6637 = vunpack.c.l.s4 1934713408
    %v6638 = vunpack.c.0.s8 %v6637
    %v6639 = vlaneseq
    %v6640 = vshrl.u32 %v6639, 7
    %v6641 = vsub.s32 %v6638, %v6640
    %v6642 = vrot.slane %v6628, %v6641
    %v6643 = vcombine.low %v6587, %v6619
    %v6644 = vcombine.high %v6587, %v6619
    %v6645 = vcombine.low %v6594, %v6626
    %v6646 = vcombine.high %v6594, %v6626
    %v6647 = vcombine.low %v6603, %v6635
    %v6648 = vcombine.high %v6603, %v6635
    %v6649 = vcombine.low %v6610, %v6642
    %v6650 = vcombine.high %v6610, %v6642
    %v6651 = vcombine.low %v6500, %v6504
    %v6652 = vcombine.high %v6500, %v6504
    %v6654 = vunpack.c.l.s4 1983009808
    %v6655 = vunpack.c.0.s8 %v6654
    %v6656 = vlaneseq
    %v6657 = vshrl.u32 %v6656, 7
    %v6658 = vsub.s32 %v6655, %v6657
    %v6659 = vrot.slane %v6651, %v6658
    %v6661 = vunpack.c.l.s4 1983009808
    %v6662 = vunpack.c.0.s8 %v6661
    %v6663 = vlaneseq
    %v6664 = vshrl.u32 %v6663, 7
    %v6665 = vsub.s32 %v6662, %v6664
    %v6666 = vrot.slane %v6652, %v6665
    %v6667 = vcombine.low %v6502, %v6506
    %v6668 = vcombine.high %v6502, %v6506
    %v6670 = vunpack.c.l.s4 1983009808
    %v6671 = vunpack.c.0.s8 %v6670
    %v6672 = vlaneseq
    %v6673 = vshrl.u32 %v6672, 7
    %v6674 = vsub.s32 %v6671, %v6673
    %v6675 = vrot.slane %v6667, %v6674
    %v6677 = vunpack.c.l.s4 1983009808
    %v6678 = vunpack.c.0.s8 %v6677
    %v6679 = vlaneseq
    %v6680 = vshrl.u32 %v6679, 7
    %v6681 = vsub.s32 %v6678, %v6680
    %v6682 = vrot.slane %v6668, %v6681
    %v6683 = vcombine.low %v6508, %v6512
    %v6684 = vcombine.high %v6508, %v6512
    %v6686 = vunpack.c.l.s4 1983009808
    %v6687 = vunpack.c.0.s8 %v6686
    %v6688 = vlaneseq
    %v6689 = vshrl.u32 %v6688, 7
    %v6690 = vsub.s32 %v6687, %v6689
    %v6691 = vrot.slane %v6683, %v6690
    %v6693 = vunpack.c.l.s4 1983009808
    %v6694 = vunpack.c.0.s8 %v6693
    %v6695 = vlaneseq
    %v6696 = vshrl.u32 %v6695, 7
    %v6697 = vsub.s32 %v6694, %v6696
    %v6698 = vrot.slane %v6684, %v6697
    %v6699 = vcombine.low %v6510, %v6514
    %v6700 = vcombine.high %v6510, %v6514
    %v6702 = vunpack.c.l.s4 1983009808
    %v6703 = vunpack.c.0.s8 %v6702
    %v6704 = vlaneseq
    %v6705 = vshrl.u32 %v6704, 7
    %v6706 = vsub.s32 %v6703, %v6705
    %v6707 = vrot.slane %v6699, %v6706
    %v6709 = vunpack.c.l.s4 1983009808
    %v6710 = vunpack.c.0.s8 %v6709
    %v6711 = vlaneseq
    %v6712 = vshrl.u32 %v6711, 7
    %v6713 = vsub.s32 %v6710, %v6712
    %v6714 = vrot.slane %v6700, %v6713
    %v6715 = vcombine.low %v6659, %v6675
    %v6716 = vcombine.high %v6659, %v6675
    %v6718 = vunpack.c.l.s4 1934713408
    %v6719 = vunpack.c.0.s8 %v6718
    %v6720 = vlaneseq
    %v6721 = vshrl.u32 %v6720, 7
    %v6722 = vsub.s32 %v6719, %v6721
    %v6723 = vrot.slane %v6715, %v6722
    %v6725 = vunpack.c.l.s4 1934713408
    %v6726 = vunpack.c.0.s8 %v6725
    %v6727 = vlaneseq
    %v6728 = vshrl.u32 %v6727, 7
    %v6729 = vsub.s32 %v6726, %v6728
    %v6730 = vrot.slane %v6716, %v6729
    %v6731 = vcombine.low %v6666, %v6682
    %v6732 = vcombine.high %v6666, %v6682
    %v6734 = vunpack.c.l.s4 1934713408
    %v6735 = vunpack.c.0.s8 %v6734
    %v6736 = vlaneseq
    %v6737 = vshrl.u32 %v6736, 7
    %v6738 = vsub.s32 %v6735, %v6737
    %v6739 = vrot.slane %v6731, %v6738
    %v6741 = vunpack.c.l.s4 1934713408
    %v6742 = vunpack.c.0.s8 %v6741
    %v6743 = vlaneseq
    %v6744 = vshrl.u32 %v6743, 7
    %v6745 = vsub.s32 %v6742, %v6744
    %v6746 = vrot.slane %v6732, %v6745
    %v6747 = vcombine.low %v6691, %v6707
    %v6748 = vcombine.high %v6691, %v6707
    %v6750 = vunpack.c.l.s4 1934713408
    %v6751 = vunpack.c.0.s8 %v6750
    %v6752 = vlaneseq
    %v6753 = vshrl.u32 %v6752, 7
    %v6754 = vsub.s32 %v6751, %v6753
    %v6755 = vrot.slane %v6747, %v6754
    %v6757 = vunpack.c.l.s4 1934713408
    %v6758 = vunpack.c.0.s8 %v6757
    %v6759 = vlaneseq
    %v6760 = vshrl.u32 %v6759, 7
    %v6761 = vsub.s32 %v6758, %v6760
    %v6762 = vrot.slane %v6748, %v6761
    %v6763 = vcombine.low %v6698, %v6714
    %v6764 = vcombine.high %v6698, %v6714
    %v6766 = vunpack.c.l.s4 1934713408
    %v6767 = vunpack.c.0.s8 %v6766
    %v6768 = vlaneseq
    %v6769 = vshrl.u32 %v6768, 7
    %v6770 = vsub.s32 %v6767, %v6769
    %v6771 = vrot.slane %v6763, %v6770
    %v6773 = vunpack.c.l.s4 1934713408
    %v6774 = vunpack.c.0.s8 %v6773
    %v6775 = vlaneseq
    %v6776 = vshrl.u32 %v6775, 7
    %v6777 = vsub.s32 %v6774, %v6776
    %v6778 = vrot.slane %v6764, %v6777
    %v6779 = vcombine.low %v6723, %v6755
    %v6780 = vcombine.high %v6723, %v6755
    %v6781 = vcombine.low %v6730, %v6762
    %v6782 = vcombine.high %v6730, %v6762
    %v6783 = vcombine.low %v6739, %v6771
    %v6784 = vcombine.high %v6739, %v6771
    %v6785 = vcombine.low %v6746, %v6778
    %v6786 = vcombine.high %v6746, %v6778
    %6788 = vrot.lane.b32.xlu0 %v6644, 16
    %v6789 = vpop.permute.xlu0 %6788
    %6792 = vrot.lane.b32.xlu0 %v6645, 32
    %v6793 = vpop.permute.xlu0 %6792
    %6796 = vrot.lane.b32.xlu0 %v6646, 48
    %v6797 = vpop.permute.xlu0 %6796
    %6800 = vrot.lane.b32.xlu0 %v6647, 64
    %v6801 = vpop.permute.xlu0 %6800
    %6804 = vrot.lane.b32.xlu0 %v6648, 80
    %v6805 = vpop.permute.xlu0 %6804
    %6808 = vrot.lane.b32.xlu0 %v6649, 96
    %v6809 = vpop.permute.xlu0 %6808
    %6812 = vrot.lane.b32.xlu0 %v6650, 112
    %v6813 = vpop.permute.xlu0 %6812
    %6816 = vrot.lane.b32.xlu0 %v6780, 16
    %v6817 = vpop.permute.xlu0 %6816
    %6820 = vrot.lane.b32.xlu0 %v6781, 32
    %v6821 = vpop.permute.xlu0 %6820
    %6824 = vrot.lane.b32.xlu0 %v6782, 48
    %v6825 = vpop.permute.xlu0 %6824
    %6828 = vrot.lane.b32.xlu0 %v6783, 64
    %v6829 = vpop.permute.xlu0 %6828
    %6832 = vrot.lane.b32.xlu0 %v6784, 80
    %v6833 = vpop.permute.xlu0 %6832
    %6836 = vrot.lane.b32.xlu0 %v6785, 96
    %v6837 = vpop.permute.xlu0 %6836
    %6840 = vrot.lane.b32.xlu0 %v6786, 112
    %v6841 = vpop.permute.xlu0 %6840
    %v6843 = vsel %vm372, %v6643, %v6789
    %v6844 = vsel %vm374, %v6843, %v6793
    %v6845 = vsel %vm376, %v6844, %v6797
    %v6846 = vsel %vm378, %v6845, %v6801
    %v6847 = vsel %vm380, %v6846, %v6805
    %v6848 = vsel %vm382, %v6847, %v6809
    %v6849 = vsel %vm384, %v6848, %v6813
    %v6850 = vsel %vm372, %v6779, %v6817
    %v6851 = vsel %vm374, %v6850, %v6821
    %v6852 = vsel %vm376, %v6851, %v6825
    %v6853 = vsel %vm378, %v6852, %v6829
    %v6854 = vsel %vm380, %v6853, %v6833
    %v6855 = vsel %vm382, %v6854, %v6837
    %v6856 = vsel %vm384, %v6855, %v6841
    %6873 = vrot.lane.b32.xlu0 %v6499, 127
    %v6874 = vpop.permute.xlu0 %6873
    %6875 = vrot.lane.b32.xlu0 %v6500, 127
    %v6876 = vpop.permute.xlu0 %6875
    %6877 = vrot.lane.b32.xlu0 %v6501, 127
    %v6878 = vpop.permute.xlu0 %6877
    %6879 = vrot.lane.b32.xlu0 %v6502, 127
    %v6880 = vpop.permute.xlu0 %6879
    %6881 = vrot.lane.b32.xlu0 %v6503, 127
    %v6882 = vpop.permute.xlu0 %6881
    %6883 = vrot.lane.b32.xlu0 %v6504, 127
    %v6884 = vpop.permute.xlu0 %6883
    %6885 = vrot.lane.b32.xlu0 %v6505, 127
    %v6886 = vpop.permute.xlu0 %6885
    %6887 = vrot.lane.b32.xlu0 %v6506, 127
    %v6888 = vpop.permute.xlu0 %6887
    %6889 = vrot.lane.b32.xlu0 %v6507, 127
    %v6890 = vpop.permute.xlu0 %6889
    %6891 = vrot.lane.b32.xlu0 %v6508, 127
    %v6892 = vpop.permute.xlu0 %6891
    %6893 = vrot.lane.b32.xlu0 %v6509, 127
    %v6894 = vpop.permute.xlu0 %6893
    %6895 = vrot.lane.b32.xlu0 %v6510, 127
    %v6896 = vpop.permute.xlu0 %6895
    %6897 = vrot.lane.b32.xlu0 %v6511, 127
    %v6898 = vpop.permute.xlu0 %6897
    %6899 = vrot.lane.b32.xlu0 %v6512, 127
    %v6900 = vpop.permute.xlu0 %6899
    %6901 = vrot.lane.b32.xlu0 %v6513, 127
    %v6902 = vpop.permute.xlu0 %6901
    %6903 = vrot.lane.b32.xlu0 %v6514, 127
    %v6904 = vpop.permute.xlu0 %6903
    %v6921 = vcombine.low %v6874, %v6882
    %v6922 = vcombine.high %v6874, %v6882
    %v6924 = vunpack.c.l.s4 1983009808
    %v6925 = vunpack.c.0.s8 %v6924
    %v6926 = vlaneseq
    %v6927 = vshrl.u32 %v6926, 7
    %v6928 = vsub.s32 %v6925, %v6927
    %v6929 = vrot.slane %v6921, %v6928
    %v6931 = vunpack.c.l.s4 1983009808
    %v6932 = vunpack.c.0.s8 %v6931
    %v6933 = vlaneseq
    %v6934 = vshrl.u32 %v6933, 7
    %v6935 = vsub.s32 %v6932, %v6934
    %v6936 = vrot.slane %v6922, %v6935
    %v6937 = vcombine.low %v6878, %v6886
    %v6938 = vcombine.high %v6878, %v6886
    %v6940 = vunpack.c.l.s4 1983009808
    %v6941 = vunpack.c.0.s8 %v6940
    %v6942 = vlaneseq
    %v6943 = vshrl.u32 %v6942, 7
    %v6944 = vsub.s32 %v6941, %v6943
    %v6945 = vrot.slane %v6937, %v6944
    %v6947 = vunpack.c.l.s4 1983009808
    %v6948 = vunpack.c.0.s8 %v6947
    %v6949 = vlaneseq
    %v6950 = vshrl.u32 %v6949, 7
    %v6951 = vsub.s32 %v6948, %v6950
    %v6952 = vrot.slane %v6938, %v6951
    %v6953 = vcombine.low %v6890, %v6898
    %v6954 = vcombine.high %v6890, %v6898
    %v6956 = vunpack.c.l.s4 1983009808
    %v6957 = vunpack.c.0.s8 %v6956
    %v6958 = vlaneseq
    %v6959 = vshrl.u32 %v6958, 7
    %v6960 = vsub.s32 %v6957, %v6959
    %v6961 = vrot.slane %v6953, %v6960
    %v6963 = vunpack.c.l.s4 1983009808
    %v6964 = vunpack.c.0.s8 %v6963
    %v6965 = vlaneseq
    %v6966 = vshrl.u32 %v6965, 7
    %v6967 = vsub.s32 %v6964, %v6966
    %v6968 = vrot.slane %v6954, %v6967
    %v6969 = vcombine.low %v6894, %v6902
    %v6970 = vcombine.high %v6894, %v6902
    %v6972 = vunpack.c.l.s4 1983009808
    %v6973 = vunpack.c.0.s8 %v6972
    %v6974 = vlaneseq
    %v6975 = vshrl.u32 %v6974, 7
    %v6976 = vsub.s32 %v6973, %v6975
    %v6977 = vrot.slane %v6969, %v6976
    %v6979 = vunpack.c.l.s4 1983009808
    %v6980 = vunpack.c.0.s8 %v6979
    %v6981 = vlaneseq
    %v6982 = vshrl.u32 %v6981, 7
    %v6983 = vsub.s32 %v6980, %v6982
    %v6984 = vrot.slane %v6970, %v6983
    %v6985 = vcombine.low %v6929, %v6945
    %v6986 = vcombine.high %v6929, %v6945
    %v6988 = vunpack.c.l.s4 1934713408
    %v6989 = vunpack.c.0.s8 %v6988
    %v6990 = vlaneseq
    %v6991 = vshrl.u32 %v6990, 7
    %v6992 = vsub.s32 %v6989, %v6991
    %v6993 = vrot.slane %v6985, %v6992
    %v6995 = vunpack.c.l.s4 1934713408
    %v6996 = vunpack.c.0.s8 %v6995
    %v6997 = vlaneseq
    %v6998 = vshrl.u32 %v6997, 7
    %v6999 = vsub.s32 %v6996, %v6998
    %v7000 = vrot.slane %v6986, %v6999
    %v7001 = vcombine.low %v6936, %v6952
    %v7002 = vcombine.high %v6936, %v6952
    %v7004 = vunpack.c.l.s4 1934713408
    %v7005 = vunpack.c.0.s8 %v7004
    %v7006 = vlaneseq
    %v7007 = vshrl.u32 %v7006, 7
    %v7008 = vsub.s32 %v7005, %v7007
    %v7009 = vrot.slane %v7001, %v7008
    %v7011 = vunpack.c.l.s4 1934713408
    %v7012 = vunpack.c.0.s8 %v7011
    %v7013 = vlaneseq
    %v7014 = vshrl.u32 %v7013, 7
    %v7015 = vsub.s32 %v7012, %v7014
    %v7016 = vrot.slane %v7002, %v7015
    %v7017 = vcombine.low %v6961, %v6977
    %v7018 = vcombine.high %v6961, %v6977
    %v7020 = vunpack.c.l.s4 1934713408
    %v7021 = vunpack.c.0.s8 %v7020
    %v7022 = vlaneseq
    %v7023 = vshrl.u32 %v7022, 7
    %v7024 = vsub.s32 %v7021, %v7023
    %v7025 = vrot.slane %v7017, %v7024
    %v7027 = vunpack.c.l.s4 1934713408
    %v7028 = vunpack.c.0.s8 %v7027
    %v7029 = vlaneseq
    %v7030 = vshrl.u32 %v7029, 7
    %v7031 = vsub.s32 %v7028, %v7030
    %v7032 = vrot.slane %v7018, %v7031
    %v7033 = vcombine.low %v6968, %v6984
    %v7034 = vcombine.high %v6968, %v6984
    %v7036 = vunpack.c.l.s4 1934713408
    %v7037 = vunpack.c.0.s8 %v7036
    %v7038 = vlaneseq
    %v7039 = vshrl.u32 %v7038, 7
    %v7040 = vsub.s32 %v7037, %v7039
    %v7041 = vrot.slane %v7033, %v7040
    %v7043 = vunpack.c.l.s4 1934713408
    %v7044 = vunpack.c.0.s8 %v7043
    %v7045 = vlaneseq
    %v7046 = vshrl.u32 %v7045, 7
    %v7047 = vsub.s32 %v7044, %v7046
    %v7048 = vrot.slane %v7034, %v7047
    %v7049 = vcombine.low %v6993, %v7025
    %v7050 = vcombine.high %v6993, %v7025
    %v7051 = vcombine.low %v7000, %v7032
    %v7052 = vcombine.high %v7000, %v7032
    %v7053 = vcombine.low %v7009, %v7041
    %v7054 = vcombine.high %v7009, %v7041
    %v7055 = vcombine.low %v7016, %v7048
    %v7056 = vcombine.high %v7016, %v7048
    %v7057 = vcombine.low %v6876, %v6884
    %v7058 = vcombine.high %v6876, %v6884
    %v7060 = vunpack.c.l.s4 1983009808
    %v7061 = vunpack.c.0.s8 %v7060
    %v7062 = vlaneseq
    %v7063 = vshrl.u32 %v7062, 7
    %v7064 = vsub.s32 %v7061, %v7063
    %v7065 = vrot.slane %v7057, %v7064
    %v7067 = vunpack.c.l.s4 1983009808
    %v7068 = vunpack.c.0.s8 %v7067
    %v7069 = vlaneseq
    %v7070 = vshrl.u32 %v7069, 7
    %v7071 = vsub.s32 %v7068, %v7070
    %v7072 = vrot.slane %v7058, %v7071
    %v7073 = vcombine.low %v6880, %v6888
    %v7074 = vcombine.high %v6880, %v6888
    %v7076 = vunpack.c.l.s4 1983009808
    %v7077 = vunpack.c.0.s8 %v7076
    %v7078 = vlaneseq
    %v7079 = vshrl.u32 %v7078, 7
    %v7080 = vsub.s32 %v7077, %v7079
    %v7081 = vrot.slane %v7073, %v7080
    %v7083 = vunpack.c.l.s4 1983009808
    %v7084 = vunpack.c.0.s8 %v7083
    %v7085 = vlaneseq
    %v7086 = vshrl.u32 %v7085, 7
    %v7087 = vsub.s32 %v7084, %v7086
    %v7088 = vrot.slane %v7074, %v7087
    %v7089 = vcombine.low %v6892, %v6900
    %v7090 = vcombine.high %v6892, %v6900
    %v7092 = vunpack.c.l.s4 1983009808
    %v7093 = vunpack.c.0.s8 %v7092
    %v7094 = vlaneseq
    %v7095 = vshrl.u32 %v7094, 7
    %v7096 = vsub.s32 %v7093, %v7095
    %v7097 = vrot.slane %v7089, %v7096
    %v7099 = vunpack.c.l.s4 1983009808
    %v7100 = vunpack.c.0.s8 %v7099
    %v7101 = vlaneseq
    %v7102 = vshrl.u32 %v7101, 7
    %v7103 = vsub.s32 %v7100, %v7102
    %v7104 = vrot.slane %v7090, %v7103
    %v7105 = vcombine.low %v6896, %v6904
    %v7106 = vcombine.high %v6896, %v6904
    %v7108 = vunpack.c.l.s4 1983009808
    %v7109 = vunpack.c.0.s8 %v7108
    %v7110 = vlaneseq
    %v7111 = vshrl.u32 %v7110, 7
    %v7112 = vsub.s32 %v7109, %v7111
    %v7113 = vrot.slane %v7105, %v7112
    %v7115 = vunpack.c.l.s4 1983009808
    %v7116 = vunpack.c.0.s8 %v7115
    %v7117 = vlaneseq
    %v7118 = vshrl.u32 %v7117, 7
    %v7119 = vsub.s32 %v7116, %v7118
    %v7120 = vrot.slane %v7106, %v7119
    %v7121 = vcombine.low %v7065, %v7081
    %v7122 = vcombine.high %v7065, %v7081
    %v7124 = vunpack.c.l.s4 1934713408
    %v7125 = vunpack.c.0.s8 %v7124
    %v7126 = vlaneseq
    %v7127 = vshrl.u32 %v7126, 7
    %v7128 = vsub.s32 %v7125, %v7127
    %v7129 = vrot.slane %v7121, %v7128
    %v7131 = vunpack.c.l.s4 1934713408
    %v7132 = vunpack.c.0.s8 %v7131
    %v7133 = vlaneseq
    %v7134 = vshrl.u32 %v7133, 7
    %v7135 = vsub.s32 %v7132, %v7134
    %v7136 = vrot.slane %v7122, %v7135
    %v7137 = vcombine.low %v7072, %v7088
    %v7138 = vcombine.high %v7072, %v7088
    %v7140 = vunpack.c.l.s4 1934713408
    %v7141 = vunpack.c.0.s8 %v7140
    %v7142 = vlaneseq
    %v7143 = vshrl.u32 %v7142, 7
    %v7144 = vsub.s32 %v7141, %v7143
    %v7145 = vrot.slane %v7137, %v7144
    %v7147 = vunpack.c.l.s4 1934713408
    %v7148 = vunpack.c.0.s8 %v7147
    %v7149 = vlaneseq
    %v7150 = vshrl.u32 %v7149, 7
    %v7151 = vsub.s32 %v7148, %v7150
    %v7152 = vrot.slane %v7138, %v7151
    %v7153 = vcombine.low %v7097, %v7113
    %v7154 = vcombine.high %v7097, %v7113
    %v7156 = vunpack.c.l.s4 1934713408
    %v7157 = vunpack.c.0.s8 %v7156
    %v7158 = vlaneseq
    %v7159 = vshrl.u32 %v7158, 7
    %v7160 = vsub.s32 %v7157, %v7159
    %v7161 = vrot.slane %v7153, %v7160
    %v7163 = vunpack.c.l.s4 1934713408
    %v7164 = vunpack.c.0.s8 %v7163
    %v7165 = vlaneseq
    %v7166 = vshrl.u32 %v7165, 7
    %v7167 = vsub.s32 %v7164, %v7166
    %v7168 = vrot.slane %v7154, %v7167
    %v7169 = vcombine.low %v7104, %v7120
    %v7170 = vcombine.high %v7104, %v7120
    %v7172 = vunpack.c.l.s4 1934713408
    %v7173 = vunpack.c.0.s8 %v7172
    %v7174 = vlaneseq
    %v7175 = vshrl.u32 %v7174, 7
    %v7176 = vsub.s32 %v7173, %v7175
    %v7177 = vrot.slane %v7169, %v7176
    %v7179 = vunpack.c.l.s4 1934713408
    %v7180 = vunpack.c.0.s8 %v7179
    %v7181 = vlaneseq
    %v7182 = vshrl.u32 %v7181, 7
    %v7183 = vsub.s32 %v7180, %v7182
    %v7184 = vrot.slane %v7170, %v7183
    %v7185 = vcombine.low %v7129, %v7161
    %v7186 = vcombine.high %v7129, %v7161
    %v7187 = vcombine.low %v7136, %v7168
    %v7188 = vcombine.high %v7136, %v7168
    %v7189 = vcombine.low %v7145, %v7177
    %v7190 = vcombine.high %v7145, %v7177
    %v7191 = vcombine.low %v7152, %v7184
    %v7192 = vcombine.high %v7152, %v7184
    %7194 = vrot.lane.b32.xlu0 %v7050, 16
    %v7195 = vpop.permute.xlu0 %7194
    %7198 = vrot.lane.b32.xlu0 %v7051, 32
    %v7199 = vpop.permute.xlu0 %7198
    %7202 = vrot.lane.b32.xlu0 %v7052, 48
    %v7203 = vpop.permute.xlu0 %7202
    %7206 = vrot.lane.b32.xlu0 %v7053, 64
    %v7207 = vpop.permute.xlu0 %7206
    %7210 = vrot.lane.b32.xlu0 %v7054, 80
    %v7211 = vpop.permute.xlu0 %7210
    %7214 = vrot.lane.b32.xlu0 %v7055, 96
    %v7215 = vpop.permute.xlu0 %7214
    %7218 = vrot.lane.b32.xlu0 %v7056, 112
    %v7219 = vpop.permute.xlu0 %7218
    %7222 = vrot.lane.b32.xlu0 %v7186, 16
    %v7223 = vpop.permute.xlu0 %7222
    %7226 = vrot.lane.b32.xlu0 %v7187, 32
    %v7227 = vpop.permute.xlu0 %7226
    %7230 = vrot.lane.b32.xlu0 %v7188, 48
    %v7231 = vpop.permute.xlu0 %7230
    %7234 = vrot.lane.b32.xlu0 %v7189, 64
    %v7235 = vpop.permute.xlu0 %7234
    %7238 = vrot.lane.b32.xlu0 %v7190, 80
    %v7239 = vpop.permute.xlu0 %7238
    %7242 = vrot.lane.b32.xlu0 %v7191, 96
    %v7243 = vpop.permute.xlu0 %7242
    %7246 = vrot.lane.b32.xlu0 %v7192, 112
    %v7247 = vpop.permute.xlu0 %7246
    %v7249 = vsel %vm372, %v7049, %v7195
    %v7250 = vsel %vm374, %v7249, %v7199
    %v7251 = vsel %vm376, %v7250, %v7203
    %v7252 = vsel %vm378, %v7251, %v7207
    %v7253 = vsel %vm380, %v7252, %v7211
    %v7254 = vsel %vm382, %v7253, %v7215
    %v7255 = vsel %vm384, %v7254, %v7219
    %v7256 = vsel %vm372, %v7185, %v7223
    %v7257 = vsel %vm374, %v7256, %v7227
    %v7258 = vsel %vm376, %v7257, %v7231
    %v7259 = vsel %vm378, %v7258, %v7235
    %v7260 = vsel %vm380, %v7259, %v7239
    %v7261 = vsel %vm382, %v7260, %v7243
    %v7262 = vsel %vm384, %v7261, %v7247
    %7263 = vrot.lane.b32.xlu0 %v6499, 126
    %v7264 = vpop.permute.xlu0 %7263
    %7265 = vrot.lane.b32.xlu0 %v6500, 126
    %v7266 = vpop.permute.xlu0 %7265
    %7267 = vrot.lane.b32.xlu0 %v6501, 126
    %v7268 = vpop.permute.xlu0 %7267
    %7269 = vrot.lane.b32.xlu0 %v6502, 126
    %v7270 = vpop.permute.xlu0 %7269
    %7271 = vrot.lane.b32.xlu0 %v6503, 126
    %v7272 = vpop.permute.xlu0 %7271
    %7273 = vrot.lane.b32.xlu0 %v6504, 126
    %v7274 = vpop.permute.xlu0 %7273
    %7275 = vrot.lane.b32.xlu0 %v6505, 126
    %v7276 = vpop.permute.xlu0 %7275
    %7277 = vrot.lane.b32.xlu0 %v6506, 126
    %v7278 = vpop.permute.xlu0 %7277
    %7279 = vrot.lane.b32.xlu0 %v6507, 126
    %v7280 = vpop.permute.xlu0 %7279
    %7281 = vrot.lane.b32.xlu0 %v6508, 126
    %v7282 = vpop.permute.xlu0 %7281
    %7283 = vrot.lane.b32.xlu0 %v6509, 126
    %v7284 = vpop.permute.xlu0 %7283
    %7285 = vrot.lane.b32.xlu0 %v6510, 126
    %v7286 = vpop.permute.xlu0 %7285
    %7287 = vrot.lane.b32.xlu0 %v6511, 126
    %v7288 = vpop.permute.xlu0 %7287
    %7289 = vrot.lane.b32.xlu0 %v6512, 126
    %v7290 = vpop.permute.xlu0 %7289
    %7291 = vrot.lane.b32.xlu0 %v6513, 126
    %v7292 = vpop.permute.xlu0 %7291
    %7293 = vrot.lane.b32.xlu0 %v6514, 126
    %v7294 = vpop.permute.xlu0 %7293
    %v7311 = vcombine.low %v7264, %v7272
    %v7312 = vcombine.high %v7264, %v7272
    %v7314 = vunpack.c.l.s4 1983009808
    %v7315 = vunpack.c.0.s8 %v7314
    %v7316 = vlaneseq
    %v7317 = vshrl.u32 %v7316, 7
    %v7318 = vsub.s32 %v7315, %v7317
    %v7319 = vrot.slane %v7311, %v7318
    %v7321 = vunpack.c.l.s4 1983009808
    %v7322 = vunpack.c.0.s8 %v7321
    %v7323 = vlaneseq
    %v7324 = vshrl.u32 %v7323, 7
    %v7325 = vsub.s32 %v7322, %v7324
    %v7326 = vrot.slane %v7312, %v7325
    %v7327 = vcombine.low %v7268, %v7276
    %v7328 = vcombine.high %v7268, %v7276
    %v7330 = vunpack.c.l.s4 1983009808
    %v7331 = vunpack.c.0.s8 %v7330
    %v7332 = vlaneseq
    %v7333 = vshrl.u32 %v7332, 7
    %v7334 = vsub.s32 %v7331, %v7333
    %v7335 = vrot.slane %v7327, %v7334
    %v7337 = vunpack.c.l.s4 1983009808
    %v7338 = vunpack.c.0.s8 %v7337
    %v7339 = vlaneseq
    %v7340 = vshrl.u32 %v7339, 7
    %v7341 = vsub.s32 %v7338, %v7340
    %v7342 = vrot.slane %v7328, %v7341
    %v7343 = vcombine.low %v7280, %v7288
    %v7344 = vcombine.high %v7280, %v7288
    %v7346 = vunpack.c.l.s4 1983009808
    %v7347 = vunpack.c.0.s8 %v7346
    %v7348 = vlaneseq
    %v7349 = vshrl.u32 %v7348, 7
    %v7350 = vsub.s32 %v7347, %v7349
    %v7351 = vrot.slane %v7343, %v7350
    %v7353 = vunpack.c.l.s4 1983009808
    %v7354 = vunpack.c.0.s8 %v7353
    %v7355 = vlaneseq
    %v7356 = vshrl.u32 %v7355, 7
    %v7357 = vsub.s32 %v7354, %v7356
    %v7358 = vrot.slane %v7344, %v7357
    %v7359 = vcombine.low %v7284, %v7292
    %v7360 = vcombine.high %v7284, %v7292
    %v7362 = vunpack.c.l.s4 1983009808
    %v7363 = vunpack.c.0.s8 %v7362
    %v7364 = vlaneseq
    %v7365 = vshrl.u32 %v7364, 7
    %v7366 = vsub.s32 %v7363, %v7365
    %v7367 = vrot.slane %v7359, %v7366
    %v7369 = vunpack.c.l.s4 1983009808
    %v7370 = vunpack.c.0.s8 %v7369
    %v7371 = vlaneseq
    %v7372 = vshrl.u32 %v7371, 7
    %v7373 = vsub.s32 %v7370, %v7372
    %v7374 = vrot.slane %v7360, %v7373
    %v7375 = vcombine.low %v7319, %v7335
    %v7376 = vcombine.high %v7319, %v7335
    %v7378 = vunpack.c.l.s4 1934713408
    %v7379 = vunpack.c.0.s8 %v7378
    %v7380 = vlaneseq
    %v7381 = vshrl.u32 %v7380, 7
    %v7382 = vsub.s32 %v7379, %v7381
    %v7383 = vrot.slane %v7375, %v7382
    %v7385 = vunpack.c.l.s4 1934713408
    %v7386 = vunpack.c.0.s8 %v7385
    %v7387 = vlaneseq
    %v7388 = vshrl.u32 %v7387, 7
    %v7389 = vsub.s32 %v7386, %v7388
    %v7390 = vrot.slane %v7376, %v7389
    %v7391 = vcombine.low %v7326, %v7342
    %v7392 = vcombine.high %v7326, %v7342
    %v7394 = vunpack.c.l.s4 1934713408
    %v7395 = vunpack.c.0.s8 %v7394
    %v7396 = vlaneseq
    %v7397 = vshrl.u32 %v7396, 7
    %v7398 = vsub.s32 %v7395, %v7397
    %v7399 = vrot.slane %v7391, %v7398
    %v7401 = vunpack.c.l.s4 1934713408
    %v7402 = vunpack.c.0.s8 %v7401
    %v7403 = vlaneseq
    %v7404 = vshrl.u32 %v7403, 7
    %v7405 = vsub.s32 %v7402, %v7404
    %v7406 = vrot.slane %v7392, %v7405
    %v7407 = vcombine.low %v7351, %v7367
    %v7408 = vcombine.high %v7351, %v7367
    %v7410 = vunpack.c.l.s4 1934713408
    %v7411 = vunpack.c.0.s8 %v7410
    %v7412 = vlaneseq
    %v7413 = vshrl.u32 %v7412, 7
    %v7414 = vsub.s32 %v7411, %v7413
    %v7415 = vrot.slane %v7407, %v7414
    %v7417 = vunpack.c.l.s4 1934713408
    %v7418 = vunpack.c.0.s8 %v7417
    %v7419 = vlaneseq
    %v7420 = vshrl.u32 %v7419, 7
    %v7421 = vsub.s32 %v7418, %v7420
    %v7422 = vrot.slane %v7408, %v7421
    %v7423 = vcombine.low %v7358, %v7374
    %v7424 = vcombine.high %v7358, %v7374
    %v7426 = vunpack.c.l.s4 1934713408
    %v7427 = vunpack.c.0.s8 %v7426
    %v7428 = vlaneseq
    %v7429 = vshrl.u32 %v7428, 7
    %v7430 = vsub.s32 %v7427, %v7429
    %v7431 = vrot.slane %v7423, %v7430
    %v7433 = vunpack.c.l.s4 1934713408
    %v7434 = vunpack.c.0.s8 %v7433
    %v7435 = vlaneseq
    %v7436 = vshrl.u32 %v7435, 7
    %v7437 = vsub.s32 %v7434, %v7436
    %v7438 = vrot.slane %v7424, %v7437
    %v7439 = vcombine.low %v7383, %v7415
    %v7440 = vcombine.high %v7383, %v7415
    %v7441 = vcombine.low %v7390, %v7422
    %v7442 = vcombine.high %v7390, %v7422
    %v7443 = vcombine.low %v7399, %v7431
    %v7444 = vcombine.high %v7399, %v7431
    %v7445 = vcombine.low %v7406, %v7438
    %v7446 = vcombine.high %v7406, %v7438
    %v7447 = vcombine.low %v7266, %v7274
    %v7448 = vcombine.high %v7266, %v7274
    %v7450 = vunpack.c.l.s4 1983009808
    %v7451 = vunpack.c.0.s8 %v7450
    %v7452 = vlaneseq
    %v7453 = vshrl.u32 %v7452, 7
    %v7454 = vsub.s32 %v7451, %v7453
    %v7455 = vrot.slane %v7447, %v7454
    %v7457 = vunpack.c.l.s4 1983009808
    %v7458 = vunpack.c.0.s8 %v7457
    %v7459 = vlaneseq
    %v7460 = vshrl.u32 %v7459, 7
    %v7461 = vsub.s32 %v7458, %v7460
    %v7462 = vrot.slane %v7448, %v7461
    %v7463 = vcombine.low %v7270, %v7278
    %v7464 = vcombine.high %v7270, %v7278
    %v7466 = vunpack.c.l.s4 1983009808
    %v7467 = vunpack.c.0.s8 %v7466
    %v7468 = vlaneseq
    %v7469 = vshrl.u32 %v7468, 7
    %v7470 = vsub.s32 %v7467, %v7469
    %v7471 = vrot.slane %v7463, %v7470
    %v7473 = vunpack.c.l.s4 1983009808
    %v7474 = vunpack.c.0.s8 %v7473
    %v7475 = vlaneseq
    %v7476 = vshrl.u32 %v7475, 7
    %v7477 = vsub.s32 %v7474, %v7476
    %v7478 = vrot.slane %v7464, %v7477
    %v7479 = vcombine.low %v7282, %v7290
    %v7480 = vcombine.high %v7282, %v7290
    %v7482 = vunpack.c.l.s4 1983009808
    %v7483 = vunpack.c.0.s8 %v7482
    %v7484 = vlaneseq
    %v7485 = vshrl.u32 %v7484, 7
    %v7486 = vsub.s32 %v7483, %v7485
    %v7487 = vrot.slane %v7479, %v7486
    %v7489 = vunpack.c.l.s4 1983009808
    %v7490 = vunpack.c.0.s8 %v7489
    %v7491 = vlaneseq
    %v7492 = vshrl.u32 %v7491, 7
    %v7493 = vsub.s32 %v7490, %v7492
    %v7494 = vrot.slane %v7480, %v7493
    %v7495 = vcombine.low %v7286, %v7294
    %v7496 = vcombine.high %v7286, %v7294
    %v7498 = vunpack.c.l.s4 1983009808
    %v7499 = vunpack.c.0.s8 %v7498
    %v7500 = vlaneseq
    %v7501 = vshrl.u32 %v7500, 7
    %v7502 = vsub.s32 %v7499, %v7501
    %v7503 = vrot.slane %v7495, %v7502
    %v7505 = vunpack.c.l.s4 1983009808
    %v7506 = vunpack.c.0.s8 %v7505
    %v7507 = vlaneseq
    %v7508 = vshrl.u32 %v7507, 7
    %v7509 = vsub.s32 %v7506, %v7508
    %v7510 = vrot.slane %v7496, %v7509
    %v7511 = vcombine.low %v7455, %v7471
    %v7512 = vcombine.high %v7455, %v7471
    %v7514 = vunpack.c.l.s4 1934713408
    %v7515 = vunpack.c.0.s8 %v7514
    %v7516 = vlaneseq
    %v7517 = vshrl.u32 %v7516, 7
    %v7518 = vsub.s32 %v7515, %v7517
    %v7519 = vrot.slane %v7511, %v7518
    %v7521 = vunpack.c.l.s4 1934713408
    %v7522 = vunpack.c.0.s8 %v7521
    %v7523 = vlaneseq
    %v7524 = vshrl.u32 %v7523, 7
    %v7525 = vsub.s32 %v7522, %v7524
    %v7526 = vrot.slane %v7512, %v7525
    %v7527 = vcombine.low %v7462, %v7478
    %v7528 = vcombine.high %v7462, %v7478
    %v7530 = vunpack.c.l.s4 1934713408
    %v7531 = vunpack.c.0.s8 %v7530
    %v7532 = vlaneseq
    %v7533 = vshrl.u32 %v7532, 7
    %v7534 = vsub.s32 %v7531, %v7533
    %v7535 = vrot.slane %v7527, %v7534
    %v7537 = vunpack.c.l.s4 1934713408
    %v7538 = vunpack.c.0.s8 %v7537
    %v7539 = vlaneseq
    %v7540 = vshrl.u32 %v7539, 7
    %v7541 = vsub.s32 %v7538, %v7540
    %v7542 = vrot.slane %v7528, %v7541
    %v7543 = vcombine.low %v7487, %v7503
    %v7544 = vcombine.high %v7487, %v7503
    %v7546 = vunpack.c.l.s4 1934713408
    %v7547 = vunpack.c.0.s8 %v7546
    %v7548 = vlaneseq
    %v7549 = vshrl.u32 %v7548, 7
    %v7550 = vsub.s32 %v7547, %v7549
    %v7551 = vrot.slane %v7543, %v7550
    %v7553 = vunpack.c.l.s4 1934713408
    %v7554 = vunpack.c.0.s8 %v7553
    %v7555 = vlaneseq
    %v7556 = vshrl.u32 %v7555, 7
    %v7557 = vsub.s32 %v7554, %v7556
    %v7558 = vrot.slane %v7544, %v7557
    %v7559 = vcombine.low %v7494, %v7510
    %v7560 = vcombine.high %v7494, %v7510
    %v7562 = vunpack.c.l.s4 1934713408
    %v7563 = vunpack.c.0.s8 %v7562
    %v7564 = vlaneseq
    %v7565 = vshrl.u32 %v7564, 7
    %v7566 = vsub.s32 %v7563, %v7565
    %v7567 = vrot.slane %v7559, %v7566
    %v7569 = vunpack.c.l.s4 1934713408
    %v7570 = vunpack.c.0.s8 %v7569
    %v7571 = vlaneseq
    %v7572 = vshrl.u32 %v7571, 7
    %v7573 = vsub.s32 %v7570, %v7572
    %v7574 = vrot.slane %v7560, %v7573
    %v7575 = vcombine.low %v7519, %v7551
    %v7576 = vcombine.high %v7519, %v7551
    %v7577 = vcombine.low %v7526, %v7558
    %v7578 = vcombine.high %v7526, %v7558
    %v7579 = vcombine.low %v7535, %v7567
    %v7580 = vcombine.high %v7535, %v7567
    %v7581 = vcombine.low %v7542, %v7574
    %v7582 = vcombine.high %v7542, %v7574
    %7584 = vrot.lane.b32.xlu0 %v7440, 16
    %v7585 = vpop.permute.xlu0 %7584
    %7588 = vrot.lane.b32.xlu0 %v7441, 32
    %v7589 = vpop.permute.xlu0 %7588
    %7592 = vrot.lane.b32.xlu0 %v7442, 48
    %v7593 = vpop.permute.xlu0 %7592
    %7596 = vrot.lane.b32.xlu0 %v7443, 64
    %v7597 = vpop.permute.xlu0 %7596
    %7600 = vrot.lane.b32.xlu0 %v7444, 80
    %v7601 = vpop.permute.xlu0 %7600
    %7604 = vrot.lane.b32.xlu0 %v7445, 96
    %v7605 = vpop.permute.xlu0 %7604
    %7608 = vrot.lane.b32.xlu0 %v7446, 112
    %v7609 = vpop.permute.xlu0 %7608
    %7612 = vrot.lane.b32.xlu0 %v7576, 16
    %v7613 = vpop.permute.xlu0 %7612
    %7616 = vrot.lane.b32.xlu0 %v7577, 32
    %v7617 = vpop.permute.xlu0 %7616
    %7620 = vrot.lane.b32.xlu0 %v7578, 48
    %v7621 = vpop.permute.xlu0 %7620
    %7624 = vrot.lane.b32.xlu0 %v7579, 64
    %v7625 = vpop.permute.xlu0 %7624
    %7628 = vrot.lane.b32.xlu0 %v7580, 80
    %v7629 = vpop.permute.xlu0 %7628
    %7632 = vrot.lane.b32.xlu0 %v7581, 96
    %v7633 = vpop.permute.xlu0 %7632
    %7636 = vrot.lane.b32.xlu0 %v7582, 112
    %v7637 = vpop.permute.xlu0 %7636
    %v7639 = vsel %vm372, %v7439, %v7585
    %v7640 = vsel %vm374, %v7639, %v7589
    %v7641 = vsel %vm376, %v7640, %v7593
    %v7642 = vsel %vm378, %v7641, %v7597
    %v7643 = vsel %vm380, %v7642, %v7601
    %v7644 = vsel %vm382, %v7643, %v7605
    %v7645 = vsel %vm384, %v7644, %v7609
    %v7646 = vsel %vm372, %v7575, %v7613
    %v7647 = vsel %vm374, %v7646, %v7617
    %v7648 = vsel %vm376, %v7647, %v7621
    %v7649 = vsel %vm378, %v7648, %v7625
    %v7650 = vsel %vm380, %v7649, %v7629
    %v7651 = vsel %vm382, %v7650, %v7633
    %v7652 = vsel %vm384, %v7651, %v7637
    %v7653 = vld [vmem:[#allocation3 + $0x2] sm:$0xff]
    %v7654 = vld [vmem:[#allocation3 + $0xa] sm:$0xff]
    %v7655 = vld [vmem:[#allocation3 + $0x1a] sm:$0xff]
    %v7656 = vld [vmem:[#allocation3 + $0x22] sm:$0xff]
    %v7657 = vld [vmem:[#allocation3 + $0x32] sm:$0xff]
    %v7658 = vld [vmem:[#allocation3 + $0x3a] sm:$0xff]
    %v7659 = vld [vmem:[#allocation3 + $0x4a] sm:$0xff]
    %v7660 = vld [vmem:[#allocation3 + $0x52] sm:$0xff]
    %v7661 = vld [vmem:[#allocation3 + $0x62] sm:$0xff]
    %v7662 = vld [vmem:[#allocation3 + $0x6a] sm:$0xff]
    %v7663 = vld [vmem:[#allocation3 + $0x7a] sm:$0xff]
    %v7664 = vld [vmem:[#allocation3 + $0x82] sm:$0xff]
    %v7665 = vld [vmem:[#allocation3 + $0x92] sm:$0xff]
    %v7666 = vld [vmem:[#allocation3 + $0x9a] sm:$0xff]
    %v7667 = vld [vmem:[#allocation3 + $0xaa] sm:$0xff]
    %v7668 = vld [vmem:[#allocation3 + $0xb2] sm:$0xff]
    %v7669 = vcombine.low %v7653, %v7657
    %v7670 = vcombine.high %v7653, %v7657
    %v7672 = vunpack.c.l.s4 1983009808
    %v7673 = vunpack.c.0.s8 %v7672
    %v7674 = vlaneseq
    %v7675 = vshrl.u32 %v7674, 7
    %v7676 = vsub.s32 %v7673, %v7675
    %v7677 = vrot.slane %v7669, %v7676
    %v7679 = vunpack.c.l.s4 1983009808
    %v7680 = vunpack.c.0.s8 %v7679
    %v7681 = vlaneseq
    %v7682 = vshrl.u32 %v7681, 7
    %v7683 = vsub.s32 %v7680, %v7682
    %v7684 = vrot.slane %v7670, %v7683
    %v7685 = vcombine.low %v7655, %v7659
    %v7686 = vcombine.high %v7655, %v7659
    %v7688 = vunpack.c.l.s4 1983009808
    %v7689 = vunpack.c.0.s8 %v7688
    %v7690 = vlaneseq
    %v7691 = vshrl.u32 %v7690, 7
    %v7692 = vsub.s32 %v7689, %v7691
    %v7693 = vrot.slane %v7685, %v7692
    %v7695 = vunpack.c.l.s4 1983009808
    %v7696 = vunpack.c.0.s8 %v7695
    %v7697 = vlaneseq
    %v7698 = vshrl.u32 %v7697, 7
    %v7699 = vsub.s32 %v7696, %v7698
    %v7700 = vrot.slane %v7686, %v7699
    %v7701 = vcombine.low %v7661, %v7665
    %v7702 = vcombine.high %v7661, %v7665
    %v7704 = vunpack.c.l.s4 1983009808
    %v7705 = vunpack.c.0.s8 %v7704
    %v7706 = vlaneseq
    %v7707 = vshrl.u32 %v7706, 7
    %v7708 = vsub.s32 %v7705, %v7707
    %v7709 = vrot.slane %v7701, %v7708
    %v7711 = vunpack.c.l.s4 1983009808
    %v7712 = vunpack.c.0.s8 %v7711
    %v7713 = vlaneseq
    %v7714 = vshrl.u32 %v7713, 7
    %v7715 = vsub.s32 %v7712, %v7714
    %v7716 = vrot.slane %v7702, %v7715
    %v7717 = vcombine.low %v7663, %v7667
    %v7718 = vcombine.high %v7663, %v7667
    %v7720 = vunpack.c.l.s4 1983009808
    %v7721 = vunpack.c.0.s8 %v7720
    %v7722 = vlaneseq
    %v7723 = vshrl.u32 %v7722, 7
    %v7724 = vsub.s32 %v7721, %v7723
    %v7725 = vrot.slane %v7717, %v7724
    %v7727 = vunpack.c.l.s4 1983009808
    %v7728 = vunpack.c.0.s8 %v7727
    %v7729 = vlaneseq
    %v7730 = vshrl.u32 %v7729, 7
    %v7731 = vsub.s32 %v7728, %v7730
    %v7732 = vrot.slane %v7718, %v7731
    %v7733 = vcombine.low %v7677, %v7693
    %v7734 = vcombine.high %v7677, %v7693
    %v7736 = vunpack.c.l.s4 1934713408
    %v7737 = vunpack.c.0.s8 %v7736
    %v7738 = vlaneseq
    %v7739 = vshrl.u32 %v7738, 7
    %v7740 = vsub.s32 %v7737, %v7739
    %v7741 = vrot.slane %v7733, %v7740
    %v7743 = vunpack.c.l.s4 1934713408
    %v7744 = vunpack.c.0.s8 %v7743
    %v7745 = vlaneseq
    %v7746 = vshrl.u32 %v7745, 7
    %v7747 = vsub.s32 %v7744, %v7746
    %v7748 = vrot.slane %v7734, %v7747
    %v7749 = vcombine.low %v7684, %v7700
    %v7750 = vcombine.high %v7684, %v7700
    %v7752 = vunpack.c.l.s4 1934713408
    %v7753 = vunpack.c.0.s8 %v7752
    %v7754 = vlaneseq
    %v7755 = vshrl.u32 %v7754, 7
    %v7756 = vsub.s32 %v7753, %v7755
    %v7757 = vrot.slane %v7749, %v7756
    %v7759 = vunpack.c.l.s4 1934713408
    %v7760 = vunpack.c.0.s8 %v7759
    %v7761 = vlaneseq
    %v7762 = vshrl.u32 %v7761, 7
    %v7763 = vsub.s32 %v7760, %v7762
    %v7764 = vrot.slane %v7750, %v7763
    %v7765 = vcombine.low %v7709, %v7725
    %v7766 = vcombine.high %v7709, %v7725
    %v7768 = vunpack.c.l.s4 1934713408
    %v7769 = vunpack.c.0.s8 %v7768
    %v7770 = vlaneseq
    %v7771 = vshrl.u32 %v7770, 7
    %v7772 = vsub.s32 %v7769, %v7771
    %v7773 = vrot.slane %v7765, %v7772
    %v7775 = vunpack.c.l.s4 1934713408
    %v7776 = vunpack.c.0.s8 %v7775
    %v7777 = vlaneseq
    %v7778 = vshrl.u32 %v7777, 7
    %v7779 = vsub.s32 %v7776, %v7778
    %v7780 = vrot.slane %v7766, %v7779
    %v7781 = vcombine.low %v7716, %v7732
    %v7782 = vcombine.high %v7716, %v7732
    %v7784 = vunpack.c.l.s4 1934713408
    %v7785 = vunpack.c.0.s8 %v7784
    %v7786 = vlaneseq
    %v7787 = vshrl.u32 %v7786, 7
    %v7788 = vsub.s32 %v7785, %v7787
    %v7789 = vrot.slane %v7781, %v7788
    %v7791 = vunpack.c.l.s4 1934713408
    %v7792 = vunpack.c.0.s8 %v7791
    %v7793 = vlaneseq
    %v7794 = vshrl.u32 %v7793, 7
    %v7795 = vsub.s32 %v7792, %v7794
    %v7796 = vrot.slane %v7782, %v7795
    %v7797 = vcombine.low %v7741, %v7773
    %v7798 = vcombine.high %v7741, %v7773
    %v7799 = vcombine.low %v7748, %v7780
    %v7800 = vcombine.high %v7748, %v7780
    %v7801 = vcombine.low %v7757, %v7789
    %v7802 = vcombine.high %v7757, %v7789
    %v7803 = vcombine.low %v7764, %v7796
    %v7804 = vcombine.high %v7764, %v7796
    %v7805 = vcombine.low %v7654, %v7658
    %v7806 = vcombine.high %v7654, %v7658
    %v7808 = vunpack.c.l.s4 1983009808
    %v7809 = vunpack.c.0.s8 %v7808
    %v7810 = vlaneseq
    %v7811 = vshrl.u32 %v7810, 7
    %v7812 = vsub.s32 %v7809, %v7811
    %v7813 = vrot.slane %v7805, %v7812
    %v7815 = vunpack.c.l.s4 1983009808
    %v7816 = vunpack.c.0.s8 %v7815
    %v7817 = vlaneseq
    %v7818 = vshrl.u32 %v7817, 7
    %v7819 = vsub.s32 %v7816, %v7818
    %v7820 = vrot.slane %v7806, %v7819
    %v7821 = vcombine.low %v7656, %v7660
    %v7822 = vcombine.high %v7656, %v7660
    %v7824 = vunpack.c.l.s4 1983009808
    %v7825 = vunpack.c.0.s8 %v7824
    %v7826 = vlaneseq
    %v7827 = vshrl.u32 %v7826, 7
    %v7828 = vsub.s32 %v7825, %v7827
    %v7829 = vrot.slane %v7821, %v7828
    %v7831 = vunpack.c.l.s4 1983009808
    %v7832 = vunpack.c.0.s8 %v7831
    %v7833 = vlaneseq
    %v7834 = vshrl.u32 %v7833, 7
    %v7835 = vsub.s32 %v7832, %v7834
    %v7836 = vrot.slane %v7822, %v7835
    %v7837 = vcombine.low %v7662, %v7666
    %v7838 = vcombine.high %v7662, %v7666
    %v7840 = vunpack.c.l.s4 1983009808
    %v7841 = vunpack.c.0.s8 %v7840
    %v7842 = vlaneseq
    %v7843 = vshrl.u32 %v7842, 7
    %v7844 = vsub.s32 %v7841, %v7843
    %v7845 = vrot.slane %v7837, %v7844
    %v7847 = vunpack.c.l.s4 1983009808
    %v7848 = vunpack.c.0.s8 %v7847
    %v7849 = vlaneseq
    %v7850 = vshrl.u32 %v7849, 7
    %v7851 = vsub.s32 %v7848, %v7850
    %v7852 = vrot.slane %v7838, %v7851
    %v7853 = vcombine.low %v7664, %v7668
    %v7854 = vcombine.high %v7664, %v7668
    %v7856 = vunpack.c.l.s4 1983009808
    %v7857 = vunpack.c.0.s8 %v7856
    %v7858 = vlaneseq
    %v7859 = vshrl.u32 %v7858, 7
    %v7860 = vsub.s32 %v7857, %v7859
    %v7861 = vrot.slane %v7853, %v7860
    %v7863 = vunpack.c.l.s4 1983009808
    %v7864 = vunpack.c.0.s8 %v7863
    %v7865 = vlaneseq
    %v7866 = vshrl.u32 %v7865, 7
    %v7867 = vsub.s32 %v7864, %v7866
    %v7868 = vrot.slane %v7854, %v7867
    %v7869 = vcombine.low %v7813, %v7829
    %v7870 = vcombine.high %v7813, %v7829
    %v7872 = vunpack.c.l.s4 1934713408
    %v7873 = vunpack.c.0.s8 %v7872
    %v7874 = vlaneseq
    %v7875 = vshrl.u32 %v7874, 7
    %v7876 = vsub.s32 %v7873, %v7875
    %v7877 = vrot.slane %v7869, %v7876
    %v7879 = vunpack.c.l.s4 1934713408
    %v7880 = vunpack.c.0.s8 %v7879
    %v7881 = vlaneseq
    %v7882 = vshrl.u32 %v7881, 7
    %v7883 = vsub.s32 %v7880, %v7882
    %v7884 = vrot.slane %v7870, %v7883
    %v7885 = vcombine.low %v7820, %v7836
    %v7886 = vcombine.high %v7820, %v7836
    %v7888 = vunpack.c.l.s4 1934713408
    %v7889 = vunpack.c.0.s8 %v7888
    %v7890 = vlaneseq
    %v7891 = vshrl.u32 %v7890, 7
    %v7892 = vsub.s32 %v7889, %v7891
    %v7893 = vrot.slane %v7885, %v7892
    %v7895 = vunpack.c.l.s4 1934713408
    %v7896 = vunpack.c.0.s8 %v7895
    %v7897 = vlaneseq
    %v7898 = vshrl.u32 %v7897, 7
    %v7899 = vsub.s32 %v7896, %v7898
    %v7900 = vrot.slane %v7886, %v7899
    %v7901 = vcombine.low %v7845, %v7861
    %v7902 = vcombine.high %v7845, %v7861
    %v7904 = vunpack.c.l.s4 1934713408
    %v7905 = vunpack.c.0.s8 %v7904
    %v7906 = vlaneseq
    %v7907 = vshrl.u32 %v7906, 7
    %v7908 = vsub.s32 %v7905, %v7907
    %v7909 = vrot.slane %v7901, %v7908
    %v7911 = vunpack.c.l.s4 1934713408
    %v7912 = vunpack.c.0.s8 %v7911
    %v7913 = vlaneseq
    %v7914 = vshrl.u32 %v7913, 7
    %v7915 = vsub.s32 %v7912, %v7914
    %v7916 = vrot.slane %v7902, %v7915
    %v7917 = vcombine.low %v7852, %v7868
    %v7918 = vcombine.high %v7852, %v7868
    %v7920 = vunpack.c.l.s4 1934713408
    %v7921 = vunpack.c.0.s8 %v7920
    %v7922 = vlaneseq
    %v7923 = vshrl.u32 %v7922, 7
    %v7924 = vsub.s32 %v7921, %v7923
    %v7925 = vrot.slane %v7917, %v7924
    %v7927 = vunpack.c.l.s4 1934713408
    %v7928 = vunpack.c.0.s8 %v7927
    %v7929 = vlaneseq
    %v7930 = vshrl.u32 %v7929, 7
    %v7931 = vsub.s32 %v7928, %v7930
    %v7932 = vrot.slane %v7918, %v7931
    %v7933 = vcombine.low %v7877, %v7909
    %v7934 = vcombine.high %v7877, %v7909
    %v7935 = vcombine.low %v7884, %v7916
    %v7936 = vcombine.high %v7884, %v7916
    %v7937 = vcombine.low %v7893, %v7925
    %v7938 = vcombine.high %v7893, %v7925
    %v7939 = vcombine.low %v7900, %v7932
    %v7940 = vcombine.high %v7900, %v7932
    %7942 = vrot.lane.b32.xlu0 %v7798, 16
    %v7943 = vpop.permute.xlu0 %7942
    %7946 = vrot.lane.b32.xlu0 %v7799, 32
    %v7947 = vpop.permute.xlu0 %7946
    %7950 = vrot.lane.b32.xlu0 %v7800, 48
    %v7951 = vpop.permute.xlu0 %7950
    %7954 = vrot.lane.b32.xlu0 %v7801, 64
    %v7955 = vpop.permute.xlu0 %7954
    %7958 = vrot.lane.b32.xlu0 %v7802, 80
    %v7959 = vpop.permute.xlu0 %7958
    %7962 = vrot.lane.b32.xlu0 %v7803, 96
    %v7963 = vpop.permute.xlu0 %7962
    %7966 = vrot.lane.b32.xlu0 %v7804, 112
    %v7967 = vpop.permute.xlu0 %7966
    %7970 = vrot.lane.b32.xlu0 %v7934, 16
    %v7971 = vpop.permute.xlu0 %7970
    %7974 = vrot.lane.b32.xlu0 %v7935, 32
    %v7975 = vpop.permute.xlu0 %7974
    %7978 = vrot.lane.b32.xlu0 %v7936, 48
    %v7979 = vpop.permute.xlu0 %7978
    %7982 = vrot.lane.b32.xlu0 %v7937, 64
    %v7983 = vpop.permute.xlu0 %7982
    %7986 = vrot.lane.b32.xlu0 %v7938, 80
    %v7987 = vpop.permute.xlu0 %7986
    %7990 = vrot.lane.b32.xlu0 %v7939, 96
    %v7991 = vpop.permute.xlu0 %7990
    %7994 = vrot.lane.b32.xlu0 %v7940, 112
    %v7995 = vpop.permute.xlu0 %7994
    %v7997 = vsel %vm372, %v7797, %v7943
    %v7998 = vsel %vm374, %v7997, %v7947
    %v7999 = vsel %vm376, %v7998, %v7951
    %v8000 = vsel %vm378, %v7999, %v7955
    %v8001 = vsel %vm380, %v8000, %v7959
    %v8002 = vsel %vm382, %v8001, %v7963
    %v8003 = vsel %vm384, %v8002, %v7967
    %v8004 = vsel %vm372, %v7933, %v7971
    %v8005 = vsel %vm374, %v8004, %v7975
    %v8006 = vsel %vm376, %v8005, %v7979
    %v8007 = vsel %vm378, %v8006, %v7983
    %v8008 = vsel %vm380, %v8007, %v7987
    %v8009 = vsel %vm382, %v8008, %v7991
    %v8010 = vsel %vm384, %v8009, %v7995
    %8027 = vrot.lane.b32.xlu0 %v7653, 127
    %v8028 = vpop.permute.xlu0 %8027
    %8029 = vrot.lane.b32.xlu0 %v7654, 127
    %v8030 = vpop.permute.xlu0 %8029
    %8031 = vrot.lane.b32.xlu0 %v7655, 127
    %v8032 = vpop.permute.xlu0 %8031
    %8033 = vrot.lane.b32.xlu0 %v7656, 127
    %v8034 = vpop.permute.xlu0 %8033
    %8035 = vrot.lane.b32.xlu0 %v7657, 127
    %v8036 = vpop.permute.xlu0 %8035
    %8037 = vrot.lane.b32.xlu0 %v7658, 127
    %v8038 = vpop.permute.xlu0 %8037
    %8039 = vrot.lane.b32.xlu0 %v7659, 127
    %v8040 = vpop.permute.xlu0 %8039
    %8041 = vrot.lane.b32.xlu0 %v7660, 127
    %v8042 = vpop.permute.xlu0 %8041
    %8043 = vrot.lane.b32.xlu0 %v7661, 127
    %v8044 = vpop.permute.xlu0 %8043
    %8045 = vrot.lane.b32.xlu0 %v7662, 127
    %v8046 = vpop.permute.xlu0 %8045
    %8047 = vrot.lane.b32.xlu0 %v7663, 127
    %v8048 = vpop.permute.xlu0 %8047
    %8049 = vrot.lane.b32.xlu0 %v7664, 127
    %v8050 = vpop.permute.xlu0 %8049
    %8051 = vrot.lane.b32.xlu0 %v7665, 127
    %v8052 = vpop.permute.xlu0 %8051
    %8053 = vrot.lane.b32.xlu0 %v7666, 127
    %v8054 = vpop.permute.xlu0 %8053
    %8055 = vrot.lane.b32.xlu0 %v7667, 127
    %v8056 = vpop.permute.xlu0 %8055
    %8057 = vrot.lane.b32.xlu0 %v7668, 127
    %v8058 = vpop.permute.xlu0 %8057
    %v8075 = vcombine.low %v8028, %v8036
    %v8076 = vcombine.high %v8028, %v8036
    %v8078 = vunpack.c.l.s4 1983009808
    %v8079 = vunpack.c.0.s8 %v8078
    %v8080 = vlaneseq
    %v8081 = vshrl.u32 %v8080, 7
    %v8082 = vsub.s32 %v8079, %v8081
    %v8083 = vrot.slane %v8075, %v8082
    %v8085 = vunpack.c.l.s4 1983009808
    %v8086 = vunpack.c.0.s8 %v8085
    %v8087 = vlaneseq
    %v8088 = vshrl.u32 %v8087, 7
    %v8089 = vsub.s32 %v8086, %v8088
    %v8090 = vrot.slane %v8076, %v8089
    %v8091 = vcombine.low %v8032, %v8040
    %v8092 = vcombine.high %v8032, %v8040
    %v8094 = vunpack.c.l.s4 1983009808
    %v8095 = vunpack.c.0.s8 %v8094
    %v8096 = vlaneseq
    %v8097 = vshrl.u32 %v8096, 7
    %v8098 = vsub.s32 %v8095, %v8097
    %v8099 = vrot.slane %v8091, %v8098
    %v8101 = vunpack.c.l.s4 1983009808
    %v8102 = vunpack.c.0.s8 %v8101
    %v8103 = vlaneseq
    %v8104 = vshrl.u32 %v8103, 7
    %v8105 = vsub.s32 %v8102, %v8104
    %v8106 = vrot.slane %v8092, %v8105
    %v8107 = vcombine.low %v8044, %v8052
    %v8108 = vcombine.high %v8044, %v8052
    %v8110 = vunpack.c.l.s4 1983009808
    %v8111 = vunpack.c.0.s8 %v8110
    %v8112 = vlaneseq
    %v8113 = vshrl.u32 %v8112, 7
    %v8114 = vsub.s32 %v8111, %v8113
    %v8115 = vrot.slane %v8107, %v8114
    %v8117 = vunpack.c.l.s4 1983009808
    %v8118 = vunpack.c.0.s8 %v8117
    %v8119 = vlaneseq
    %v8120 = vshrl.u32 %v8119, 7
    %v8121 = vsub.s32 %v8118, %v8120
    %v8122 = vrot.slane %v8108, %v8121
    %v8123 = vcombine.low %v8048, %v8056
    %v8124 = vcombine.high %v8048, %v8056
    %v8126 = vunpack.c.l.s4 1983009808
    %v8127 = vunpack.c.0.s8 %v8126
    %v8128 = vlaneseq
    %v8129 = vshrl.u32 %v8128, 7
    %v8130 = vsub.s32 %v8127, %v8129
    %v8131 = vrot.slane %v8123, %v8130
    %v8133 = vunpack.c.l.s4 1983009808
    %v8134 = vunpack.c.0.s8 %v8133
    %v8135 = vlaneseq
    %v8136 = vshrl.u32 %v8135, 7
    %v8137 = vsub.s32 %v8134, %v8136
    %v8138 = vrot.slane %v8124, %v8137
    %v8139 = vcombine.low %v8083, %v8099
    %v8140 = vcombine.high %v8083, %v8099
    %v8142 = vunpack.c.l.s4 1934713408
    %v8143 = vunpack.c.0.s8 %v8142
    %v8144 = vlaneseq
    %v8145 = vshrl.u32 %v8144, 7
    %v8146 = vsub.s32 %v8143, %v8145
    %v8147 = vrot.slane %v8139, %v8146
    %v8149 = vunpack.c.l.s4 1934713408
    %v8150 = vunpack.c.0.s8 %v8149
    %v8151 = vlaneseq
    %v8152 = vshrl.u32 %v8151, 7
    %v8153 = vsub.s32 %v8150, %v8152
    %v8154 = vrot.slane %v8140, %v8153
    %v8155 = vcombine.low %v8090, %v8106
    %v8156 = vcombine.high %v8090, %v8106
    %v8158 = vunpack.c.l.s4 1934713408
    %v8159 = vunpack.c.0.s8 %v8158
    %v8160 = vlaneseq
    %v8161 = vshrl.u32 %v8160, 7
    %v8162 = vsub.s32 %v8159, %v8161
    %v8163 = vrot.slane %v8155, %v8162
    %v8165 = vunpack.c.l.s4 1934713408
    %v8166 = vunpack.c.0.s8 %v8165
    %v8167 = vlaneseq
    %v8168 = vshrl.u32 %v8167, 7
    %v8169 = vsub.s32 %v8166, %v8168
    %v8170 = vrot.slane %v8156, %v8169
    %v8171 = vcombine.low %v8115, %v8131
    %v8172 = vcombine.high %v8115, %v8131
    %v8174 = vunpack.c.l.s4 1934713408
    %v8175 = vunpack.c.0.s8 %v8174
    %v8176 = vlaneseq
    %v8177 = vshrl.u32 %v8176, 7
    %v8178 = vsub.s32 %v8175, %v8177
    %v8179 = vrot.slane %v8171, %v8178
    %v8181 = vunpack.c.l.s4 1934713408
    %v8182 = vunpack.c.0.s8 %v8181
    %v8183 = vlaneseq
    %v8184 = vshrl.u32 %v8183, 7
    %v8185 = vsub.s32 %v8182, %v8184
    %v8186 = vrot.slane %v8172, %v8185
    %v8187 = vcombine.low %v8122, %v8138
    %v8188 = vcombine.high %v8122, %v8138
    %v8190 = vunpack.c.l.s4 1934713408
    %v8191 = vunpack.c.0.s8 %v8190
    %v8192 = vlaneseq
    %v8193 = vshrl.u32 %v8192, 7
    %v8194 = vsub.s32 %v8191, %v8193
    %v8195 = vrot.slane %v8187, %v8194
    %v8197 = vunpack.c.l.s4 1934713408
    %v8198 = vunpack.c.0.s8 %v8197
    %v8199 = vlaneseq
    %v8200 = vshrl.u32 %v8199, 7
    %v8201 = vsub.s32 %v8198, %v8200
    %v8202 = vrot.slane %v8188, %v8201
    %v8203 = vcombine.low %v8147, %v8179
    %v8204 = vcombine.high %v8147, %v8179
    %v8205 = vcombine.low %v8154, %v8186
    %v8206 = vcombine.high %v8154, %v8186
    %v8207 = vcombine.low %v8163, %v8195
    %v8208 = vcombine.high %v8163, %v8195
    %v8209 = vcombine.low %v8170, %v8202
    %v8210 = vcombine.high %v8170, %v8202
    %v8211 = vcombine.low %v8030, %v8038
    %v8212 = vcombine.high %v8030, %v8038
    %v8214 = vunpack.c.l.s4 1983009808
    %v8215 = vunpack.c.0.s8 %v8214
    %v8216 = vlaneseq
    %v8217 = vshrl.u32 %v8216, 7
    %v8218 = vsub.s32 %v8215, %v8217
    %v8219 = vrot.slane %v8211, %v8218
    %v8221 = vunpack.c.l.s4 1983009808
    %v8222 = vunpack.c.0.s8 %v8221
    %v8223 = vlaneseq
    %v8224 = vshrl.u32 %v8223, 7
    %v8225 = vsub.s32 %v8222, %v8224
    %v8226 = vrot.slane %v8212, %v8225
    %v8227 = vcombine.low %v8034, %v8042
    %v8228 = vcombine.high %v8034, %v8042
    %v8230 = vunpack.c.l.s4 1983009808
    %v8231 = vunpack.c.0.s8 %v8230
    %v8232 = vlaneseq
    %v8233 = vshrl.u32 %v8232, 7
    %v8234 = vsub.s32 %v8231, %v8233
    %v8235 = vrot.slane %v8227, %v8234
    %v8237 = vunpack.c.l.s4 1983009808
    %v8238 = vunpack.c.0.s8 %v8237
    %v8239 = vlaneseq
    %v8240 = vshrl.u32 %v8239, 7
    %v8241 = vsub.s32 %v8238, %v8240
    %v8242 = vrot.slane %v8228, %v8241
    %v8243 = vcombine.low %v8046, %v8054
    %v8244 = vcombine.high %v8046, %v8054
    %v8246 = vunpack.c.l.s4 1983009808
    %v8247 = vunpack.c.0.s8 %v8246
    %v8248 = vlaneseq
    %v8249 = vshrl.u32 %v8248, 7
    %v8250 = vsub.s32 %v8247, %v8249
    %v8251 = vrot.slane %v8243, %v8250
    %v8253 = vunpack.c.l.s4 1983009808
    %v8254 = vunpack.c.0.s8 %v8253
    %v8255 = vlaneseq
    %v8256 = vshrl.u32 %v8255, 7
    %v8257 = vsub.s32 %v8254, %v8256
    %v8258 = vrot.slane %v8244, %v8257
    %v8259 = vcombine.low %v8050, %v8058
    %v8260 = vcombine.high %v8050, %v8058
    %v8262 = vunpack.c.l.s4 1983009808
    %v8263 = vunpack.c.0.s8 %v8262
    %v8264 = vlaneseq
    %v8265 = vshrl.u32 %v8264, 7
    %v8266 = vsub.s32 %v8263, %v8265
    %v8267 = vrot.slane %v8259, %v8266
    %v8269 = vunpack.c.l.s4 1983009808
    %v8270 = vunpack.c.0.s8 %v8269
    %v8271 = vlaneseq
    %v8272 = vshrl.u32 %v8271, 7
    %v8273 = vsub.s32 %v8270, %v8272
    %v8274 = vrot.slane %v8260, %v8273
    %v8275 = vcombine.low %v8219, %v8235
    %v8276 = vcombine.high %v8219, %v8235
    %v8278 = vunpack.c.l.s4 1934713408
    %v8279 = vunpack.c.0.s8 %v8278
    %v8280 = vlaneseq
    %v8281 = vshrl.u32 %v8280, 7
    %v8282 = vsub.s32 %v8279, %v8281
    %v8283 = vrot.slane %v8275, %v8282
    %v8285 = vunpack.c.l.s4 1934713408
    %v8286 = vunpack.c.0.s8 %v8285
    %v8287 = vlaneseq
    %v8288 = vshrl.u32 %v8287, 7
    %v8289 = vsub.s32 %v8286, %v8288
    %v8290 = vrot.slane %v8276, %v8289
    %v8291 = vcombine.low %v8226, %v8242
    %v8292 = vcombine.high %v8226, %v8242
    %v8294 = vunpack.c.l.s4 1934713408
    %v8295 = vunpack.c.0.s8 %v8294
    %v8296 = vlaneseq
    %v8297 = vshrl.u32 %v8296, 7
    %v8298 = vsub.s32 %v8295, %v8297
    %v8299 = vrot.slane %v8291, %v8298
    %v8301 = vunpack.c.l.s4 1934713408
    %v8302 = vunpack.c.0.s8 %v8301
    %v8303 = vlaneseq
    %v8304 = vshrl.u32 %v8303, 7
    %v8305 = vsub.s32 %v8302, %v8304
    %v8306 = vrot.slane %v8292, %v8305
    %v8307 = vcombine.low %v8251, %v8267
    %v8308 = vcombine.high %v8251, %v8267
    %v8310 = vunpack.c.l.s4 1934713408
    %v8311 = vunpack.c.0.s8 %v8310
    %v8312 = vlaneseq
    %v8313 = vshrl.u32 %v8312, 7
    %v8314 = vsub.s32 %v8311, %v8313
    %v8315 = vrot.slane %v8307, %v8314
    %v8317 = vunpack.c.l.s4 1934713408
    %v8318 = vunpack.c.0.s8 %v8317
    %v8319 = vlaneseq
    %v8320 = vshrl.u32 %v8319, 7
    %v8321 = vsub.s32 %v8318, %v8320
    %v8322 = vrot.slane %v8308, %v8321
    %v8323 = vcombine.low %v8258, %v8274
    %v8324 = vcombine.high %v8258, %v8274
    %v8326 = vunpack.c.l.s4 1934713408
    %v8327 = vunpack.c.0.s8 %v8326
    %v8328 = vlaneseq
    %v8329 = vshrl.u32 %v8328, 7
    %v8330 = vsub.s32 %v8327, %v8329
    %v8331 = vrot.slane %v8323, %v8330
    %v8333 = vunpack.c.l.s4 1934713408
    %v8334 = vunpack.c.0.s8 %v8333
    %v8335 = vlaneseq
    %v8336 = vshrl.u32 %v8335, 7
    %v8337 = vsub.s32 %v8334, %v8336
    %v8338 = vrot.slane %v8324, %v8337
    %v8339 = vcombine.low %v8283, %v8315
    %v8340 = vcombine.high %v8283, %v8315
    %v8341 = vcombine.low %v8290, %v8322
    %v8342 = vcombine.high %v8290, %v8322
    %v8343 = vcombine.low %v8299, %v8331
    %v8344 = vcombine.high %v8299, %v8331
    %v8345 = vcombine.low %v8306, %v8338
    %v8346 = vcombine.high %v8306, %v8338
    %8348 = vrot.lane.b32.xlu0 %v8204, 16
    %v8349 = vpop.permute.xlu0 %8348
    %8352 = vrot.lane.b32.xlu0 %v8205, 32
    %v8353 = vpop.permute.xlu0 %8352
    %8356 = vrot.lane.b32.xlu0 %v8206, 48
    %v8357 = vpop.permute.xlu0 %8356
    %8360 = vrot.lane.b32.xlu0 %v8207, 64
    %v8361 = vpop.permute.xlu0 %8360
    %8364 = vrot.lane.b32.xlu0 %v8208, 80
    %v8365 = vpop.permute.xlu0 %8364
    %8368 = vrot.lane.b32.xlu0 %v8209, 96
    %v8369 = vpop.permute.xlu0 %8368
    %8372 = vrot.lane.b32.xlu0 %v8210, 112
    %v8373 = vpop.permute.xlu0 %8372
    %8376 = vrot.lane.b32.xlu0 %v8340, 16
    %v8377 = vpop.permute.xlu0 %8376
    %8380 = vrot.lane.b32.xlu0 %v8341, 32
    %v8381 = vpop.permute.xlu0 %8380
    %8384 = vrot.lane.b32.xlu0 %v8342, 48
    %v8385 = vpop.permute.xlu0 %8384
    %8388 = vrot.lane.b32.xlu0 %v8343, 64
    %v8389 = vpop.permute.xlu0 %8388
    %8392 = vrot.lane.b32.xlu0 %v8344, 80
    %v8393 = vpop.permute.xlu0 %8392
    %8396 = vrot.lane.b32.xlu0 %v8345, 96
    %v8397 = vpop.permute.xlu0 %8396
    %8400 = vrot.lane.b32.xlu0 %v8346, 112
    %v8401 = vpop.permute.xlu0 %8400
    %v8403 = vsel %vm372, %v8203, %v8349
    %v8404 = vsel %vm374, %v8403, %v8353
    %v8405 = vsel %vm376, %v8404, %v8357
    %v8406 = vsel %vm378, %v8405, %v8361
    %v8407 = vsel %vm380, %v8406, %v8365
    %v8408 = vsel %vm382, %v8407, %v8369
    %v8409 = vsel %vm384, %v8408, %v8373
    %v8410 = vsel %vm372, %v8339, %v8377
    %v8411 = vsel %vm374, %v8410, %v8381
    %v8412 = vsel %vm376, %v8411, %v8385
    %v8413 = vsel %vm378, %v8412, %v8389
    %v8414 = vsel %vm380, %v8413, %v8393
    %v8415 = vsel %vm382, %v8414, %v8397
    %v8416 = vsel %vm384, %v8415, %v8401
    %8417 = vrot.lane.b32.xlu0 %v7653, 126
    %v8418 = vpop.permute.xlu0 %8417
    %8419 = vrot.lane.b32.xlu0 %v7654, 126
    %v8420 = vpop.permute.xlu0 %8419
    %8421 = vrot.lane.b32.xlu0 %v7655, 126
    %v8422 = vpop.permute.xlu0 %8421
    %8423 = vrot.lane.b32.xlu0 %v7656, 126
    %v8424 = vpop.permute.xlu0 %8423
    %8425 = vrot.lane.b32.xlu0 %v7657, 126
    %v8426 = vpop.permute.xlu0 %8425
    %8427 = vrot.lane.b32.xlu0 %v7658, 126
    %v8428 = vpop.permute.xlu0 %8427
    %8429 = vrot.lane.b32.xlu0 %v7659, 126
    %v8430 = vpop.permute.xlu0 %8429
    %8431 = vrot.lane.b32.xlu0 %v7660, 126
    %v8432 = vpop.permute.xlu0 %8431
    %8433 = vrot.lane.b32.xlu0 %v7661, 126
    %v8434 = vpop.permute.xlu0 %8433
    %8435 = vrot.lane.b32.xlu0 %v7662, 126
    %v8436 = vpop.permute.xlu0 %8435
    %8437 = vrot.lane.b32.xlu0 %v7663, 126
    %v8438 = vpop.permute.xlu0 %8437
    %8439 = vrot.lane.b32.xlu0 %v7664, 126
    %v8440 = vpop.permute.xlu0 %8439
    %8441 = vrot.lane.b32.xlu0 %v7665, 126
    %v8442 = vpop.permute.xlu0 %8441
    %8443 = vrot.lane.b32.xlu0 %v7666, 126
    %v8444 = vpop.permute.xlu0 %8443
    %8445 = vrot.lane.b32.xlu0 %v7667, 126
    %v8446 = vpop.permute.xlu0 %8445
    %8447 = vrot.lane.b32.xlu0 %v7668, 126
    %v8448 = vpop.permute.xlu0 %8447
    %v8465 = vcombine.low %v8418, %v8426
    %v8466 = vcombine.high %v8418, %v8426
    %v8468 = vunpack.c.l.s4 1983009808
    %v8469 = vunpack.c.0.s8 %v8468
    %v8470 = vlaneseq
    %v8471 = vshrl.u32 %v8470, 7
    %v8472 = vsub.s32 %v8469, %v8471
    %v8473 = vrot.slane %v8465, %v8472
    %v8475 = vunpack.c.l.s4 1983009808
    %v8476 = vunpack.c.0.s8 %v8475
    %v8477 = vlaneseq
    %v8478 = vshrl.u32 %v8477, 7
    %v8479 = vsub.s32 %v8476, %v8478
    %v8480 = vrot.slane %v8466, %v8479
    %v8481 = vcombine.low %v8422, %v8430
    %v8482 = vcombine.high %v8422, %v8430
    %v8484 = vunpack.c.l.s4 1983009808
    %v8485 = vunpack.c.0.s8 %v8484
    %v8486 = vlaneseq
    %v8487 = vshrl.u32 %v8486, 7
    %v8488 = vsub.s32 %v8485, %v8487
    %v8489 = vrot.slane %v8481, %v8488
    %v8491 = vunpack.c.l.s4 1983009808
    %v8492 = vunpack.c.0.s8 %v8491
    %v8493 = vlaneseq
    %v8494 = vshrl.u32 %v8493, 7
    %v8495 = vsub.s32 %v8492, %v8494
    %v8496 = vrot.slane %v8482, %v8495
    %v8497 = vcombine.low %v8434, %v8442
    %v8498 = vcombine.high %v8434, %v8442
    %v8500 = vunpack.c.l.s4 1983009808
    %v8501 = vunpack.c.0.s8 %v8500
    %v8502 = vlaneseq
    %v8503 = vshrl.u32 %v8502, 7
    %v8504 = vsub.s32 %v8501, %v8503
    %v8505 = vrot.slane %v8497, %v8504
    %v8507 = vunpack.c.l.s4 1983009808
    %v8508 = vunpack.c.0.s8 %v8507
    %v8509 = vlaneseq
    %v8510 = vshrl.u32 %v8509, 7
    %v8511 = vsub.s32 %v8508, %v8510
    %v8512 = vrot.slane %v8498, %v8511
    %v8513 = vcombine.low %v8438, %v8446
    %v8514 = vcombine.high %v8438, %v8446
    %v8516 = vunpack.c.l.s4 1983009808
    %v8517 = vunpack.c.0.s8 %v8516
    %v8518 = vlaneseq
    %v8519 = vshrl.u32 %v8518, 7
    %v8520 = vsub.s32 %v8517, %v8519
    %v8521 = vrot.slane %v8513, %v8520
    %v8523 = vunpack.c.l.s4 1983009808
    %v8524 = vunpack.c.0.s8 %v8523
    %v8525 = vlaneseq
    %v8526 = vshrl.u32 %v8525, 7
    %v8527 = vsub.s32 %v8524, %v8526
    %v8528 = vrot.slane %v8514, %v8527
    %v8529 = vcombine.low %v8473, %v8489
    %v8530 = vcombine.high %v8473, %v8489
    %v8532 = vunpack.c.l.s4 1934713408
    %v8533 = vunpack.c.0.s8 %v8532
    %v8534 = vlaneseq
    %v8535 = vshrl.u32 %v8534, 7
    %v8536 = vsub.s32 %v8533, %v8535
    %v8537 = vrot.slane %v8529, %v8536
    %v8539 = vunpack.c.l.s4 1934713408
    %v8540 = vunpack.c.0.s8 %v8539
    %v8541 = vlaneseq
    %v8542 = vshrl.u32 %v8541, 7
    %v8543 = vsub.s32 %v8540, %v8542
    %v8544 = vrot.slane %v8530, %v8543
    %v8545 = vcombine.low %v8480, %v8496
    %v8546 = vcombine.high %v8480, %v8496
    %v8548 = vunpack.c.l.s4 1934713408
    %v8549 = vunpack.c.0.s8 %v8548
    %v8550 = vlaneseq
    %v8551 = vshrl.u32 %v8550, 7
    %v8552 = vsub.s32 %v8549, %v8551
    %v8553 = vrot.slane %v8545, %v8552
    %v8555 = vunpack.c.l.s4 1934713408
    %v8556 = vunpack.c.0.s8 %v8555
    %v8557 = vlaneseq
    %v8558 = vshrl.u32 %v8557, 7
    %v8559 = vsub.s32 %v8556, %v8558
    %v8560 = vrot.slane %v8546, %v8559
    %v8561 = vcombine.low %v8505, %v8521
    %v8562 = vcombine.high %v8505, %v8521
    %v8564 = vunpack.c.l.s4 1934713408
    %v8565 = vunpack.c.0.s8 %v8564
    %v8566 = vlaneseq
    %v8567 = vshrl.u32 %v8566, 7
    %v8568 = vsub.s32 %v8565, %v8567
    %v8569 = vrot.slane %v8561, %v8568
    %v8571 = vunpack.c.l.s4 1934713408
    %v8572 = vunpack.c.0.s8 %v8571
    %v8573 = vlaneseq
    %v8574 = vshrl.u32 %v8573, 7
    %v8575 = vsub.s32 %v8572, %v8574
    %v8576 = vrot.slane %v8562, %v8575
    %v8577 = vcombine.low %v8512, %v8528
    %v8578 = vcombine.high %v8512, %v8528
    %v8580 = vunpack.c.l.s4 1934713408
    %v8581 = vunpack.c.0.s8 %v8580
    %v8582 = vlaneseq
    %v8583 = vshrl.u32 %v8582, 7
    %v8584 = vsub.s32 %v8581, %v8583
    %v8585 = vrot.slane %v8577, %v8584
    %v8587 = vunpack.c.l.s4 1934713408
    %v8588 = vunpack.c.0.s8 %v8587
    %v8589 = vlaneseq
    %v8590 = vshrl.u32 %v8589, 7
    %v8591 = vsub.s32 %v8588, %v8590
    %v8592 = vrot.slane %v8578, %v8591
    %v8593 = vcombine.low %v8537, %v8569
    %v8594 = vcombine.high %v8537, %v8569
    %v8595 = vcombine.low %v8544, %v8576
    %v8596 = vcombine.high %v8544, %v8576
    %v8597 = vcombine.low %v8553, %v8585
    %v8598 = vcombine.high %v8553, %v8585
    %v8599 = vcombine.low %v8560, %v8592
    %v8600 = vcombine.high %v8560, %v8592
    %v8601 = vcombine.low %v8420, %v8428
    %v8602 = vcombine.high %v8420, %v8428
    %v8604 = vunpack.c.l.s4 1983009808
    %v8605 = vunpack.c.0.s8 %v8604
    %v8606 = vlaneseq
    %v8607 = vshrl.u32 %v8606, 7
    %v8608 = vsub.s32 %v8605, %v8607
    %v8609 = vrot.slane %v8601, %v8608
    %v8611 = vunpack.c.l.s4 1983009808
    %v8612 = vunpack.c.0.s8 %v8611
    %v8613 = vlaneseq
    %v8614 = vshrl.u32 %v8613, 7
    %v8615 = vsub.s32 %v8612, %v8614
    %v8616 = vrot.slane %v8602, %v8615
    %v8617 = vcombine.low %v8424, %v8432
    %v8618 = vcombine.high %v8424, %v8432
    %v8620 = vunpack.c.l.s4 1983009808
    %v8621 = vunpack.c.0.s8 %v8620
    %v8622 = vlaneseq
    %v8623 = vshrl.u32 %v8622, 7
    %v8624 = vsub.s32 %v8621, %v8623
    %v8625 = vrot.slane %v8617, %v8624
    %v8627 = vunpack.c.l.s4 1983009808
    %v8628 = vunpack.c.0.s8 %v8627
    %v8629 = vlaneseq
    %v8630 = vshrl.u32 %v8629, 7
    %v8631 = vsub.s32 %v8628, %v8630
    %v8632 = vrot.slane %v8618, %v8631
    %v8633 = vcombine.low %v8436, %v8444
    %v8634 = vcombine.high %v8436, %v8444
    %v8636 = vunpack.c.l.s4 1983009808
    %v8637 = vunpack.c.0.s8 %v8636
    %v8638 = vlaneseq
    %v8639 = vshrl.u32 %v8638, 7
    %v8640 = vsub.s32 %v8637, %v8639
    %v8641 = vrot.slane %v8633, %v8640
    %v8643 = vunpack.c.l.s4 1983009808
    %v8644 = vunpack.c.0.s8 %v8643
    %v8645 = vlaneseq
    %v8646 = vshrl.u32 %v8645, 7
    %v8647 = vsub.s32 %v8644, %v8646
    %v8648 = vrot.slane %v8634, %v8647
    %v8649 = vcombine.low %v8440, %v8448
    %v8650 = vcombine.high %v8440, %v8448
    %v8652 = vunpack.c.l.s4 1983009808
    %v8653 = vunpack.c.0.s8 %v8652
    %v8654 = vlaneseq
    %v8655 = vshrl.u32 %v8654, 7
    %v8656 = vsub.s32 %v8653, %v8655
    %v8657 = vrot.slane %v8649, %v8656
    %v8659 = vunpack.c.l.s4 1983009808
    %v8660 = vunpack.c.0.s8 %v8659
    %v8661 = vlaneseq
    %v8662 = vshrl.u32 %v8661, 7
    %v8663 = vsub.s32 %v8660, %v8662
    %v8664 = vrot.slane %v8650, %v8663
    %v8665 = vcombine.low %v8609, %v8625
    %v8666 = vcombine.high %v8609, %v8625
    %v8668 = vunpack.c.l.s4 1934713408
    %v8669 = vunpack.c.0.s8 %v8668
    %v8670 = vlaneseq
    %v8671 = vshrl.u32 %v8670, 7
    %v8672 = vsub.s32 %v8669, %v8671
    %v8673 = vrot.slane %v8665, %v8672
    %v8675 = vunpack.c.l.s4 1934713408
    %v8676 = vunpack.c.0.s8 %v8675
    %v8677 = vlaneseq
    %v8678 = vshrl.u32 %v8677, 7
    %v8679 = vsub.s32 %v8676, %v8678
    %v8680 = vrot.slane %v8666, %v8679
    %v8681 = vcombine.low %v8616, %v8632
    %v8682 = vcombine.high %v8616, %v8632
    %v8684 = vunpack.c.l.s4 1934713408
    %v8685 = vunpack.c.0.s8 %v8684
    %v8686 = vlaneseq
    %v8687 = vshrl.u32 %v8686, 7
    %v8688 = vsub.s32 %v8685, %v8687
    %v8689 = vrot.slane %v8681, %v8688
    %v8691 = vunpack.c.l.s4 1934713408
    %v8692 = vunpack.c.0.s8 %v8691
    %v8693 = vlaneseq
    %v8694 = vshrl.u32 %v8693, 7
    %v8695 = vsub.s32 %v8692, %v8694
    %v8696 = vrot.slane %v8682, %v8695
    %v8697 = vcombine.low %v8641, %v8657
    %v8698 = vcombine.high %v8641, %v8657
    %v8700 = vunpack.c.l.s4 1934713408
    %v8701 = vunpack.c.0.s8 %v8700
    %v8702 = vlaneseq
    %v8703 = vshrl.u32 %v8702, 7
    %v8704 = vsub.s32 %v8701, %v8703
    %v8705 = vrot.slane %v8697, %v8704
    %v8707 = vunpack.c.l.s4 1934713408
    %v8708 = vunpack.c.0.s8 %v8707
    %v8709 = vlaneseq
    %v8710 = vshrl.u32 %v8709, 7
    %v8711 = vsub.s32 %v8708, %v8710
    %v8712 = vrot.slane %v8698, %v8711
    %v8713 = vcombine.low %v8648, %v8664
    %v8714 = vcombine.high %v8648, %v8664
    %v8716 = vunpack.c.l.s4 1934713408
    %v8717 = vunpack.c.0.s8 %v8716
    %v8718 = vlaneseq
    %v8719 = vshrl.u32 %v8718, 7
    %v8720 = vsub.s32 %v8717, %v8719
    %v8721 = vrot.slane %v8713, %v8720
    %v8723 = vunpack.c.l.s4 1934713408
    %v8724 = vunpack.c.0.s8 %v8723
    %v8725 = vlaneseq
    %v8726 = vshrl.u32 %v8725, 7
    %v8727 = vsub.s32 %v8724, %v8726
    %v8728 = vrot.slane %v8714, %v8727
    %v8729 = vcombine.low %v8673, %v8705
    %v8730 = vcombine.high %v8673, %v8705
    %v8731 = vcombine.low %v8680, %v8712
    %v8732 = vcombine.high %v8680, %v8712
    %v8733 = vcombine.low %v8689, %v8721
    %v8734 = vcombine.high %v8689, %v8721
    %v8735 = vcombine.low %v8696, %v8728
    %v8736 = vcombine.high %v8696, %v8728
    %8738 = vrot.lane.b32.xlu0 %v8594, 16
    %v8739 = vpop.permute.xlu0 %8738
    %8742 = vrot.lane.b32.xlu0 %v8595, 32
    %v8743 = vpop.permute.xlu0 %8742
    %8746 = vrot.lane.b32.xlu0 %v8596, 48
    %v8747 = vpop.permute.xlu0 %8746
    %8750 = vrot.lane.b32.xlu0 %v8597, 64
    %v8751 = vpop.permute.xlu0 %8750
    %8754 = vrot.lane.b32.xlu0 %v8598, 80
    %v8755 = vpop.permute.xlu0 %8754
    %8758 = vrot.lane.b32.xlu0 %v8599, 96
    %v8759 = vpop.permute.xlu0 %8758
    %8762 = vrot.lane.b32.xlu0 %v8600, 112
    %v8763 = vpop.permute.xlu0 %8762
    %8766 = vrot.lane.b32.xlu0 %v8730, 16
    %v8767 = vpop.permute.xlu0 %8766
    %8770 = vrot.lane.b32.xlu0 %v8731, 32
    %v8771 = vpop.permute.xlu0 %8770
    %8774 = vrot.lane.b32.xlu0 %v8732, 48
    %v8775 = vpop.permute.xlu0 %8774
    %8778 = vrot.lane.b32.xlu0 %v8733, 64
    %v8779 = vpop.permute.xlu0 %8778
    %8782 = vrot.lane.b32.xlu0 %v8734, 80
    %v8783 = vpop.permute.xlu0 %8782
    %8786 = vrot.lane.b32.xlu0 %v8735, 96
    %v8787 = vpop.permute.xlu0 %8786
    %8790 = vrot.lane.b32.xlu0 %v8736, 112
    %v8791 = vpop.permute.xlu0 %8790
    %v8793 = vsel %vm372, %v8593, %v8739
    %v8794 = vsel %vm374, %v8793, %v8743
    %v8795 = vsel %vm376, %v8794, %v8747
    %v8796 = vsel %vm378, %v8795, %v8751
    %v8797 = vsel %vm380, %v8796, %v8755
    %v8798 = vsel %vm382, %v8797, %v8759
    %v8799 = vsel %vm384, %v8798, %v8763
    %v8800 = vsel %vm372, %v8729, %v8767
    %v8801 = vsel %vm374, %v8800, %v8771
    %v8802 = vsel %vm376, %v8801, %v8775
    %v8803 = vsel %vm378, %v8802, %v8779
    %v8804 = vsel %vm380, %v8803, %v8783
    %v8805 = vsel %vm382, %v8804, %v8787
    %v8806 = vsel %vm384, %v8805, %v8791
    %v8807 = vld [vmem:[%s5327] sm:$0xff]
    %v8808 = vld [vmem:[%s5327 + $0x8] sm:$0xff]
    %v8809 = vld [vmem:[%s5327 + $0x18] sm:$0xff]
    %v8810 = vld [vmem:[%s5327 + $0x20] sm:$0xff]
    %v8811 = vld [vmem:[%s5327 + $0x30] sm:$0xff]
    %v8812 = vld [vmem:[%s5327 + $0x38] sm:$0xff]
    %v8813 = vld [vmem:[%s5327 + $0x48] sm:$0xff]
    %v8814 = vld [vmem:[%s5327 + $0x50] sm:$0xff]
    %v8815 = vld [vmem:[%s5327 + $0x60] sm:$0xff]
    %v8816 = vld [vmem:[%s5327 + $0x68] sm:$0xff]
    %v8817 = vld [vmem:[%s5327 + $0x78] sm:$0xff]
    %v8818 = vld [vmem:[%s5327 + $0x80] sm:$0xff]
    %v8819 = vld [vmem:[%s5327 + $0x90] sm:$0xff]
    %v8820 = vld [vmem:[%s5327 + $0x98] sm:$0xff]
    %v8821 = vld [vmem:[%s5327 + $0xa8] sm:$0xff]
    %v8822 = vld [vmem:[%s5327 + $0xb0] sm:$0xff]
    %v8823 = vcombine.low %v8807, %v8811
    %v8824 = vcombine.high %v8807, %v8811
    %v8826 = vunpack.c.l.s4 1983009808
    %v8827 = vunpack.c.0.s8 %v8826
    %v8828 = vlaneseq
    %v8829 = vshrl.u32 %v8828, 7
    %v8830 = vsub.s32 %v8827, %v8829
    %v8831 = vrot.slane %v8823, %v8830
    %v8833 = vunpack.c.l.s4 1983009808
    %v8834 = vunpack.c.0.s8 %v8833
    %v8835 = vlaneseq
    %v8836 = vshrl.u32 %v8835, 7
    %v8837 = vsub.s32 %v8834, %v8836
    %v8838 = vrot.slane %v8824, %v8837
    %v8839 = vcombine.low %v8809, %v8813
    %v8840 = vcombine.high %v8809, %v8813
    %v8842 = vunpack.c.l.s4 1983009808
    %v8843 = vunpack.c.0.s8 %v8842
    %v8844 = vlaneseq
    %v8845 = vshrl.u32 %v8844, 7
    %v8846 = vsub.s32 %v8843, %v8845
    %v8847 = vrot.slane %v8839, %v8846
    %v8849 = vunpack.c.l.s4 1983009808
    %v8850 = vunpack.c.0.s8 %v8849
    %v8851 = vlaneseq
    %v8852 = vshrl.u32 %v8851, 7
    %v8853 = vsub.s32 %v8850, %v8852
    %v8854 = vrot.slane %v8840, %v8853
    %v8855 = vcombine.low %v8815, %v8819
    %v8856 = vcombine.high %v8815, %v8819
    %v8858 = vunpack.c.l.s4 1983009808
    %v8859 = vunpack.c.0.s8 %v8858
    %v8860 = vlaneseq
    %v8861 = vshrl.u32 %v8860, 7
    %v8862 = vsub.s32 %v8859, %v8861
    %v8863 = vrot.slane %v8855, %v8862
    %v8865 = vunpack.c.l.s4 1983009808
    %v8866 = vunpack.c.0.s8 %v8865
    %v8867 = vlaneseq
    %v8868 = vshrl.u32 %v8867, 7
    %v8869 = vsub.s32 %v8866, %v8868
    %v8870 = vrot.slane %v8856, %v8869
    %v8871 = vcombine.low %v8817, %v8821
    %v8872 = vcombine.high %v8817, %v8821
    %v8874 = vunpack.c.l.s4 1983009808
    %v8875 = vunpack.c.0.s8 %v8874
    %v8876 = vlaneseq
    %v8877 = vshrl.u32 %v8876, 7
    %v8878 = vsub.s32 %v8875, %v8877
    %v8879 = vrot.slane %v8871, %v8878
    %v8881 = vunpack.c.l.s4 1983009808
    %v8882 = vunpack.c.0.s8 %v8881
    %v8883 = vlaneseq
    %v8884 = vshrl.u32 %v8883, 7
    %v8885 = vsub.s32 %v8882, %v8884
    %v8886 = vrot.slane %v8872, %v8885
    %v8887 = vcombine.low %v8831, %v8847
    %v8888 = vcombine.high %v8831, %v8847
    %v8890 = vunpack.c.l.s4 1934713408
    %v8891 = vunpack.c.0.s8 %v8890
    %v8892 = vlaneseq
    %v8893 = vshrl.u32 %v8892, 7
    %v8894 = vsub.s32 %v8891, %v8893
    %v8895 = vrot.slane %v8887, %v8894
    %v8897 = vunpack.c.l.s4 1934713408
    %v8898 = vunpack.c.0.s8 %v8897
    %v8899 = vlaneseq
    %v8900 = vshrl.u32 %v8899, 7
    %v8901 = vsub.s32 %v8898, %v8900
    %v8902 = vrot.slane %v8888, %v8901
    %v8903 = vcombine.low %v8838, %v8854
    %v8904 = vcombine.high %v8838, %v8854
    %v8906 = vunpack.c.l.s4 1934713408
    %v8907 = vunpack.c.0.s8 %v8906
    %v8908 = vlaneseq
    %v8909 = vshrl.u32 %v8908, 7
    %v8910 = vsub.s32 %v8907, %v8909
    %v8911 = vrot.slane %v8903, %v8910
    %v8913 = vunpack.c.l.s4 1934713408
    %v8914 = vunpack.c.0.s8 %v8913
    %v8915 = vlaneseq
    %v8916 = vshrl.u32 %v8915, 7
    %v8917 = vsub.s32 %v8914, %v8916
    %v8918 = vrot.slane %v8904, %v8917
    %v8919 = vcombine.low %v8863, %v8879
    %v8920 = vcombine.high %v8863, %v8879
    %v8922 = vunpack.c.l.s4 1934713408
    %v8923 = vunpack.c.0.s8 %v8922
    %v8924 = vlaneseq
    %v8925 = vshrl.u32 %v8924, 7
    %v8926 = vsub.s32 %v8923, %v8925
    %v8927 = vrot.slane %v8919, %v8926
    %v8929 = vunpack.c.l.s4 1934713408
    %v8930 = vunpack.c.0.s8 %v8929
    %v8931 = vlaneseq
    %v8932 = vshrl.u32 %v8931, 7
    %v8933 = vsub.s32 %v8930, %v8932
    %v8934 = vrot.slane %v8920, %v8933
    %v8935 = vcombine.low %v8870, %v8886
    %v8936 = vcombine.high %v8870, %v8886
    %v8938 = vunpack.c.l.s4 1934713408
    %v8939 = vunpack.c.0.s8 %v8938
    %v8940 = vlaneseq
    %v8941 = vshrl.u32 %v8940, 7
    %v8942 = vsub.s32 %v8939, %v8941
    %v8943 = vrot.slane %v8935, %v8942
    %v8945 = vunpack.c.l.s4 1934713408
    %v8946 = vunpack.c.0.s8 %v8945
    %v8947 = vlaneseq
    %v8948 = vshrl.u32 %v8947, 7
    %v8949 = vsub.s32 %v8946, %v8948
    %v8950 = vrot.slane %v8936, %v8949
    %v8951 = vcombine.low %v8895, %v8927
    %v8952 = vcombine.high %v8895, %v8927
    %v8953 = vcombine.low %v8902, %v8934
    %v8954 = vcombine.high %v8902, %v8934
    %v8955 = vcombine.low %v8911, %v8943
    %v8956 = vcombine.high %v8911, %v8943
    %v8957 = vcombine.low %v8918, %v8950
    %v8958 = vcombine.high %v8918, %v8950
    %v8959 = vcombine.low %v8808, %v8812
    %v8960 = vcombine.high %v8808, %v8812
    %v8962 = vunpack.c.l.s4 1983009808
    %v8963 = vunpack.c.0.s8 %v8962
    %v8964 = vlaneseq
    %v8965 = vshrl.u32 %v8964, 7
    %v8966 = vsub.s32 %v8963, %v8965
    %v8967 = vrot.slane %v8959, %v8966
    %v8969 = vunpack.c.l.s4 1983009808
    %v8970 = vunpack.c.0.s8 %v8969
    %v8971 = vlaneseq
    %v8972 = vshrl.u32 %v8971, 7
    %v8973 = vsub.s32 %v8970, %v8972
    %v8974 = vrot.slane %v8960, %v8973
    %v8975 = vcombine.low %v8810, %v8814
    %v8976 = vcombine.high %v8810, %v8814
    %v8978 = vunpack.c.l.s4 1983009808
    %v8979 = vunpack.c.0.s8 %v8978
    %v8980 = vlaneseq
    %v8981 = vshrl.u32 %v8980, 7
    %v8982 = vsub.s32 %v8979, %v8981
    %v8983 = vrot.slane %v8975, %v8982
    %v8985 = vunpack.c.l.s4 1983009808
    %v8986 = vunpack.c.0.s8 %v8985
    %v8987 = vlaneseq
    %v8988 = vshrl.u32 %v8987, 7
    %v8989 = vsub.s32 %v8986, %v8988
    %v8990 = vrot.slane %v8976, %v8989
    %v8991 = vcombine.low %v8816, %v8820
    %v8992 = vcombine.high %v8816, %v8820
    %v8994 = vunpack.c.l.s4 1983009808
    %v8995 = vunpack.c.0.s8 %v8994
    %v8996 = vlaneseq
    %v8997 = vshrl.u32 %v8996, 7
    %v8998 = vsub.s32 %v8995, %v8997
    %v8999 = vrot.slane %v8991, %v8998
    %v9001 = vunpack.c.l.s4 1983009808
    %v9002 = vunpack.c.0.s8 %v9001
    %v9003 = vlaneseq
    %v9004 = vshrl.u32 %v9003, 7
    %v9005 = vsub.s32 %v9002, %v9004
    %v9006 = vrot.slane %v8992, %v9005
    %v9007 = vcombine.low %v8818, %v8822
    %v9008 = vcombine.high %v8818, %v8822
    %v9010 = vunpack.c.l.s4 1983009808
    %v9011 = vunpack.c.0.s8 %v9010
    %v9012 = vlaneseq
    %v9013 = vshrl.u32 %v9012, 7
    %v9014 = vsub.s32 %v9011, %v9013
    %v9015 = vrot.slane %v9007, %v9014
    %v9017 = vunpack.c.l.s4 1983009808
    %v9018 = vunpack.c.0.s8 %v9017
    %v9019 = vlaneseq
    %v9020 = vshrl.u32 %v9019, 7
    %v9021 = vsub.s32 %v9018, %v9020
    %v9022 = vrot.slane %v9008, %v9021
    %v9023 = vcombine.low %v8967, %v8983
    %v9024 = vcombine.high %v8967, %v8983
    %v9026 = vunpack.c.l.s4 1934713408
    %v9027 = vunpack.c.0.s8 %v9026
    %v9028 = vlaneseq
    %v9029 = vshrl.u32 %v9028, 7
    %v9030 = vsub.s32 %v9027, %v9029
    %v9031 = vrot.slane %v9023, %v9030
    %v9033 = vunpack.c.l.s4 1934713408
    %v9034 = vunpack.c.0.s8 %v9033
    %v9035 = vlaneseq
    %v9036 = vshrl.u32 %v9035, 7
    %v9037 = vsub.s32 %v9034, %v9036
    %v9038 = vrot.slane %v9024, %v9037
    %v9039 = vcombine.low %v8974, %v8990
    %v9040 = vcombine.high %v8974, %v8990
    %v9042 = vunpack.c.l.s4 1934713408
    %v9043 = vunpack.c.0.s8 %v9042
    %v9044 = vlaneseq
    %v9045 = vshrl.u32 %v9044, 7
    %v9046 = vsub.s32 %v9043, %v9045
    %v9047 = vrot.slane %v9039, %v9046
    %v9049 = vunpack.c.l.s4 1934713408
    %v9050 = vunpack.c.0.s8 %v9049
    %v9051 = vlaneseq
    %v9052 = vshrl.u32 %v9051, 7
    %v9053 = vsub.s32 %v9050, %v9052
    %v9054 = vrot.slane %v9040, %v9053
    %v9055 = vcombine.low %v8999, %v9015
    %v9056 = vcombine.high %v8999, %v9015
    %v9058 = vunpack.c.l.s4 1934713408
    %v9059 = vunpack.c.0.s8 %v9058
    %v9060 = vlaneseq
    %v9061 = vshrl.u32 %v9060, 7
    %v9062 = vsub.s32 %v9059, %v9061
    %v9063 = vrot.slane %v9055, %v9062
    %v9065 = vunpack.c.l.s4 1934713408
    %v9066 = vunpack.c.0.s8 %v9065
    %v9067 = vlaneseq
    %v9068 = vshrl.u32 %v9067, 7
    %v9069 = vsub.s32 %v9066, %v9068
    %v9070 = vrot.slane %v9056, %v9069
    %v9071 = vcombine.low %v9006, %v9022
    %v9072 = vcombine.high %v9006, %v9022
    %v9074 = vunpack.c.l.s4 1934713408
    %v9075 = vunpack.c.0.s8 %v9074
    %v9076 = vlaneseq
    %v9077 = vshrl.u32 %v9076, 7
    %v9078 = vsub.s32 %v9075, %v9077
    %v9079 = vrot.slane %v9071, %v9078
    %v9081 = vunpack.c.l.s4 1934713408
    %v9082 = vunpack.c.0.s8 %v9081
    %v9083 = vlaneseq
    %v9084 = vshrl.u32 %v9083, 7
    %v9085 = vsub.s32 %v9082, %v9084
    %v9086 = vrot.slane %v9072, %v9085
    %v9087 = vcombine.low %v9031, %v9063
    %v9088 = vcombine.high %v9031, %v9063
    %v9089 = vcombine.low %v9038, %v9070
    %v9090 = vcombine.high %v9038, %v9070
    %v9091 = vcombine.low %v9047, %v9079
    %v9092 = vcombine.high %v9047, %v9079
    %v9093 = vcombine.low %v9054, %v9086
    %v9094 = vcombine.high %v9054, %v9086
    %9096 = vrot.lane.b32.xlu0 %v8952, 16
    %v9097 = vpop.permute.xlu0 %9096
    %9100 = vrot.lane.b32.xlu0 %v8953, 32
    %v9101 = vpop.permute.xlu0 %9100
    %9104 = vrot.lane.b32.xlu0 %v8954, 48
    %v9105 = vpop.permute.xlu0 %9104
    %9108 = vrot.lane.b32.xlu0 %v8955, 64
    %v9109 = vpop.permute.xlu0 %9108
    %9112 = vrot.lane.b32.xlu0 %v8956, 80
    %v9113 = vpop.permute.xlu0 %9112
    %9116 = vrot.lane.b32.xlu0 %v8957, 96
    %v9117 = vpop.permute.xlu0 %9116
    %9120 = vrot.lane.b32.xlu0 %v8958, 112
    %v9121 = vpop.permute.xlu0 %9120
    %9124 = vrot.lane.b32.xlu0 %v9088, 16
    %v9125 = vpop.permute.xlu0 %9124
    %9128 = vrot.lane.b32.xlu0 %v9089, 32
    %v9129 = vpop.permute.xlu0 %9128
    %9132 = vrot.lane.b32.xlu0 %v9090, 48
    %v9133 = vpop.permute.xlu0 %9132
    %9136 = vrot.lane.b32.xlu0 %v9091, 64
    %v9137 = vpop.permute.xlu0 %9136
    %9140 = vrot.lane.b32.xlu0 %v9092, 80
    %v9141 = vpop.permute.xlu0 %9140
    %9144 = vrot.lane.b32.xlu0 %v9093, 96
    %v9145 = vpop.permute.xlu0 %9144
    %9148 = vrot.lane.b32.xlu0 %v9094, 112
    %v9149 = vpop.permute.xlu0 %9148
    %v9151 = vsel %vm372, %v8951, %v9097
    %v9152 = vsel %vm374, %v9151, %v9101
    %v9153 = vsel %vm376, %v9152, %v9105
    %v9154 = vsel %vm378, %v9153, %v9109
    %v9155 = vsel %vm380, %v9154, %v9113
    %v9156 = vsel %vm382, %v9155, %v9117
    %v9157 = vsel %vm384, %v9156, %v9121
    %v9158 = vsel %vm372, %v9087, %v9125
    %v9159 = vsel %vm374, %v9158, %v9129
    %v9160 = vsel %vm376, %v9159, %v9133
    %v9161 = vsel %vm378, %v9160, %v9137
    %v9162 = vsel %vm380, %v9161, %v9141
    %v9163 = vsel %vm382, %v9162, %v9145
    %v9164 = vsel %vm384, %v9163, %v9149
    %9181 = vrot.lane.b32.xlu0 %v8807, 127
    %v9182 = vpop.permute.xlu0 %9181
    %9183 = vrot.lane.b32.xlu0 %v8808, 127
    %v9184 = vpop.permute.xlu0 %9183
    %9185 = vrot.lane.b32.xlu0 %v8809, 127
    %v9186 = vpop.permute.xlu0 %9185
    %9187 = vrot.lane.b32.xlu0 %v8810, 127
    %v9188 = vpop.permute.xlu0 %9187
    %9189 = vrot.lane.b32.xlu0 %v8811, 127
    %v9190 = vpop.permute.xlu0 %9189
    %9191 = vrot.lane.b32.xlu0 %v8812, 127
    %v9192 = vpop.permute.xlu0 %9191
    %9193 = vrot.lane.b32.xlu0 %v8813, 127
    %v9194 = vpop.permute.xlu0 %9193
    %9195 = vrot.lane.b32.xlu0 %v8814, 127
    %v9196 = vpop.permute.xlu0 %9195
    %9197 = vrot.lane.b32.xlu0 %v8815, 127
    %v9198 = vpop.permute.xlu0 %9197
    %9199 = vrot.lane.b32.xlu0 %v8816, 127
    %v9200 = vpop.permute.xlu0 %9199
    %9201 = vrot.lane.b32.xlu0 %v8817, 127
    %v9202 = vpop.permute.xlu0 %9201
    %9203 = vrot.lane.b32.xlu0 %v8818, 127
    %v9204 = vpop.permute.xlu0 %9203
    %9205 = vrot.lane.b32.xlu0 %v8819, 127
    %v9206 = vpop.permute.xlu0 %9205
    %9207 = vrot.lane.b32.xlu0 %v8820, 127
    %v9208 = vpop.permute.xlu0 %9207
    %9209 = vrot.lane.b32.xlu0 %v8821, 127
    %v9210 = vpop.permute.xlu0 %9209
    %9211 = vrot.lane.b32.xlu0 %v8822, 127
    %v9212 = vpop.permute.xlu0 %9211
    %v9229 = vcombine.low %v9182, %v9190
    %v9230 = vcombine.high %v9182, %v9190
    %v9232 = vunpack.c.l.s4 1983009808
    %v9233 = vunpack.c.0.s8 %v9232
    %v9234 = vlaneseq
    %v9235 = vshrl.u32 %v9234, 7
    %v9236 = vsub.s32 %v9233, %v9235
    %v9237 = vrot.slane %v9229, %v9236
    %v9239 = vunpack.c.l.s4 1983009808
    %v9240 = vunpack.c.0.s8 %v9239
    %v9241 = vlaneseq
    %v9242 = vshrl.u32 %v9241, 7
    %v9243 = vsub.s32 %v9240, %v9242
    %v9244 = vrot.slane %v9230, %v9243
    %v9245 = vcombine.low %v9186, %v9194
    %v9246 = vcombine.high %v9186, %v9194
    %v9248 = vunpack.c.l.s4 1983009808
    %v9249 = vunpack.c.0.s8 %v9248
    %v9250 = vlaneseq
    %v9251 = vshrl.u32 %v9250, 7
    %v9252 = vsub.s32 %v9249, %v9251
    %v9253 = vrot.slane %v9245, %v9252
    %v9255 = vunpack.c.l.s4 1983009808
    %v9256 = vunpack.c.0.s8 %v9255
    %v9257 = vlaneseq
    %v9258 = vshrl.u32 %v9257, 7
    %v9259 = vsub.s32 %v9256, %v9258
    %v9260 = vrot.slane %v9246, %v9259
    %v9261 = vcombine.low %v9198, %v9206
    %v9262 = vcombine.high %v9198, %v9206
    %v9264 = vunpack.c.l.s4 1983009808
    %v9265 = vunpack.c.0.s8 %v9264
    %v9266 = vlaneseq
    %v9267 = vshrl.u32 %v9266, 7
    %v9268 = vsub.s32 %v9265, %v9267
    %v9269 = vrot.slane %v9261, %v9268
    %v9271 = vunpack.c.l.s4 1983009808
    %v9272 = vunpack.c.0.s8 %v9271
    %v9273 = vlaneseq
    %v9274 = vshrl.u32 %v9273, 7
    %v9275 = vsub.s32 %v9272, %v9274
    %v9276 = vrot.slane %v9262, %v9275
    %v9277 = vcombine.low %v9202, %v9210
    %v9278 = vcombine.high %v9202, %v9210
    %v9280 = vunpack.c.l.s4 1983009808
    %v9281 = vunpack.c.0.s8 %v9280
    %v9282 = vlaneseq
    %v9283 = vshrl.u32 %v9282, 7
    %v9284 = vsub.s32 %v9281, %v9283
    %v9285 = vrot.slane %v9277, %v9284
    %v9287 = vunpack.c.l.s4 1983009808
    %v9288 = vunpack.c.0.s8 %v9287
    %v9289 = vlaneseq
    %v9290 = vshrl.u32 %v9289, 7
    %v9291 = vsub.s32 %v9288, %v9290
    %v9292 = vrot.slane %v9278, %v9291
    %v9293 = vcombine.low %v9237, %v9253
    %v9294 = vcombine.high %v9237, %v9253
    %v9296 = vunpack.c.l.s4 1934713408
    %v9297 = vunpack.c.0.s8 %v9296
    %v9298 = vlaneseq
    %v9299 = vshrl.u32 %v9298, 7
    %v9300 = vsub.s32 %v9297, %v9299
    %v9301 = vrot.slane %v9293, %v9300
    %v9303 = vunpack.c.l.s4 1934713408
    %v9304 = vunpack.c.0.s8 %v9303
    %v9305 = vlaneseq
    %v9306 = vshrl.u32 %v9305, 7
    %v9307 = vsub.s32 %v9304, %v9306
    %v9308 = vrot.slane %v9294, %v9307
    %v9309 = vcombine.low %v9244, %v9260
    %v9310 = vcombine.high %v9244, %v9260
    %v9312 = vunpack.c.l.s4 1934713408
    %v9313 = vunpack.c.0.s8 %v9312
    %v9314 = vlaneseq
    %v9315 = vshrl.u32 %v9314, 7
    %v9316 = vsub.s32 %v9313, %v9315
    %v9317 = vrot.slane %v9309, %v9316
    %v9319 = vunpack.c.l.s4 1934713408
    %v9320 = vunpack.c.0.s8 %v9319
    %v9321 = vlaneseq
    %v9322 = vshrl.u32 %v9321, 7
    %v9323 = vsub.s32 %v9320, %v9322
    %v9324 = vrot.slane %v9310, %v9323
    %v9325 = vcombine.low %v9269, %v9285
    %v9326 = vcombine.high %v9269, %v9285
    %v9328 = vunpack.c.l.s4 1934713408
    %v9329 = vunpack.c.0.s8 %v9328
    %v9330 = vlaneseq
    %v9331 = vshrl.u32 %v9330, 7
    %v9332 = vsub.s32 %v9329, %v9331
    %v9333 = vrot.slane %v9325, %v9332
    %v9335 = vunpack.c.l.s4 1934713408
    %v9336 = vunpack.c.0.s8 %v9335
    %v9337 = vlaneseq
    %v9338 = vshrl.u32 %v9337, 7
    %v9339 = vsub.s32 %v9336, %v9338
    %v9340 = vrot.slane %v9326, %v9339
    %v9341 = vcombine.low %v9276, %v9292
    %v9342 = vcombine.high %v9276, %v9292
    %v9344 = vunpack.c.l.s4 1934713408
    %v9345 = vunpack.c.0.s8 %v9344
    %v9346 = vlaneseq
    %v9347 = vshrl.u32 %v9346, 7
    %v9348 = vsub.s32 %v9345, %v9347
    %v9349 = vrot.slane %v9341, %v9348
    %v9351 = vunpack.c.l.s4 1934713408
    %v9352 = vunpack.c.0.s8 %v9351
    %v9353 = vlaneseq
    %v9354 = vshrl.u32 %v9353, 7
    %v9355 = vsub.s32 %v9352, %v9354
    %v9356 = vrot.slane %v9342, %v9355
    %v9357 = vcombine.low %v9301, %v9333
    %v9358 = vcombine.high %v9301, %v9333
    %v9359 = vcombine.low %v9308, %v9340
    %v9360 = vcombine.high %v9308, %v9340
    %v9361 = vcombine.low %v9317, %v9349
    %v9362 = vcombine.high %v9317, %v9349
    %v9363 = vcombine.low %v9324, %v9356
    %v9364 = vcombine.high %v9324, %v9356
    %v9365 = vcombine.low %v9184, %v9192
    %v9366 = vcombine.high %v9184, %v9192
    %v9368 = vunpack.c.l.s4 1983009808
    %v9369 = vunpack.c.0.s8 %v9368
    %v9370 = vlaneseq
    %v9371 = vshrl.u32 %v9370, 7
    %v9372 = vsub.s32 %v9369, %v9371
    %v9373 = vrot.slane %v9365, %v9372
    %v9375 = vunpack.c.l.s4 1983009808
    %v9376 = vunpack.c.0.s8 %v9375
    %v9377 = vlaneseq
    %v9378 = vshrl.u32 %v9377, 7
    %v9379 = vsub.s32 %v9376, %v9378
    %v9380 = vrot.slane %v9366, %v9379
    %v9381 = vcombine.low %v9188, %v9196
    %v9382 = vcombine.high %v9188, %v9196
    %v9384 = vunpack.c.l.s4 1983009808
    %v9385 = vunpack.c.0.s8 %v9384
    %v9386 = vlaneseq
    %v9387 = vshrl.u32 %v9386, 7
    %v9388 = vsub.s32 %v9385, %v9387
    %v9389 = vrot.slane %v9381, %v9388
    %v9391 = vunpack.c.l.s4 1983009808
    %v9392 = vunpack.c.0.s8 %v9391
    %v9393 = vlaneseq
    %v9394 = vshrl.u32 %v9393, 7
    %v9395 = vsub.s32 %v9392, %v9394
    %v9396 = vrot.slane %v9382, %v9395
    %v9397 = vcombine.low %v9200, %v9208
    %v9398 = vcombine.high %v9200, %v9208
    %v9400 = vunpack.c.l.s4 1983009808
    %v9401 = vunpack.c.0.s8 %v9400
    %v9402 = vlaneseq
    %v9403 = vshrl.u32 %v9402, 7
    %v9404 = vsub.s32 %v9401, %v9403
    %v9405 = vrot.slane %v9397, %v9404
    %v9407 = vunpack.c.l.s4 1983009808
    %v9408 = vunpack.c.0.s8 %v9407
    %v9409 = vlaneseq
    %v9410 = vshrl.u32 %v9409, 7
    %v9411 = vsub.s32 %v9408, %v9410
    %v9412 = vrot.slane %v9398, %v9411
    %v9413 = vcombine.low %v9204, %v9212
    %v9414 = vcombine.high %v9204, %v9212
    %v9416 = vunpack.c.l.s4 1983009808
    %v9417 = vunpack.c.0.s8 %v9416
    %v9418 = vlaneseq
    %v9419 = vshrl.u32 %v9418, 7
    %v9420 = vsub.s32 %v9417, %v9419
    %v9421 = vrot.slane %v9413, %v9420
    %v9423 = vunpack.c.l.s4 1983009808
    %v9424 = vunpack.c.0.s8 %v9423
    %v9425 = vlaneseq
    %v9426 = vshrl.u32 %v9425, 7
    %v9427 = vsub.s32 %v9424, %v9426
    %v9428 = vrot.slane %v9414, %v9427
    %v9429 = vcombine.low %v9373, %v9389
    %v9430 = vcombine.high %v9373, %v9389
    %v9432 = vunpack.c.l.s4 1934713408
    %v9433 = vunpack.c.0.s8 %v9432
    %v9434 = vlaneseq
    %v9435 = vshrl.u32 %v9434, 7
    %v9436 = vsub.s32 %v9433, %v9435
    %v9437 = vrot.slane %v9429, %v9436
    %v9439 = vunpack.c.l.s4 1934713408
    %v9440 = vunpack.c.0.s8 %v9439
    %v9441 = vlaneseq
    %v9442 = vshrl.u32 %v9441, 7
    %v9443 = vsub.s32 %v9440, %v9442
    %v9444 = vrot.slane %v9430, %v9443
    %v9445 = vcombine.low %v9380, %v9396
    %v9446 = vcombine.high %v9380, %v9396
    %v9448 = vunpack.c.l.s4 1934713408
    %v9449 = vunpack.c.0.s8 %v9448
    %v9450 = vlaneseq
    %v9451 = vshrl.u32 %v9450, 7
    %v9452 = vsub.s32 %v9449, %v9451
    %v9453 = vrot.slane %v9445, %v9452
    %v9455 = vunpack.c.l.s4 1934713408
    %v9456 = vunpack.c.0.s8 %v9455
    %v9457 = vlaneseq
    %v9458 = vshrl.u32 %v9457, 7
    %v9459 = vsub.s32 %v9456, %v9458
    %v9460 = vrot.slane %v9446, %v9459
    %v9461 = vcombine.low %v9405, %v9421
    %v9462 = vcombine.high %v9405, %v9421
    %v9464 = vunpack.c.l.s4 1934713408
    %v9465 = vunpack.c.0.s8 %v9464
    %v9466 = vlaneseq
    %v9467 = vshrl.u32 %v9466, 7
    %v9468 = vsub.s32 %v9465, %v9467
    %v9469 = vrot.slane %v9461, %v9468
    %v9471 = vunpack.c.l.s4 1934713408
    %v9472 = vunpack.c.0.s8 %v9471
    %v9473 = vlaneseq
    %v9474 = vshrl.u32 %v9473, 7
    %v9475 = vsub.s32 %v9472, %v9474
    %v9476 = vrot.slane %v9462, %v9475
    %v9477 = vcombine.low %v9412, %v9428
    %v9478 = vcombine.high %v9412, %v9428
    %v9480 = vunpack.c.l.s4 1934713408
    %v9481 = vunpack.c.0.s8 %v9480
    %v9482 = vlaneseq
    %v9483 = vshrl.u32 %v9482, 7
    %v9484 = vsub.s32 %v9481, %v9483
    %v9485 = vrot.slane %v9477, %v9484
    %v9487 = vunpack.c.l.s4 1934713408
    %v9488 = vunpack.c.0.s8 %v9487
    %v9489 = vlaneseq
    %v9490 = vshrl.u32 %v9489, 7
    %v9491 = vsub.s32 %v9488, %v9490
    %v9492 = vrot.slane %v9478, %v9491
    %v9493 = vcombine.low %v9437, %v9469
    %v9494 = vcombine.high %v9437, %v9469
    %v9495 = vcombine.low %v9444, %v9476
    %v9496 = vcombine.high %v9444, %v9476
    %v9497 = vcombine.low %v9453, %v9485
    %v9498 = vcombine.high %v9453, %v9485
    %v9499 = vcombine.low %v9460, %v9492
    %v9500 = vcombine.high %v9460, %v9492
    %9502 = vrot.lane.b32.xlu0 %v9358, 16
    %v9503 = vpop.permute.xlu0 %9502
    %9506 = vrot.lane.b32.xlu0 %v9359, 32
    %v9507 = vpop.permute.xlu0 %9506
    %9510 = vrot.lane.b32.xlu0 %v9360, 48
    %v9511 = vpop.permute.xlu0 %9510
    %9514 = vrot.lane.b32.xlu0 %v9361, 64
    %v9515 = vpop.permute.xlu0 %9514
    %9518 = vrot.lane.b32.xlu0 %v9362, 80
    %v9519 = vpop.permute.xlu0 %9518
    %9522 = vrot.lane.b32.xlu0 %v9363, 96
    %v9523 = vpop.permute.xlu0 %9522
    %9526 = vrot.lane.b32.xlu0 %v9364, 112
    %v9527 = vpop.permute.xlu0 %9526
    %9530 = vrot.lane.b32.xlu0 %v9494, 16
    %v9531 = vpop.permute.xlu0 %9530
    %9534 = vrot.lane.b32.xlu0 %v9495, 32
    %v9535 = vpop.permute.xlu0 %9534
    %9538 = vrot.lane.b32.xlu0 %v9496, 48
    %v9539 = vpop.permute.xlu0 %9538
    %9542 = vrot.lane.b32.xlu0 %v9497, 64
    %v9543 = vpop.permute.xlu0 %9542
    %9546 = vrot.lane.b32.xlu0 %v9498, 80
    %v9547 = vpop.permute.xlu0 %9546
    %9550 = vrot.lane.b32.xlu0 %v9499, 96
    %v9551 = vpop.permute.xlu0 %9550
    %9554 = vrot.lane.b32.xlu0 %v9500, 112
    %v9555 = vpop.permute.xlu0 %9554
    %v9557 = vsel %vm372, %v9357, %v9503
    %v9558 = vsel %vm374, %v9557, %v9507
    %v9559 = vsel %vm376, %v9558, %v9511
    %v9560 = vsel %vm378, %v9559, %v9515
    %v9561 = vsel %vm380, %v9560, %v9519
    %v9562 = vsel %vm382, %v9561, %v9523
    %v9563 = vsel %vm384, %v9562, %v9527
    %v9564 = vsel %vm372, %v9493, %v9531
    %v9565 = vsel %vm374, %v9564, %v9535
    %v9566 = vsel %vm376, %v9565, %v9539
    %v9567 = vsel %vm378, %v9566, %v9543
    %v9568 = vsel %vm380, %v9567, %v9547
    %v9569 = vsel %vm382, %v9568, %v9551
    %v9570 = vsel %vm384, %v9569, %v9555
    %9571 = vrot.lane.b32.xlu0 %v8807, 126
    %v9572 = vpop.permute.xlu0 %9571
    %9573 = vrot.lane.b32.xlu0 %v8808, 126
    %v9574 = vpop.permute.xlu0 %9573
    %9575 = vrot.lane.b32.xlu0 %v8809, 126
    %v9576 = vpop.permute.xlu0 %9575
    %9577 = vrot.lane.b32.xlu0 %v8810, 126
    %v9578 = vpop.permute.xlu0 %9577
    %9579 = vrot.lane.b32.xlu0 %v8811, 126
    %v9580 = vpop.permute.xlu0 %9579
    %9581 = vrot.lane.b32.xlu0 %v8812, 126
    %v9582 = vpop.permute.xlu0 %9581
    %9583 = vrot.lane.b32.xlu0 %v8813, 126
    %v9584 = vpop.permute.xlu0 %9583
    %9585 = vrot.lane.b32.xlu0 %v8814, 126
    %v9586 = vpop.permute.xlu0 %9585
    %9587 = vrot.lane.b32.xlu0 %v8815, 126
    %v9588 = vpop.permute.xlu0 %9587
    %9589 = vrot.lane.b32.xlu0 %v8816, 126
    %v9590 = vpop.permute.xlu0 %9589
    %9591 = vrot.lane.b32.xlu0 %v8817, 126
    %v9592 = vpop.permute.xlu0 %9591
    %9593 = vrot.lane.b32.xlu0 %v8818, 126
    %v9594 = vpop.permute.xlu0 %9593
    %9595 = vrot.lane.b32.xlu0 %v8819, 126
    %v9596 = vpop.permute.xlu0 %9595
    %9597 = vrot.lane.b32.xlu0 %v8820, 126
    %v9598 = vpop.permute.xlu0 %9597
    %9599 = vrot.lane.b32.xlu0 %v8821, 126
    %v9600 = vpop.permute.xlu0 %9599
    %9601 = vrot.lane.b32.xlu0 %v8822, 126
    %v9602 = vpop.permute.xlu0 %9601
    %v9619 = vcombine.low %v9572, %v9580
    %v9620 = vcombine.high %v9572, %v9580
    %v9622 = vunpack.c.l.s4 1983009808
    %v9623 = vunpack.c.0.s8 %v9622
    %v9624 = vlaneseq
    %v9625 = vshrl.u32 %v9624, 7
    %v9626 = vsub.s32 %v9623, %v9625
    %v9627 = vrot.slane %v9619, %v9626
    %v9629 = vunpack.c.l.s4 1983009808
    %v9630 = vunpack.c.0.s8 %v9629
    %v9631 = vlaneseq
    %v9632 = vshrl.u32 %v9631, 7
    %v9633 = vsub.s32 %v9630, %v9632
    %v9634 = vrot.slane %v9620, %v9633
    %v9635 = vcombine.low %v9576, %v9584
    %v9636 = vcombine.high %v9576, %v9584
    %v9638 = vunpack.c.l.s4 1983009808
    %v9639 = vunpack.c.0.s8 %v9638
    %v9640 = vlaneseq
    %v9641 = vshrl.u32 %v9640, 7
    %v9642 = vsub.s32 %v9639, %v9641
    %v9643 = vrot.slane %v9635, %v9642
    %v9645 = vunpack.c.l.s4 1983009808
    %v9646 = vunpack.c.0.s8 %v9645
    %v9647 = vlaneseq
    %v9648 = vshrl.u32 %v9647, 7
    %v9649 = vsub.s32 %v9646, %v9648
    %v9650 = vrot.slane %v9636, %v9649
    %v9651 = vcombine.low %v9588, %v9596
    %v9652 = vcombine.high %v9588, %v9596
    %v9654 = vunpack.c.l.s4 1983009808
    %v9655 = vunpack.c.0.s8 %v9654
    %v9656 = vlaneseq
    %v9657 = vshrl.u32 %v9656, 7
    %v9658 = vsub.s32 %v9655, %v9657
    %v9659 = vrot.slane %v9651, %v9658
    %v9661 = vunpack.c.l.s4 1983009808
    %v9662 = vunpack.c.0.s8 %v9661
    %v9663 = vlaneseq
    %v9664 = vshrl.u32 %v9663, 7
    %v9665 = vsub.s32 %v9662, %v9664
    %v9666 = vrot.slane %v9652, %v9665
    %v9667 = vcombine.low %v9592, %v9600
    %v9668 = vcombine.high %v9592, %v9600
    %v9670 = vunpack.c.l.s4 1983009808
    %v9671 = vunpack.c.0.s8 %v9670
    %v9672 = vlaneseq
    %v9673 = vshrl.u32 %v9672, 7
    %v9674 = vsub.s32 %v9671, %v9673
    %v9675 = vrot.slane %v9667, %v9674
    %v9677 = vunpack.c.l.s4 1983009808
    %v9678 = vunpack.c.0.s8 %v9677
    %v9679 = vlaneseq
    %v9680 = vshrl.u32 %v9679, 7
    %v9681 = vsub.s32 %v9678, %v9680
    %v9682 = vrot.slane %v9668, %v9681
    %v9683 = vcombine.low %v9627, %v9643
    %v9684 = vcombine.high %v9627, %v9643
    %v9686 = vunpack.c.l.s4 1934713408
    %v9687 = vunpack.c.0.s8 %v9686
    %v9688 = vlaneseq
    %v9689 = vshrl.u32 %v9688, 7
    %v9690 = vsub.s32 %v9687, %v9689
    %v9691 = vrot.slane %v9683, %v9690
    %v9693 = vunpack.c.l.s4 1934713408
    %v9694 = vunpack.c.0.s8 %v9693
    %v9695 = vlaneseq
    %v9696 = vshrl.u32 %v9695, 7
    %v9697 = vsub.s32 %v9694, %v9696
    %v9698 = vrot.slane %v9684, %v9697
    %v9699 = vcombine.low %v9634, %v9650
    %v9700 = vcombine.high %v9634, %v9650
    %v9702 = vunpack.c.l.s4 1934713408
    %v9703 = vunpack.c.0.s8 %v9702
    %v9704 = vlaneseq
    %v9705 = vshrl.u32 %v9704, 7
    %v9706 = vsub.s32 %v9703, %v9705
    %v9707 = vrot.slane %v9699, %v9706
    %v9709 = vunpack.c.l.s4 1934713408
    %v9710 = vunpack.c.0.s8 %v9709
    %v9711 = vlaneseq
    %v9712 = vshrl.u32 %v9711, 7
    %v9713 = vsub.s32 %v9710, %v9712
    %v9714 = vrot.slane %v9700, %v9713
    %v9715 = vcombine.low %v9659, %v9675
    %v9716 = vcombine.high %v9659, %v9675
    %v9718 = vunpack.c.l.s4 1934713408
    %v9719 = vunpack.c.0.s8 %v9718
    %v9720 = vlaneseq
    %v9721 = vshrl.u32 %v9720, 7
    %v9722 = vsub.s32 %v9719, %v9721
    %v9723 = vrot.slane %v9715, %v9722
    %v9725 = vunpack.c.l.s4 1934713408
    %v9726 = vunpack.c.0.s8 %v9725
    %v9727 = vlaneseq
    %v9728 = vshrl.u32 %v9727, 7
    %v9729 = vsub.s32 %v9726, %v9728
    %v9730 = vrot.slane %v9716, %v9729
    %v9731 = vcombine.low %v9666, %v9682
    %v9732 = vcombine.high %v9666, %v9682
    %v9734 = vunpack.c.l.s4 1934713408
    %v9735 = vunpack.c.0.s8 %v9734
    %v9736 = vlaneseq
    %v9737 = vshrl.u32 %v9736, 7
    %v9738 = vsub.s32 %v9735, %v9737
    %v9739 = vrot.slane %v9731, %v9738
    %v9741 = vunpack.c.l.s4 1934713408
    %v9742 = vunpack.c.0.s8 %v9741
    %v9743 = vlaneseq
    %v9744 = vshrl.u32 %v9743, 7
    %v9745 = vsub.s32 %v9742, %v9744
    %v9746 = vrot.slane %v9732, %v9745
    %v9747 = vcombine.low %v9691, %v9723
    %v9748 = vcombine.high %v9691, %v9723
    %v9749 = vcombine.low %v9698, %v9730
    %v9750 = vcombine.high %v9698, %v9730
    %v9751 = vcombine.low %v9707, %v9739
    %v9752 = vcombine.high %v9707, %v9739
    %v9753 = vcombine.low %v9714, %v9746
    %v9754 = vcombine.high %v9714, %v9746
    %v9755 = vcombine.low %v9574, %v9582
    %v9756 = vcombine.high %v9574, %v9582
    %v9758 = vunpack.c.l.s4 1983009808
    %v9759 = vunpack.c.0.s8 %v9758
    %v9760 = vlaneseq
    %v9761 = vshrl.u32 %v9760, 7
    %v9762 = vsub.s32 %v9759, %v9761
    %v9763 = vrot.slane %v9755, %v9762
    %v9765 = vunpack.c.l.s4 1983009808
    %v9766 = vunpack.c.0.s8 %v9765
    %v9767 = vlaneseq
    %v9768 = vshrl.u32 %v9767, 7
    %v9769 = vsub.s32 %v9766, %v9768
    %v9770 = vrot.slane %v9756, %v9769
    %v9771 = vcombine.low %v9578, %v9586
    %v9772 = vcombine.high %v9578, %v9586
    %v9774 = vunpack.c.l.s4 1983009808
    %v9775 = vunpack.c.0.s8 %v9774
    %v9776 = vlaneseq
    %v9777 = vshrl.u32 %v9776, 7
    %v9778 = vsub.s32 %v9775, %v9777
    %v9779 = vrot.slane %v9771, %v9778
    %v9781 = vunpack.c.l.s4 1983009808
    %v9782 = vunpack.c.0.s8 %v9781
    %v9783 = vlaneseq
    %v9784 = vshrl.u32 %v9783, 7
    %v9785 = vsub.s32 %v9782, %v9784
    %v9786 = vrot.slane %v9772, %v9785
    %v9787 = vcombine.low %v9590, %v9598
    %v9788 = vcombine.high %v9590, %v9598
    %v9790 = vunpack.c.l.s4 1983009808
    %v9791 = vunpack.c.0.s8 %v9790
    %v9792 = vlaneseq
    %v9793 = vshrl.u32 %v9792, 7
    %v9794 = vsub.s32 %v9791, %v9793
    %v9795 = vrot.slane %v9787, %v9794
    %v9797 = vunpack.c.l.s4 1983009808
    %v9798 = vunpack.c.0.s8 %v9797
    %v9799 = vlaneseq
    %v9800 = vshrl.u32 %v9799, 7
    %v9801 = vsub.s32 %v9798, %v9800
    %v9802 = vrot.slane %v9788, %v9801
    %v9803 = vcombine.low %v9594, %v9602
    %v9804 = vcombine.high %v9594, %v9602
    %v9806 = vunpack.c.l.s4 1983009808
    %v9807 = vunpack.c.0.s8 %v9806
    %v9808 = vlaneseq
    %v9809 = vshrl.u32 %v9808, 7
    %v9810 = vsub.s32 %v9807, %v9809
    %v9811 = vrot.slane %v9803, %v9810
    %v9813 = vunpack.c.l.s4 1983009808
    %v9814 = vunpack.c.0.s8 %v9813
    %v9815 = vlaneseq
    %v9816 = vshrl.u32 %v9815, 7
    %v9817 = vsub.s32 %v9814, %v9816
    %v9818 = vrot.slane %v9804, %v9817
    %v9819 = vcombine.low %v9763, %v9779
    %v9820 = vcombine.high %v9763, %v9779
    %v9822 = vunpack.c.l.s4 1934713408
    %v9823 = vunpack.c.0.s8 %v9822
    %v9824 = vlaneseq
    %v9825 = vshrl.u32 %v9824, 7
    %v9826 = vsub.s32 %v9823, %v9825
    %v9827 = vrot.slane %v9819, %v9826
    %v9829 = vunpack.c.l.s4 1934713408
    %v9830 = vunpack.c.0.s8 %v9829
    %v9831 = vlaneseq
    %v9832 = vshrl.u32 %v9831, 7
    %v9833 = vsub.s32 %v9830, %v9832
    %v9834 = vrot.slane %v9820, %v9833
    %v9835 = vcombine.low %v9770, %v9786
    %v9836 = vcombine.high %v9770, %v9786
    %v9838 = vunpack.c.l.s4 1934713408
    %v9839 = vunpack.c.0.s8 %v9838
    %v9840 = vlaneseq
    %v9841 = vshrl.u32 %v9840, 7
    %v9842 = vsub.s32 %v9839, %v9841
    %v9843 = vrot.slane %v9835, %v9842
    %v9845 = vunpack.c.l.s4 1934713408
    %v9846 = vunpack.c.0.s8 %v9845
    %v9847 = vlaneseq
    %v9848 = vshrl.u32 %v9847, 7
    %v9849 = vsub.s32 %v9846, %v9848
    %v9850 = vrot.slane %v9836, %v9849
    %v9851 = vcombine.low %v9795, %v9811
    %v9852 = vcombine.high %v9795, %v9811
    %v9854 = vunpack.c.l.s4 1934713408
    %v9855 = vunpack.c.0.s8 %v9854
    %v9856 = vlaneseq
    %v9857 = vshrl.u32 %v9856, 7
    %v9858 = vsub.s32 %v9855, %v9857
    %v9859 = vrot.slane %v9851, %v9858
    %v9861 = vunpack.c.l.s4 1934713408
    %v9862 = vunpack.c.0.s8 %v9861
    %v9863 = vlaneseq
    %v9864 = vshrl.u32 %v9863, 7
    %v9865 = vsub.s32 %v9862, %v9864
    %v9866 = vrot.slane %v9852, %v9865
    %v9867 = vcombine.low %v9802, %v9818
    %v9868 = vcombine.high %v9802, %v9818
    %v9870 = vunpack.c.l.s4 1934713408
    %v9871 = vunpack.c.0.s8 %v9870
    %v9872 = vlaneseq
    %v9873 = vshrl.u32 %v9872, 7
    %v9874 = vsub.s32 %v9871, %v9873
    %v9875 = vrot.slane %v9867, %v9874
    %v9877 = vunpack.c.l.s4 1934713408
    %v9878 = vunpack.c.0.s8 %v9877
    %v9879 = vlaneseq
    %v9880 = vshrl.u32 %v9879, 7
    %v9881 = vsub.s32 %v9878, %v9880
    %v9882 = vrot.slane %v9868, %v9881
    %v9883 = vcombine.low %v9827, %v9859
    %v9884 = vcombine.high %v9827, %v9859
    %v9885 = vcombine.low %v9834, %v9866
    %v9886 = vcombine.high %v9834, %v9866
    %v9887 = vcombine.low %v9843, %v9875
    %v9888 = vcombine.high %v9843, %v9875
    %v9889 = vcombine.low %v9850, %v9882
    %v9890 = vcombine.high %v9850, %v9882
    %9892 = vrot.lane.b32.xlu0 %v9748, 16
    %v9893 = vpop.permute.xlu0 %9892
    %9896 = vrot.lane.b32.xlu0 %v9749, 32
    %v9897 = vpop.permute.xlu0 %9896
    %9900 = vrot.lane.b32.xlu0 %v9750, 48
    %v9901 = vpop.permute.xlu0 %9900
    %9904 = vrot.lane.b32.xlu0 %v9751, 64
    %v9905 = vpop.permute.xlu0 %9904
    %9908 = vrot.lane.b32.xlu0 %v9752, 80
    %v9909 = vpop.permute.xlu0 %9908
    %9912 = vrot.lane.b32.xlu0 %v9753, 96
    %v9913 = vpop.permute.xlu0 %9912
    %9916 = vrot.lane.b32.xlu0 %v9754, 112
    %v9917 = vpop.permute.xlu0 %9916
    %9920 = vrot.lane.b32.xlu0 %v9884, 16
    %v9921 = vpop.permute.xlu0 %9920
    %9924 = vrot.lane.b32.xlu0 %v9885, 32
    %v9925 = vpop.permute.xlu0 %9924
    %9928 = vrot.lane.b32.xlu0 %v9886, 48
    %v9929 = vpop.permute.xlu0 %9928
    %9932 = vrot.lane.b32.xlu0 %v9887, 64
    %v9933 = vpop.permute.xlu0 %9932
    %9936 = vrot.lane.b32.xlu0 %v9888, 80
    %v9937 = vpop.permute.xlu0 %9936
    %9940 = vrot.lane.b32.xlu0 %v9889, 96
    %v9941 = vpop.permute.xlu0 %9940
    %9944 = vrot.lane.b32.xlu0 %v9890, 112
    %v9945 = vpop.permute.xlu0 %9944
    %v9947 = vsel %vm372, %v9747, %v9893
    %v9948 = vsel %vm374, %v9947, %v9897
    %v9949 = vsel %vm376, %v9948, %v9901
    %v9950 = vsel %vm378, %v9949, %v9905
    %v9951 = vsel %vm380, %v9950, %v9909
    %v9952 = vsel %vm382, %v9951, %v9913
    %v9953 = vsel %vm384, %v9952, %v9917
    %v9954 = vsel %vm372, %v9883, %v9921
    %v9955 = vsel %vm374, %v9954, %v9925
    %v9956 = vsel %vm376, %v9955, %v9929
    %v9957 = vsel %vm378, %v9956, %v9933
    %v9958 = vsel %vm380, %v9957, %v9937
    %v9959 = vsel %vm382, %v9958, %v9941
    %v9960 = vsel %vm384, %v9959, %v9945
    %v9961 = vld [vmem:[%s5327 + $0x1] sm:$0xff]
    %v9962 = vld [vmem:[%s5327 + $0x9] sm:$0xff]
    %v9963 = vld [vmem:[%s5327 + $0x19] sm:$0xff]
    %v9964 = vld [vmem:[%s5327 + $0x21] sm:$0xff]
    %v9965 = vld [vmem:[%s5327 + $0x31] sm:$0xff]
    %v9966 = vld [vmem:[%s5327 + $0x39] sm:$0xff]
    %v9967 = vld [vmem:[%s5327 + $0x49] sm:$0xff]
    %v9968 = vld [vmem:[%s5327 + $0x51] sm:$0xff]
    %v9969 = vld [vmem:[%s5327 + $0x61] sm:$0xff]
    %v9970 = vld [vmem:[%s5327 + $0x69] sm:$0xff]
    %v9971 = vld [vmem:[%s5327 + $0x79] sm:$0xff]
    %v9972 = vld [vmem:[%s5327 + $0x81] sm:$0xff]
    %v9973 = vld [vmem:[%s5327 + $0x91] sm:$0xff]
    %v9974 = vld [vmem:[%s5327 + $0x99] sm:$0xff]
    %v9975 = vld [vmem:[%s5327 + $0xa9] sm:$0xff]
    %v9976 = vld [vmem:[%s5327 + $0xb1] sm:$0xff]
    %v9977 = vcombine.low %v9961, %v9965
    %v9978 = vcombine.high %v9961, %v9965
    %v9980 = vunpack.c.l.s4 1983009808
    %v9981 = vunpack.c.0.s8 %v9980
    %v9982 = vlaneseq
    %v9983 = vshrl.u32 %v9982, 7
    %v9984 = vsub.s32 %v9981, %v9983
    %v9985 = vrot.slane %v9977, %v9984
    %v9987 = vunpack.c.l.s4 1983009808
    %v9988 = vunpack.c.0.s8 %v9987
    %v9989 = vlaneseq
    %v9990 = vshrl.u32 %v9989, 7
    %v9991 = vsub.s32 %v9988, %v9990
    %v9992 = vrot.slane %v9978, %v9991
    %v9993 = vcombine.low %v9963, %v9967
    %v9994 = vcombine.high %v9963, %v9967
    %v9996 = vunpack.c.l.s4 1983009808
    %v9997 = vunpack.c.0.s8 %v9996
    %v9998 = vlaneseq
    %v9999 = vshrl.u32 %v9998, 7
    %v10000 = vsub.s32 %v9997, %v9999
    %v10001 = vrot.slane %v9993, %v10000
    %v10003 = vunpack.c.l.s4 1983009808
    %v10004 = vunpack.c.0.s8 %v10003
    %v10005 = vlaneseq
    %v10006 = vshrl.u32 %v10005, 7
    %v10007 = vsub.s32 %v10004, %v10006
    %v10008 = vrot.slane %v9994, %v10007
    %v10009 = vcombine.low %v9969, %v9973
    %v10010 = vcombine.high %v9969, %v9973
    %v10012 = vunpack.c.l.s4 1983009808
    %v10013 = vunpack.c.0.s8 %v10012
    %v10014 = vlaneseq
    %v10015 = vshrl.u32 %v10014, 7
    %v10016 = vsub.s32 %v10013, %v10015
    %v10017 = vrot.slane %v10009, %v10016
    %v10019 = vunpack.c.l.s4 1983009808
    %v10020 = vunpack.c.0.s8 %v10019
    %v10021 = vlaneseq
    %v10022 = vshrl.u32 %v10021, 7
    %v10023 = vsub.s32 %v10020, %v10022
    %v10024 = vrot.slane %v10010, %v10023
    %v10025 = vcombine.low %v9971, %v9975
    %v10026 = vcombine.high %v9971, %v9975
    %v10028 = vunpack.c.l.s4 1983009808
    %v10029 = vunpack.c.0.s8 %v10028
    %v10030 = vlaneseq
    %v10031 = vshrl.u32 %v10030, 7
    %v10032 = vsub.s32 %v10029, %v10031
    %v10033 = vrot.slane %v10025, %v10032
    %v10035 = vunpack.c.l.s4 1983009808
    %v10036 = vunpack.c.0.s8 %v10035
    %v10037 = vlaneseq
    %v10038 = vshrl.u32 %v10037, 7
    %v10039 = vsub.s32 %v10036, %v10038
    %v10040 = vrot.slane %v10026, %v10039
    %v10041 = vcombine.low %v9985, %v10001
    %v10042 = vcombine.high %v9985, %v10001
    %v10044 = vunpack.c.l.s4 1934713408
    %v10045 = vunpack.c.0.s8 %v10044
    %v10046 = vlaneseq
    %v10047 = vshrl.u32 %v10046, 7
    %v10048 = vsub.s32 %v10045, %v10047
    %v10049 = vrot.slane %v10041, %v10048
    %v10051 = vunpack.c.l.s4 1934713408
    %v10052 = vunpack.c.0.s8 %v10051
    %v10053 = vlaneseq
    %v10054 = vshrl.u32 %v10053, 7
    %v10055 = vsub.s32 %v10052, %v10054
    %v10056 = vrot.slane %v10042, %v10055
    %v10057 = vcombine.low %v9992, %v10008
    %v10058 = vcombine.high %v9992, %v10008
    %v10060 = vunpack.c.l.s4 1934713408
    %v10061 = vunpack.c.0.s8 %v10060
    %v10062 = vlaneseq
    %v10063 = vshrl.u32 %v10062, 7
    %v10064 = vsub.s32 %v10061, %v10063
    %v10065 = vrot.slane %v10057, %v10064
    %v10067 = vunpack.c.l.s4 1934713408
    %v10068 = vunpack.c.0.s8 %v10067
    %v10069 = vlaneseq
    %v10070 = vshrl.u32 %v10069, 7
    %v10071 = vsub.s32 %v10068, %v10070
    %v10072 = vrot.slane %v10058, %v10071
    %v10073 = vcombine.low %v10017, %v10033
    %v10074 = vcombine.high %v10017, %v10033
    %v10076 = vunpack.c.l.s4 1934713408
    %v10077 = vunpack.c.0.s8 %v10076
    %v10078 = vlaneseq
    %v10079 = vshrl.u32 %v10078, 7
    %v10080 = vsub.s32 %v10077, %v10079
    %v10081 = vrot.slane %v10073, %v10080
    %v10083 = vunpack.c.l.s4 1934713408
    %v10084 = vunpack.c.0.s8 %v10083
    %v10085 = vlaneseq
    %v10086 = vshrl.u32 %v10085, 7
    %v10087 = vsub.s32 %v10084, %v10086
    %v10088 = vrot.slane %v10074, %v10087
    %v10089 = vcombine.low %v10024, %v10040
    %v10090 = vcombine.high %v10024, %v10040
    %v10092 = vunpack.c.l.s4 1934713408
    %v10093 = vunpack.c.0.s8 %v10092
    %v10094 = vlaneseq
    %v10095 = vshrl.u32 %v10094, 7
    %v10096 = vsub.s32 %v10093, %v10095
    %v10097 = vrot.slane %v10089, %v10096
    %v10099 = vunpack.c.l.s4 1934713408
    %v10100 = vunpack.c.0.s8 %v10099
    %v10101 = vlaneseq
    %v10102 = vshrl.u32 %v10101, 7
    %v10103 = vsub.s32 %v10100, %v10102
    %v10104 = vrot.slane %v10090, %v10103
    %v10105 = vcombine.low %v10049, %v10081
    %v10106 = vcombine.high %v10049, %v10081
    %v10107 = vcombine.low %v10056, %v10088
    %v10108 = vcombine.high %v10056, %v10088
    %v10109 = vcombine.low %v10065, %v10097
    %v10110 = vcombine.high %v10065, %v10097
    %v10111 = vcombine.low %v10072, %v10104
    %v10112 = vcombine.high %v10072, %v10104
    %v10113 = vcombine.low %v9962, %v9966
    %v10114 = vcombine.high %v9962, %v9966
    %v10116 = vunpack.c.l.s4 1983009808
    %v10117 = vunpack.c.0.s8 %v10116
    %v10118 = vlaneseq
    %v10119 = vshrl.u32 %v10118, 7
    %v10120 = vsub.s32 %v10117, %v10119
    %v10121 = vrot.slane %v10113, %v10120
    %v10123 = vunpack.c.l.s4 1983009808
    %v10124 = vunpack.c.0.s8 %v10123
    %v10125 = vlaneseq
    %v10126 = vshrl.u32 %v10125, 7
    %v10127 = vsub.s32 %v10124, %v10126
    %v10128 = vrot.slane %v10114, %v10127
    %v10129 = vcombine.low %v9964, %v9968
    %v10130 = vcombine.high %v9964, %v9968
    %v10132 = vunpack.c.l.s4 1983009808
    %v10133 = vunpack.c.0.s8 %v10132
    %v10134 = vlaneseq
    %v10135 = vshrl.u32 %v10134, 7
    %v10136 = vsub.s32 %v10133, %v10135
    %v10137 = vrot.slane %v10129, %v10136
    %v10139 = vunpack.c.l.s4 1983009808
    %v10140 = vunpack.c.0.s8 %v10139
    %v10141 = vlaneseq
    %v10142 = vshrl.u32 %v10141, 7
    %v10143 = vsub.s32 %v10140, %v10142
    %v10144 = vrot.slane %v10130, %v10143
    %v10145 = vcombine.low %v9970, %v9974
    %v10146 = vcombine.high %v9970, %v9974
    %v10148 = vunpack.c.l.s4 1983009808
    %v10149 = vunpack.c.0.s8 %v10148
    %v10150 = vlaneseq
    %v10151 = vshrl.u32 %v10150, 7
    %v10152 = vsub.s32 %v10149, %v10151
    %v10153 = vrot.slane %v10145, %v10152
    %v10155 = vunpack.c.l.s4 1983009808
    %v10156 = vunpack.c.0.s8 %v10155
    %v10157 = vlaneseq
    %v10158 = vshrl.u32 %v10157, 7
    %v10159 = vsub.s32 %v10156, %v10158
    %v10160 = vrot.slane %v10146, %v10159
    %v10161 = vcombine.low %v9972, %v9976
    %v10162 = vcombine.high %v9972, %v9976
    %v10164 = vunpack.c.l.s4 1983009808
    %v10165 = vunpack.c.0.s8 %v10164
    %v10166 = vlaneseq
    %v10167 = vshrl.u32 %v10166, 7
    %v10168 = vsub.s32 %v10165, %v10167
    %v10169 = vrot.slane %v10161, %v10168
    %v10171 = vunpack.c.l.s4 1983009808
    %v10172 = vunpack.c.0.s8 %v10171
    %v10173 = vlaneseq
    %v10174 = vshrl.u32 %v10173, 7
    %v10175 = vsub.s32 %v10172, %v10174
    %v10176 = vrot.slane %v10162, %v10175
    %v10177 = vcombine.low %v10121, %v10137
    %v10178 = vcombine.high %v10121, %v10137
    %v10180 = vunpack.c.l.s4 1934713408
    %v10181 = vunpack.c.0.s8 %v10180
    %v10182 = vlaneseq
    %v10183 = vshrl.u32 %v10182, 7
    %v10184 = vsub.s32 %v10181, %v10183
    %v10185 = vrot.slane %v10177, %v10184
    %v10187 = vunpack.c.l.s4 1934713408
    %v10188 = vunpack.c.0.s8 %v10187
    %v10189 = vlaneseq
    %v10190 = vshrl.u32 %v10189, 7
    %v10191 = vsub.s32 %v10188, %v10190
    %v10192 = vrot.slane %v10178, %v10191
    %v10193 = vcombine.low %v10128, %v10144
    %v10194 = vcombine.high %v10128, %v10144
    %v10196 = vunpack.c.l.s4 1934713408
    %v10197 = vunpack.c.0.s8 %v10196
    %v10198 = vlaneseq
    %v10199 = vshrl.u32 %v10198, 7
    %v10200 = vsub.s32 %v10197, %v10199
    %v10201 = vrot.slane %v10193, %v10200
    %v10203 = vunpack.c.l.s4 1934713408
    %v10204 = vunpack.c.0.s8 %v10203
    %v10205 = vlaneseq
    %v10206 = vshrl.u32 %v10205, 7
    %v10207 = vsub.s32 %v10204, %v10206
    %v10208 = vrot.slane %v10194, %v10207
    %v10209 = vcombine.low %v10153, %v10169
    %v10210 = vcombine.high %v10153, %v10169
    %v10212 = vunpack.c.l.s4 1934713408
    %v10213 = vunpack.c.0.s8 %v10212
    %v10214 = vlaneseq
    %v10215 = vshrl.u32 %v10214, 7
    %v10216 = vsub.s32 %v10213, %v10215
    %v10217 = vrot.slane %v10209, %v10216
    %v10219 = vunpack.c.l.s4 1934713408
    %v10220 = vunpack.c.0.s8 %v10219
    %v10221 = vlaneseq
    %v10222 = vshrl.u32 %v10221, 7
    %v10223 = vsub.s32 %v10220, %v10222
    %v10224 = vrot.slane %v10210, %v10223
    %v10225 = vcombine.low %v10160, %v10176
    %v10226 = vcombine.high %v10160, %v10176
    %v10228 = vunpack.c.l.s4 1934713408
    %v10229 = vunpack.c.0.s8 %v10228
    %v10230 = vlaneseq
    %v10231 = vshrl.u32 %v10230, 7
    %v10232 = vsub.s32 %v10229, %v10231
    %v10233 = vrot.slane %v10225, %v10232
    %v10235 = vunpack.c.l.s4 1934713408
    %v10236 = vunpack.c.0.s8 %v10235
    %v10237 = vlaneseq
    %v10238 = vshrl.u32 %v10237, 7
    %v10239 = vsub.s32 %v10236, %v10238
    %v10240 = vrot.slane %v10226, %v10239
    %v10241 = vcombine.low %v10185, %v10217
    %v10242 = vcombine.high %v10185, %v10217
    %v10243 = vcombine.low %v10192, %v10224
    %v10244 = vcombine.high %v10192, %v10224
    %v10245 = vcombine.low %v10201, %v10233
    %v10246 = vcombine.high %v10201, %v10233
    %v10247 = vcombine.low %v10208, %v10240
    %v10248 = vcombine.high %v10208, %v10240
    %10250 = vrot.lane.b32.xlu0 %v10106, 16
    %v10251 = vpop.permute.xlu0 %10250
    %10254 = vrot.lane.b32.xlu0 %v10107, 32
    %v10255 = vpop.permute.xlu0 %10254
    %10258 = vrot.lane.b32.xlu0 %v10108, 48
    %v10259 = vpop.permute.xlu0 %10258
    %10262 = vrot.lane.b32.xlu0 %v10109, 64
    %v10263 = vpop.permute.xlu0 %10262
    %10266 = vrot.lane.b32.xlu0 %v10110, 80
    %v10267 = vpop.permute.xlu0 %10266
    %10270 = vrot.lane.b32.xlu0 %v10111, 96
    %v10271 = vpop.permute.xlu0 %10270
    %10274 = vrot.lane.b32.xlu0 %v10112, 112
    %v10275 = vpop.permute.xlu0 %10274
    %10278 = vrot.lane.b32.xlu0 %v10242, 16
    %v10279 = vpop.permute.xlu0 %10278
    %10282 = vrot.lane.b32.xlu0 %v10243, 32
    %v10283 = vpop.permute.xlu0 %10282
    %10286 = vrot.lane.b32.xlu0 %v10244, 48
    %v10287 = vpop.permute.xlu0 %10286
    %10290 = vrot.lane.b32.xlu0 %v10245, 64
    %v10291 = vpop.permute.xlu0 %10290
    %10294 = vrot.lane.b32.xlu0 %v10246, 80
    %v10295 = vpop.permute.xlu0 %10294
    %10298 = vrot.lane.b32.xlu0 %v10247, 96
    %v10299 = vpop.permute.xlu0 %10298
    %10302 = vrot.lane.b32.xlu0 %v10248, 112
    %v10303 = vpop.permute.xlu0 %10302
    %v10305 = vsel %vm372, %v10105, %v10251
    %v10306 = vsel %vm374, %v10305, %v10255
    %v10307 = vsel %vm376, %v10306, %v10259
    %v10308 = vsel %vm378, %v10307, %v10263
    %v10309 = vsel %vm380, %v10308, %v10267
    %v10310 = vsel %vm382, %v10309, %v10271
    %v10311 = vsel %vm384, %v10310, %v10275
    %v10312 = vsel %vm372, %v10241, %v10279
    %v10313 = vsel %vm374, %v10312, %v10283
    %v10314 = vsel %vm376, %v10313, %v10287
    %v10315 = vsel %vm378, %v10314, %v10291
    %v10316 = vsel %vm380, %v10315, %v10295
    %v10317 = vsel %vm382, %v10316, %v10299
    %v10318 = vsel %vm384, %v10317, %v10303
    %10335 = vrot.lane.b32.xlu0 %v9961, 127
    %v10336 = vpop.permute.xlu0 %10335
    %10337 = vrot.lane.b32.xlu0 %v9962, 127
    %v10338 = vpop.permute.xlu0 %10337
    %10339 = vrot.lane.b32.xlu0 %v9963, 127
    %v10340 = vpop.permute.xlu0 %10339
    %10341 = vrot.lane.b32.xlu0 %v9964, 127
    %v10342 = vpop.permute.xlu0 %10341
    %10343 = vrot.lane.b32.xlu0 %v9965, 127
    %v10344 = vpop.permute.xlu0 %10343
    %10345 = vrot.lane.b32.xlu0 %v9966, 127
    %v10346 = vpop.permute.xlu0 %10345
    %10347 = vrot.lane.b32.xlu0 %v9967, 127
    %v10348 = vpop.permute.xlu0 %10347
    %10349 = vrot.lane.b32.xlu0 %v9968, 127
    %v10350 = vpop.permute.xlu0 %10349
    %10351 = vrot.lane.b32.xlu0 %v9969, 127
    %v10352 = vpop.permute.xlu0 %10351
    %10353 = vrot.lane.b32.xlu0 %v9970, 127
    %v10354 = vpop.permute.xlu0 %10353
    %10355 = vrot.lane.b32.xlu0 %v9971, 127
    %v10356 = vpop.permute.xlu0 %10355
    %10357 = vrot.lane.b32.xlu0 %v9972, 127
    %v10358 = vpop.permute.xlu0 %10357
    %10359 = vrot.lane.b32.xlu0 %v9973, 127
    %v10360 = vpop.permute.xlu0 %10359
    %10361 = vrot.lane.b32.xlu0 %v9974, 127
    %v10362 = vpop.permute.xlu0 %10361
    %10363 = vrot.lane.b32.xlu0 %v9975, 127
    %v10364 = vpop.permute.xlu0 %10363
    %10365 = vrot.lane.b32.xlu0 %v9976, 127
    %v10366 = vpop.permute.xlu0 %10365
    %v10383 = vcombine.low %v10336, %v10344
    %v10384 = vcombine.high %v10336, %v10344
    %v10386 = vunpack.c.l.s4 1983009808
    %v10387 = vunpack.c.0.s8 %v10386
    %v10388 = vlaneseq
    %v10389 = vshrl.u32 %v10388, 7
    %v10390 = vsub.s32 %v10387, %v10389
    %v10391 = vrot.slane %v10383, %v10390
    %v10393 = vunpack.c.l.s4 1983009808
    %v10394 = vunpack.c.0.s8 %v10393
    %v10395 = vlaneseq
    %v10396 = vshrl.u32 %v10395, 7
    %v10397 = vsub.s32 %v10394, %v10396
    %v10398 = vrot.slane %v10384, %v10397
    %v10399 = vcombine.low %v10340, %v10348
    %v10400 = vcombine.high %v10340, %v10348
    %v10402 = vunpack.c.l.s4 1983009808
    %v10403 = vunpack.c.0.s8 %v10402
    %v10404 = vlaneseq
    %v10405 = vshrl.u32 %v10404, 7
    %v10406 = vsub.s32 %v10403, %v10405
    %v10407 = vrot.slane %v10399, %v10406
    %v10409 = vunpack.c.l.s4 1983009808
    %v10410 = vunpack.c.0.s8 %v10409
    %v10411 = vlaneseq
    %v10412 = vshrl.u32 %v10411, 7
    %v10413 = vsub.s32 %v10410, %v10412
    %v10414 = vrot.slane %v10400, %v10413
    %v10415 = vcombine.low %v10352, %v10360
    %v10416 = vcombine.high %v10352, %v10360
    %v10418 = vunpack.c.l.s4 1983009808
    %v10419 = vunpack.c.0.s8 %v10418
    %v10420 = vlaneseq
    %v10421 = vshrl.u32 %v10420, 7
    %v10422 = vsub.s32 %v10419, %v10421
    %v10423 = vrot.slane %v10415, %v10422
    %v10425 = vunpack.c.l.s4 1983009808
    %v10426 = vunpack.c.0.s8 %v10425
    %v10427 = vlaneseq
    %v10428 = vshrl.u32 %v10427, 7
    %v10429 = vsub.s32 %v10426, %v10428
    %v10430 = vrot.slane %v10416, %v10429
    %v10431 = vcombine.low %v10356, %v10364
    %v10432 = vcombine.high %v10356, %v10364
    %v10434 = vunpack.c.l.s4 1983009808
    %v10435 = vunpack.c.0.s8 %v10434
    %v10436 = vlaneseq
    %v10437 = vshrl.u32 %v10436, 7
    %v10438 = vsub.s32 %v10435, %v10437
    %v10439 = vrot.slane %v10431, %v10438
    %v10441 = vunpack.c.l.s4 1983009808
    %v10442 = vunpack.c.0.s8 %v10441
    %v10443 = vlaneseq
    %v10444 = vshrl.u32 %v10443, 7
    %v10445 = vsub.s32 %v10442, %v10444
    %v10446 = vrot.slane %v10432, %v10445
    %v10447 = vcombine.low %v10391, %v10407
    %v10448 = vcombine.high %v10391, %v10407
    %v10450 = vunpack.c.l.s4 1934713408
    %v10451 = vunpack.c.0.s8 %v10450
    %v10452 = vlaneseq
    %v10453 = vshrl.u32 %v10452, 7
    %v10454 = vsub.s32 %v10451, %v10453
    %v10455 = vrot.slane %v10447, %v10454
    %v10457 = vunpack.c.l.s4 1934713408
    %v10458 = vunpack.c.0.s8 %v10457
    %v10459 = vlaneseq
    %v10460 = vshrl.u32 %v10459, 7
    %v10461 = vsub.s32 %v10458, %v10460
    %v10462 = vrot.slane %v10448, %v10461
    %v10463 = vcombine.low %v10398, %v10414
    %v10464 = vcombine.high %v10398, %v10414
    %v10466 = vunpack.c.l.s4 1934713408
    %v10467 = vunpack.c.0.s8 %v10466
    %v10468 = vlaneseq
    %v10469 = vshrl.u32 %v10468, 7
    %v10470 = vsub.s32 %v10467, %v10469
    %v10471 = vrot.slane %v10463, %v10470
    %v10473 = vunpack.c.l.s4 1934713408
    %v10474 = vunpack.c.0.s8 %v10473
    %v10475 = vlaneseq
    %v10476 = vshrl.u32 %v10475, 7
    %v10477 = vsub.s32 %v10474, %v10476
    %v10478 = vrot.slane %v10464, %v10477
    %v10479 = vcombine.low %v10423, %v10439
    %v10480 = vcombine.high %v10423, %v10439
    %v10482 = vunpack.c.l.s4 1934713408
    %v10483 = vunpack.c.0.s8 %v10482
    %v10484 = vlaneseq
    %v10485 = vshrl.u32 %v10484, 7
    %v10486 = vsub.s32 %v10483, %v10485
    %v10487 = vrot.slane %v10479, %v10486
    %v10489 = vunpack.c.l.s4 1934713408
    %v10490 = vunpack.c.0.s8 %v10489
    %v10491 = vlaneseq
    %v10492 = vshrl.u32 %v10491, 7
    %v10493 = vsub.s32 %v10490, %v10492
    %v10494 = vrot.slane %v10480, %v10493
    %v10495 = vcombine.low %v10430, %v10446
    %v10496 = vcombine.high %v10430, %v10446
    %v10498 = vunpack.c.l.s4 1934713408
    %v10499 = vunpack.c.0.s8 %v10498
    %v10500 = vlaneseq
    %v10501 = vshrl.u32 %v10500, 7
    %v10502 = vsub.s32 %v10499, %v10501
    %v10503 = vrot.slane %v10495, %v10502
    %v10505 = vunpack.c.l.s4 1934713408
    %v10506 = vunpack.c.0.s8 %v10505
    %v10507 = vlaneseq
    %v10508 = vshrl.u32 %v10507, 7
    %v10509 = vsub.s32 %v10506, %v10508
    %v10510 = vrot.slane %v10496, %v10509
    %v10511 = vcombine.low %v10455, %v10487
    %v10512 = vcombine.high %v10455, %v10487
    %v10513 = vcombine.low %v10462, %v10494
    %v10514 = vcombine.high %v10462, %v10494
    %v10515 = vcombine.low %v10471, %v10503
    %v10516 = vcombine.high %v10471, %v10503
    %v10517 = vcombine.low %v10478, %v10510
    %v10518 = vcombine.high %v10478, %v10510
    %v10519 = vcombine.low %v10338, %v10346
    %v10520 = vcombine.high %v10338, %v10346
    %v10522 = vunpack.c.l.s4 1983009808
    %v10523 = vunpack.c.0.s8 %v10522
    %v10524 = vlaneseq
    %v10525 = vshrl.u32 %v10524, 7
    %v10526 = vsub.s32 %v10523, %v10525
    %v10527 = vrot.slane %v10519, %v10526
    %v10529 = vunpack.c.l.s4 1983009808
    %v10530 = vunpack.c.0.s8 %v10529
    %v10531 = vlaneseq
    %v10532 = vshrl.u32 %v10531, 7
    %v10533 = vsub.s32 %v10530, %v10532
    %v10534 = vrot.slane %v10520, %v10533
    %v10535 = vcombine.low %v10342, %v10350
    %v10536 = vcombine.high %v10342, %v10350
    %v10538 = vunpack.c.l.s4 1983009808
    %v10539 = vunpack.c.0.s8 %v10538
    %v10540 = vlaneseq
    %v10541 = vshrl.u32 %v10540, 7
    %v10542 = vsub.s32 %v10539, %v10541
    %v10543 = vrot.slane %v10535, %v10542
    %v10545 = vunpack.c.l.s4 1983009808
    %v10546 = vunpack.c.0.s8 %v10545
    %v10547 = vlaneseq
    %v10548 = vshrl.u32 %v10547, 7
    %v10549 = vsub.s32 %v10546, %v10548
    %v10550 = vrot.slane %v10536, %v10549
    %v10551 = vcombine.low %v10354, %v10362
    %v10552 = vcombine.high %v10354, %v10362
    %v10554 = vunpack.c.l.s4 1983009808
    %v10555 = vunpack.c.0.s8 %v10554
    %v10556 = vlaneseq
    %v10557 = vshrl.u32 %v10556, 7
    %v10558 = vsub.s32 %v10555, %v10557
    %v10559 = vrot.slane %v10551, %v10558
    %v10561 = vunpack.c.l.s4 1983009808
    %v10562 = vunpack.c.0.s8 %v10561
    %v10563 = vlaneseq
    %v10564 = vshrl.u32 %v10563, 7
    %v10565 = vsub.s32 %v10562, %v10564
    %v10566 = vrot.slane %v10552, %v10565
    %v10567 = vcombine.low %v10358, %v10366
    %v10568 = vcombine.high %v10358, %v10366
    %v10570 = vunpack.c.l.s4 1983009808
    %v10571 = vunpack.c.0.s8 %v10570
    %v10572 = vlaneseq
    %v10573 = vshrl.u32 %v10572, 7
    %v10574 = vsub.s32 %v10571, %v10573
    %v10575 = vrot.slane %v10567, %v10574
    %v10577 = vunpack.c.l.s4 1983009808
    %v10578 = vunpack.c.0.s8 %v10577
    %v10579 = vlaneseq
    %v10580 = vshrl.u32 %v10579, 7
    %v10581 = vsub.s32 %v10578, %v10580
    %v10582 = vrot.slane %v10568, %v10581
    %v10583 = vcombine.low %v10527, %v10543
    %v10584 = vcombine.high %v10527, %v10543
    %v10586 = vunpack.c.l.s4 1934713408
    %v10587 = vunpack.c.0.s8 %v10586
    %v10588 = vlaneseq
    %v10589 = vshrl.u32 %v10588, 7
    %v10590 = vsub.s32 %v10587, %v10589
    %v10591 = vrot.slane %v10583, %v10590
    %v10593 = vunpack.c.l.s4 1934713408
    %v10594 = vunpack.c.0.s8 %v10593
    %v10595 = vlaneseq
    %v10596 = vshrl.u32 %v10595, 7
    %v10597 = vsub.s32 %v10594, %v10596
    %v10598 = vrot.slane %v10584, %v10597
    %v10599 = vcombine.low %v10534, %v10550
    %v10600 = vcombine.high %v10534, %v10550
    %v10602 = vunpack.c.l.s4 1934713408
    %v10603 = vunpack.c.0.s8 %v10602
    %v10604 = vlaneseq
    %v10605 = vshrl.u32 %v10604, 7
    %v10606 = vsub.s32 %v10603, %v10605
    %v10607 = vrot.slane %v10599, %v10606
    %v10609 = vunpack.c.l.s4 1934713408
    %v10610 = vunpack.c.0.s8 %v10609
    %v10611 = vlaneseq
    %v10612 = vshrl.u32 %v10611, 7
    %v10613 = vsub.s32 %v10610, %v10612
    %v10614 = vrot.slane %v10600, %v10613
    %v10615 = vcombine.low %v10559, %v10575
    %v10616 = vcombine.high %v10559, %v10575
    %v10618 = vunpack.c.l.s4 1934713408
    %v10619 = vunpack.c.0.s8 %v10618
    %v10620 = vlaneseq
    %v10621 = vshrl.u32 %v10620, 7
    %v10622 = vsub.s32 %v10619, %v10621
    %v10623 = vrot.slane %v10615, %v10622
    %v10625 = vunpack.c.l.s4 1934713408
    %v10626 = vunpack.c.0.s8 %v10625
    %v10627 = vlaneseq
    %v10628 = vshrl.u32 %v10627, 7
    %v10629 = vsub.s32 %v10626, %v10628
    %v10630 = vrot.slane %v10616, %v10629
    %v10631 = vcombine.low %v10566, %v10582
    %v10632 = vcombine.high %v10566, %v10582
    %v10634 = vunpack.c.l.s4 1934713408
    %v10635 = vunpack.c.0.s8 %v10634
    %v10636 = vlaneseq
    %v10637 = vshrl.u32 %v10636, 7
    %v10638 = vsub.s32 %v10635, %v10637
    %v10639 = vrot.slane %v10631, %v10638
    %v10641 = vunpack.c.l.s4 1934713408
    %v10642 = vunpack.c.0.s8 %v10641
    %v10643 = vlaneseq
    %v10644 = vshrl.u32 %v10643, 7
    %v10645 = vsub.s32 %v10642, %v10644
    %v10646 = vrot.slane %v10632, %v10645
    %v10647 = vcombine.low %v10591, %v10623
    %v10648 = vcombine.high %v10591, %v10623
    %v10649 = vcombine.low %v10598, %v10630
    %v10650 = vcombine.high %v10598, %v10630
    %v10651 = vcombine.low %v10607, %v10639
    %v10652 = vcombine.high %v10607, %v10639
    %v10653 = vcombine.low %v10614, %v10646
    %v10654 = vcombine.high %v10614, %v10646
    %10656 = vrot.lane.b32.xlu0 %v10512, 16
    %v10657 = vpop.permute.xlu0 %10656
    %10660 = vrot.lane.b32.xlu0 %v10513, 32
    %v10661 = vpop.permute.xlu0 %10660
    %10664 = vrot.lane.b32.xlu0 %v10514, 48
    %v10665 = vpop.permute.xlu0 %10664
    %10668 = vrot.lane.b32.xlu0 %v10515, 64
    %v10669 = vpop.permute.xlu0 %10668
    %10672 = vrot.lane.b32.xlu0 %v10516, 80
    %v10673 = vpop.permute.xlu0 %10672
    %10676 = vrot.lane.b32.xlu0 %v10517, 96
    %v10677 = vpop.permute.xlu0 %10676
    %10680 = vrot.lane.b32.xlu0 %v10518, 112
    %v10681 = vpop.permute.xlu0 %10680
    %10684 = vrot.lane.b32.xlu0 %v10648, 16
    %v10685 = vpop.permute.xlu0 %10684
    %10688 = vrot.lane.b32.xlu0 %v10649, 32
    %v10689 = vpop.permute.xlu0 %10688
    %10692 = vrot.lane.b32.xlu0 %v10650, 48
    %v10693 = vpop.permute.xlu0 %10692
    %10696 = vrot.lane.b32.xlu0 %v10651, 64
    %v10697 = vpop.permute.xlu0 %10696
    %10700 = vrot.lane.b32.xlu0 %v10652, 80
    %v10701 = vpop.permute.xlu0 %10700
    %10704 = vrot.lane.b32.xlu0 %v10653, 96
    %v10705 = vpop.permute.xlu0 %10704
    %10708 = vrot.lane.b32.xlu0 %v10654, 112
    %v10709 = vpop.permute.xlu0 %10708
    %v10711 = vsel %vm372, %v10511, %v10657
    %v10712 = vsel %vm374, %v10711, %v10661
    %v10713 = vsel %vm376, %v10712, %v10665
    %v10714 = vsel %vm378, %v10713, %v10669
    %v10715 = vsel %vm380, %v10714, %v10673
    %v10716 = vsel %vm382, %v10715, %v10677
    %v10717 = vsel %vm384, %v10716, %v10681
    %v10718 = vsel %vm372, %v10647, %v10685
    %v10719 = vsel %vm374, %v10718, %v10689
    %v10720 = vsel %vm376, %v10719, %v10693
    %v10721 = vsel %vm378, %v10720, %v10697
    %v10722 = vsel %vm380, %v10721, %v10701
    %v10723 = vsel %vm382, %v10722, %v10705
    %v10724 = vsel %vm384, %v10723, %v10709
    %10725 = vrot.lane.b32.xlu0 %v9961, 126
    %v10726 = vpop.permute.xlu0 %10725
    %10727 = vrot.lane.b32.xlu0 %v9962, 126
    %v10728 = vpop.permute.xlu0 %10727
    %10729 = vrot.lane.b32.xlu0 %v9963, 126
    %v10730 = vpop.permute.xlu0 %10729
    %10731 = vrot.lane.b32.xlu0 %v9964, 126
    %v10732 = vpop.permute.xlu0 %10731
    %10733 = vrot.lane.b32.xlu0 %v9965, 126
    %v10734 = vpop.permute.xlu0 %10733
    %10735 = vrot.lane.b32.xlu0 %v9966, 126
    %v10736 = vpop.permute.xlu0 %10735
    %10737 = vrot.lane.b32.xlu0 %v9967, 126
    %v10738 = vpop.permute.xlu0 %10737
    %10739 = vrot.lane.b32.xlu0 %v9968, 126
    %v10740 = vpop.permute.xlu0 %10739
    %10741 = vrot.lane.b32.xlu0 %v9969, 126
    %v10742 = vpop.permute.xlu0 %10741
    %10743 = vrot.lane.b32.xlu0 %v9970, 126
    %v10744 = vpop.permute.xlu0 %10743
    %10745 = vrot.lane.b32.xlu0 %v9971, 126
    %v10746 = vpop.permute.xlu0 %10745
    %10747 = vrot.lane.b32.xlu0 %v9972, 126
    %v10748 = vpop.permute.xlu0 %10747
    %10749 = vrot.lane.b32.xlu0 %v9973, 126
    %v10750 = vpop.permute.xlu0 %10749
    %10751 = vrot.lane.b32.xlu0 %v9974, 126
    %v10752 = vpop.permute.xlu0 %10751
    %10753 = vrot.lane.b32.xlu0 %v9975, 126
    %v10754 = vpop.permute.xlu0 %10753
    %10755 = vrot.lane.b32.xlu0 %v9976, 126
    %v10756 = vpop.permute.xlu0 %10755
    %v10773 = vcombine.low %v10726, %v10734
    %v10774 = vcombine.high %v10726, %v10734
    %v10776 = vunpack.c.l.s4 1983009808
    %v10777 = vunpack.c.0.s8 %v10776
    %v10778 = vlaneseq
    %v10779 = vshrl.u32 %v10778, 7
    %v10780 = vsub.s32 %v10777, %v10779
    %v10781 = vrot.slane %v10773, %v10780
    %v10783 = vunpack.c.l.s4 1983009808
    %v10784 = vunpack.c.0.s8 %v10783
    %v10785 = vlaneseq
    %v10786 = vshrl.u32 %v10785, 7
    %v10787 = vsub.s32 %v10784, %v10786
    %v10788 = vrot.slane %v10774, %v10787
    %v10789 = vcombine.low %v10730, %v10738
    %v10790 = vcombine.high %v10730, %v10738
    %v10792 = vunpack.c.l.s4 1983009808
    %v10793 = vunpack.c.0.s8 %v10792
    %v10794 = vlaneseq
    %v10795 = vshrl.u32 %v10794, 7
    %v10796 = vsub.s32 %v10793, %v10795
    %v10797 = vrot.slane %v10789, %v10796
    %v10799 = vunpack.c.l.s4 1983009808
    %v10800 = vunpack.c.0.s8 %v10799
    %v10801 = vlaneseq
    %v10802 = vshrl.u32 %v10801, 7
    %v10803 = vsub.s32 %v10800, %v10802
    %v10804 = vrot.slane %v10790, %v10803
    %v10805 = vcombine.low %v10742, %v10750
    %v10806 = vcombine.high %v10742, %v10750
    %v10808 = vunpack.c.l.s4 1983009808
    %v10809 = vunpack.c.0.s8 %v10808
    %v10810 = vlaneseq
    %v10811 = vshrl.u32 %v10810, 7
    %v10812 = vsub.s32 %v10809, %v10811
    %v10813 = vrot.slane %v10805, %v10812
    %v10815 = vunpack.c.l.s4 1983009808
    %v10816 = vunpack.c.0.s8 %v10815
    %v10817 = vlaneseq
    %v10818 = vshrl.u32 %v10817, 7
    %v10819 = vsub.s32 %v10816, %v10818
    %v10820 = vrot.slane %v10806, %v10819
    %v10821 = vcombine.low %v10746, %v10754
    %v10822 = vcombine.high %v10746, %v10754
    %v10824 = vunpack.c.l.s4 1983009808
    %v10825 = vunpack.c.0.s8 %v10824
    %v10826 = vlaneseq
    %v10827 = vshrl.u32 %v10826, 7
    %v10828 = vsub.s32 %v10825, %v10827
    %v10829 = vrot.slane %v10821, %v10828
    %v10831 = vunpack.c.l.s4 1983009808
    %v10832 = vunpack.c.0.s8 %v10831
    %v10833 = vlaneseq
    %v10834 = vshrl.u32 %v10833, 7
    %v10835 = vsub.s32 %v10832, %v10834
    %v10836 = vrot.slane %v10822, %v10835
    %v10837 = vcombine.low %v10781, %v10797
    %v10838 = vcombine.high %v10781, %v10797
    %v10840 = vunpack.c.l.s4 1934713408
    %v10841 = vunpack.c.0.s8 %v10840
    %v10842 = vlaneseq
    %v10843 = vshrl.u32 %v10842, 7
    %v10844 = vsub.s32 %v10841, %v10843
    %v10845 = vrot.slane %v10837, %v10844
    %v10847 = vunpack.c.l.s4 1934713408
    %v10848 = vunpack.c.0.s8 %v10847
    %v10849 = vlaneseq
    %v10850 = vshrl.u32 %v10849, 7
    %v10851 = vsub.s32 %v10848, %v10850
    %v10852 = vrot.slane %v10838, %v10851
    %v10853 = vcombine.low %v10788, %v10804
    %v10854 = vcombine.high %v10788, %v10804
    %v10856 = vunpack.c.l.s4 1934713408
    %v10857 = vunpack.c.0.s8 %v10856
    %v10858 = vlaneseq
    %v10859 = vshrl.u32 %v10858, 7
    %v10860 = vsub.s32 %v10857, %v10859
    %v10861 = vrot.slane %v10853, %v10860
    %v10863 = vunpack.c.l.s4 1934713408
    %v10864 = vunpack.c.0.s8 %v10863
    %v10865 = vlaneseq
    %v10866 = vshrl.u32 %v10865, 7
    %v10867 = vsub.s32 %v10864, %v10866
    %v10868 = vrot.slane %v10854, %v10867
    %v10869 = vcombine.low %v10813, %v10829
    %v10870 = vcombine.high %v10813, %v10829
    %v10872 = vunpack.c.l.s4 1934713408
    %v10873 = vunpack.c.0.s8 %v10872
    %v10874 = vlaneseq
    %v10875 = vshrl.u32 %v10874, 7
    %v10876 = vsub.s32 %v10873, %v10875
    %v10877 = vrot.slane %v10869, %v10876
    %v10879 = vunpack.c.l.s4 1934713408
    %v10880 = vunpack.c.0.s8 %v10879
    %v10881 = vlaneseq
    %v10882 = vshrl.u32 %v10881, 7
    %v10883 = vsub.s32 %v10880, %v10882
    %v10884 = vrot.slane %v10870, %v10883
    %v10885 = vcombine.low %v10820, %v10836
    %v10886 = vcombine.high %v10820, %v10836
    %v10888 = vunpack.c.l.s4 1934713408
    %v10889 = vunpack.c.0.s8 %v10888
    %v10890 = vlaneseq
    %v10891 = vshrl.u32 %v10890, 7
    %v10892 = vsub.s32 %v10889, %v10891
    %v10893 = vrot.slane %v10885, %v10892
    %v10895 = vunpack.c.l.s4 1934713408
    %v10896 = vunpack.c.0.s8 %v10895
    %v10897 = vlaneseq
    %v10898 = vshrl.u32 %v10897, 7
    %v10899 = vsub.s32 %v10896, %v10898
    %v10900 = vrot.slane %v10886, %v10899
    %v10901 = vcombine.low %v10845, %v10877
    %v10902 = vcombine.high %v10845, %v10877
    %v10903 = vcombine.low %v10852, %v10884
    %v10904 = vcombine.high %v10852, %v10884
    %v10905 = vcombine.low %v10861, %v10893
    %v10906 = vcombine.high %v10861, %v10893
    %v10907 = vcombine.low %v10868, %v10900
    %v10908 = vcombine.high %v10868, %v10900
    %v10909 = vcombine.low %v10728, %v10736
    %v10910 = vcombine.high %v10728, %v10736
    %v10912 = vunpack.c.l.s4 1983009808
    %v10913 = vunpack.c.0.s8 %v10912
    %v10914 = vlaneseq
    %v10915 = vshrl.u32 %v10914, 7
    %v10916 = vsub.s32 %v10913, %v10915
    %v10917 = vrot.slane %v10909, %v10916
    %v10919 = vunpack.c.l.s4 1983009808
    %v10920 = vunpack.c.0.s8 %v10919
    %v10921 = vlaneseq
    %v10922 = vshrl.u32 %v10921, 7
    %v10923 = vsub.s32 %v10920, %v10922
    %v10924 = vrot.slane %v10910, %v10923
    %v10925 = vcombine.low %v10732, %v10740
    %v10926 = vcombine.high %v10732, %v10740
    %v10928 = vunpack.c.l.s4 1983009808
    %v10929 = vunpack.c.0.s8 %v10928
    %v10930 = vlaneseq
    %v10931 = vshrl.u32 %v10930, 7
    %v10932 = vsub.s32 %v10929, %v10931
    %v10933 = vrot.slane %v10925, %v10932
    %v10935 = vunpack.c.l.s4 1983009808
    %v10936 = vunpack.c.0.s8 %v10935
    %v10937 = vlaneseq
    %v10938 = vshrl.u32 %v10937, 7
    %v10939 = vsub.s32 %v10936, %v10938
    %v10940 = vrot.slane %v10926, %v10939
    %v10941 = vcombine.low %v10744, %v10752
    %v10942 = vcombine.high %v10744, %v10752
    %v10944 = vunpack.c.l.s4 1983009808
    %v10945 = vunpack.c.0.s8 %v10944
    %v10946 = vlaneseq
    %v10947 = vshrl.u32 %v10946, 7
    %v10948 = vsub.s32 %v10945, %v10947
    %v10949 = vrot.slane %v10941, %v10948
    %v10951 = vunpack.c.l.s4 1983009808
    %v10952 = vunpack.c.0.s8 %v10951
    %v10953 = vlaneseq
    %v10954 = vshrl.u32 %v10953, 7
    %v10955 = vsub.s32 %v10952, %v10954
    %v10956 = vrot.slane %v10942, %v10955
    %v10957 = vcombine.low %v10748, %v10756
    %v10958 = vcombine.high %v10748, %v10756
    %v10960 = vunpack.c.l.s4 1983009808
    %v10961 = vunpack.c.0.s8 %v10960
    %v10962 = vlaneseq
    %v10963 = vshrl.u32 %v10962, 7
    %v10964 = vsub.s32 %v10961, %v10963
    %v10965 = vrot.slane %v10957, %v10964
    %v10967 = vunpack.c.l.s4 1983009808
    %v10968 = vunpack.c.0.s8 %v10967
    %v10969 = vlaneseq
    %v10970 = vshrl.u32 %v10969, 7
    %v10971 = vsub.s32 %v10968, %v10970
    %v10972 = vrot.slane %v10958, %v10971
    %v10973 = vcombine.low %v10917, %v10933
    %v10974 = vcombine.high %v10917, %v10933
    %v10976 = vunpack.c.l.s4 1934713408
    %v10977 = vunpack.c.0.s8 %v10976
    %v10978 = vlaneseq
    %v10979 = vshrl.u32 %v10978, 7
    %v10980 = vsub.s32 %v10977, %v10979
    %v10981 = vrot.slane %v10973, %v10980
    %v10983 = vunpack.c.l.s4 1934713408
    %v10984 = vunpack.c.0.s8 %v10983
    %v10985 = vlaneseq
    %v10986 = vshrl.u32 %v10985, 7
    %v10987 = vsub.s32 %v10984, %v10986
    %v10988 = vrot.slane %v10974, %v10987
    %v10989 = vcombine.low %v10924, %v10940
    %v10990 = vcombine.high %v10924, %v10940
    %v10992 = vunpack.c.l.s4 1934713408
    %v10993 = vunpack.c.0.s8 %v10992
    %v10994 = vlaneseq
    %v10995 = vshrl.u32 %v10994, 7
    %v10996 = vsub.s32 %v10993, %v10995
    %v10997 = vrot.slane %v10989, %v10996
    %v10999 = vunpack.c.l.s4 1934713408
    %v11000 = vunpack.c.0.s8 %v10999
    %v11001 = vlaneseq
    %v11002 = vshrl.u32 %v11001, 7
    %v11003 = vsub.s32 %v11000, %v11002
    %v11004 = vrot.slane %v10990, %v11003
    %v11005 = vcombine.low %v10949, %v10965
    %v11006 = vcombine.high %v10949, %v10965
    %v11008 = vunpack.c.l.s4 1934713408
    %v11009 = vunpack.c.0.s8 %v11008
    %v11010 = vlaneseq
    %v11011 = vshrl.u32 %v11010, 7
    %v11012 = vsub.s32 %v11009, %v11011
    %v11013 = vrot.slane %v11005, %v11012
    %v11015 = vunpack.c.l.s4 1934713408
    %v11016 = vunpack.c.0.s8 %v11015
    %v11017 = vlaneseq
    %v11018 = vshrl.u32 %v11017, 7
    %v11019 = vsub.s32 %v11016, %v11018
    %v11020 = vrot.slane %v11006, %v11019
    %v11021 = vcombine.low %v10956, %v10972
    %v11022 = vcombine.high %v10956, %v10972
    %v11024 = vunpack.c.l.s4 1934713408
    %v11025 = vunpack.c.0.s8 %v11024
    %v11026 = vlaneseq
    %v11027 = vshrl.u32 %v11026, 7
    %v11028 = vsub.s32 %v11025, %v11027
    %v11029 = vrot.slane %v11021, %v11028
    %v11031 = vunpack.c.l.s4 1934713408
    %v11032 = vunpack.c.0.s8 %v11031
    %v11033 = vlaneseq
    %v11034 = vshrl.u32 %v11033, 7
    %v11035 = vsub.s32 %v11032, %v11034
    %v11036 = vrot.slane %v11022, %v11035
    %v11037 = vcombine.low %v10981, %v11013
    %v11038 = vcombine.high %v10981, %v11013
    %v11039 = vcombine.low %v10988, %v11020
    %v11040 = vcombine.high %v10988, %v11020
    %v11041 = vcombine.low %v10997, %v11029
    %v11042 = vcombine.high %v10997, %v11029
    %v11043 = vcombine.low %v11004, %v11036
    %v11044 = vcombine.high %v11004, %v11036
    %11046 = vrot.lane.b32.xlu0 %v10902, 16
    %v11047 = vpop.permute.xlu0 %11046
    %11050 = vrot.lane.b32.xlu0 %v10903, 32
    %v11051 = vpop.permute.xlu0 %11050
    %11054 = vrot.lane.b32.xlu0 %v10904, 48
    %v11055 = vpop.permute.xlu0 %11054
    %11058 = vrot.lane.b32.xlu0 %v10905, 64
    %v11059 = vpop.permute.xlu0 %11058
    %11062 = vrot.lane.b32.xlu0 %v10906, 80
    %v11063 = vpop.permute.xlu0 %11062
    %11066 = vrot.lane.b32.xlu0 %v10907, 96
    %v11067 = vpop.permute.xlu0 %11066
    %11070 = vrot.lane.b32.xlu0 %v10908, 112
    %v11071 = vpop.permute.xlu0 %11070
    %11074 = vrot.lane.b32.xlu0 %v11038, 16
    %v11075 = vpop.permute.xlu0 %11074
    %11078 = vrot.lane.b32.xlu0 %v11039, 32
    %v11079 = vpop.permute.xlu0 %11078
    %11082 = vrot.lane.b32.xlu0 %v11040, 48
    %v11083 = vpop.permute.xlu0 %11082
    %11086 = vrot.lane.b32.xlu0 %v11041, 64
    %v11087 = vpop.permute.xlu0 %11086
    %11090 = vrot.lane.b32.xlu0 %v11042, 80
    %v11091 = vpop.permute.xlu0 %11090
    %11094 = vrot.lane.b32.xlu0 %v11043, 96
    %v11095 = vpop.permute.xlu0 %11094
    %11098 = vrot.lane.b32.xlu0 %v11044, 112
    %v11099 = vpop.permute.xlu0 %11098
    %v11101 = vsel %vm372, %v10901, %v11047
    %v11102 = vsel %vm374, %v11101, %v11051
    %v11103 = vsel %vm376, %v11102, %v11055
    %v11104 = vsel %vm378, %v11103, %v11059
    %v11105 = vsel %vm380, %v11104, %v11063
    %v11106 = vsel %vm382, %v11105, %v11067
    %v11107 = vsel %vm384, %v11106, %v11071
    %v11108 = vsel %vm372, %v11037, %v11075
    %v11109 = vsel %vm374, %v11108, %v11079
    %v11110 = vsel %vm376, %v11109, %v11083
    %v11111 = vsel %vm378, %v11110, %v11087
    %v11112 = vsel %vm380, %v11111, %v11091
    %v11113 = vsel %vm382, %v11112, %v11095
    %v11114 = vsel %vm384, %v11113, %v11099
    %v11115 = vld [vmem:[%s5327 + $0x2] sm:$0xff]
    %v11116 = vld [vmem:[%s5327 + $0xa] sm:$0xff]
    %v11117 = vld [vmem:[%s5327 + $0x1a] sm:$0xff]
    %v11118 = vld [vmem:[%s5327 + $0x22] sm:$0xff]
    %v11119 = vld [vmem:[%s5327 + $0x32] sm:$0xff]
    %v11120 = vld [vmem:[%s5327 + $0x3a] sm:$0xff]
    %v11121 = vld [vmem:[%s5327 + $0x4a] sm:$0xff]
    %v11122 = vld [vmem:[%s5327 + $0x52] sm:$0xff]
    %v11123 = vld [vmem:[%s5327 + $0x62] sm:$0xff]
    %v11124 = vld [vmem:[%s5327 + $0x6a] sm:$0xff]
    %v11125 = vld [vmem:[%s5327 + $0x7a] sm:$0xff]
    %v11126 = vld [vmem:[%s5327 + $0x82] sm:$0xff]
    %v11127 = vld [vmem:[%s5327 + $0x92] sm:$0xff]
    %v11128 = vld [vmem:[%s5327 + $0x9a] sm:$0xff]
    %v11129 = vld [vmem:[%s5327 + $0xaa] sm:$0xff]
    %v11130 = vld [vmem:[%s5327 + $0xb2] sm:$0xff]
    %v11131 = vcombine.low %v11115, %v11119
    %v11132 = vcombine.high %v11115, %v11119
    %v11134 = vunpack.c.l.s4 1983009808
    %v11135 = vunpack.c.0.s8 %v11134
    %v11136 = vlaneseq
    %v11137 = vshrl.u32 %v11136, 7
    %v11138 = vsub.s32 %v11135, %v11137
    %v11139 = vrot.slane %v11131, %v11138
    %v11141 = vunpack.c.l.s4 1983009808
    %v11142 = vunpack.c.0.s8 %v11141
    %v11143 = vlaneseq
    %v11144 = vshrl.u32 %v11143, 7
    %v11145 = vsub.s32 %v11142, %v11144
    %v11146 = vrot.slane %v11132, %v11145
    %v11147 = vcombine.low %v11117, %v11121
    %v11148 = vcombine.high %v11117, %v11121
    %v11150 = vunpack.c.l.s4 1983009808
    %v11151 = vunpack.c.0.s8 %v11150
    %v11152 = vlaneseq
    %v11153 = vshrl.u32 %v11152, 7
    %v11154 = vsub.s32 %v11151, %v11153
    %v11155 = vrot.slane %v11147, %v11154
    %v11157 = vunpack.c.l.s4 1983009808
    %v11158 = vunpack.c.0.s8 %v11157
    %v11159 = vlaneseq
    %v11160 = vshrl.u32 %v11159, 7
    %v11161 = vsub.s32 %v11158, %v11160
    %v11162 = vrot.slane %v11148, %v11161
    %v11163 = vcombine.low %v11123, %v11127
    %v11164 = vcombine.high %v11123, %v11127
    %v11166 = vunpack.c.l.s4 1983009808
    %v11167 = vunpack.c.0.s8 %v11166
    %v11168 = vlaneseq
    %v11169 = vshrl.u32 %v11168, 7
    %v11170 = vsub.s32 %v11167, %v11169
    %v11171 = vrot.slane %v11163, %v11170
    %v11173 = vunpack.c.l.s4 1983009808
    %v11174 = vunpack.c.0.s8 %v11173
    %v11175 = vlaneseq
    %v11176 = vshrl.u32 %v11175, 7
    %v11177 = vsub.s32 %v11174, %v11176
    %v11178 = vrot.slane %v11164, %v11177
    %v11179 = vcombine.low %v11125, %v11129
    %v11180 = vcombine.high %v11125, %v11129
    %v11182 = vunpack.c.l.s4 1983009808
    %v11183 = vunpack.c.0.s8 %v11182
    %v11184 = vlaneseq
    %v11185 = vshrl.u32 %v11184, 7
    %v11186 = vsub.s32 %v11183, %v11185
    %v11187 = vrot.slane %v11179, %v11186
    %v11189 = vunpack.c.l.s4 1983009808
    %v11190 = vunpack.c.0.s8 %v11189
    %v11191 = vlaneseq
    %v11192 = vshrl.u32 %v11191, 7
    %v11193 = vsub.s32 %v11190, %v11192
    %v11194 = vrot.slane %v11180, %v11193
    %v11195 = vcombine.low %v11139, %v11155
    %v11196 = vcombine.high %v11139, %v11155
    %v11198 = vunpack.c.l.s4 1934713408
    %v11199 = vunpack.c.0.s8 %v11198
    %v11200 = vlaneseq
    %v11201 = vshrl.u32 %v11200, 7
    %v11202 = vsub.s32 %v11199, %v11201
    %v11203 = vrot.slane %v11195, %v11202
    %v11205 = vunpack.c.l.s4 1934713408
    %v11206 = vunpack.c.0.s8 %v11205
    %v11207 = vlaneseq
    %v11208 = vshrl.u32 %v11207, 7
    %v11209 = vsub.s32 %v11206, %v11208
    %v11210 = vrot.slane %v11196, %v11209
    %v11211 = vcombine.low %v11146, %v11162
    %v11212 = vcombine.high %v11146, %v11162
    %v11214 = vunpack.c.l.s4 1934713408
    %v11215 = vunpack.c.0.s8 %v11214
    %v11216 = vlaneseq
    %v11217 = vshrl.u32 %v11216, 7
    %v11218 = vsub.s32 %v11215, %v11217
    %v11219 = vrot.slane %v11211, %v11218
    %v11221 = vunpack.c.l.s4 1934713408
    %v11222 = vunpack.c.0.s8 %v11221
    %v11223 = vlaneseq
    %v11224 = vshrl.u32 %v11223, 7
    %v11225 = vsub.s32 %v11222, %v11224
    %v11226 = vrot.slane %v11212, %v11225
    %v11227 = vcombine.low %v11171, %v11187
    %v11228 = vcombine.high %v11171, %v11187
    %v11230 = vunpack.c.l.s4 1934713408
    %v11231 = vunpack.c.0.s8 %v11230
    %v11232 = vlaneseq
    %v11233 = vshrl.u32 %v11232, 7
    %v11234 = vsub.s32 %v11231, %v11233
    %v11235 = vrot.slane %v11227, %v11234
    %v11237 = vunpack.c.l.s4 1934713408
    %v11238 = vunpack.c.0.s8 %v11237
    %v11239 = vlaneseq
    %v11240 = vshrl.u32 %v11239, 7
    %v11241 = vsub.s32 %v11238, %v11240
    %v11242 = vrot.slane %v11228, %v11241
    %v11243 = vcombine.low %v11178, %v11194
    %v11244 = vcombine.high %v11178, %v11194
    %v11246 = vunpack.c.l.s4 1934713408
    %v11247 = vunpack.c.0.s8 %v11246
    %v11248 = vlaneseq
    %v11249 = vshrl.u32 %v11248, 7
    %v11250 = vsub.s32 %v11247, %v11249
    %v11251 = vrot.slane %v11243, %v11250
    %v11253 = vunpack.c.l.s4 1934713408
    %v11254 = vunpack.c.0.s8 %v11253
    %v11255 = vlaneseq
    %v11256 = vshrl.u32 %v11255, 7
    %v11257 = vsub.s32 %v11254, %v11256
    %v11258 = vrot.slane %v11244, %v11257
    %v11259 = vcombine.low %v11203, %v11235
    %v11260 = vcombine.high %v11203, %v11235
    %v11261 = vcombine.low %v11210, %v11242
    %v11262 = vcombine.high %v11210, %v11242
    %v11263 = vcombine.low %v11219, %v11251
    %v11264 = vcombine.high %v11219, %v11251
    %v11265 = vcombine.low %v11226, %v11258
    %v11266 = vcombine.high %v11226, %v11258
    %v11267 = vcombine.low %v11116, %v11120
    %v11268 = vcombine.high %v11116, %v11120
    %v11270 = vunpack.c.l.s4 1983009808
    %v11271 = vunpack.c.0.s8 %v11270
    %v11272 = vlaneseq
    %v11273 = vshrl.u32 %v11272, 7
    %v11274 = vsub.s32 %v11271, %v11273
    %v11275 = vrot.slane %v11267, %v11274
    %v11277 = vunpack.c.l.s4 1983009808
    %v11278 = vunpack.c.0.s8 %v11277
    %v11279 = vlaneseq
    %v11280 = vshrl.u32 %v11279, 7
    %v11281 = vsub.s32 %v11278, %v11280
    %v11282 = vrot.slane %v11268, %v11281
    %v11283 = vcombine.low %v11118, %v11122
    %v11284 = vcombine.high %v11118, %v11122
    %v11286 = vunpack.c.l.s4 1983009808
    %v11287 = vunpack.c.0.s8 %v11286
    %v11288 = vlaneseq
    %v11289 = vshrl.u32 %v11288, 7
    %v11290 = vsub.s32 %v11287, %v11289
    %v11291 = vrot.slane %v11283, %v11290
    %v11293 = vunpack.c.l.s4 1983009808
    %v11294 = vunpack.c.0.s8 %v11293
    %v11295 = vlaneseq
    %v11296 = vshrl.u32 %v11295, 7
    %v11297 = vsub.s32 %v11294, %v11296
    %v11298 = vrot.slane %v11284, %v11297
    %v11299 = vcombine.low %v11124, %v11128
    %v11300 = vcombine.high %v11124, %v11128
    %v11302 = vunpack.c.l.s4 1983009808
    %v11303 = vunpack.c.0.s8 %v11302
    %v11304 = vlaneseq
    %v11305 = vshrl.u32 %v11304, 7
    %v11306 = vsub.s32 %v11303, %v11305
    %v11307 = vrot.slane %v11299, %v11306
    %v11309 = vunpack.c.l.s4 1983009808
    %v11310 = vunpack.c.0.s8 %v11309
    %v11311 = vlaneseq
    %v11312 = vshrl.u32 %v11311, 7
    %v11313 = vsub.s32 %v11310, %v11312
    %v11314 = vrot.slane %v11300, %v11313
    %v11315 = vcombine.low %v11126, %v11130
    %v11316 = vcombine.high %v11126, %v11130
    %v11318 = vunpack.c.l.s4 1983009808
    %v11319 = vunpack.c.0.s8 %v11318
    %v11320 = vlaneseq
    %v11321 = vshrl.u32 %v11320, 7
    %v11322 = vsub.s32 %v11319, %v11321
    %v11323 = vrot.slane %v11315, %v11322
    %v11325 = vunpack.c.l.s4 1983009808
    %v11326 = vunpack.c.0.s8 %v11325
    %v11327 = vlaneseq
    %v11328 = vshrl.u32 %v11327, 7
    %v11329 = vsub.s32 %v11326, %v11328
    %v11330 = vrot.slane %v11316, %v11329
    %v11331 = vcombine.low %v11275, %v11291
    %v11332 = vcombine.high %v11275, %v11291
    %v11334 = vunpack.c.l.s4 1934713408
    %v11335 = vunpack.c.0.s8 %v11334
    %v11336 = vlaneseq
    %v11337 = vshrl.u32 %v11336, 7
    %v11338 = vsub.s32 %v11335, %v11337
    %v11339 = vrot.slane %v11331, %v11338
    %v11341 = vunpack.c.l.s4 1934713408
    %v11342 = vunpack.c.0.s8 %v11341
    %v11343 = vlaneseq
    %v11344 = vshrl.u32 %v11343, 7
    %v11345 = vsub.s32 %v11342, %v11344
    %v11346 = vrot.slane %v11332, %v11345
    %v11347 = vcombine.low %v11282, %v11298
    %v11348 = vcombine.high %v11282, %v11298
    %v11350 = vunpack.c.l.s4 1934713408
    %v11351 = vunpack.c.0.s8 %v11350
    %v11352 = vlaneseq
    %v11353 = vshrl.u32 %v11352, 7
    %v11354 = vsub.s32 %v11351, %v11353
    %v11355 = vrot.slane %v11347, %v11354
    %v11357 = vunpack.c.l.s4 1934713408
    %v11358 = vunpack.c.0.s8 %v11357
    %v11359 = vlaneseq
    %v11360 = vshrl.u32 %v11359, 7
    %v11361 = vsub.s32 %v11358, %v11360
    %v11362 = vrot.slane %v11348, %v11361
    %v11363 = vcombine.low %v11307, %v11323
    %v11364 = vcombine.high %v11307, %v11323
    %v11366 = vunpack.c.l.s4 1934713408
    %v11367 = vunpack.c.0.s8 %v11366
    %v11368 = vlaneseq
    %v11369 = vshrl.u32 %v11368, 7
    %v11370 = vsub.s32 %v11367, %v11369
    %v11371 = vrot.slane %v11363, %v11370
    %v11373 = vunpack.c.l.s4 1934713408
    %v11374 = vunpack.c.0.s8 %v11373
    %v11375 = vlaneseq
    %v11376 = vshrl.u32 %v11375, 7
    %v11377 = vsub.s32 %v11374, %v11376
    %v11378 = vrot.slane %v11364, %v11377
    %v11379 = vcombine.low %v11314, %v11330
    %v11380 = vcombine.high %v11314, %v11330
    %v11382 = vunpack.c.l.s4 1934713408
    %v11383 = vunpack.c.0.s8 %v11382
    %v11384 = vlaneseq
    %v11385 = vshrl.u32 %v11384, 7
    %v11386 = vsub.s32 %v11383, %v11385
    %v11387 = vrot.slane %v11379, %v11386
    %v11389 = vunpack.c.l.s4 1934713408
    %v11390 = vunpack.c.0.s8 %v11389
    %v11391 = vlaneseq
    %v11392 = vshrl.u32 %v11391, 7
    %v11393 = vsub.s32 %v11390, %v11392
    %v11394 = vrot.slane %v11380, %v11393
    %v11395 = vcombine.low %v11339, %v11371
    %v11396 = vcombine.high %v11339, %v11371
    %v11397 = vcombine.low %v11346, %v11378
    %v11398 = vcombine.high %v11346, %v11378
    %v11399 = vcombine.low %v11355, %v11387
    %v11400 = vcombine.high %v11355, %v11387
    %v11401 = vcombine.low %v11362, %v11394
    %v11402 = vcombine.high %v11362, %v11394
    %11404 = vrot.lane.b32.xlu0 %v11260, 16
    %v11405 = vpop.permute.xlu0 %11404
    %11408 = vrot.lane.b32.xlu0 %v11261, 32
    %v11409 = vpop.permute.xlu0 %11408
    %11412 = vrot.lane.b32.xlu0 %v11262, 48
    %v11413 = vpop.permute.xlu0 %11412
    %11416 = vrot.lane.b32.xlu0 %v11263, 64
    %v11417 = vpop.permute.xlu0 %11416
    %11420 = vrot.lane.b32.xlu0 %v11264, 80
    %v11421 = vpop.permute.xlu0 %11420
    %11424 = vrot.lane.b32.xlu0 %v11265, 96
    %v11425 = vpop.permute.xlu0 %11424
    %11428 = vrot.lane.b32.xlu0 %v11266, 112
    %v11429 = vpop.permute.xlu0 %11428
    %11432 = vrot.lane.b32.xlu0 %v11396, 16
    %v11433 = vpop.permute.xlu0 %11432
    %11436 = vrot.lane.b32.xlu0 %v11397, 32
    %v11437 = vpop.permute.xlu0 %11436
    %11440 = vrot.lane.b32.xlu0 %v11398, 48
    %v11441 = vpop.permute.xlu0 %11440
    %11444 = vrot.lane.b32.xlu0 %v11399, 64
    %v11445 = vpop.permute.xlu0 %11444
    %11448 = vrot.lane.b32.xlu0 %v11400, 80
    %v11449 = vpop.permute.xlu0 %11448
    %11452 = vrot.lane.b32.xlu0 %v11401, 96
    %v11453 = vpop.permute.xlu0 %11452
    %11456 = vrot.lane.b32.xlu0 %v11402, 112
    %v11457 = vpop.permute.xlu0 %11456
    %v11459 = vsel %vm372, %v11259, %v11405
    %v11460 = vsel %vm374, %v11459, %v11409
    %v11461 = vsel %vm376, %v11460, %v11413
    %v11462 = vsel %vm378, %v11461, %v11417
    %v11463 = vsel %vm380, %v11462, %v11421
    %v11464 = vsel %vm382, %v11463, %v11425
    %v11465 = vsel %vm384, %v11464, %v11429
    %v11466 = vsel %vm372, %v11395, %v11433
    %v11467 = vsel %vm374, %v11466, %v11437
    %v11468 = vsel %vm376, %v11467, %v11441
    %v11469 = vsel %vm378, %v11468, %v11445
    %v11470 = vsel %vm380, %v11469, %v11449
    %v11471 = vsel %vm382, %v11470, %v11453
    %v11472 = vsel %vm384, %v11471, %v11457
    %11489 = vrot.lane.b32.xlu0 %v11115, 127
    %v11490 = vpop.permute.xlu0 %11489
    %11491 = vrot.lane.b32.xlu0 %v11116, 127
    %v11492 = vpop.permute.xlu0 %11491
    %11493 = vrot.lane.b32.xlu0 %v11117, 127
    %v11494 = vpop.permute.xlu0 %11493
    %11495 = vrot.lane.b32.xlu0 %v11118, 127
    %v11496 = vpop.permute.xlu0 %11495
    %11497 = vrot.lane.b32.xlu0 %v11119, 127
    %v11498 = vpop.permute.xlu0 %11497
    %11499 = vrot.lane.b32.xlu0 %v11120, 127
    %v11500 = vpop.permute.xlu0 %11499
    %11501 = vrot.lane.b32.xlu0 %v11121, 127
    %v11502 = vpop.permute.xlu0 %11501
    %11503 = vrot.lane.b32.xlu0 %v11122, 127
    %v11504 = vpop.permute.xlu0 %11503
    %11505 = vrot.lane.b32.xlu0 %v11123, 127
    %v11506 = vpop.permute.xlu0 %11505
    %11507 = vrot.lane.b32.xlu0 %v11124, 127
    %v11508 = vpop.permute.xlu0 %11507
    %11509 = vrot.lane.b32.xlu0 %v11125, 127
    %v11510 = vpop.permute.xlu0 %11509
    %11511 = vrot.lane.b32.xlu0 %v11126, 127
    %v11512 = vpop.permute.xlu0 %11511
    %11513 = vrot.lane.b32.xlu0 %v11127, 127
    %v11514 = vpop.permute.xlu0 %11513
    %11515 = vrot.lane.b32.xlu0 %v11128, 127
    %v11516 = vpop.permute.xlu0 %11515
    %11517 = vrot.lane.b32.xlu0 %v11129, 127
    %v11518 = vpop.permute.xlu0 %11517
    %11519 = vrot.lane.b32.xlu0 %v11130, 127
    %v11520 = vpop.permute.xlu0 %11519
    %v11537 = vcombine.low %v11490, %v11498
    %v11538 = vcombine.high %v11490, %v11498
    %v11540 = vunpack.c.l.s4 1983009808
    %v11541 = vunpack.c.0.s8 %v11540
    %v11542 = vlaneseq
    %v11543 = vshrl.u32 %v11542, 7
    %v11544 = vsub.s32 %v11541, %v11543
    %v11545 = vrot.slane %v11537, %v11544
    %v11547 = vunpack.c.l.s4 1983009808
    %v11548 = vunpack.c.0.s8 %v11547
    %v11549 = vlaneseq
    %v11550 = vshrl.u32 %v11549, 7
    %v11551 = vsub.s32 %v11548, %v11550
    %v11552 = vrot.slane %v11538, %v11551
    %v11553 = vcombine.low %v11494, %v11502
    %v11554 = vcombine.high %v11494, %v11502
    %v11556 = vunpack.c.l.s4 1983009808
    %v11557 = vunpack.c.0.s8 %v11556
    %v11558 = vlaneseq
    %v11559 = vshrl.u32 %v11558, 7
    %v11560 = vsub.s32 %v11557, %v11559
    %v11561 = vrot.slane %v11553, %v11560
    %v11563 = vunpack.c.l.s4 1983009808
    %v11564 = vunpack.c.0.s8 %v11563
    %v11565 = vlaneseq
    %v11566 = vshrl.u32 %v11565, 7
    %v11567 = vsub.s32 %v11564, %v11566
    %v11568 = vrot.slane %v11554, %v11567
    %v11569 = vcombine.low %v11506, %v11514
    %v11570 = vcombine.high %v11506, %v11514
    %v11572 = vunpack.c.l.s4 1983009808
    %v11573 = vunpack.c.0.s8 %v11572
    %v11574 = vlaneseq
    %v11575 = vshrl.u32 %v11574, 7
    %v11576 = vsub.s32 %v11573, %v11575
    %v11577 = vrot.slane %v11569, %v11576
    %v11579 = vunpack.c.l.s4 1983009808
    %v11580 = vunpack.c.0.s8 %v11579
    %v11581 = vlaneseq
    %v11582 = vshrl.u32 %v11581, 7
    %v11583 = vsub.s32 %v11580, %v11582
    %v11584 = vrot.slane %v11570, %v11583
    %v11585 = vcombine.low %v11510, %v11518
    %v11586 = vcombine.high %v11510, %v11518
    %v11588 = vunpack.c.l.s4 1983009808
    %v11589 = vunpack.c.0.s8 %v11588
    %v11590 = vlaneseq
    %v11591 = vshrl.u32 %v11590, 7
    %v11592 = vsub.s32 %v11589, %v11591
    %v11593 = vrot.slane %v11585, %v11592
    %v11595 = vunpack.c.l.s4 1983009808
    %v11596 = vunpack.c.0.s8 %v11595
    %v11597 = vlaneseq
    %v11598 = vshrl.u32 %v11597, 7
    %v11599 = vsub.s32 %v11596, %v11598
    %v11600 = vrot.slane %v11586, %v11599
    %v11601 = vcombine.low %v11545, %v11561
    %v11602 = vcombine.high %v11545, %v11561
    %v11604 = vunpack.c.l.s4 1934713408
    %v11605 = vunpack.c.0.s8 %v11604
    %v11606 = vlaneseq
    %v11607 = vshrl.u32 %v11606, 7
    %v11608 = vsub.s32 %v11605, %v11607
    %v11609 = vrot.slane %v11601, %v11608
    %v11611 = vunpack.c.l.s4 1934713408
    %v11612 = vunpack.c.0.s8 %v11611
    %v11613 = vlaneseq
    %v11614 = vshrl.u32 %v11613, 7
    %v11615 = vsub.s32 %v11612, %v11614
    %v11616 = vrot.slane %v11602, %v11615
    %v11617 = vcombine.low %v11552, %v11568
    %v11618 = vcombine.high %v11552, %v11568
    %v11620 = vunpack.c.l.s4 1934713408
    %v11621 = vunpack.c.0.s8 %v11620
    %v11622 = vlaneseq
    %v11623 = vshrl.u32 %v11622, 7
    %v11624 = vsub.s32 %v11621, %v11623
    %v11625 = vrot.slane %v11617, %v11624
    %v11627 = vunpack.c.l.s4 1934713408
    %v11628 = vunpack.c.0.s8 %v11627
    %v11629 = vlaneseq
    %v11630 = vshrl.u32 %v11629, 7
    %v11631 = vsub.s32 %v11628, %v11630
    %v11632 = vrot.slane %v11618, %v11631
    %v11633 = vcombine.low %v11577, %v11593
    %v11634 = vcombine.high %v11577, %v11593
    %v11636 = vunpack.c.l.s4 1934713408
    %v11637 = vunpack.c.0.s8 %v11636
    %v11638 = vlaneseq
    %v11639 = vshrl.u32 %v11638, 7
    %v11640 = vsub.s32 %v11637, %v11639
    %v11641 = vrot.slane %v11633, %v11640
    %v11643 = vunpack.c.l.s4 1934713408
    %v11644 = vunpack.c.0.s8 %v11643
    %v11645 = vlaneseq
    %v11646 = vshrl.u32 %v11645, 7
    %v11647 = vsub.s32 %v11644, %v11646
    %v11648 = vrot.slane %v11634, %v11647
    %v11649 = vcombine.low %v11584, %v11600
    %v11650 = vcombine.high %v11584, %v11600
    %v11652 = vunpack.c.l.s4 1934713408
    %v11653 = vunpack.c.0.s8 %v11652
    %v11654 = vlaneseq
    %v11655 = vshrl.u32 %v11654, 7
    %v11656 = vsub.s32 %v11653, %v11655
    %v11657 = vrot.slane %v11649, %v11656
    %v11659 = vunpack.c.l.s4 1934713408
    %v11660 = vunpack.c.0.s8 %v11659
    %v11661 = vlaneseq
    %v11662 = vshrl.u32 %v11661, 7
    %v11663 = vsub.s32 %v11660, %v11662
    %v11664 = vrot.slane %v11650, %v11663
    %v11665 = vcombine.low %v11609, %v11641
    %v11666 = vcombine.high %v11609, %v11641
    %v11667 = vcombine.low %v11616, %v11648
    %v11668 = vcombine.high %v11616, %v11648
    %v11669 = vcombine.low %v11625, %v11657
    %v11670 = vcombine.high %v11625, %v11657
    %v11671 = vcombine.low %v11632, %v11664
    %v11672 = vcombine.high %v11632, %v11664
    %v11673 = vcombine.low %v11492, %v11500
    %v11674 = vcombine.high %v11492, %v11500
    %v11676 = vunpack.c.l.s4 1983009808
    %v11677 = vunpack.c.0.s8 %v11676
    %v11678 = vlaneseq
    %v11679 = vshrl.u32 %v11678, 7
    %v11680 = vsub.s32 %v11677, %v11679
    %v11681 = vrot.slane %v11673, %v11680
    %v11683 = vunpack.c.l.s4 1983009808
    %v11684 = vunpack.c.0.s8 %v11683
    %v11685 = vlaneseq
    %v11686 = vshrl.u32 %v11685, 7
    %v11687 = vsub.s32 %v11684, %v11686
    %v11688 = vrot.slane %v11674, %v11687
    %v11689 = vcombine.low %v11496, %v11504
    %v11690 = vcombine.high %v11496, %v11504
    %v11692 = vunpack.c.l.s4 1983009808
    %v11693 = vunpack.c.0.s8 %v11692
    %v11694 = vlaneseq
    %v11695 = vshrl.u32 %v11694, 7
    %v11696 = vsub.s32 %v11693, %v11695
    %v11697 = vrot.slane %v11689, %v11696
    %v11699 = vunpack.c.l.s4 1983009808
    %v11700 = vunpack.c.0.s8 %v11699
    %v11701 = vlaneseq
    %v11702 = vshrl.u32 %v11701, 7
    %v11703 = vsub.s32 %v11700, %v11702
    %v11704 = vrot.slane %v11690, %v11703
    %v11705 = vcombine.low %v11508, %v11516
    %v11706 = vcombine.high %v11508, %v11516
    %v11708 = vunpack.c.l.s4 1983009808
    %v11709 = vunpack.c.0.s8 %v11708
    %v11710 = vlaneseq
    %v11711 = vshrl.u32 %v11710, 7
    %v11712 = vsub.s32 %v11709, %v11711
    %v11713 = vrot.slane %v11705, %v11712
    %v11715 = vunpack.c.l.s4 1983009808
    %v11716 = vunpack.c.0.s8 %v11715
    %v11717 = vlaneseq
    %v11718 = vshrl.u32 %v11717, 7
    %v11719 = vsub.s32 %v11716, %v11718
    %v11720 = vrot.slane %v11706, %v11719
    %v11721 = vcombine.low %v11512, %v11520
    %v11722 = vcombine.high %v11512, %v11520
    %v11724 = vunpack.c.l.s4 1983009808
    %v11725 = vunpack.c.0.s8 %v11724
    %v11726 = vlaneseq
    %v11727 = vshrl.u32 %v11726, 7
    %v11728 = vsub.s32 %v11725, %v11727
    %v11729 = vrot.slane %v11721, %v11728
    %v11731 = vunpack.c.l.s4 1983009808
    %v11732 = vunpack.c.0.s8 %v11731
    %v11733 = vlaneseq
    %v11734 = vshrl.u32 %v11733, 7
    %v11735 = vsub.s32 %v11732, %v11734
    %v11736 = vrot.slane %v11722, %v11735
    %v11737 = vcombine.low %v11681, %v11697
    %v11738 = vcombine.high %v11681, %v11697
    %v11740 = vunpack.c.l.s4 1934713408
    %v11741 = vunpack.c.0.s8 %v11740
    %v11742 = vlaneseq
    %v11743 = vshrl.u32 %v11742, 7
    %v11744 = vsub.s32 %v11741, %v11743
    %v11745 = vrot.slane %v11737, %v11744
    %v11747 = vunpack.c.l.s4 1934713408
    %v11748 = vunpack.c.0.s8 %v11747
    %v11749 = vlaneseq
    %v11750 = vshrl.u32 %v11749, 7
    %v11751 = vsub.s32 %v11748, %v11750
    %v11752 = vrot.slane %v11738, %v11751
    %v11753 = vcombine.low %v11688, %v11704
    %v11754 = vcombine.high %v11688, %v11704
    %v11756 = vunpack.c.l.s4 1934713408
    %v11757 = vunpack.c.0.s8 %v11756
    %v11758 = vlaneseq
    %v11759 = vshrl.u32 %v11758, 7
    %v11760 = vsub.s32 %v11757, %v11759
    %v11761 = vrot.slane %v11753, %v11760
    %v11763 = vunpack.c.l.s4 1934713408
    %v11764 = vunpack.c.0.s8 %v11763
    %v11765 = vlaneseq
    %v11766 = vshrl.u32 %v11765, 7
    %v11767 = vsub.s32 %v11764, %v11766
    %v11768 = vrot.slane %v11754, %v11767
    %v11769 = vcombine.low %v11713, %v11729
    %v11770 = vcombine.high %v11713, %v11729
    %v11772 = vunpack.c.l.s4 1934713408
    %v11773 = vunpack.c.0.s8 %v11772
    %v11774 = vlaneseq
    %v11775 = vshrl.u32 %v11774, 7
    %v11776 = vsub.s32 %v11773, %v11775
    %v11777 = vrot.slane %v11769, %v11776
    %v11779 = vunpack.c.l.s4 1934713408
    %v11780 = vunpack.c.0.s8 %v11779
    %v11781 = vlaneseq
    %v11782 = vshrl.u32 %v11781, 7
    %v11783 = vsub.s32 %v11780, %v11782
    %v11784 = vrot.slane %v11770, %v11783
    %v11785 = vcombine.low %v11720, %v11736
    %v11786 = vcombine.high %v11720, %v11736
    %v11788 = vunpack.c.l.s4 1934713408
    %v11789 = vunpack.c.0.s8 %v11788
    %v11790 = vlaneseq
    %v11791 = vshrl.u32 %v11790, 7
    %v11792 = vsub.s32 %v11789, %v11791
    %v11793 = vrot.slane %v11785, %v11792
    %v11795 = vunpack.c.l.s4 1934713408
    %v11796 = vunpack.c.0.s8 %v11795
    %v11797 = vlaneseq
    %v11798 = vshrl.u32 %v11797, 7
    %v11799 = vsub.s32 %v11796, %v11798
    %v11800 = vrot.slane %v11786, %v11799
    %v11801 = vcombine.low %v11745, %v11777
    %v11802 = vcombine.high %v11745, %v11777
    %v11803 = vcombine.low %v11752, %v11784
    %v11804 = vcombine.high %v11752, %v11784
    %v11805 = vcombine.low %v11761, %v11793
    %v11806 = vcombine.high %v11761, %v11793
    %v11807 = vcombine.low %v11768, %v11800
    %v11808 = vcombine.high %v11768, %v11800
    %11810 = vrot.lane.b32.xlu0 %v11666, 16
    %v11811 = vpop.permute.xlu0 %11810
    %11814 = vrot.lane.b32.xlu0 %v11667, 32
    %v11815 = vpop.permute.xlu0 %11814
    %11818 = vrot.lane.b32.xlu0 %v11668, 48
    %v11819 = vpop.permute.xlu0 %11818
    %11822 = vrot.lane.b32.xlu0 %v11669, 64
    %v11823 = vpop.permute.xlu0 %11822
    %11826 = vrot.lane.b32.xlu0 %v11670, 80
    %v11827 = vpop.permute.xlu0 %11826
    %11830 = vrot.lane.b32.xlu0 %v11671, 96
    %v11831 = vpop.permute.xlu0 %11830
    %11834 = vrot.lane.b32.xlu0 %v11672, 112
    %v11835 = vpop.permute.xlu0 %11834
    %11838 = vrot.lane.b32.xlu0 %v11802, 16
    %v11839 = vpop.permute.xlu0 %11838
    %11842 = vrot.lane.b32.xlu0 %v11803, 32
    %v11843 = vpop.permute.xlu0 %11842
    %11846 = vrot.lane.b32.xlu0 %v11804, 48
    %v11847 = vpop.permute.xlu0 %11846
    %11850 = vrot.lane.b32.xlu0 %v11805, 64
    %v11851 = vpop.permute.xlu0 %11850
    %11854 = vrot.lane.b32.xlu0 %v11806, 80
    %v11855 = vpop.permute.xlu0 %11854
    %11858 = vrot.lane.b32.xlu0 %v11807, 96
    %v11859 = vpop.permute.xlu0 %11858
    %11862 = vrot.lane.b32.xlu0 %v11808, 112
    %v11863 = vpop.permute.xlu0 %11862
    %v11865 = vsel %vm372, %v11665, %v11811
    %v11866 = vsel %vm374, %v11865, %v11815
    %v11867 = vsel %vm376, %v11866, %v11819
    %v11868 = vsel %vm378, %v11867, %v11823
    %v11869 = vsel %vm380, %v11868, %v11827
    %v11870 = vsel %vm382, %v11869, %v11831
    %v11871 = vsel %vm384, %v11870, %v11835
    %v11872 = vsel %vm372, %v11801, %v11839
    %v11873 = vsel %vm374, %v11872, %v11843
    %v11874 = vsel %vm376, %v11873, %v11847
    %v11875 = vsel %vm378, %v11874, %v11851
    %v11876 = vsel %vm380, %v11875, %v11855
    %v11877 = vsel %vm382, %v11876, %v11859
    %v11878 = vsel %vm384, %v11877, %v11863
    %11879 = vrot.lane.b32.xlu0 %v11115, 126
    %v11880 = vpop.permute.xlu0 %11879
    %11881 = vrot.lane.b32.xlu0 %v11116, 126
    %v11882 = vpop.permute.xlu0 %11881
    %11883 = vrot.lane.b32.xlu0 %v11117, 126
    %v11884 = vpop.permute.xlu0 %11883
    %11885 = vrot.lane.b32.xlu0 %v11118, 126
    %v11886 = vpop.permute.xlu0 %11885
    %11887 = vrot.lane.b32.xlu0 %v11119, 126
    %v11888 = vpop.permute.xlu0 %11887
    %11889 = vrot.lane.b32.xlu0 %v11120, 126
    %v11890 = vpop.permute.xlu0 %11889
    %11891 = vrot.lane.b32.xlu0 %v11121, 126
    %v11892 = vpop.permute.xlu0 %11891
    %11893 = vrot.lane.b32.xlu0 %v11122, 126
    %v11894 = vpop.permute.xlu0 %11893
    %11895 = vrot.lane.b32.xlu0 %v11123, 126
    %v11896 = vpop.permute.xlu0 %11895
    %11897 = vrot.lane.b32.xlu0 %v11124, 126
    %v11898 = vpop.permute.xlu0 %11897
    %11899 = vrot.lane.b32.xlu0 %v11125, 126
    %v11900 = vpop.permute.xlu0 %11899
    %11901 = vrot.lane.b32.xlu0 %v11126, 126
    %v11902 = vpop.permute.xlu0 %11901
    %11903 = vrot.lane.b32.xlu0 %v11127, 126
    %v11904 = vpop.permute.xlu0 %11903
    %11905 = vrot.lane.b32.xlu0 %v11128, 126
    %v11906 = vpop.permute.xlu0 %11905
    %11907 = vrot.lane.b32.xlu0 %v11129, 126
    %v11908 = vpop.permute.xlu0 %11907
    %11909 = vrot.lane.b32.xlu0 %v11130, 126
    %v11910 = vpop.permute.xlu0 %11909
    %v11927 = vcombine.low %v11880, %v11888
    %v11928 = vcombine.high %v11880, %v11888
    %v11930 = vunpack.c.l.s4 1983009808
    %v11931 = vunpack.c.0.s8 %v11930
    %v11932 = vlaneseq
    %v11933 = vshrl.u32 %v11932, 7
    %v11934 = vsub.s32 %v11931, %v11933
    %v11935 = vrot.slane %v11927, %v11934
    %v11937 = vunpack.c.l.s4 1983009808
    %v11938 = vunpack.c.0.s8 %v11937
    %v11939 = vlaneseq
    %v11940 = vshrl.u32 %v11939, 7
    %v11941 = vsub.s32 %v11938, %v11940
    %v11942 = vrot.slane %v11928, %v11941
    %v11943 = vcombine.low %v11884, %v11892
    %v11944 = vcombine.high %v11884, %v11892
    %v11946 = vunpack.c.l.s4 1983009808
    %v11947 = vunpack.c.0.s8 %v11946
    %v11948 = vlaneseq
    %v11949 = vshrl.u32 %v11948, 7
    %v11950 = vsub.s32 %v11947, %v11949
    %v11951 = vrot.slane %v11943, %v11950
    %v11953 = vunpack.c.l.s4 1983009808
    %v11954 = vunpack.c.0.s8 %v11953
    %v11955 = vlaneseq
    %v11956 = vshrl.u32 %v11955, 7
    %v11957 = vsub.s32 %v11954, %v11956
    %v11958 = vrot.slane %v11944, %v11957
    %v11959 = vcombine.low %v11896, %v11904
    %v11960 = vcombine.high %v11896, %v11904
    %v11962 = vunpack.c.l.s4 1983009808
    %v11963 = vunpack.c.0.s8 %v11962
    %v11964 = vlaneseq
    %v11965 = vshrl.u32 %v11964, 7
    %v11966 = vsub.s32 %v11963, %v11965
    %v11967 = vrot.slane %v11959, %v11966
    %v11969 = vunpack.c.l.s4 1983009808
    %v11970 = vunpack.c.0.s8 %v11969
    %v11971 = vlaneseq
    %v11972 = vshrl.u32 %v11971, 7
    %v11973 = vsub.s32 %v11970, %v11972
    %v11974 = vrot.slane %v11960, %v11973
    %v11975 = vcombine.low %v11900, %v11908
    %v11976 = vcombine.high %v11900, %v11908
    %v11978 = vunpack.c.l.s4 1983009808
    %v11979 = vunpack.c.0.s8 %v11978
    %v11980 = vlaneseq
    %v11981 = vshrl.u32 %v11980, 7
    %v11982 = vsub.s32 %v11979, %v11981
    %v11983 = vrot.slane %v11975, %v11982
    %v11985 = vunpack.c.l.s4 1983009808
    %v11986 = vunpack.c.0.s8 %v11985
    %v11987 = vlaneseq
    %v11988 = vshrl.u32 %v11987, 7
    %v11989 = vsub.s32 %v11986, %v11988
    %v11990 = vrot.slane %v11976, %v11989
    %v11991 = vcombine.low %v11935, %v11951
    %v11992 = vcombine.high %v11935, %v11951
    %v11994 = vunpack.c.l.s4 1934713408
    %v11995 = vunpack.c.0.s8 %v11994
    %v11996 = vlaneseq
    %v11997 = vshrl.u32 %v11996, 7
    %v11998 = vsub.s32 %v11995, %v11997
    %v11999 = vrot.slane %v11991, %v11998
    %v12001 = vunpack.c.l.s4 1934713408
    %v12002 = vunpack.c.0.s8 %v12001
    %v12003 = vlaneseq
    %v12004 = vshrl.u32 %v12003, 7
    %v12005 = vsub.s32 %v12002, %v12004
    %v12006 = vrot.slane %v11992, %v12005
    %v12007 = vcombine.low %v11942, %v11958
    %v12008 = vcombine.high %v11942, %v11958
    %v12010 = vunpack.c.l.s4 1934713408
    %v12011 = vunpack.c.0.s8 %v12010
    %v12012 = vlaneseq
    %v12013 = vshrl.u32 %v12012, 7
    %v12014 = vsub.s32 %v12011, %v12013
    %v12015 = vrot.slane %v12007, %v12014
    %v12017 = vunpack.c.l.s4 1934713408
    %v12018 = vunpack.c.0.s8 %v12017
    %v12019 = vlaneseq
    %v12020 = vshrl.u32 %v12019, 7
    %v12021 = vsub.s32 %v12018, %v12020
    %v12022 = vrot.slane %v12008, %v12021
    %v12023 = vcombine.low %v11967, %v11983
    %v12024 = vcombine.high %v11967, %v11983
    %v12026 = vunpack.c.l.s4 1934713408
    %v12027 = vunpack.c.0.s8 %v12026
    %v12028 = vlaneseq
    %v12029 = vshrl.u32 %v12028, 7
    %v12030 = vsub.s32 %v12027, %v12029
    %v12031 = vrot.slane %v12023, %v12030
    %v12033 = vunpack.c.l.s4 1934713408
    %v12034 = vunpack.c.0.s8 %v12033
    %v12035 = vlaneseq
    %v12036 = vshrl.u32 %v12035, 7
    %v12037 = vsub.s32 %v12034, %v12036
    %v12038 = vrot.slane %v12024, %v12037
    %v12039 = vcombine.low %v11974, %v11990
    %v12040 = vcombine.high %v11974, %v11990
    %v12042 = vunpack.c.l.s4 1934713408
    %v12043 = vunpack.c.0.s8 %v12042
    %v12044 = vlaneseq
    %v12045 = vshrl.u32 %v12044, 7
    %v12046 = vsub.s32 %v12043, %v12045
    %v12047 = vrot.slane %v12039, %v12046
    %v12049 = vunpack.c.l.s4 1934713408
    %v12050 = vunpack.c.0.s8 %v12049
    %v12051 = vlaneseq
    %v12052 = vshrl.u32 %v12051, 7
    %v12053 = vsub.s32 %v12050, %v12052
    %v12054 = vrot.slane %v12040, %v12053
    %v12055 = vcombine.low %v11999, %v12031
    %v12056 = vcombine.high %v11999, %v12031
    %v12057 = vcombine.low %v12006, %v12038
    %v12058 = vcombine.high %v12006, %v12038
    %v12059 = vcombine.low %v12015, %v12047
    %v12060 = vcombine.high %v12015, %v12047
    %v12061 = vcombine.low %v12022, %v12054
    %v12062 = vcombine.high %v12022, %v12054
    %v12063 = vcombine.low %v11882, %v11890
    %v12064 = vcombine.high %v11882, %v11890
    %v12066 = vunpack.c.l.s4 1983009808
    %v12067 = vunpack.c.0.s8 %v12066
    %v12068 = vlaneseq
    %v12069 = vshrl.u32 %v12068, 7
    %v12070 = vsub.s32 %v12067, %v12069
    %v12071 = vrot.slane %v12063, %v12070
    %v12073 = vunpack.c.l.s4 1983009808
    %v12074 = vunpack.c.0.s8 %v12073
    %v12075 = vlaneseq
    %v12076 = vshrl.u32 %v12075, 7
    %v12077 = vsub.s32 %v12074, %v12076
    %v12078 = vrot.slane %v12064, %v12077
    %v12079 = vcombine.low %v11886, %v11894
    %v12080 = vcombine.high %v11886, %v11894
    %v12082 = vunpack.c.l.s4 1983009808
    %v12083 = vunpack.c.0.s8 %v12082
    %v12084 = vlaneseq
    %v12085 = vshrl.u32 %v12084, 7
    %v12086 = vsub.s32 %v12083, %v12085
    %v12087 = vrot.slane %v12079, %v12086
    %v12089 = vunpack.c.l.s4 1983009808
    %v12090 = vunpack.c.0.s8 %v12089
    %v12091 = vlaneseq
    %v12092 = vshrl.u32 %v12091, 7
    %v12093 = vsub.s32 %v12090, %v12092
    %v12094 = vrot.slane %v12080, %v12093
    %v12095 = vcombine.low %v11898, %v11906
    %v12096 = vcombine.high %v11898, %v11906
    %v12098 = vunpack.c.l.s4 1983009808
    %v12099 = vunpack.c.0.s8 %v12098
    %v12100 = vlaneseq
    %v12101 = vshrl.u32 %v12100, 7
    %v12102 = vsub.s32 %v12099, %v12101
    %v12103 = vrot.slane %v12095, %v12102
    %v12105 = vunpack.c.l.s4 1983009808
    %v12106 = vunpack.c.0.s8 %v12105
    %v12107 = vlaneseq
    %v12108 = vshrl.u32 %v12107, 7
    %v12109 = vsub.s32 %v12106, %v12108
    %v12110 = vrot.slane %v12096, %v12109
    %v12111 = vcombine.low %v11902, %v11910
    %v12112 = vcombine.high %v11902, %v11910
    %v12114 = vunpack.c.l.s4 1983009808
    %v12115 = vunpack.c.0.s8 %v12114
    %v12116 = vlaneseq
    %v12117 = vshrl.u32 %v12116, 7
    %v12118 = vsub.s32 %v12115, %v12117
    %v12119 = vrot.slane %v12111, %v12118
    %v12121 = vunpack.c.l.s4 1983009808
    %v12122 = vunpack.c.0.s8 %v12121
    %v12123 = vlaneseq
    %v12124 = vshrl.u32 %v12123, 7
    %v12125 = vsub.s32 %v12122, %v12124
    %v12126 = vrot.slane %v12112, %v12125
    %v12127 = vcombine.low %v12071, %v12087
    %v12128 = vcombine.high %v12071, %v12087
    %v12130 = vunpack.c.l.s4 1934713408
    %v12131 = vunpack.c.0.s8 %v12130
    %v12132 = vlaneseq
    %v12133 = vshrl.u32 %v12132, 7
    %v12134 = vsub.s32 %v12131, %v12133
    %v12135 = vrot.slane %v12127, %v12134
    %v12137 = vunpack.c.l.s4 1934713408
    %v12138 = vunpack.c.0.s8 %v12137
    %v12139 = vlaneseq
    %v12140 = vshrl.u32 %v12139, 7
    %v12141 = vsub.s32 %v12138, %v12140
    %v12142 = vrot.slane %v12128, %v12141
    %v12143 = vcombine.low %v12078, %v12094
    %v12144 = vcombine.high %v12078, %v12094
    %v12146 = vunpack.c.l.s4 1934713408
    %v12147 = vunpack.c.0.s8 %v12146
    %v12148 = vlaneseq
    %v12149 = vshrl.u32 %v12148, 7
    %v12150 = vsub.s32 %v12147, %v12149
    %v12151 = vrot.slane %v12143, %v12150
    %v12153 = vunpack.c.l.s4 1934713408
    %v12154 = vunpack.c.0.s8 %v12153
    %v12155 = vlaneseq
    %v12156 = vshrl.u32 %v12155, 7
    %v12157 = vsub.s32 %v12154, %v12156
    %v12158 = vrot.slane %v12144, %v12157
    %v12159 = vcombine.low %v12103, %v12119
    %v12160 = vcombine.high %v12103, %v12119
    %v12162 = vunpack.c.l.s4 1934713408
    %v12163 = vunpack.c.0.s8 %v12162
    %v12164 = vlaneseq
    %v12165 = vshrl.u32 %v12164, 7
    %v12166 = vsub.s32 %v12163, %v12165
    %v12167 = vrot.slane %v12159, %v12166
    %v12169 = vunpack.c.l.s4 1934713408
    %v12170 = vunpack.c.0.s8 %v12169
    %v12171 = vlaneseq
    %v12172 = vshrl.u32 %v12171, 7
    %v12173 = vsub.s32 %v12170, %v12172
    %v12174 = vrot.slane %v12160, %v12173
    %v12175 = vcombine.low %v12110, %v12126
    %v12176 = vcombine.high %v12110, %v12126
    %v12178 = vunpack.c.l.s4 1934713408
    %v12179 = vunpack.c.0.s8 %v12178
    %v12180 = vlaneseq
    %v12181 = vshrl.u32 %v12180, 7
    %v12182 = vsub.s32 %v12179, %v12181
    %v12183 = vrot.slane %v12175, %v12182
    %v12185 = vunpack.c.l.s4 1934713408
    %v12186 = vunpack.c.0.s8 %v12185
    %v12187 = vlaneseq
    %v12188 = vshrl.u32 %v12187, 7
    %v12189 = vsub.s32 %v12186, %v12188
    %v12190 = vrot.slane %v12176, %v12189
    %v12191 = vcombine.low %v12135, %v12167
    %v12192 = vcombine.high %v12135, %v12167
    %v12193 = vcombine.low %v12142, %v12174
    %v12194 = vcombine.high %v12142, %v12174
    %v12195 = vcombine.low %v12151, %v12183
    %v12196 = vcombine.high %v12151, %v12183
    %v12197 = vcombine.low %v12158, %v12190
    %v12198 = vcombine.high %v12158, %v12190
    %12200 = vrot.lane.b32.xlu0 %v12056, 16
    %v12201 = vpop.permute.xlu0 %12200
    %12204 = vrot.lane.b32.xlu0 %v12057, 32
    %v12205 = vpop.permute.xlu0 %12204
    %12208 = vrot.lane.b32.xlu0 %v12058, 48
    %v12209 = vpop.permute.xlu0 %12208
    %12212 = vrot.lane.b32.xlu0 %v12059, 64
    %v12213 = vpop.permute.xlu0 %12212
    %12216 = vrot.lane.b32.xlu0 %v12060, 80
    %v12217 = vpop.permute.xlu0 %12216
    %12220 = vrot.lane.b32.xlu0 %v12061, 96
    %v12221 = vpop.permute.xlu0 %12220
    %12224 = vrot.lane.b32.xlu0 %v12062, 112
    %v12225 = vpop.permute.xlu0 %12224
    %12228 = vrot.lane.b32.xlu0 %v12192, 16
    %v12229 = vpop.permute.xlu0 %12228
    %12232 = vrot.lane.b32.xlu0 %v12193, 32
    %v12233 = vpop.permute.xlu0 %12232
    %12236 = vrot.lane.b32.xlu0 %v12194, 48
    %v12237 = vpop.permute.xlu0 %12236
    %12240 = vrot.lane.b32.xlu0 %v12195, 64
    %v12241 = vpop.permute.xlu0 %12240
    %12244 = vrot.lane.b32.xlu0 %v12196, 80
    %v12245 = vpop.permute.xlu0 %12244
    %12248 = vrot.lane.b32.xlu0 %v12197, 96
    %v12249 = vpop.permute.xlu0 %12248
    %12252 = vrot.lane.b32.xlu0 %v12198, 112
    %v12253 = vpop.permute.xlu0 %12252
    %v12255 = vsel %vm372, %v12055, %v12201
    %v12256 = vsel %vm374, %v12255, %v12205
    %v12257 = vsel %vm376, %v12256, %v12209
    %v12258 = vsel %vm378, %v12257, %v12213
    %v12259 = vsel %vm380, %v12258, %v12217
    %v12260 = vsel %vm382, %v12259, %v12221
    %v12261 = vsel %vm384, %v12260, %v12225
    %v12262 = vsel %vm372, %v12191, %v12229
    %v12263 = vsel %vm374, %v12262, %v12233
    %v12264 = vsel %vm376, %v12263, %v12237
    %v12265 = vsel %vm378, %v12264, %v12241
    %v12266 = vsel %vm380, %v12265, %v12245
    %v12267 = vsel %vm382, %v12266, %v12249
    %v12268 = vsel %vm384, %v12267, %v12253
    %v12269 = vpack.c.bf16 %v6101, %v5695
    %v12270 = vpack.c.bf16 %v6108, %v5702
    %v12271 = vpack.c.bf16 %v9563, %v9157
    %v12272 = vpack.c.bf16 %v9570, %v9164
    %v12273 = vpack.c.bf16 %v6849, %v6491
    %v12274 = vpack.c.bf16 %v6856, %v6498
    %v12275 = vpack.c.bf16 %v10311, %v9953
    %v12276 = vpack.c.bf16 %v10318, %v9960
    %v12277 = vpack.c.bf16 %v7645, %v7255
    %v12278 = vpack.c.bf16 %v7652, %v7262
    %v12279 = vpack.c.bf16 %v11107, %v10717
    %v12280 = vpack.c.bf16 %v11114, %v10724
    %v12281 = vpack.c.bf16 %v8409, %v8003
    %v12282 = vpack.c.bf16 %v8416, %v8010
    %v12283 = vpack.c.bf16 %v11871, %v11465
    %v12284 = vpack.c.bf16 %v11878, %v11472
    %v12285 = vpack.c.bf16 %v8799, %v8799
    %v12286 = vpack.c.bf16 %v8806, %v8806
    %v12287 = vpack.c.bf16 %v12261, %v12261
    %v12288 = vpack.c.bf16 %v12268, %v12268
    %v12289 = vld [vmem:[%s6] sm:$0xff]
    %12291 = vset.pattern.permute.xlu0 0
    %12292 = vperm.xlu0 %12291, %v12289
    %v12293 = vpop.permute.xlu0 %12292
    %vm12295 = vcmask 588800
    %v12297 = vsel %vm12295, %v5344, 0
    %v12300 = vsel %vm2249, %v12285, 0
    %v12303 = vsel %vm2249, %v12286, 0
    %v12306 = vsel %vm2249, %v12287, 0
    %v12309 = vsel %vm2249, %v12288, 0
    %12311 = vmatprep.subr.bf16.mxu0 %v12270
    %12312 = vmatpush1.bf16.msra.mxu0 %v12269
    %12313 = vmatprep.subr.bf16.mxu0 %v12274
    %12314 = vmatpush1.bf16.msra.mxu0 %v12273
    %12315 = vmatprep.subr.bf16.mxu0 %v12278
    %12316 = vmatpush1.bf16.msra.mxu0 %v12277
    %12317 = vmatprep.subr.bf16.mxu0 %v12282
    %12318 = vmatpush1.bf16.msra.mxu0 %v12281
    %12319 = vmatprep.subr.bf16.mxu0 %v12303
    %12320 = vmatpush1.bf16.msra.mxu0 %v12300
    %12321 = vmatprep.subr.bf16.mxu0 0
    %12322 = vmatpush1.bf16.msra.mxu0 0
    %12323 = vmatprep.subr.bf16.mxu0 0
    %12324 = vmatpush1.bf16.msra.mxu0 0
    %12325 = vmatprep.subr.bf16.mxu0 0
    %12326 = vmatpush1.bf16.msra.mxu0 0
    %12327 = vmatprep.subr.bf16.mxu0 0
    %12328 = vmatpush1.bf16.msra.mxu0 0
    %12329 = vmatprep.subr.bf16.mxu0 0
    %12330 = vmatpush1.bf16.msra.mxu0 0
    %12331 = vmatprep.subr.bf16.mxu0 0
    %12332 = vmatpush1.bf16.msra.mxu0 0
    %12333 = vmatprep.subr.bf16.mxu0 0
    %12334 = vmatpush1.bf16.msra.mxu0 0
    %12335 = vmatprep.subr.bf16.mxu0 0
    %12336 = vmatpush1.bf16.msra.mxu0 0
    %12337 = vmatprep.subr.bf16.mxu0 0
    %12338 = vmatpush1.bf16.msra.mxu0 0
    %12339 = vmatprep.subr.bf16.mxu0 0
    %12340 = vmatpush1.bf16.msra.mxu0 0
    %12341 = vmatprep.subr.bf16.mxu0 0
    %12342 = vmatpush1.bf16.msra.mxu0 0
    %12343 = vmatprep.mubr.bf16.mxu0 0
    %12344 = vmatmul.mubr.bf16.gmra.mrb[0].mxu0 %v12297
    %v12345 = vpop.f32.mrb[0].mxu0
    %v12346 = vadd.f32 %v12293, %v12345
    %v12347 = vpop.f32.mrb[0].mxu0
    %v12348 = vadd.f32 %v12293, %v12347
    %v12349 = vpop.f32.mrb[0].mxu0
    %v12350 = vpop.f32.mrb[0].mxu0
    %12351 = vdwg.mxu0
    %12352 = vmatprep.subr.bf16.mxu0 %v12272
    %12353 = vmatpush1.bf16.msra.mxu0 %v12271
    %12354 = vmatprep.subr.bf16.mxu0 %v12276
    %12355 = vmatpush1.bf16.msra.mxu0 %v12275
    %12356 = vmatprep.subr.bf16.mxu0 %v12280
    %12357 = vmatpush1.bf16.msra.mxu0 %v12279
    %12358 = vmatprep.subr.bf16.mxu0 %v12284
    %12359 = vmatpush1.bf16.msra.mxu0 %v12283
    %12360 = vmatprep.subr.bf16.mxu0 %v12309
    %12361 = vmatpush1.bf16.msra.mxu0 %v12306
    %12362 = vmatprep.subr.bf16.mxu0 0
    %12363 = vmatpush1.bf16.msra.mxu0 0
    %12364 = vmatprep.subr.bf16.mxu0 0
    %12365 = vmatpush1.bf16.msra.mxu0 0
    %12366 = vmatprep.subr.bf16.mxu0 0
    %12367 = vmatpush1.bf16.msra.mxu0 0
    %12368 = vmatprep.subr.bf16.mxu0 0
    %12369 = vmatpush1.bf16.msra.mxu0 0
    %12370 = vmatprep.subr.bf16.mxu0 0
    %12371 = vmatpush1.bf16.msra.mxu0 0
    %12372 = vmatprep.subr.bf16.mxu0 0
    %12373 = vmatpush1.bf16.msra.mxu0 0
    %12374 = vmatprep.subr.bf16.mxu0 0
    %12375 = vmatpush1.bf16.msra.mxu0 0
    %12376 = vmatprep.subr.bf16.mxu0 0
    %12377 = vmatpush1.bf16.msra.mxu0 0
    %12378 = vmatprep.subr.bf16.mxu0 0
    %12379 = vmatpush1.bf16.msra.mxu0 0
    %12380 = vmatprep.subr.bf16.mxu0 0
    %12381 = vmatpush1.bf16.msra.mxu0 0
    %12382 = vmatprep.subr.bf16.mxu0 0
    %12383 = vmatpush1.bf16.msra.mxu0 0
    %12384 = vmatprep.mubr.bf16.mxu0 0
    %12385 = vmatmul.mubr.bf16.gmra.mrb[0].mxu0 %v12297
    %v12386 = vpop.f32.mrb[0].mxu0
    %v12387 = vadd.f32 %v12293, %v12386
    %v12388 = vpop.f32.mrb[0].mxu0
    %v12389 = vadd.f32 %v12293, %v12388
    %v12390 = vpop.f32.mrb[0].mxu0
    %v12391 = vpop.f32.mrb[0].mxu0
    %12392 = vdwg.mxu0
    %v12393 = vld [vmem:[%s7] sm:$0xff]
    %v12394 = vld [vmem:[%s8] sm:$0xff]
    %v12395 = vadd.f32 %v12346, %v12348
    %v12396 = vadd.f32 %v12395, %v12387
    %v12397 = vadd.f32 %v12396, %v12389
    %12398 = vadd.xlane.f32.xlu0 %v12397
    %v12399 = vpop.xlane.xlu0 %12398
    %v12400 = vmul.f32 %v12399, 0.001953125
    %v12401 = vsub.f32 %v12346, %v12400
    %v12402 = vsub.f32 %v12348, %v12400
    %v12403 = vsub.f32 %v12387, %v12400
    %v12404 = vsub.f32 %v12389, %v12400
    %v12405 = vmul.f32 %v12401, %v12401
    %v12406 = vmul.f32 %v12402, %v12402
    %v12407 = vmul.f32 %v12403, %v12403
    %v12408 = vmul.f32 %v12404, %v12404
    %v12409 = vadd.f32 %v12405, %v12406
    %v12410 = vadd.f32 %v12409, %v12407
    %v12411 = vadd.f32 %v12410, %v12408
    %12412 = vadd.xlane.f32.xlu0 %v12411
    %v12413 = vpop.xlane.xlu0 %12412
    %v12414 = vmul.f32 %v12413, 0.001953125
    %v12415 = vadd.f32 %v12414, 1e-05
    %v12416 = vrsqrt.pop %v12415
    %v12417 = vmul.f32 %v12393, %v12416
    %v12418 = vmul.f32 %v12400, %v12417
    %v12419 = vsub.f32 %v12394, %v12418
    %12421 = vset.pattern.permute.xlu0 0
    %12422 = vperm.xlu0 %12421, %v12417
    %v12423 = vpop.permute.xlu0 %12422
    %v12425 = vmul.f32 %v12346, %v12423
    %v12426 = vmul.f32 %v12348, %v12423
    %v12427 = vmul.f32 %v12387, %v12423
    %v12428 = vmul.f32 %v12389, %v12423
    %12430 = vset.pattern.permute.xlu0 0
    %12431 = vperm.xlu0 %12430, %v12419
    %v12432 = vpop.permute.xlu0 %12431
    %v12434 = vadd.f32 %v12425, %v12432
    %v12435 = vadd.f32 %v12426, %v12432
    %v12436 = vadd.f32 %v12427, %v12432
    %v12437 = vadd.f32 %v12428, %v12432
    %v12438 = vmax.f32 %v12434, 0.0
    %v12439 = vmax.f32 %v12435, 0.0
    %v12440 = vmax.f32 %v12436, 0.0
    %v12441 = vmax.f32 %v12437, 0.0
    %12442 = vst [vmem:[#allocation7] sm:$0xff] %v12438
    %12443 = vst [vmem:[#allocation7 + $0x8] sm:$0xff] %v12439
    %s12444 = scalar_lea.vmem [#allocation7], 16
    %12445 = vst [vmem:[%s12444] sm:$0xff] %v12440
    %12446 = vst [vmem:[%s12444 + $0x8] sm:$0xff] %v12441
    // Predicated region
    $region42: #{tpu_custom_call.1} parent=1 // pred_check
      _
    $region43: #{tpu_custom_call.1} parent=1 // pred_check_branch
      %12448 = sbr.rel (0) target = $region45
    $region44: #{tpu_custom_call.1} parent=1 // pred_region
      %s12450 = ssub.s32 512, 512
      %12451 = vsyncadd [#allocation6], %s12450
      %s12452 = sshll.u32 [#allocation7], 4
      %s12453 = int_to_ptr.vmem [resolvable:$true] %s12452
      %12458 = dma.vmem_to_hbm [thread:$0]  %s12453, 512, %s9, [#allocation6], 256, 256, 16
    $region45: #{tpu_custom_call.1} parent=1 // pred_fallthru
      _
    // Predicated region
    $region46: #{tpu_custom_call.1} parent=1 // pred_check
      _
    $region47: #{tpu_custom_call.1} parent=1 // pred_check_branch
      %12460 = sbr.rel (0) target = $region49
    $region48: #{tpu_custom_call.1} parent=1 // pred_region
      %12461 = dma.done [#allocation6], 512
    $region49: #{tpu_custom_call.1} parent=1 // pred_fallthru
      _
    %12462 = vsyncpa [#allocation5], 1
    %12463 = vsyncpa [#allocation6], 1

</llo_original>
